<compile_context>
chip_gen: v7x
topology: tpu7x:2x2x1
jax: 0.10.0
libtpu: 0.0.40
codegen_flags: <defaults>
</compile_context>

<pallas_src>
import numpy as np
import jax
import jax.numpy as jnp
from jax.experimental import pallas as pl
from jax.experimental.pallas import tpu as pltpu

_EPS = 1e-5


# ---------------------------------------------------------------------------
# Host-side (numpy) constant builders
# ---------------------------------------------------------------------------

def _pad_matrix(h, w, pad):
    """Replication-pad as a 0/1 matrix A: x_pad_flat = x_flat @ A."""
    hp, wp = h + 2 * pad, w + 2 * pad
    A = np.zeros((h * w, hp * wp), np.float32)
    for ip in range(hp):
        i = min(max(ip - pad, 0), h - 1)
        for jp in range(wp):
            j = min(max(jp - pad, 0), w - 1)
            A[i * w + j, ip * wp + jp] = 1.0
    return A, hp, wp


def _interp1d(n_in, n_out):
    """Bilinear x2 (align_corners=True) 1-D interpolation matrix (n_out, n_in)."""
    if n_in == 1:
        return np.ones((n_out, 1), np.float64)
    src = np.arange(n_out, dtype=np.float64) * (n_in - 1) / (n_out - 1)
    lo = np.clip(np.floor(src).astype(np.int64), 0, n_in - 2)
    frac = src - lo
    m = np.zeros((n_out, n_in), np.float64)
    m[np.arange(n_out), lo] += 1.0 - frac
    m[np.arange(n_out), lo + 1] += frac
    return m


def _upsample_pad_matrix(h, w, pad):
    """bilinear x2 upsample (align_corners=True) + ReplicationPad2d(pad) folded
    into one (h*w, hp*wp) matrix."""
    mh, mw = _interp1d(h, 2 * h), _interp1d(w, 2 * w)
    mh = np.concatenate([mh[:1]] * pad + [mh] + [mh[-1:]] * pad, axis=0)
    mw = np.concatenate([mw[:1]] * pad + [mw] + [mw[-1:]] * pad, axis=0)
    hp, wp = mh.shape[0], mw.shape[0]
    A = np.einsum("ph,qw->hwpq", mh, mw).reshape(h * w, hp * wp)
    return A.astype(np.float32), hp, wp


def _tap_select(A, hp, wp, ksize, dil):
    """Fold a spatial pre-map A (Min -> padded hp*wp grid) with the per-tap
    window select of a k x k (dilated) conv: S[t] has shape (Min, Ho*Wo)."""
    ho = hp - dil * (ksize - 1)
    wo = wp - dil * (ksize - 1)
    Ar = A.reshape(A.shape[0], hp, wp)
    S = np.zeros((ksize * ksize, A.shape[0], ho * wo), np.float32)
    for ky in range(ksize):
        for kx in range(ksize):
            S[ky * ksize + kx] = Ar[:, ky * dil:ky * dil + ho,
                                    kx * dil:kx * dil + wo].reshape(A.shape[0],
                                                                    ho * wo)
    return S


def _maxpool_select(h, w):
    """Four 0/1 matrices picking the 2x2 neighbours: out = max_k (x @ P[k])."""
    ho, wo = h // 2, w // 2
    P = np.zeros((4, h * w, ho * wo), np.float32)
    for k, (dy, dx) in enumerate(((0, 0), (0, 1), (1, 0), (1, 1))):
        for i in range(ho):
            for j in range(wo):
                P[k, (2 * i + dy) * w + (2 * j + dx), i * wo + j] = 1.0
    return P


# ---------------------------------------------------------------------------
# In-kernel helpers
# ---------------------------------------------------------------------------

def _mm(a, b):
    if a.shape[1] == 1:                 # degenerate K=1 contraction -> broadcast
        return a * b
    return jnp.dot(a, b, preferred_element_type=jnp.float32)


def _conv_acc(x, w_ref, s_ref, ntaps=9):
    """y = sum_t (W_t @ x) @ S_t  for a k x k conv in (C, M) layout."""
    acc = None
    for t in range(ntaps):
        part = _mm(_mm(w_ref[t], x), s_ref[t])
        acc = part if acc is None else acc + part
    return acc


def _in_relu(x, inv_m):
    """InstanceNorm (affine=False, biased var, two-pass) + ReLU over the lane
    (spatial) axis of a (C, M) tile."""
    mean = jnp.sum(x, axis=-1, keepdims=True) * inv_m
    xc = x - mean
    var = jnp.sum(xc * xc, axis=-1, keepdims=True) * inv_m
    return jnp.maximum(xc * jax.lax.rsqrt(var + _EPS), 0.0)


def _cparams(in_arrays, out_shapes):
    nbytes = sum(int(np.prod(a.shape)) * jnp.dtype(a.dtype).itemsize
                 for a in in_arrays)
    nbytes += sum(int(np.prod(s.shape)) * jnp.dtype(s.dtype).itemsize
                  for s in out_shapes)
    limit = int(min(60 * 2 ** 20, max(16 * 2 ** 20, 4 * nbytes)))
    return pltpu.CompilerParams(dimension_semantics=("parallel",),
                                vmem_limit_bytes=limit)


def _bspec(shape, batched):
    nd = len(shape)
    if batched:
        return pl.BlockSpec((1,) + tuple(shape[1:]),
                            lambda n, _nd=nd: (n,) + (0,) * (_nd - 1))
    return pl.BlockSpec(tuple(shape), lambda n, _nd=nd: (0,) * _nd)


# ---------------------------------------------------------------------------
# Fused blocks (one pallas_call each)
# ---------------------------------------------------------------------------

def reduce3d_block(x, S, w, b):
    """ReplicationPad3d((1,1,1,1,0,0)) -> Conv3d(k=3) -> InstanceNorm3d -> ReLU.
    x: (N, D, Cin, M); w: (3, 9, Cout, Cin); out: (N, D-2, Cout, M)."""
    N, D, Cin, M = x.shape
    Cout = w.shape[2]
    Dout = D - 2
    inv = 1.0 / float(Dout * M)
    w27 = w.reshape(27, Cout, Cin)

    def kernel(x_ref, s_ref, w_ref, b_ref, o_ref):
        bv = b_ref[...]
        ys = []
        for do in range(Dout):
            acc = None
            for kd in range(3):
                xv = x_ref[0, do + kd]                      # (Cin, M)
                for t in range(9):
                    part = _mm(_mm(w_ref[kd * 9 + t], xv), s_ref[t])
                    acc = part if acc is None else acc + part
            ys.append(acc + bv)
        # InstanceNorm3d: per-channel stats over (Dout, M), two-pass.
        mean = sum(jnp.sum(y, axis=-1, keepdims=True) for y in ys) * inv
        var = sum(jnp.sum((y - mean) ** 2, axis=-1, keepdims=True) for y in ys) * inv
        inv_std = jax.lax.rsqrt(var + _EPS)
        for do in range(Dout):
            o_ref[0, do] = jnp.maximum((ys[do] - mean) * inv_std, 0.0)

    ins = [x, S, w27, b]
    out_shape = jax.ShapeDtypeStruct((N, Dout, Cout, M), jnp.float32)
    return pl.pallas_call(
        kernel,
        out_shape=out_shape,
        grid=(N,),
        in_specs=[_bspec(x.shape, True)] + [_bspec(a.shape, False) for a in ins[1:]],
        out_specs=_bspec(out_shape.shape, True),
        compiler_params=_cparams(ins, [out_shape]),
    )(*ins)


def down_block(x, S, P, w1, b1, w2, b2):
    """down_layer: (pad+conv+IN+ReLU+drop0) x2, with MaxPool2d(2) fused as a
    second output (selection matmuls -> no relayout, no extra HBM read)."""
    Nb, Cin, M = x.shape
    Cout = w2.shape[1]
    Mp = P.shape[-1]
    inv = 1.0 / float(M)

    def kernel(x_ref, s_ref, p_ref, w1_ref, b1_ref, w2_ref, b2_ref, o_ref, op_ref):
        xv = x_ref[0]
        y = _in_relu(_conv_acc(xv, w1_ref, s_ref) + b1_ref[...], inv)
        y = _in_relu(_conv_acc(y, w2_ref, s_ref) + b2_ref[...], inv)
        o_ref[0] = y
        m = None
        for k in range(4):
            v = _mm(y, p_ref[k])
            m = v if m is None else jnp.maximum(m, v)
        op_ref[0] = m

    ins = [x, S, P, w1, b1, w2, b2]
    out_shapes = (jax.ShapeDtypeStruct((Nb, Cout, M), jnp.float32),
                  jax.ShapeDtypeStruct((Nb, Cout, Mp), jnp.float32))
    return pl.pallas_call(
        kernel,
        out_shape=out_shapes,
        grid=(Nb,),
        in_specs=[_bspec(x.shape, True)] + [_bspec(a.shape, False) for a in ins[1:]],
        out_specs=tuple(_bspec(s.shape, True) for s in out_shapes),
        compiler_params=_cparams(ins, out_shapes),
    )(*ins)


def dense_unit_block(x, S, w, b):
    """DilatedDenseUnit: IN+ReLU -> pad(d)+dilated conv -> cat([x, new], C)."""
    Nb, Cin, M = x.shape
    Cg = w.shape[1]
    inv = 1.0 / float(M)

    def kernel(x_ref, s_ref, w_ref, b_ref, o_ref):
        xv = x_ref[0]
        a = _in_relu(xv, inv)
        y = _conv_acc(a, w_ref, s_ref) + b_ref[...]
        o_ref[0] = jnp.concatenate([xv, y], axis=0)    # channel concat in VMEM

    ins = [x, S, w, b]
    out_shape = jax.ShapeDtypeStruct((Nb, Cin + Cg, M), jnp.float32)
    return pl.pallas_call(
        kernel,
        out_shape=out_shape,
        grid=(Nb,),
        in_specs=[_bspec(x.shape, True)] + [_bspec(a.shape, False) for a in ins[1:]],
        out_specs=_bspec(out_shape.shape, True),
        compiler_params=_cparams(ins, [out_shape]),
    )(*ins)


def attention_block(x, S, w1, b1, w2, b2):
    """AttentionModule: x * sigmoid(conv2(IN+ReLU(conv1(IN+ReLU(x)))))."""
    Nb, C, M = x.shape
    inv = 1.0 / float(M)

    def kernel(x_ref, s_ref, w1_ref, b1_ref, w2_ref, b2_ref, o_ref):
        xv = x_ref[0]
        a = _in_relu(xv, inv)
        y = _in_relu(_conv_acc(a, w1_ref, s_ref) + b1_ref[...], inv)
        g = _conv_acc(y, w2_ref, s_ref) + b2_ref[...]
        o_ref[0] = xv * jax.nn.sigmoid(g)              # gate with pre-norm x

    ins = [x, S, w1, b1, w2, b2]
    out_shape = jax.ShapeDtypeStruct((Nb, C, M), jnp.float32)
    return pl.pallas_call(
        kernel,
        out_shape=out_shape,
        grid=(Nb,),
        in_specs=[_bspec(x.shape, True)] + [_bspec(a.shape, False) for a in ins[1:]],
        out_specs=_bspec(out_shape.shape, True),
        compiler_params=_cparams(ins, [out_shape]),
    )(*ins)


def up_block(xs, link, S_up, S, wu, bu, w1l, w1u, b1, w2, b2, last=None):
    """Decoder stage: [bilinear x2 + pad + conv] -> cat(link, .) ->
    (pad+conv+IN+ReLU) x2 [-> final 1x1 conv].  The channel concat is folded
    into conv1 by splitting its weight along input channels (link | upsampled)."""
    Nb, Cup, Ms = xs.shape
    _, Cl, Ml = link.shape
    Cout = w2.shape[1]
    inv = 1.0 / float(Ml)
    with_last = last is not None

    def kernel(xs_ref, lk_ref, su_ref, s_ref, wu_ref, bu_ref,
               w1l_ref, w1u_ref, b1_ref, w2_ref, b2_ref, *rest):
        xsv = xs_ref[0]
        lkv = lk_ref[0]
        u = _conv_acc(xsv, wu_ref, su_ref) + bu_ref[...]     # upsample+pad+conv
        y = (_conv_acc(lkv, w1l_ref, s_ref) + _conv_acc(u, w1u_ref, s_ref)
             + b1_ref[...])
        y = _in_relu(y, inv)
        y = _in_relu(_conv_acc(y, w2_ref, s_ref) + b2_ref[...], inv)
        if with_last:
            wl_ref, bl_ref, o_ref = rest
            o_ref[0] = _mm(wl_ref[...], y) + bl_ref[...]     # fused final 1x1 conv
        else:
            (o_ref,) = rest
            o_ref[0] = y

    ins = [xs, link, S_up, S, wu, bu, w1l, w1u, b1, w2, b2]
    if with_last:
        ins += [last[0], last[1]]
        out_c = last[0].shape[0]
    else:
        out_c = Cout
    out_shape = jax.ShapeDtypeStruct((Nb, out_c, Ml), jnp.float32)
    in_specs = ([_bspec(xs.shape, True), _bspec(link.shape, True)]
                + [_bspec(a.shape, False) for a in ins[2:]])
    return pl.pallas_call(
        kernel,
        out_shape=out_shape,
        grid=(Nb,),
        in_specs=in_specs,
        out_specs=_bspec(out_shape.shape, True),
        compiler_params=_cparams(ins, [out_shape]),
    )(*ins)


# ---------------------------------------------------------------------------
# Model parameters (weights kept directly in the per-tap (k*k, Cout, Cin) layout)
# ---------------------------------------------------------------------------

def build_model(key, depth=1, channels_in=1, channels_2d_to_3d=8, channels=8,
                output_channels=1, slices=5, dilated_layers=(1, 1), growth_rate=4):
    keys = iter(jax.random.split(key, 128))

    def conv2d(cin, cout):
        k1, k2 = jax.random.split(next(keys))
        w = jax.random.normal(k1, (9, cout, cin), jnp.float32) / np.sqrt(9 * cin)
        b = jax.random.normal(k2, (cout, 1), jnp.float32) * 0.01
        return w, b

    def conv3d(cin, cout):
        k1, k2 = jax.random.split(next(keys))
        w = jax.random.normal(k1, (3, 9, cout, cin), jnp.float32) / np.sqrt(27 * cin)
        b = jax.random.normal(k2, (cout, 1), jnp.float32) * 0.01
        return w, b

    p = {}
    p["reduce3d"] = [conv3d(cin, channels_2d_to_3d)
                     for cin in [channels_in] + [channels_2d_to_3d] * (slices // 2 - 1)]
    p["down1"] = (conv2d(channels_2d_to_3d, channels), conv2d(channels, channels))
    p["down_layers"] = [
        (conv2d(channels * 2 ** i, channels * 2 ** (i + 1)),
         conv2d(channels * 2 ** (i + 1), channels * 2 ** (i + 1)))
        for i in range(depth)]

    in_ch = channels * 2 ** depth
    bottleneck = []
    for idx, growth_steps in enumerate(dilated_layers):
        dil = 2 ** idx
        for _ in range(growth_steps):
            bottleneck.append(("dense", dil, conv2d(in_ch, growth_rate)))
            in_ch += growth_rate
        bottleneck.append(("attn", 1, (conv2d(in_ch, in_ch // 4),
                                       conv2d(in_ch // 4, in_ch))))
    p["bottleneck"] = bottleneck
    bf = in_ch

    p["upsampling"] = [conv2d(bf, bf) for _ in range(depth + 1)]
    ups = []
    for i in range(depth, -1, -1):
        cl = channels * 2 ** i
        (w1, b1), (w2, b2) = conv2d(cl + bf, bf), conv2d(bf, bf)
        # conv1 consumes cat([link(cl), upsampled(bf)], C): split its weight
        ups.append(((w1[:, :, :cl], w1[:, :, cl:], b1), (w2, b2)))
    p["up_layers"] = ups

    k1, k2 = jax.random.split(next(keys))
    p["last"] = (jax.random.normal(k1, (output_channels, bf), jnp.float32) / np.sqrt(bf),
                 jax.random.normal(k2, (output_channels, 1), jnp.float32) * 0.01)
    return p


# ---------------------------------------------------------------------------
# Forward pass
# ---------------------------------------------------------------------------

def forward(params, x_ncdhw):
    """x: (N, C_in, D, H, W) NCDHW  ->  (N*D_out, output_channels, H, W)."""
    N, Cin, D, H, W = x_ncdhw.shape
    x = jnp.transpose(x_ncdhw, (0, 2, 1, 3, 4)).reshape(N, D, Cin, H * W)
    x = x.astype(jnp.float32)

    consts = {}

    def conv_S(h, w, pad, dil):
        k = ("conv", h, w, pad, dil)
        if k not in consts:
            A, hp, wp = _pad_matrix(h, w, pad)
            consts[k] = jnp.asarray(_tap_select(A, hp, wp, 3, dil))
        return consts[k]

    def up_S(h, w):
        k = ("up", h, w)
        if k not in consts:
            A, hp, wp = _upsample_pad_matrix(h, w, 1)
            consts[k] = jnp.asarray(_tap_select(A, hp, wp, 3, 1))
        return consts[k]

    def pool_P(h, w):
        k = ("pool", h, w)
        if k not in consts:
            consts[k] = jnp.asarray(_maxpool_select(h, w))
        return consts[k]

    # ---- 3D depth-reducing stage (D: slices -> 1), no HBM depth-concat ----
    for (w3, b3) in params["reduce3d"]:
        x = reduce3d_block(x, conv_S(H, W, 1, 1), w3, b3)

    # transpose_(1,2) + view(-1, C, H, W): merge (N, D) into the batch axis
    n_, d_, c_, m_ = x.shape
    out = x.reshape(n_ * d_, c_, m_)

    # ---- encoder ----
    h, w = H, W
    links = []
    (dw1, db1), (dw2, db2) = params["down1"]
    lk, out = down_block(out, conv_S(h, w, 1, 1), pool_P(h, w), dw1, db1, dw2, db2)
    links.append((lk, h, w))
    h, w = h // 2, w // 2
    for (p1, p2) in params["down_layers"]:
        lk, out = down_block(out, conv_S(h, w, 1, 1), pool_P(h, w),
                             p1[0], p1[1], p2[0], p2[1])
        links.append((lk, h, w))
        h, w = h // 2, w // 2

    # ---- dense atrous bottleneck with attention ----
    for kind, dil, pp in params["bottleneck"]:
        if kind == "dense":
            wd, bd = pp
            out = dense_unit_block(out, conv_S(h, w, dil, dil), wd, bd)
        else:
            (wa1, ba1), (wa2, ba2) = pp
            out = attention_block(out, conv_S(h, w, 1, 1), wa1, ba1, wa2, ba2)

    # ---- decoder ----
    links = links[::-1]
    n_up = len(params["up_layers"])
    for i in range(n_up):
        wu, bu = params["upsampling"][i]
        (w1l, w1u, b1u), (w2u, b2u) = params["up_layers"][i]
        lk, lh, lw = links[i]
        last = params["last"] if i == n_up - 1 else None
        out = up_block(out, lk, up_S(h, w), conv_S(lh, lw, 1, 1),
                       wu, bu, w1l, w1u, b1u, w2u, b2u, last=last)
        h, w = lh, lw

    nb, co, _ = out.shape
    return out.reshape(nb, co, H, W)                 # NCHW, matches PyTorch


# ---------------------------------------------------------------------------

if __name__ == "__main__":
    key = jax.random.PRNGKey(0)
    pkey, xkey = jax.random.split(key)

    # small config consistent with the module: depth=1, slices=5, channels_in=1,
    # channels_2d_to_3d=8, channels=8, dilated_layers=[1,1], growth_rate=4
    params = build_model(pkey, depth=1, channels_in=1, channels_2d_to_3d=8,
                         channels=8, output_channels=1, slices=5,
                         dilated_layers=(1, 1), growth_rate=4)

    x = jax.random.normal(xkey, (2, 1, 5, 16, 16), jnp.float32)  # (N, C_in, D, H, W)
    y = forward(params, x)
    y = jax.block_until_ready(y)
    assert y.shape == (2, 1, 16, 16), y.shape
    assert bool(jnp.all(jnp.isfinite(y)))
    print("KERNEL_OK")
</pallas_src>

<mosaic_0001>
module attributes {stable_mosaic.version = 11 : i64} {
  func.func @kernel(%arg0: i32, %arg1: memref<1x5x1x256xf32, #tpu.memory_space<vmem>>, %arg2: memref<9x256x256xf32, #tpu.memory_space<vmem>>, %arg3: memref<27x8x1xf32, #tpu.memory_space<vmem>>, %arg4: memref<8x1xf32, #tpu.memory_space<vmem>>, %arg5: memref<1x3x8x256xf32, #tpu.memory_space<vmem>>) attributes {dimension_semantics = [#tpu.dimension_semantics<parallel>], iteration_bounds = array<i64: 2>, scalar_prefetch = 0 : i64, scratch_operands = 0 : i64, tpu.core_type = #tpu.core_type<tc>, window_params = [{transform_indices = @transform_0, window_bounds = array<i64: 1, 5, 1, 256>}, {pipeline_mode = #tpu.pipeline_mode<synchronous>, transform_indices = @transform_1, window_bounds = array<i64: 9, 256, 256>}, {pipeline_mode = #tpu.pipeline_mode<synchronous>, transform_indices = @transform_2, window_bounds = array<i64: 27, 8, 1>}, {pipeline_mode = #tpu.pipeline_mode<synchronous>, transform_indices = @transform_3, window_bounds = array<i64: 8, 1>}, {transform_indices = @transform_4, window_bounds = array<i64: 1, 3, 8, 256>}]} {
    %c0 = arith.constant 0 : index
    %c0_0 = arith.constant 0 : index
    %0 = vector.load %arg4[%c0, %c0_0] : memref<8x1xf32, #tpu.memory_space<vmem>>, vector<8x1xf32>
    %c0_1 = arith.constant 0 : index
    %c0_2 = arith.constant 0 : index
    %c0_3 = arith.constant 0 : index
    %c0_4 = arith.constant 0 : index
    %1 = vector.load %arg1[%c0_1, %c0_2, %c0_3, %c0_4] : memref<1x5x1x256xf32, #tpu.memory_space<vmem>>, vector<1x1x1x256xf32>
    %2 = vector.shape_cast %1 : vector<1x1x1x256xf32> to vector<1x256xf32>
    %c0_5 = arith.constant 0 : index
    %c0_6 = arith.constant 0 : index
    %c0_7 = arith.constant 0 : index
    %3 = vector.load %arg3[%c0_5, %c0_6, %c0_7] : memref<27x8x1xf32, #tpu.memory_space<vmem>>, vector<1x8x1xf32>
    %4 = vector.shape_cast %3 : vector<1x8x1xf32> to vector<8x1xf32>
    %5 = vector.broadcast %4 : vector<8x1xf32> to vector<8x256xf32>
    %6 = vector.broadcast %2 : vector<1x256xf32> to vector<8x256xf32>
    %7 = arith.mulf %5, %6 : vector<8x256xf32>
    %c0_8 = arith.constant 0 : index
    %c0_9 = arith.constant 0 : index
    %c0_10 = arith.constant 0 : index
    %8 = vector.load %arg2[%c0_8, %c0_9, %c0_10] : memref<9x256x256xf32, #tpu.memory_space<vmem>>, vector<1x256x256xf32>
    %9 = vector.shape_cast %8 : vector<1x256x256xf32> to vector<256x256xf32>
    %cst = arith.constant dense<0.000000e+00> : vector<8x256xf32>
    %10 = tpu.matmul %7, %9, %cst {dimension_numbers = #tpu.dot_dimension_numbers<[1], [0], [0], [1], [0, 0, 1, 1], [], []>} : vector<8x256xf32>, vector<256x256xf32>, vector<8x256xf32> -> vector<8x256xf32>
    %c1 = arith.constant 1 : index
    %c0_11 = arith.constant 0 : index
    %c0_12 = arith.constant 0 : index
    %11 = vector.load %arg3[%c1, %c0_11, %c0_12] : memref<27x8x1xf32, #tpu.memory_space<vmem>>, vector<1x8x1xf32>
    %12 = vector.shape_cast %11 : vector<1x8x1xf32> to vector<8x1xf32>
    %13 = vector.broadcast %12 : vector<8x1xf32> to vector<8x256xf32>
    %14 = vector.broadcast %2 : vector<1x256xf32> to vector<8x256xf32>
    %15 = arith.mulf %13, %14 : vector<8x256xf32>
    %c1_13 = arith.constant 1 : index
    %c0_14 = arith.constant 0 : index
    %c0_15 = arith.constant 0 : index
    %16 = vector.load %arg2[%c1_13, %c0_14, %c0_15] : memref<9x256x256xf32, #tpu.memory_space<vmem>>, vector<1x256x256xf32>
    %17 = vector.shape_cast %16 : vector<1x256x256xf32> to vector<256x256xf32>
    %cst_16 = arith.constant dense<0.000000e+00> : vector<8x256xf32>
    %18 = tpu.matmul %15, %17, %cst_16 {dimension_numbers = #tpu.dot_dimension_numbers<[1], [0], [0], [1], [0, 0, 1, 1], [], []>} : vector<8x256xf32>, vector<256x256xf32>, vector<8x256xf32> -> vector<8x256xf32>
    %19 = arith.addf %10, %18 : vector<8x256xf32>
    %c2 = arith.constant 2 : index
    %c0_17 = arith.constant 0 : index
    %c0_18 = arith.constant 0 : index
    %20 = vector.load %arg3[%c2, %c0_17, %c0_18] : memref<27x8x1xf32, #tpu.memory_space<vmem>>, vector<1x8x1xf32>
    %21 = vector.shape_cast %20 : vector<1x8x1xf32> to vector<8x1xf32>
    %22 = vector.broadcast %21 : vector<8x1xf32> to vector<8x256xf32>
    %23 = vector.broadcast %2 : vector<1x256xf32> to vector<8x256xf32>
    %24 = arith.mulf %22, %23 : vector<8x256xf32>
    %c2_19 = arith.constant 2 : index
    %c0_20 = arith.constant 0 : index
    %c0_21 = arith.constant 0 : index
    %25 = vector.load %arg2[%c2_19, %c0_20, %c0_21] : memref<9x256x256xf32, #tpu.memory_space<vmem>>, vector<1x256x256xf32>
    %26 = vector.shape_cast %25 : vector<1x256x256xf32> to vector<256x256xf32>
    %cst_22 = arith.constant dense<0.000000e+00> : vector<8x256xf32>
    %27 = tpu.matmul %24, %26, %cst_22 {dimension_numbers = #tpu.dot_dimension_numbers<[1], [0], [0], [1], [0, 0, 1, 1], [], []>} : vector<8x256xf32>, vector<256x256xf32>, vector<8x256xf32> -> vector<8x256xf32>
    %28 = arith.addf %19, %27 : vector<8x256xf32>
    %c3 = arith.constant 3 : index
    %c0_23 = arith.constant 0 : index
    %c0_24 = arith.constant 0 : index
    %29 = vector.load %arg3[%c3, %c0_23, %c0_24] : memref<27x8x1xf32, #tpu.memory_space<vmem>>, vector<1x8x1xf32>
    %30 = vector.shape_cast %29 : vector<1x8x1xf32> to vector<8x1xf32>
    %31 = vector.broadcast %30 : vector<8x1xf32> to vector<8x256xf32>
    %32 = vector.broadcast %2 : vector<1x256xf32> to vector<8x256xf32>
    %33 = arith.mulf %31, %32 : vector<8x256xf32>
    %c3_25 = arith.constant 3 : index
    %c0_26 = arith.constant 0 : index
    %c0_27 = arith.constant 0 : index
    %34 = vector.load %arg2[%c3_25, %c0_26, %c0_27] : memref<9x256x256xf32, #tpu.memory_space<vmem>>, vector<1x256x256xf32>
    %35 = vector.shape_cast %34 : vector<1x256x256xf32> to vector<256x256xf32>
    %cst_28 = arith.constant dense<0.000000e+00> : vector<8x256xf32>
    %36 = tpu.matmul %33, %35, %cst_28 {dimension_numbers = #tpu.dot_dimension_numbers<[1], [0], [0], [1], [0, 0, 1, 1], [], []>} : vector<8x256xf32>, vector<256x256xf32>, vector<8x256xf32> -> vector<8x256xf32>
    %37 = arith.addf %28, %36 : vector<8x256xf32>
    %c4 = arith.constant 4 : index
    %c0_29 = arith.constant 0 : index
    %c0_30 = arith.constant 0 : index
    %38 = vector.load %arg3[%c4, %c0_29, %c0_30] : memref<27x8x1xf32, #tpu.memory_space<vmem>>, vector<1x8x1xf32>
    %39 = vector.shape_cast %38 : vector<1x8x1xf32> to vector<8x1xf32>
    %40 = vector.broadcast %39 : vector<8x1xf32> to vector<8x256xf32>
    %41 = vector.broadcast %2 : vector<1x256xf32> to vector<8x256xf32>
    %42 = arith.mulf %40, %41 : vector<8x256xf32>
    %c4_31 = arith.constant 4 : index
    %c0_32 = arith.constant 0 : index
    %c0_33 = arith.constant 0 : index
    %43 = vector.load %arg2[%c4_31, %c0_32, %c0_33] : memref<9x256x256xf32, #tpu.memory_space<vmem>>, vector<1x256x256xf32>
    %44 = vector.shape_cast %43 : vector<1x256x256xf32> to vector<256x256xf32>
    %cst_34 = arith.constant dense<0.000000e+00> : vector<8x256xf32>
    %45 = tpu.matmul %42, %44, %cst_34 {dimension_numbers = #tpu.dot_dimension_numbers<[1], [0], [0], [1], [0, 0, 1, 1], [], []>} : vector<8x256xf32>, vector<256x256xf32>, vector<8x256xf32> -> vector<8x256xf32>
    %46 = arith.addf %37, %45 : vector<8x256xf32>
    %c5 = arith.constant 5 : index
    %c0_35 = arith.constant 0 : index
    %c0_36 = arith.constant 0 : index
    %47 = vector.load %arg3[%c5, %c0_35, %c0_36] : memref<27x8x1xf32, #tpu.memory_space<vmem>>, vector<1x8x1xf32>
    %48 = vector.shape_cast %47 : vector<1x8x1xf32> to vector<8x1xf32>
    %49 = vector.broadcast %48 : vector<8x1xf32> to vector<8x256xf32>
    %50 = vector.broadcast %2 : vector<1x256xf32> to vector<8x256xf32>
    %51 = arith.mulf %49, %50 : vector<8x256xf32>
    %c5_37 = arith.constant 5 : index
    %c0_38 = arith.constant 0 : index
    %c0_39 = arith.constant 0 : index
    %52 = vector.load %arg2[%c5_37, %c0_38, %c0_39] : memref<9x256x256xf32, #tpu.memory_space<vmem>>, vector<1x256x256xf32>
    %53 = vector.shape_cast %52 : vector<1x256x256xf32> to vector<256x256xf32>
    %cst_40 = arith.constant dense<0.000000e+00> : vector<8x256xf32>
    %54 = tpu.matmul %51, %53, %cst_40 {dimension_numbers = #tpu.dot_dimension_numbers<[1], [0], [0], [1], [0, 0, 1, 1], [], []>} : vector<8x256xf32>, vector<256x256xf32>, vector<8x256xf32> -> vector<8x256xf32>
    %55 = arith.addf %46, %54 : vector<8x256xf32>
    %c6 = arith.constant 6 : index
    %c0_41 = arith.constant 0 : index
    %c0_42 = arith.constant 0 : index
    %56 = vector.load %arg3[%c6, %c0_41, %c0_42] : memref<27x8x1xf32, #tpu.memory_space<vmem>>, vector<1x8x1xf32>
    %57 = vector.shape_cast %56 : vector<1x8x1xf32> to vector<8x1xf32>
    %58 = vector.broadcast %57 : vector<8x1xf32> to vector<8x256xf32>
    %59 = vector.broadcast %2 : vector<1x256xf32> to vector<8x256xf32>
    %60 = arith.mulf %58, %59 : vector<8x256xf32>
    %c6_43 = arith.constant 6 : index
    %c0_44 = arith.constant 0 : index
    %c0_45 = arith.constant 0 : index
    %61 = vector.load %arg2[%c6_43, %c0_44, %c0_45] : memref<9x256x256xf32, #tpu.memory_space<vmem>>, vector<1x256x256xf32>
    %62 = vector.shape_cast %61 : vector<1x256x256xf32> to vector<256x256xf32>
    %cst_46 = arith.constant dense<0.000000e+00> : vector<8x256xf32>
    %63 = tpu.matmul %60, %62, %cst_46 {dimension_numbers = #tpu.dot_dimension_numbers<[1], [0], [0], [1], [0, 0, 1, 1], [], []>} : vector<8x256xf32>, vector<256x256xf32>, vector<8x256xf32> -> vector<8x256xf32>
    %64 = arith.addf %55, %63 : vector<8x256xf32>
    %c7 = arith.constant 7 : index
    %c0_47 = arith.constant 0 : index
    %c0_48 = arith.constant 0 : index
    %65 = vector.load %arg3[%c7, %c0_47, %c0_48] : memref<27x8x1xf32, #tpu.memory_space<vmem>>, vector<1x8x1xf32>
    %66 = vector.shape_cast %65 : vector<1x8x1xf32> to vector<8x1xf32>
    %67 = vector.broadcast %66 : vector<8x1xf32> to vector<8x256xf32>
    %68 = vector.broadcast %2 : vector<1x256xf32> to vector<8x256xf32>
    %69 = arith.mulf %67, %68 : vector<8x256xf32>
    %c7_49 = arith.constant 7 : index
    %c0_50 = arith.constant 0 : index
    %c0_51 = arith.constant 0 : index
    %70 = vector.load %arg2[%c7_49, %c0_50, %c0_51] : memref<9x256x256xf32, #tpu.memory_space<vmem>>, vector<1x256x256xf32>
    %71 = vector.shape_cast %70 : vector<1x256x256xf32> to vector<256x256xf32>
    %cst_52 = arith.constant dense<0.000000e+00> : vector<8x256xf32>
    %72 = tpu.matmul %69, %71, %cst_52 {dimension_numbers = #tpu.dot_dimension_numbers<[1], [0], [0], [1], [0, 0, 1, 1], [], []>} : vector<8x256xf32>, vector<256x256xf32>, vector<8x256xf32> -> vector<8x256xf32>
    %73 = arith.addf %64, %72 : vector<8x256xf32>
    %c8 = arith.constant 8 : index
    %c0_53 = arith.constant 0 : index
    %c0_54 = arith.constant 0 : index
    %74 = vector.load %arg3[%c8, %c0_53, %c0_54] : memref<27x8x1xf32, #tpu.memory_space<vmem>>, vector<1x8x1xf32>
    %75 = vector.shape_cast %74 : vector<1x8x1xf32> to vector<8x1xf32>
    %76 = vector.broadcast %75 : vector<8x1xf32> to vector<8x256xf32>
    %77 = vector.broadcast %2 : vector<1x256xf32> to vector<8x256xf32>
    %78 = arith.mulf %76, %77 : vector<8x256xf32>
    %c8_55 = arith.constant 8 : index
    %c0_56 = arith.constant 0 : index
    %c0_57 = arith.constant 0 : index
    %79 = vector.load %arg2[%c8_55, %c0_56, %c0_57] : memref<9x256x256xf32, #tpu.memory_space<vmem>>, vector<1x256x256xf32>
    %80 = vector.shape_cast %79 : vector<1x256x256xf32> to vector<256x256xf32>
    %cst_58 = arith.constant dense<0.000000e+00> : vector<8x256xf32>
    %81 = tpu.matmul %78, %80, %cst_58 {dimension_numbers = #tpu.dot_dimension_numbers<[1], [0], [0], [1], [0, 0, 1, 1], [], []>} : vector<8x256xf32>, vector<256x256xf32>, vector<8x256xf32> -> vector<8x256xf32>
    %82 = arith.addf %73, %81 : vector<8x256xf32>
    %c0_59 = arith.constant 0 : index
    %c1_60 = arith.constant 1 : index
    %c0_61 = arith.constant 0 : index
    %c0_62 = arith.constant 0 : index
    %83 = vector.load %arg1[%c0_59, %c1_60, %c0_61, %c0_62] : memref<1x5x1x256xf32, #tpu.memory_space<vmem>>, vector<1x1x1x256xf32>
    %84 = vector.shape_cast %83 : vector<1x1x1x256xf32> to vector<1x256xf32>
    %c9 = arith.constant 9 : index
    %c0_63 = arith.constant 0 : index
    %c0_64 = arith.constant 0 : index
    %85 = vector.load %arg3[%c9, %c0_63, %c0_64] : memref<27x8x1xf32, #tpu.memory_space<vmem>>, vector<1x8x1xf32>
    %86 = vector.shape_cast %85 : vector<1x8x1xf32> to vector<8x1xf32>
    %87 = vector.broadcast %86 : vector<8x1xf32> to vector<8x256xf32>
    %88 = vector.broadcast %84 : vector<1x256xf32> to vector<8x256xf32>
    %89 = arith.mulf %87, %88 : vector<8x256xf32>
    %c0_65 = arith.constant 0 : index
    %c0_66 = arith.constant 0 : index
    %c0_67 = arith.constant 0 : index
    %90 = vector.load %arg2[%c0_65, %c0_66, %c0_67] : memref<9x256x256xf32, #tpu.memory_space<vmem>>, vector<1x256x256xf32>
    %91 = vector.shape_cast %90 : vector<1x256x256xf32> to vector<256x256xf32>
    %cst_68 = arith.constant dense<0.000000e+00> : vector<8x256xf32>
    %92 = tpu.matmul %89, %91, %cst_68 {dimension_numbers = #tpu.dot_dimension_numbers<[1], [0], [0], [1], [0, 0, 1, 1], [], []>} : vector<8x256xf32>, vector<256x256xf32>, vector<8x256xf32> -> vector<8x256xf32>
    %93 = arith.addf %82, %92 : vector<8x256xf32>
    %c10 = arith.constant 10 : index
    %c0_69 = arith.constant 0 : index
    %c0_70 = arith.constant 0 : index
    %94 = vector.load %arg3[%c10, %c0_69, %c0_70] : memref<27x8x1xf32, #tpu.memory_space<vmem>>, vector<1x8x1xf32>
    %95 = vector.shape_cast %94 : vector<1x8x1xf32> to vector<8x1xf32>
    %96 = vector.broadcast %95 : vector<8x1xf32> to vector<8x256xf32>
    %97 = vector.broadcast %84 : vector<1x256xf32> to vector<8x256xf32>
    %98 = arith.mulf %96, %97 : vector<8x256xf32>
    %c1_71 = arith.constant 1 : index
    %c0_72 = arith.constant 0 : index
    %c0_73 = arith.constant 0 : index
    %99 = vector.load %arg2[%c1_71, %c0_72, %c0_73] : memref<9x256x256xf32, #tpu.memory_space<vmem>>, vector<1x256x256xf32>
    %100 = vector.shape_cast %99 : vector<1x256x256xf32> to vector<256x256xf32>
    %cst_74 = arith.constant dense<0.000000e+00> : vector<8x256xf32>
    %101 = tpu.matmul %98, %100, %cst_74 {dimension_numbers = #tpu.dot_dimension_numbers<[1], [0], [0], [1], [0, 0, 1, 1], [], []>} : vector<8x256xf32>, vector<256x256xf32>, vector<8x256xf32> -> vector<8x256xf32>
    %102 = arith.addf %93, %101 : vector<8x256xf32>
    %c11 = arith.constant 11 : index
    %c0_75 = arith.constant 0 : index
    %c0_76 = arith.constant 0 : index
    %103 = vector.load %arg3[%c11, %c0_75, %c0_76] : memref<27x8x1xf32, #tpu.memory_space<vmem>>, vector<1x8x1xf32>
    %104 = vector.shape_cast %103 : vector<1x8x1xf32> to vector<8x1xf32>
    %105 = vector.broadcast %104 : vector<8x1xf32> to vector<8x256xf32>
    %106 = vector.broadcast %84 : vector<1x256xf32> to vector<8x256xf32>
    %107 = arith.mulf %105, %106 : vector<8x256xf32>
    %c2_77 = arith.constant 2 : index
    %c0_78 = arith.constant 0 : index
    %c0_79 = arith.constant 0 : index
    %108 = vector.load %arg2[%c2_77, %c0_78, %c0_79] : memref<9x256x256xf32, #tpu.memory_space<vmem>>, vector<1x256x256xf32>
    %109 = vector.shape_cast %108 : vector<1x256x256xf32> to vector<256x256xf32>
    %cst_80 = arith.constant dense<0.000000e+00> : vector<8x256xf32>
    %110 = tpu.matmul %107, %109, %cst_80 {dimension_numbers = #tpu.dot_dimension_numbers<[1], [0], [0], [1], [0, 0, 1, 1], [], []>} : vector<8x256xf32>, vector<256x256xf32>, vector<8x256xf32> -> vector<8x256xf32>
    %111 = arith.addf %102, %110 : vector<8x256xf32>
    %c12 = arith.constant 12 : index
    %c0_81 = arith.constant 0 : index
    %c0_82 = arith.constant 0 : index
    %112 = vector.load %arg3[%c12, %c0_81, %c0_82] : memref<27x8x1xf32, #tpu.memory_space<vmem>>, vector<1x8x1xf32>
    %113 = vector.shape_cast %112 : vector<1x8x1xf32> to vector<8x1xf32>
    %114 = vector.broadcast %113 : vector<8x1xf32> to vector<8x256xf32>
    %115 = vector.broadcast %84 : vector<1x256xf32> to vector<8x256xf32>
    %116 = arith.mulf %114, %115 : vector<8x256xf32>
    %c3_83 = arith.constant 3 : index
    %c0_84 = arith.constant 0 : index
    %c0_85 = arith.constant 0 : index
    %117 = vector.load %arg2[%c3_83, %c0_84, %c0_85] : memref<9x256x256xf32, #tpu.memory_space<vmem>>, vector<1x256x256xf32>
    %118 = vector.shape_cast %117 : vector<1x256x256xf32> to vector<256x256xf32>
    %cst_86 = arith.constant dense<0.000000e+00> : vector<8x256xf32>
    %119 = tpu.matmul %116, %118, %cst_86 {dimension_numbers = #tpu.dot_dimension_numbers<[1], [0], [0], [1], [0, 0, 1, 1], [], []>} : vector<8x256xf32>, vector<256x256xf32>, vector<8x256xf32> -> vector<8x256xf32>
    %120 = arith.addf %111, %119 : vector<8x256xf32>
    %c13 = arith.constant 13 : index
    %c0_87 = arith.constant 0 : index
    %c0_88 = arith.constant 0 : index
    %121 = vector.load %arg3[%c13, %c0_87, %c0_88] : memref<27x8x1xf32, #tpu.memory_space<vmem>>, vector<1x8x1xf32>
    %122 = vector.shape_cast %121 : vector<1x8x1xf32> to vector<8x1xf32>
    %123 = vector.broadcast %122 : vector<8x1xf32> to vector<8x256xf32>
    %124 = vector.broadcast %84 : vector<1x256xf32> to vector<8x256xf32>
    %125 = arith.mulf %123, %124 : vector<8x256xf32>
    %c4_89 = arith.constant 4 : index
    %c0_90 = arith.constant 0 : index
    %c0_91 = arith.constant 0 : index
    %126 = vector.load %arg2[%c4_89, %c0_90, %c0_91] : memref<9x256x256xf32, #tpu.memory_space<vmem>>, vector<1x256x256xf32>
    %127 = vector.shape_cast %126 : vector<1x256x256xf32> to vector<256x256xf32>
    %cst_92 = arith.constant dense<0.000000e+00> : vector<8x256xf32>
    %128 = tpu.matmul %125, %127, %cst_92 {dimension_numbers = #tpu.dot_dimension_numbers<[1], [0], [0], [1], [0, 0, 1, 1], [], []>} : vector<8x256xf32>, vector<256x256xf32>, vector<8x256xf32> -> vector<8x256xf32>
    %129 = arith.addf %120, %128 : vector<8x256xf32>
    %c14 = arith.constant 14 : index
    %c0_93 = arith.constant 0 : index
    %c0_94 = arith.constant 0 : index
    %130 = vector.load %arg3[%c14, %c0_93, %c0_94] : memref<27x8x1xf32, #tpu.memory_space<vmem>>, vector<1x8x1xf32>
    %131 = vector.shape_cast %130 : vector<1x8x1xf32> to vector<8x1xf32>
    %132 = vector.broadcast %131 : vector<8x1xf32> to vector<8x256xf32>
    %133 = vector.broadcast %84 : vector<1x256xf32> to vector<8x256xf32>
    %134 = arith.mulf %132, %133 : vector<8x256xf32>
    %c5_95 = arith.constant 5 : index
    %c0_96 = arith.constant 0 : index
    %c0_97 = arith.constant 0 : index
    %135 = vector.load %arg2[%c5_95, %c0_96, %c0_97] : memref<9x256x256xf32, #tpu.memory_space<vmem>>, vector<1x256x256xf32>
    %136 = vector.shape_cast %135 : vector<1x256x256xf32> to vector<256x256xf32>
    %cst_98 = arith.constant dense<0.000000e+00> : vector<8x256xf32>
    %137 = tpu.matmul %134, %136, %cst_98 {dimension_numbers = #tpu.dot_dimension_numbers<[1], [0], [0], [1], [0, 0, 1, 1], [], []>} : vector<8x256xf32>, vector<256x256xf32>, vector<8x256xf32> -> vector<8x256xf32>
    %138 = arith.addf %129, %137 : vector<8x256xf32>
    %c15 = arith.constant 15 : index
    %c0_99 = arith.constant 0 : index
    %c0_100 = arith.constant 0 : index
    %139 = vector.load %arg3[%c15, %c0_99, %c0_100] : memref<27x8x1xf32, #tpu.memory_space<vmem>>, vector<1x8x1xf32>
    %140 = vector.shape_cast %139 : vector<1x8x1xf32> to vector<8x1xf32>
    %141 = vector.broadcast %140 : vector<8x1xf32> to vector<8x256xf32>
    %142 = vector.broadcast %84 : vector<1x256xf32> to vector<8x256xf32>
    %143 = arith.mulf %141, %142 : vector<8x256xf32>
    %c6_101 = arith.constant 6 : index
    %c0_102 = arith.constant 0 : index
    %c0_103 = arith.constant 0 : index
    %144 = vector.load %arg2[%c6_101, %c0_102, %c0_103] : memref<9x256x256xf32, #tpu.memory_space<vmem>>, vector<1x256x256xf32>
    %145 = vector.shape_cast %144 : vector<1x256x256xf32> to vector<256x256xf32>
    %cst_104 = arith.constant dense<0.000000e+00> : vector<8x256xf32>
    %146 = tpu.matmul %143, %145, %cst_104 {dimension_numbers = #tpu.dot_dimension_numbers<[1], [0], [0], [1], [0, 0, 1, 1], [], []>} : vector<8x256xf32>, vector<256x256xf32>, vector<8x256xf32> -> vector<8x256xf32>
    %147 = arith.addf %138, %146 : vector<8x256xf32>
    %c16 = arith.constant 16 : index
    %c0_105 = arith.constant 0 : index
    %c0_106 = arith.constant 0 : index
    %148 = vector.load %arg3[%c16, %c0_105, %c0_106] : memref<27x8x1xf32, #tpu.memory_space<vmem>>, vector<1x8x1xf32>
    %149 = vector.shape_cast %148 : vector<1x8x1xf32> to vector<8x1xf32>
    %150 = vector.broadcast %149 : vector<8x1xf32> to vector<8x256xf32>
    %151 = vector.broadcast %84 : vector<1x256xf32> to vector<8x256xf32>
    %152 = arith.mulf %150, %151 : vector<8x256xf32>
    %c7_107 = arith.constant 7 : index
    %c0_108 = arith.constant 0 : index
    %c0_109 = arith.constant 0 : index
    %153 = vector.load %arg2[%c7_107, %c0_108, %c0_109] : memref<9x256x256xf32, #tpu.memory_space<vmem>>, vector<1x256x256xf32>
    %154 = vector.shape_cast %153 : vector<1x256x256xf32> to vector<256x256xf32>
    %cst_110 = arith.constant dense<0.000000e+00> : vector<8x256xf32>
    %155 = tpu.matmul %152, %154, %cst_110 {dimension_numbers = #tpu.dot_dimension_numbers<[1], [0], [0], [1], [0, 0, 1, 1], [], []>} : vector<8x256xf32>, vector<256x256xf32>, vector<8x256xf32> -> vector<8x256xf32>
    %156 = arith.addf %147, %155 : vector<8x256xf32>
    %c17 = arith.constant 17 : index
    %c0_111 = arith.constant 0 : index
    %c0_112 = arith.constant 0 : index
    %157 = vector.load %arg3[%c17, %c0_111, %c0_112] : memref<27x8x1xf32, #tpu.memory_space<vmem>>, vector<1x8x1xf32>
    %158 = vector.shape_cast %157 : vector<1x8x1xf32> to vector<8x1xf32>
    %159 = vector.broadcast %158 : vector<8x1xf32> to vector<8x256xf32>
    %160 = vector.broadcast %84 : vector<1x256xf32> to vector<8x256xf32>
    %161 = arith.mulf %159, %160 : vector<8x256xf32>
    %c8_113 = arith.constant 8 : index
    %c0_114 = arith.constant 0 : index
    %c0_115 = arith.constant 0 : index
    %162 = vector.load %arg2[%c8_113, %c0_114, %c0_115] : memref<9x256x256xf32, #tpu.memory_space<vmem>>, vector<1x256x256xf32>
    %163 = vector.shape_cast %162 : vector<1x256x256xf32> to vector<256x256xf32>
    %cst_116 = arith.constant dense<0.000000e+00> : vector<8x256xf32>
    %164 = tpu.matmul %161, %163, %cst_116 {dimension_numbers = #tpu.dot_dimension_numbers<[1], [0], [0], [1], [0, 0, 1, 1], [], []>} : vector<8x256xf32>, vector<256x256xf32>, vector<8x256xf32> -> vector<8x256xf32>
    %165 = arith.addf %156, %164 : vector<8x256xf32>
    %c0_117 = arith.constant 0 : index
    %c2_118 = arith.constant 2 : index
    %c0_119 = arith.constant 0 : index
    %c0_120 = arith.constant 0 : index
    %166 = vector.load %arg1[%c0_117, %c2_118, %c0_119, %c0_120] : memref<1x5x1x256xf32, #tpu.memory_space<vmem>>, vector<1x1x1x256xf32>
    %167 = vector.shape_cast %166 : vector<1x1x1x256xf32> to vector<1x256xf32>
    %c18 = arith.constant 18 : index
    %c0_121 = arith.constant 0 : index
    %c0_122 = arith.constant 0 : index
    %168 = vector.load %arg3[%c18, %c0_121, %c0_122] : memref<27x8x1xf32, #tpu.memory_space<vmem>>, vector<1x8x1xf32>
    %169 = vector.shape_cast %168 : vector<1x8x1xf32> to vector<8x1xf32>
    %170 = vector.broadcast %169 : vector<8x1xf32> to vector<8x256xf32>
    %171 = vector.broadcast %167 : vector<1x256xf32> to vector<8x256xf32>
    %172 = arith.mulf %170, %171 : vector<8x256xf32>
    %c0_123 = arith.constant 0 : index
    %c0_124 = arith.constant 0 : index
    %c0_125 = arith.constant 0 : index
    %173 = vector.load %arg2[%c0_123, %c0_124, %c0_125] : memref<9x256x256xf32, #tpu.memory_space<vmem>>, vector<1x256x256xf32>
    %174 = vector.shape_cast %173 : vector<1x256x256xf32> to vector<256x256xf32>
    %cst_126 = arith.constant dense<0.000000e+00> : vector<8x256xf32>
    %175 = tpu.matmul %172, %174, %cst_126 {dimension_numbers = #tpu.dot_dimension_numbers<[1], [0], [0], [1], [0, 0, 1, 1], [], []>} : vector<8x256xf32>, vector<256x256xf32>, vector<8x256xf32> -> vector<8x256xf32>
    %176 = arith.addf %165, %175 : vector<8x256xf32>
    %c19 = arith.constant 19 : index
    %c0_127 = arith.constant 0 : index
    %c0_128 = arith.constant 0 : index
    %177 = vector.load %arg3[%c19, %c0_127, %c0_128] : memref<27x8x1xf32, #tpu.memory_space<vmem>>, vector<1x8x1xf32>
    %178 = vector.shape_cast %177 : vector<1x8x1xf32> to vector<8x1xf32>
    %179 = vector.broadcast %178 : vector<8x1xf32> to vector<8x256xf32>
    %180 = vector.broadcast %167 : vector<1x256xf32> to vector<8x256xf32>
    %181 = arith.mulf %179, %180 : vector<8x256xf32>
    %c1_129 = arith.constant 1 : index
    %c0_130 = arith.constant 0 : index
    %c0_131 = arith.constant 0 : index
    %182 = vector.load %arg2[%c1_129, %c0_130, %c0_131] : memref<9x256x256xf32, #tpu.memory_space<vmem>>, vector<1x256x256xf32>
    %183 = vector.shape_cast %182 : vector<1x256x256xf32> to vector<256x256xf32>
    %cst_132 = arith.constant dense<0.000000e+00> : vector<8x256xf32>
    %184 = tpu.matmul %181, %183, %cst_132 {dimension_numbers = #tpu.dot_dimension_numbers<[1], [0], [0], [1], [0, 0, 1, 1], [], []>} : vector<8x256xf32>, vector<256x256xf32>, vector<8x256xf32> -> vector<8x256xf32>
    %185 = arith.addf %176, %184 : vector<8x256xf32>
    %c20 = arith.constant 20 : index
    %c0_133 = arith.constant 0 : index
    %c0_134 = arith.constant 0 : index
    %186 = vector.load %arg3[%c20, %c0_133, %c0_134] : memref<27x8x1xf32, #tpu.memory_space<vmem>>, vector<1x8x1xf32>
    %187 = vector.shape_cast %186 : vector<1x8x1xf32> to vector<8x1xf32>
    %188 = vector.broadcast %187 : vector<8x1xf32> to vector<8x256xf32>
    %189 = vector.broadcast %167 : vector<1x256xf32> to vector<8x256xf32>
    %190 = arith.mulf %188, %189 : vector<8x256xf32>
    %c2_135 = arith.constant 2 : index
    %c0_136 = arith.constant 0 : index
    %c0_137 = arith.constant 0 : index
    %191 = vector.load %arg2[%c2_135, %c0_136, %c0_137] : memref<9x256x256xf32, #tpu.memory_space<vmem>>, vector<1x256x256xf32>
    %192 = vector.shape_cast %191 : vector<1x256x256xf32> to vector<256x256xf32>
    %cst_138 = arith.constant dense<0.000000e+00> : vector<8x256xf32>
    %193 = tpu.matmul %190, %192, %cst_138 {dimension_numbers = #tpu.dot_dimension_numbers<[1], [0], [0], [1], [0, 0, 1, 1], [], []>} : vector<8x256xf32>, vector<256x256xf32>, vector<8x256xf32> -> vector<8x256xf32>
    %194 = arith.addf %185, %193 : vector<8x256xf32>
    %c21 = arith.constant 21 : index
    %c0_139 = arith.constant 0 : index
    %c0_140 = arith.constant 0 : index
    %195 = vector.load %arg3[%c21, %c0_139, %c0_140] : memref<27x8x1xf32, #tpu.memory_space<vmem>>, vector<1x8x1xf32>
    %196 = vector.shape_cast %195 : vector<1x8x1xf32> to vector<8x1xf32>
    %197 = vector.broadcast %196 : vector<8x1xf32> to vector<8x256xf32>
    %198 = vector.broadcast %167 : vector<1x256xf32> to vector<8x256xf32>
    %199 = arith.mulf %197, %198 : vector<8x256xf32>
    %c3_141 = arith.constant 3 : index
    %c0_142 = arith.constant 0 : index
    %c0_143 = arith.constant 0 : index
    %200 = vector.load %arg2[%c3_141, %c0_142, %c0_143] : memref<9x256x256xf32, #tpu.memory_space<vmem>>, vector<1x256x256xf32>
    %201 = vector.shape_cast %200 : vector<1x256x256xf32> to vector<256x256xf32>
    %cst_144 = arith.constant dense<0.000000e+00> : vector<8x256xf32>
    %202 = tpu.matmul %199, %201, %cst_144 {dimension_numbers = #tpu.dot_dimension_numbers<[1], [0], [0], [1], [0, 0, 1, 1], [], []>} : vector<8x256xf32>, vector<256x256xf32>, vector<8x256xf32> -> vector<8x256xf32>
    %203 = arith.addf %194, %202 : vector<8x256xf32>
    %c22 = arith.constant 22 : index
    %c0_145 = arith.constant 0 : index
    %c0_146 = arith.constant 0 : index
    %204 = vector.load %arg3[%c22, %c0_145, %c0_146] : memref<27x8x1xf32, #tpu.memory_space<vmem>>, vector<1x8x1xf32>
    %205 = vector.shape_cast %204 : vector<1x8x1xf32> to vector<8x1xf32>
    %206 = vector.broadcast %205 : vector<8x1xf32> to vector<8x256xf32>
    %207 = vector.broadcast %167 : vector<1x256xf32> to vector<8x256xf32>
    %208 = arith.mulf %206, %207 : vector<8x256xf32>
    %c4_147 = arith.constant 4 : index
    %c0_148 = arith.constant 0 : index
    %c0_149 = arith.constant 0 : index
    %209 = vector.load %arg2[%c4_147, %c0_148, %c0_149] : memref<9x256x256xf32, #tpu.memory_space<vmem>>, vector<1x256x256xf32>
    %210 = vector.shape_cast %209 : vector<1x256x256xf32> to vector<256x256xf32>
    %cst_150 = arith.constant dense<0.000000e+00> : vector<8x256xf32>
    %211 = tpu.matmul %208, %210, %cst_150 {dimension_numbers = #tpu.dot_dimension_numbers<[1], [0], [0], [1], [0, 0, 1, 1], [], []>} : vector<8x256xf32>, vector<256x256xf32>, vector<8x256xf32> -> vector<8x256xf32>
    %212 = arith.addf %203, %211 : vector<8x256xf32>
    %c23 = arith.constant 23 : index
    %c0_151 = arith.constant 0 : index
    %c0_152 = arith.constant 0 : index
    %213 = vector.load %arg3[%c23, %c0_151, %c0_152] : memref<27x8x1xf32, #tpu.memory_space<vmem>>, vector<1x8x1xf32>
    %214 = vector.shape_cast %213 : vector<1x8x1xf32> to vector<8x1xf32>
    %215 = vector.broadcast %214 : vector<8x1xf32> to vector<8x256xf32>
    %216 = vector.broadcast %167 : vector<1x256xf32> to vector<8x256xf32>
    %217 = arith.mulf %215, %216 : vector<8x256xf32>
    %c5_153 = arith.constant 5 : index
    %c0_154 = arith.constant 0 : index
    %c0_155 = arith.constant 0 : index
    %218 = vector.load %arg2[%c5_153, %c0_154, %c0_155] : memref<9x256x256xf32, #tpu.memory_space<vmem>>, vector<1x256x256xf32>
    %219 = vector.shape_cast %218 : vector<1x256x256xf32> to vector<256x256xf32>
    %cst_156 = arith.constant dense<0.000000e+00> : vector<8x256xf32>
    %220 = tpu.matmul %217, %219, %cst_156 {dimension_numbers = #tpu.dot_dimension_numbers<[1], [0], [0], [1], [0, 0, 1, 1], [], []>} : vector<8x256xf32>, vector<256x256xf32>, vector<8x256xf32> -> vector<8x256xf32>
    %221 = arith.addf %212, %220 : vector<8x256xf32>
    %c24 = arith.constant 24 : index
    %c0_157 = arith.constant 0 : index
    %c0_158 = arith.constant 0 : index
    %222 = vector.load %arg3[%c24, %c0_157, %c0_158] : memref<27x8x1xf32, #tpu.memory_space<vmem>>, vector<1x8x1xf32>
    %223 = vector.shape_cast %222 : vector<1x8x1xf32> to vector<8x1xf32>
    %224 = vector.broadcast %223 : vector<8x1xf32> to vector<8x256xf32>
    %225 = vector.broadcast %167 : vector<1x256xf32> to vector<8x256xf32>
    %226 = arith.mulf %224, %225 : vector<8x256xf32>
    %c6_159 = arith.constant 6 : index
    %c0_160 = arith.constant 0 : index
    %c0_161 = arith.constant 0 : index
    %227 = vector.load %arg2[%c6_159, %c0_160, %c0_161] : memref<9x256x256xf32, #tpu.memory_space<vmem>>, vector<1x256x256xf32>
    %228 = vector.shape_cast %227 : vector<1x256x256xf32> to vector<256x256xf32>
    %cst_162 = arith.constant dense<0.000000e+00> : vector<8x256xf32>
    %229 = tpu.matmul %226, %228, %cst_162 {dimension_numbers = #tpu.dot_dimension_numbers<[1], [0], [0], [1], [0, 0, 1, 1], [], []>} : vector<8x256xf32>, vector<256x256xf32>, vector<8x256xf32> -> vector<8x256xf32>
    %230 = arith.addf %221, %229 : vector<8x256xf32>
    %c25 = arith.constant 25 : index
    %c0_163 = arith.constant 0 : index
    %c0_164 = arith.constant 0 : index
    %231 = vector.load %arg3[%c25, %c0_163, %c0_164] : memref<27x8x1xf32, #tpu.memory_space<vmem>>, vector<1x8x1xf32>
    %232 = vector.shape_cast %231 : vector<1x8x1xf32> to vector<8x1xf32>
    %233 = vector.broadcast %232 : vector<8x1xf32> to vector<8x256xf32>
    %234 = vector.broadcast %167 : vector<1x256xf32> to vector<8x256xf32>
    %235 = arith.mulf %233, %234 : vector<8x256xf32>
    %c7_165 = arith.constant 7 : index
    %c0_166 = arith.constant 0 : index
    %c0_167 = arith.constant 0 : index
    %236 = vector.load %arg2[%c7_165, %c0_166, %c0_167] : memref<9x256x256xf32, #tpu.memory_space<vmem>>, vector<1x256x256xf32>
    %237 = vector.shape_cast %236 : vector<1x256x256xf32> to vector<256x256xf32>
    %cst_168 = arith.constant dense<0.000000e+00> : vector<8x256xf32>
    %238 = tpu.matmul %235, %237, %cst_168 {dimension_numbers = #tpu.dot_dimension_numbers<[1], [0], [0], [1], [0, 0, 1, 1], [], []>} : vector<8x256xf32>, vector<256x256xf32>, vector<8x256xf32> -> vector<8x256xf32>
    %239 = arith.addf %230, %238 : vector<8x256xf32>
    %c26 = arith.constant 26 : index
    %c0_169 = arith.constant 0 : index
    %c0_170 = arith.constant 0 : index
    %240 = vector.load %arg3[%c26, %c0_169, %c0_170] : memref<27x8x1xf32, #tpu.memory_space<vmem>>, vector<1x8x1xf32>
    %241 = vector.shape_cast %240 : vector<1x8x1xf32> to vector<8x1xf32>
    %242 = vector.broadcast %241 : vector<8x1xf32> to vector<8x256xf32>
    %243 = vector.broadcast %167 : vector<1x256xf32> to vector<8x256xf32>
    %244 = arith.mulf %242, %243 : vector<8x256xf32>
    %c8_171 = arith.constant 8 : index
    %c0_172 = arith.constant 0 : index
    %c0_173 = arith.constant 0 : index
    %245 = vector.load %arg2[%c8_171, %c0_172, %c0_173] : memref<9x256x256xf32, #tpu.memory_space<vmem>>, vector<1x256x256xf32>
    %246 = vector.shape_cast %245 : vector<1x256x256xf32> to vector<256x256xf32>
    %cst_174 = arith.constant dense<0.000000e+00> : vector<8x256xf32>
    %247 = tpu.matmul %244, %246, %cst_174 {dimension_numbers = #tpu.dot_dimension_numbers<[1], [0], [0], [1], [0, 0, 1, 1], [], []>} : vector<8x256xf32>, vector<256x256xf32>, vector<8x256xf32> -> vector<8x256xf32>
    %248 = arith.addf %239, %247 : vector<8x256xf32>
    %249 = vector.broadcast %0 : vector<8x1xf32> to vector<8x256xf32>
    %250 = arith.addf %248, %249 : vector<8x256xf32>
    %c0_175 = arith.constant 0 : index
    %c1_176 = arith.constant 1 : index
    %c0_177 = arith.constant 0 : index
    %c0_178 = arith.constant 0 : index
    %251 = vector.load %arg1[%c0_175, %c1_176, %c0_177, %c0_178] : memref<1x5x1x256xf32, #tpu.memory_space<vmem>>, vector<1x1x1x256xf32>
    %252 = vector.shape_cast %251 : vector<1x1x1x256xf32> to vector<1x256xf32>
    %c0_179 = arith.constant 0 : index
    %c0_180 = arith.constant 0 : index
    %c0_181 = arith.constant 0 : index
    %253 = vector.load %arg3[%c0_179, %c0_180, %c0_181] : memref<27x8x1xf32, #tpu.memory_space<vmem>>, vector<1x8x1xf32>
    %254 = vector.shape_cast %253 : vector<1x8x1xf32> to vector<8x1xf32>
    %255 = vector.broadcast %254 : vector<8x1xf32> to vector<8x256xf32>
    %256 = vector.broadcast %252 : vector<1x256xf32> to vector<8x256xf32>
    %257 = arith.mulf %255, %256 : vector<8x256xf32>
    %c0_182 = arith.constant 0 : index
    %c0_183 = arith.constant 0 : index
    %c0_184 = arith.constant 0 : index
    %258 = vector.load %arg2[%c0_182, %c0_183, %c0_184] : memref<9x256x256xf32, #tpu.memory_space<vmem>>, vector<1x256x256xf32>
    %259 = vector.shape_cast %258 : vector<1x256x256xf32> to vector<256x256xf32>
    %cst_185 = arith.constant dense<0.000000e+00> : vector<8x256xf32>
    %260 = tpu.matmul %257, %259, %cst_185 {dimension_numbers = #tpu.dot_dimension_numbers<[1], [0], [0], [1], [0, 0, 1, 1], [], []>} : vector<8x256xf32>, vector<256x256xf32>, vector<8x256xf32> -> vector<8x256xf32>
    %c1_186 = arith.constant 1 : index
    %c0_187 = arith.constant 0 : index
    %c0_188 = arith.constant 0 : index
    %261 = vector.load %arg3[%c1_186, %c0_187, %c0_188] : memref<27x8x1xf32, #tpu.memory_space<vmem>>, vector<1x8x1xf32>
    %262 = vector.shape_cast %261 : vector<1x8x1xf32> to vector<8x1xf32>
    %263 = vector.broadcast %262 : vector<8x1xf32> to vector<8x256xf32>
    %264 = vector.broadcast %252 : vector<1x256xf32> to vector<8x256xf32>
    %265 = arith.mulf %263, %264 : vector<8x256xf32>
    %c1_189 = arith.constant 1 : index
    %c0_190 = arith.constant 0 : index
    %c0_191 = arith.constant 0 : index
    %266 = vector.load %arg2[%c1_189, %c0_190, %c0_191] : memref<9x256x256xf32, #tpu.memory_space<vmem>>, vector<1x256x256xf32>
    %267 = vector.shape_cast %266 : vector<1x256x256xf32> to vector<256x256xf32>
    %cst_192 = arith.constant dense<0.000000e+00> : vector<8x256xf32>
    %268 = tpu.matmul %265, %267, %cst_192 {dimension_numbers = #tpu.dot_dimension_numbers<[1], [0], [0], [1], [0, 0, 1, 1], [], []>} : vector<8x256xf32>, vector<256x256xf32>, vector<8x256xf32> -> vector<8x256xf32>
    %269 = arith.addf %260, %268 : vector<8x256xf32>
    %c2_193 = arith.constant 2 : index
    %c0_194 = arith.constant 0 : index
    %c0_195 = arith.constant 0 : index
    %270 = vector.load %arg3[%c2_193, %c0_194, %c0_195] : memref<27x8x1xf32, #tpu.memory_space<vmem>>, vector<1x8x1xf32>
    %271 = vector.shape_cast %270 : vector<1x8x1xf32> to vector<8x1xf32>
    %272 = vector.broadcast %271 : vector<8x1xf32> to vector<8x256xf32>
    %273 = vector.broadcast %252 : vector<1x256xf32> to vector<8x256xf32>
    %274 = arith.mulf %272, %273 : vector<8x256xf32>
    %c2_196 = arith.constant 2 : index
    %c0_197 = arith.constant 0 : index
    %c0_198 = arith.constant 0 : index
    %275 = vector.load %arg2[%c2_196, %c0_197, %c0_198] : memref<9x256x256xf32, #tpu.memory_space<vmem>>, vector<1x256x256xf32>
    %276 = vector.shape_cast %275 : vector<1x256x256xf32> to vector<256x256xf32>
    %cst_199 = arith.constant dense<0.000000e+00> : vector<8x256xf32>
    %277 = tpu.matmul %274, %276, %cst_199 {dimension_numbers = #tpu.dot_dimension_numbers<[1], [0], [0], [1], [0, 0, 1, 1], [], []>} : vector<8x256xf32>, vector<256x256xf32>, vector<8x256xf32> -> vector<8x256xf32>
    %278 = arith.addf %269, %277 : vector<8x256xf32>
    %c3_200 = arith.constant 3 : index
    %c0_201 = arith.constant 0 : index
    %c0_202 = arith.constant 0 : index
    %279 = vector.load %arg3[%c3_200, %c0_201, %c0_202] : memref<27x8x1xf32, #tpu.memory_space<vmem>>, vector<1x8x1xf32>
    %280 = vector.shape_cast %279 : vector<1x8x1xf32> to vector<8x1xf32>
    %281 = vector.broadcast %280 : vector<8x1xf32> to vector<8x256xf32>
    %282 = vector.broadcast %252 : vector<1x256xf32> to vector<8x256xf32>
    %283 = arith.mulf %281, %282 : vector<8x256xf32>
    %c3_203 = arith.constant 3 : index
    %c0_204 = arith.constant 0 : index
    %c0_205 = arith.constant 0 : index
    %284 = vector.load %arg2[%c3_203, %c0_204, %c0_205] : memref<9x256x256xf32, #tpu.memory_space<vmem>>, vector<1x256x256xf32>
    %285 = vector.shape_cast %284 : vector<1x256x256xf32> to vector<256x256xf32>
    %cst_206 = arith.constant dense<0.000000e+00> : vector<8x256xf32>
    %286 = tpu.matmul %283, %285, %cst_206 {dimension_numbers = #tpu.dot_dimension_numbers<[1], [0], [0], [1], [0, 0, 1, 1], [], []>} : vector<8x256xf32>, vector<256x256xf32>, vector<8x256xf32> -> vector<8x256xf32>
    %287 = arith.addf %278, %286 : vector<8x256xf32>
    %c4_207 = arith.constant 4 : index
    %c0_208 = arith.constant 0 : index
    %c0_209 = arith.constant 0 : index
    %288 = vector.load %arg3[%c4_207, %c0_208, %c0_209] : memref<27x8x1xf32, #tpu.memory_space<vmem>>, vector<1x8x1xf32>
    %289 = vector.shape_cast %288 : vector<1x8x1xf32> to vector<8x1xf32>
    %290 = vector.broadcast %289 : vector<8x1xf32> to vector<8x256xf32>
    %291 = vector.broadcast %252 : vector<1x256xf32> to vector<8x256xf32>
    %292 = arith.mulf %290, %291 : vector<8x256xf32>
    %c4_210 = arith.constant 4 : index
    %c0_211 = arith.constant 0 : index
    %c0_212 = arith.constant 0 : index
    %293 = vector.load %arg2[%c4_210, %c0_211, %c0_212] : memref<9x256x256xf32, #tpu.memory_space<vmem>>, vector<1x256x256xf32>
    %294 = vector.shape_cast %293 : vector<1x256x256xf32> to vector<256x256xf32>
    %cst_213 = arith.constant dense<0.000000e+00> : vector<8x256xf32>
    %295 = tpu.matmul %292, %294, %cst_213 {dimension_numbers = #tpu.dot_dimension_numbers<[1], [0], [0], [1], [0, 0, 1, 1], [], []>} : vector<8x256xf32>, vector<256x256xf32>, vector<8x256xf32> -> vector<8x256xf32>
    %296 = arith.addf %287, %295 : vector<8x256xf32>
    %c5_214 = arith.constant 5 : index
    %c0_215 = arith.constant 0 : index
    %c0_216 = arith.constant 0 : index
    %297 = vector.load %arg3[%c5_214, %c0_215, %c0_216] : memref<27x8x1xf32, #tpu.memory_space<vmem>>, vector<1x8x1xf32>
    %298 = vector.shape_cast %297 : vector<1x8x1xf32> to vector<8x1xf32>
    %299 = vector.broadcast %298 : vector<8x1xf32> to vector<8x256xf32>
    %300 = vector.broadcast %252 : vector<1x256xf32> to vector<8x256xf32>
    %301 = arith.mulf %299, %300 : vector<8x256xf32>
    %c5_217 = arith.constant 5 : index
    %c0_218 = arith.constant 0 : index
    %c0_219 = arith.constant 0 : index
    %302 = vector.load %arg2[%c5_217, %c0_218, %c0_219] : memref<9x256x256xf32, #tpu.memory_space<vmem>>, vector<1x256x256xf32>
    %303 = vector.shape_cast %302 : vector<1x256x256xf32> to vector<256x256xf32>
    %cst_220 = arith.constant dense<0.000000e+00> : vector<8x256xf32>
    %304 = tpu.matmul %301, %303, %cst_220 {dimension_numbers = #tpu.dot_dimension_numbers<[1], [0], [0], [1], [0, 0, 1, 1], [], []>} : vector<8x256xf32>, vector<256x256xf32>, vector<8x256xf32> -> vector<8x256xf32>
    %305 = arith.addf %296, %304 : vector<8x256xf32>
    %c6_221 = arith.constant 6 : index
    %c0_222 = arith.constant 0 : index
    %c0_223 = arith.constant 0 : index
    %306 = vector.load %arg3[%c6_221, %c0_222, %c0_223] : memref<27x8x1xf32, #tpu.memory_space<vmem>>, vector<1x8x1xf32>
    %307 = vector.shape_cast %306 : vector<1x8x1xf32> to vector<8x1xf32>
    %308 = vector.broadcast %307 : vector<8x1xf32> to vector<8x256xf32>
    %309 = vector.broadcast %252 : vector<1x256xf32> to vector<8x256xf32>
    %310 = arith.mulf %308, %309 : vector<8x256xf32>
    %c6_224 = arith.constant 6 : index
    %c0_225 = arith.constant 0 : index
    %c0_226 = arith.constant 0 : index
    %311 = vector.load %arg2[%c6_224, %c0_225, %c0_226] : memref<9x256x256xf32, #tpu.memory_space<vmem>>, vector<1x256x256xf32>
    %312 = vector.shape_cast %311 : vector<1x256x256xf32> to vector<256x256xf32>
    %cst_227 = arith.constant dense<0.000000e+00> : vector<8x256xf32>
    %313 = tpu.matmul %310, %312, %cst_227 {dimension_numbers = #tpu.dot_dimension_numbers<[1], [0], [0], [1], [0, 0, 1, 1], [], []>} : vector<8x256xf32>, vector<256x256xf32>, vector<8x256xf32> -> vector<8x256xf32>
    %314 = arith.addf %305, %313 : vector<8x256xf32>
    %c7_228 = arith.constant 7 : index
    %c0_229 = arith.constant 0 : index
    %c0_230 = arith.constant 0 : index
    %315 = vector.load %arg3[%c7_228, %c0_229, %c0_230] : memref<27x8x1xf32, #tpu.memory_space<vmem>>, vector<1x8x1xf32>
    %316 = vector.shape_cast %315 : vector<1x8x1xf32> to vector<8x1xf32>
    %317 = vector.broadcast %316 : vector<8x1xf32> to vector<8x256xf32>
    %318 = vector.broadcast %252 : vector<1x256xf32> to vector<8x256xf32>
    %319 = arith.mulf %317, %318 : vector<8x256xf32>
    %c7_231 = arith.constant 7 : index
    %c0_232 = arith.constant 0 : index
    %c0_233 = arith.constant 0 : index
    %320 = vector.load %arg2[%c7_231, %c0_232, %c0_233] : memref<9x256x256xf32, #tpu.memory_space<vmem>>, vector<1x256x256xf32>
    %321 = vector.shape_cast %320 : vector<1x256x256xf32> to vector<256x256xf32>
    %cst_234 = arith.constant dense<0.000000e+00> : vector<8x256xf32>
    %322 = tpu.matmul %319, %321, %cst_234 {dimension_numbers = #tpu.dot_dimension_numbers<[1], [0], [0], [1], [0, 0, 1, 1], [], []>} : vector<8x256xf32>, vector<256x256xf32>, vector<8x256xf32> -> vector<8x256xf32>
    %323 = arith.addf %314, %322 : vector<8x256xf32>
    %c8_235 = arith.constant 8 : index
    %c0_236 = arith.constant 0 : index
    %c0_237 = arith.constant 0 : index
    %324 = vector.load %arg3[%c8_235, %c0_236, %c0_237] : memref<27x8x1xf32, #tpu.memory_space<vmem>>, vector<1x8x1xf32>
    %325 = vector.shape_cast %324 : vector<1x8x1xf32> to vector<8x1xf32>
    %326 = vector.broadcast %325 : vector<8x1xf32> to vector<8x256xf32>
    %327 = vector.broadcast %252 : vector<1x256xf32> to vector<8x256xf32>
    %328 = arith.mulf %326, %327 : vector<8x256xf32>
    %c8_238 = arith.constant 8 : index
    %c0_239 = arith.constant 0 : index
    %c0_240 = arith.constant 0 : index
    %329 = vector.load %arg2[%c8_238, %c0_239, %c0_240] : memref<9x256x256xf32, #tpu.memory_space<vmem>>, vector<1x256x256xf32>
    %330 = vector.shape_cast %329 : vector<1x256x256xf32> to vector<256x256xf32>
    %cst_241 = arith.constant dense<0.000000e+00> : vector<8x256xf32>
    %331 = tpu.matmul %328, %330, %cst_241 {dimension_numbers = #tpu.dot_dimension_numbers<[1], [0], [0], [1], [0, 0, 1, 1], [], []>} : vector<8x256xf32>, vector<256x256xf32>, vector<8x256xf32> -> vector<8x256xf32>
    %332 = arith.addf %323, %331 : vector<8x256xf32>
    %c0_242 = arith.constant 0 : index
    %c2_243 = arith.constant 2 : index
    %c0_244 = arith.constant 0 : index
    %c0_245 = arith.constant 0 : index
    %333 = vector.load %arg1[%c0_242, %c2_243, %c0_244, %c0_245] : memref<1x5x1x256xf32, #tpu.memory_space<vmem>>, vector<1x1x1x256xf32>
    %334 = vector.shape_cast %333 : vector<1x1x1x256xf32> to vector<1x256xf32>
    %c9_246 = arith.constant 9 : index
    %c0_247 = arith.constant 0 : index
    %c0_248 = arith.constant 0 : index
    %335 = vector.load %arg3[%c9_246, %c0_247, %c0_248] : memref<27x8x1xf32, #tpu.memory_space<vmem>>, vector<1x8x1xf32>
    %336 = vector.shape_cast %335 : vector<1x8x1xf32> to vector<8x1xf32>
    %337 = vector.broadcast %336 : vector<8x1xf32> to vector<8x256xf32>
    %338 = vector.broadcast %334 : vector<1x256xf32> to vector<8x256xf32>
    %339 = arith.mulf %337, %338 : vector<8x256xf32>
    %c0_249 = arith.constant 0 : index
    %c0_250 = arith.constant 0 : index
    %c0_251 = arith.constant 0 : index
    %340 = vector.load %arg2[%c0_249, %c0_250, %c0_251] : memref<9x256x256xf32, #tpu.memory_space<vmem>>, vector<1x256x256xf32>
    %341 = vector.shape_cast %340 : vector<1x256x256xf32> to vector<256x256xf32>
    %cst_252 = arith.constant dense<0.000000e+00> : vector<8x256xf32>
    %342 = tpu.matmul %339, %341, %cst_252 {dimension_numbers = #tpu.dot_dimension_numbers<[1], [0], [0], [1], [0, 0, 1, 1], [], []>} : vector<8x256xf32>, vector<256x256xf32>, vector<8x256xf32> -> vector<8x256xf32>
    %343 = arith.addf %332, %342 : vector<8x256xf32>
    %c10_253 = arith.constant 10 : index
    %c0_254 = arith.constant 0 : index
    %c0_255 = arith.constant 0 : index
    %344 = vector.load %arg3[%c10_253, %c0_254, %c0_255] : memref<27x8x1xf32, #tpu.memory_space<vmem>>, vector<1x8x1xf32>
    %345 = vector.shape_cast %344 : vector<1x8x1xf32> to vector<8x1xf32>
    %346 = vector.broadcast %345 : vector<8x1xf32> to vector<8x256xf32>
    %347 = vector.broadcast %334 : vector<1x256xf32> to vector<8x256xf32>
    %348 = arith.mulf %346, %347 : vector<8x256xf32>
    %c1_256 = arith.constant 1 : index
    %c0_257 = arith.constant 0 : index
    %c0_258 = arith.constant 0 : index
    %349 = vector.load %arg2[%c1_256, %c0_257, %c0_258] : memref<9x256x256xf32, #tpu.memory_space<vmem>>, vector<1x256x256xf32>
    %350 = vector.shape_cast %349 : vector<1x256x256xf32> to vector<256x256xf32>
    %cst_259 = arith.constant dense<0.000000e+00> : vector<8x256xf32>
    %351 = tpu.matmul %348, %350, %cst_259 {dimension_numbers = #tpu.dot_dimension_numbers<[1], [0], [0], [1], [0, 0, 1, 1], [], []>} : vector<8x256xf32>, vector<256x256xf32>, vector<8x256xf32> -> vector<8x256xf32>
    %352 = arith.addf %343, %351 : vector<8x256xf32>
    %c11_260 = arith.constant 11 : index
    %c0_261 = arith.constant 0 : index
    %c0_262 = arith.constant 0 : index
    %353 = vector.load %arg3[%c11_260, %c0_261, %c0_262] : memref<27x8x1xf32, #tpu.memory_space<vmem>>, vector<1x8x1xf32>
    %354 = vector.shape_cast %353 : vector<1x8x1xf32> to vector<8x1xf32>
    %355 = vector.broadcast %354 : vector<8x1xf32> to vector<8x256xf32>
    %356 = vector.broadcast %334 : vector<1x256xf32> to vector<8x256xf32>
    %357 = arith.mulf %355, %356 : vector<8x256xf32>
    %c2_263 = arith.constant 2 : index
    %c0_264 = arith.constant 0 : index
    %c0_265 = arith.constant 0 : index
    %358 = vector.load %arg2[%c2_263, %c0_264, %c0_265] : memref<9x256x256xf32, #tpu.memory_space<vmem>>, vector<1x256x256xf32>
    %359 = vector.shape_cast %358 : vector<1x256x256xf32> to vector<256x256xf32>
    %cst_266 = arith.constant dense<0.000000e+00> : vector<8x256xf32>
    %360 = tpu.matmul %357, %359, %cst_266 {dimension_numbers = #tpu.dot_dimension_numbers<[1], [0], [0], [1], [0, 0, 1, 1], [], []>} : vector<8x256xf32>, vector<256x256xf32>, vector<8x256xf32> -> vector<8x256xf32>
    %361 = arith.addf %352, %360 : vector<8x256xf32>
    %c12_267 = arith.constant 12 : index
    %c0_268 = arith.constant 0 : index
    %c0_269 = arith.constant 0 : index
    %362 = vector.load %arg3[%c12_267, %c0_268, %c0_269] : memref<27x8x1xf32, #tpu.memory_space<vmem>>, vector<1x8x1xf32>
    %363 = vector.shape_cast %362 : vector<1x8x1xf32> to vector<8x1xf32>
    %364 = vector.broadcast %363 : vector<8x1xf32> to vector<8x256xf32>
    %365 = vector.broadcast %334 : vector<1x256xf32> to vector<8x256xf32>
    %366 = arith.mulf %364, %365 : vector<8x256xf32>
    %c3_270 = arith.constant 3 : index
    %c0_271 = arith.constant 0 : index
    %c0_272 = arith.constant 0 : index
    %367 = vector.load %arg2[%c3_270, %c0_271, %c0_272] : memref<9x256x256xf32, #tpu.memory_space<vmem>>, vector<1x256x256xf32>
    %368 = vector.shape_cast %367 : vector<1x256x256xf32> to vector<256x256xf32>
    %cst_273 = arith.constant dense<0.000000e+00> : vector<8x256xf32>
    %369 = tpu.matmul %366, %368, %cst_273 {dimension_numbers = #tpu.dot_dimension_numbers<[1], [0], [0], [1], [0, 0, 1, 1], [], []>} : vector<8x256xf32>, vector<256x256xf32>, vector<8x256xf32> -> vector<8x256xf32>
    %370 = arith.addf %361, %369 : vector<8x256xf32>
    %c13_274 = arith.constant 13 : index
    %c0_275 = arith.constant 0 : index
    %c0_276 = arith.constant 0 : index
    %371 = vector.load %arg3[%c13_274, %c0_275, %c0_276] : memref<27x8x1xf32, #tpu.memory_space<vmem>>, vector<1x8x1xf32>
    %372 = vector.shape_cast %371 : vector<1x8x1xf32> to vector<8x1xf32>
    %373 = vector.broadcast %372 : vector<8x1xf32> to vector<8x256xf32>
    %374 = vector.broadcast %334 : vector<1x256xf32> to vector<8x256xf32>
    %375 = arith.mulf %373, %374 : vector<8x256xf32>
    %c4_277 = arith.constant 4 : index
    %c0_278 = arith.constant 0 : index
    %c0_279 = arith.constant 0 : index
    %376 = vector.load %arg2[%c4_277, %c0_278, %c0_279] : memref<9x256x256xf32, #tpu.memory_space<vmem>>, vector<1x256x256xf32>
    %377 = vector.shape_cast %376 : vector<1x256x256xf32> to vector<256x256xf32>
    %cst_280 = arith.constant dense<0.000000e+00> : vector<8x256xf32>
    %378 = tpu.matmul %375, %377, %cst_280 {dimension_numbers = #tpu.dot_dimension_numbers<[1], [0], [0], [1], [0, 0, 1, 1], [], []>} : vector<8x256xf32>, vector<256x256xf32>, vector<8x256xf32> -> vector<8x256xf32>
    %379 = arith.addf %370, %378 : vector<8x256xf32>
    %c14_281 = arith.constant 14 : index
    %c0_282 = arith.constant 0 : index
    %c0_283 = arith.constant 0 : index
    %380 = vector.load %arg3[%c14_281, %c0_282, %c0_283] : memref<27x8x1xf32, #tpu.memory_space<vmem>>, vector<1x8x1xf32>
    %381 = vector.shape_cast %380 : vector<1x8x1xf32> to vector<8x1xf32>
    %382 = vector.broadcast %381 : vector<8x1xf32> to vector<8x256xf32>
    %383 = vector.broadcast %334 : vector<1x256xf32> to vector<8x256xf32>
    %384 = arith.mulf %382, %383 : vector<8x256xf32>
    %c5_284 = arith.constant 5 : index
    %c0_285 = arith.constant 0 : index
    %c0_286 = arith.constant 0 : index
    %385 = vector.load %arg2[%c5_284, %c0_285, %c0_286] : memref<9x256x256xf32, #tpu.memory_space<vmem>>, vector<1x256x256xf32>
    %386 = vector.shape_cast %385 : vector<1x256x256xf32> to vector<256x256xf32>
    %cst_287 = arith.constant dense<0.000000e+00> : vector<8x256xf32>
    %387 = tpu.matmul %384, %386, %cst_287 {dimension_numbers = #tpu.dot_dimension_numbers<[1], [0], [0], [1], [0, 0, 1, 1], [], []>} : vector<8x256xf32>, vector<256x256xf32>, vector<8x256xf32> -> vector<8x256xf32>
    %388 = arith.addf %379, %387 : vector<8x256xf32>
    %c15_288 = arith.constant 15 : index
    %c0_289 = arith.constant 0 : index
    %c0_290 = arith.constant 0 : index
    %389 = vector.load %arg3[%c15_288, %c0_289, %c0_290] : memref<27x8x1xf32, #tpu.memory_space<vmem>>, vector<1x8x1xf32>
    %390 = vector.shape_cast %389 : vector<1x8x1xf32> to vector<8x1xf32>
    %391 = vector.broadcast %390 : vector<8x1xf32> to vector<8x256xf32>
    %392 = vector.broadcast %334 : vector<1x256xf32> to vector<8x256xf32>
    %393 = arith.mulf %391, %392 : vector<8x256xf32>
    %c6_291 = arith.constant 6 : index
    %c0_292 = arith.constant 0 : index
    %c0_293 = arith.constant 0 : index
    %394 = vector.load %arg2[%c6_291, %c0_292, %c0_293] : memref<9x256x256xf32, #tpu.memory_space<vmem>>, vector<1x256x256xf32>
    %395 = vector.shape_cast %394 : vector<1x256x256xf32> to vector<256x256xf32>
    %cst_294 = arith.constant dense<0.000000e+00> : vector<8x256xf32>
    %396 = tpu.matmul %393, %395, %cst_294 {dimension_numbers = #tpu.dot_dimension_numbers<[1], [0], [0], [1], [0, 0, 1, 1], [], []>} : vector<8x256xf32>, vector<256x256xf32>, vector<8x256xf32> -> vector<8x256xf32>
    %397 = arith.addf %388, %396 : vector<8x256xf32>
    %c16_295 = arith.constant 16 : index
    %c0_296 = arith.constant 0 : index
    %c0_297 = arith.constant 0 : index
    %398 = vector.load %arg3[%c16_295, %c0_296, %c0_297] : memref<27x8x1xf32, #tpu.memory_space<vmem>>, vector<1x8x1xf32>
    %399 = vector.shape_cast %398 : vector<1x8x1xf32> to vector<8x1xf32>
    %400 = vector.broadcast %399 : vector<8x1xf32> to vector<8x256xf32>
    %401 = vector.broadcast %334 : vector<1x256xf32> to vector<8x256xf32>
    %402 = arith.mulf %400, %401 : vector<8x256xf32>
    %c7_298 = arith.constant 7 : index
    %c0_299 = arith.constant 0 : index
    %c0_300 = arith.constant 0 : index
    %403 = vector.load %arg2[%c7_298, %c0_299, %c0_300] : memref<9x256x256xf32, #tpu.memory_space<vmem>>, vector<1x256x256xf32>
    %404 = vector.shape_cast %403 : vector<1x256x256xf32> to vector<256x256xf32>
    %cst_301 = arith.constant dense<0.000000e+00> : vector<8x256xf32>
    %405 = tpu.matmul %402, %404, %cst_301 {dimension_numbers = #tpu.dot_dimension_numbers<[1], [0], [0], [1], [0, 0, 1, 1], [], []>} : vector<8x256xf32>, vector<256x256xf32>, vector<8x256xf32> -> vector<8x256xf32>
    %406 = arith.addf %397, %405 : vector<8x256xf32>
    %c17_302 = arith.constant 17 : index
    %c0_303 = arith.constant 0 : index
    %c0_304 = arith.constant 0 : index
    %407 = vector.load %arg3[%c17_302, %c0_303, %c0_304] : memref<27x8x1xf32, #tpu.memory_space<vmem>>, vector<1x8x1xf32>
    %408 = vector.shape_cast %407 : vector<1x8x1xf32> to vector<8x1xf32>
    %409 = vector.broadcast %408 : vector<8x1xf32> to vector<8x256xf32>
    %410 = vector.broadcast %334 : vector<1x256xf32> to vector<8x256xf32>
    %411 = arith.mulf %409, %410 : vector<8x256xf32>
    %c8_305 = arith.constant 8 : index
    %c0_306 = arith.constant 0 : index
    %c0_307 = arith.constant 0 : index
    %412 = vector.load %arg2[%c8_305, %c0_306, %c0_307] : memref<9x256x256xf32, #tpu.memory_space<vmem>>, vector<1x256x256xf32>
    %413 = vector.shape_cast %412 : vector<1x256x256xf32> to vector<256x256xf32>
    %cst_308 = arith.constant dense<0.000000e+00> : vector<8x256xf32>
    %414 = tpu.matmul %411, %413, %cst_308 {dimension_numbers = #tpu.dot_dimension_numbers<[1], [0], [0], [1], [0, 0, 1, 1], [], []>} : vector<8x256xf32>, vector<256x256xf32>, vector<8x256xf32> -> vector<8x256xf32>
    %415 = arith.addf %406, %414 : vector<8x256xf32>
    %c0_309 = arith.constant 0 : index
    %c3_310 = arith.constant 3 : index
    %c0_311 = arith.constant 0 : index
    %c0_312 = arith.constant 0 : index
    %416 = vector.load %arg1[%c0_309, %c3_310, %c0_311, %c0_312] : memref<1x5x1x256xf32, #tpu.memory_space<vmem>>, vector<1x1x1x256xf32>
    %417 = vector.shape_cast %416 : vector<1x1x1x256xf32> to vector<1x256xf32>
    %c18_313 = arith.constant 18 : index
    %c0_314 = arith.constant 0 : index
    %c0_315 = arith.constant 0 : index
    %418 = vector.load %arg3[%c18_313, %c0_314, %c0_315] : memref<27x8x1xf32, #tpu.memory_space<vmem>>, vector<1x8x1xf32>
    %419 = vector.shape_cast %418 : vector<1x8x1xf32> to vector<8x1xf32>
    %420 = vector.broadcast %419 : vector<8x1xf32> to vector<8x256xf32>
    %421 = vector.broadcast %417 : vector<1x256xf32> to vector<8x256xf32>
    %422 = arith.mulf %420, %421 : vector<8x256xf32>
    %c0_316 = arith.constant 0 : index
    %c0_317 = arith.constant 0 : index
    %c0_318 = arith.constant 0 : index
    %423 = vector.load %arg2[%c0_316, %c0_317, %c0_318] : memref<9x256x256xf32, #tpu.memory_space<vmem>>, vector<1x256x256xf32>
    %424 = vector.shape_cast %423 : vector<1x256x256xf32> to vector<256x256xf32>
    %cst_319 = arith.constant dense<0.000000e+00> : vector<8x256xf32>
    %425 = tpu.matmul %422, %424, %cst_319 {dimension_numbers = #tpu.dot_dimension_numbers<[1], [0], [0], [1], [0, 0, 1, 1], [], []>} : vector<8x256xf32>, vector<256x256xf32>, vector<8x256xf32> -> vector<8x256xf32>
    %426 = arith.addf %415, %425 : vector<8x256xf32>
    %c19_320 = arith.constant 19 : index
    %c0_321 = arith.constant 0 : index
    %c0_322 = arith.constant 0 : index
    %427 = vector.load %arg3[%c19_320, %c0_321, %c0_322] : memref<27x8x1xf32, #tpu.memory_space<vmem>>, vector<1x8x1xf32>
    %428 = vector.shape_cast %427 : vector<1x8x1xf32> to vector<8x1xf32>
    %429 = vector.broadcast %428 : vector<8x1xf32> to vector<8x256xf32>
    %430 = vector.broadcast %417 : vector<1x256xf32> to vector<8x256xf32>
    %431 = arith.mulf %429, %430 : vector<8x256xf32>
    %c1_323 = arith.constant 1 : index
    %c0_324 = arith.constant 0 : index
    %c0_325 = arith.constant 0 : index
    %432 = vector.load %arg2[%c1_323, %c0_324, %c0_325] : memref<9x256x256xf32, #tpu.memory_space<vmem>>, vector<1x256x256xf32>
    %433 = vector.shape_cast %432 : vector<1x256x256xf32> to vector<256x256xf32>
    %cst_326 = arith.constant dense<0.000000e+00> : vector<8x256xf32>
    %434 = tpu.matmul %431, %433, %cst_326 {dimension_numbers = #tpu.dot_dimension_numbers<[1], [0], [0], [1], [0, 0, 1, 1], [], []>} : vector<8x256xf32>, vector<256x256xf32>, vector<8x256xf32> -> vector<8x256xf32>
    %435 = arith.addf %426, %434 : vector<8x256xf32>
    %c20_327 = arith.constant 20 : index
    %c0_328 = arith.constant 0 : index
    %c0_329 = arith.constant 0 : index
    %436 = vector.load %arg3[%c20_327, %c0_328, %c0_329] : memref<27x8x1xf32, #tpu.memory_space<vmem>>, vector<1x8x1xf32>
    %437 = vector.shape_cast %436 : vector<1x8x1xf32> to vector<8x1xf32>
    %438 = vector.broadcast %437 : vector<8x1xf32> to vector<8x256xf32>
    %439 = vector.broadcast %417 : vector<1x256xf32> to vector<8x256xf32>
    %440 = arith.mulf %438, %439 : vector<8x256xf32>
    %c2_330 = arith.constant 2 : index
    %c0_331 = arith.constant 0 : index
    %c0_332 = arith.constant 0 : index
    %441 = vector.load %arg2[%c2_330, %c0_331, %c0_332] : memref<9x256x256xf32, #tpu.memory_space<vmem>>, vector<1x256x256xf32>
    %442 = vector.shape_cast %441 : vector<1x256x256xf32> to vector<256x256xf32>
    %cst_333 = arith.constant dense<0.000000e+00> : vector<8x256xf32>
    %443 = tpu.matmul %440, %442, %cst_333 {dimension_numbers = #tpu.dot_dimension_numbers<[1], [0], [0], [1], [0, 0, 1, 1], [], []>} : vector<8x256xf32>, vector<256x256xf32>, vector<8x256xf32> -> vector<8x256xf32>
    %444 = arith.addf %435, %443 : vector<8x256xf32>
    %c21_334 = arith.constant 21 : index
    %c0_335 = arith.constant 0 : index
    %c0_336 = arith.constant 0 : index
    %445 = vector.load %arg3[%c21_334, %c0_335, %c0_336] : memref<27x8x1xf32, #tpu.memory_space<vmem>>, vector<1x8x1xf32>
    %446 = vector.shape_cast %445 : vector<1x8x1xf32> to vector<8x1xf32>
    %447 = vector.broadcast %446 : vector<8x1xf32> to vector<8x256xf32>
    %448 = vector.broadcast %417 : vector<1x256xf32> to vector<8x256xf32>
    %449 = arith.mulf %447, %448 : vector<8x256xf32>
    %c3_337 = arith.constant 3 : index
    %c0_338 = arith.constant 0 : index
    %c0_339 = arith.constant 0 : index
    %450 = vector.load %arg2[%c3_337, %c0_338, %c0_339] : memref<9x256x256xf32, #tpu.memory_space<vmem>>, vector<1x256x256xf32>
    %451 = vector.shape_cast %450 : vector<1x256x256xf32> to vector<256x256xf32>
    %cst_340 = arith.constant dense<0.000000e+00> : vector<8x256xf32>
    %452 = tpu.matmul %449, %451, %cst_340 {dimension_numbers = #tpu.dot_dimension_numbers<[1], [0], [0], [1], [0, 0, 1, 1], [], []>} : vector<8x256xf32>, vector<256x256xf32>, vector<8x256xf32> -> vector<8x256xf32>
    %453 = arith.addf %444, %452 : vector<8x256xf32>
    %c22_341 = arith.constant 22 : index
    %c0_342 = arith.constant 0 : index
    %c0_343 = arith.constant 0 : index
    %454 = vector.load %arg3[%c22_341, %c0_342, %c0_343] : memref<27x8x1xf32, #tpu.memory_space<vmem>>, vector<1x8x1xf32>
    %455 = vector.shape_cast %454 : vector<1x8x1xf32> to vector<8x1xf32>
    %456 = vector.broadcast %455 : vector<8x1xf32> to vector<8x256xf32>
    %457 = vector.broadcast %417 : vector<1x256xf32> to vector<8x256xf32>
    %458 = arith.mulf %456, %457 : vector<8x256xf32>
    %c4_344 = arith.constant 4 : index
    %c0_345 = arith.constant 0 : index
    %c0_346 = arith.constant 0 : index
    %459 = vector.load %arg2[%c4_344, %c0_345, %c0_346] : memref<9x256x256xf32, #tpu.memory_space<vmem>>, vector<1x256x256xf32>
    %460 = vector.shape_cast %459 : vector<1x256x256xf32> to vector<256x256xf32>
    %cst_347 = arith.constant dense<0.000000e+00> : vector<8x256xf32>
    %461 = tpu.matmul %458, %460, %cst_347 {dimension_numbers = #tpu.dot_dimension_numbers<[1], [0], [0], [1], [0, 0, 1, 1], [], []>} : vector<8x256xf32>, vector<256x256xf32>, vector<8x256xf32> -> vector<8x256xf32>
    %462 = arith.addf %453, %461 : vector<8x256xf32>
    %c23_348 = arith.constant 23 : index
    %c0_349 = arith.constant 0 : index
    %c0_350 = arith.constant 0 : index
    %463 = vector.load %arg3[%c23_348, %c0_349, %c0_350] : memref<27x8x1xf32, #tpu.memory_space<vmem>>, vector<1x8x1xf32>
    %464 = vector.shape_cast %463 : vector<1x8x1xf32> to vector<8x1xf32>
    %465 = vector.broadcast %464 : vector<8x1xf32> to vector<8x256xf32>
    %466 = vector.broadcast %417 : vector<1x256xf32> to vector<8x256xf32>
    %467 = arith.mulf %465, %466 : vector<8x256xf32>
    %c5_351 = arith.constant 5 : index
    %c0_352 = arith.constant 0 : index
    %c0_353 = arith.constant 0 : index
    %468 = vector.load %arg2[%c5_351, %c0_352, %c0_353] : memref<9x256x256xf32, #tpu.memory_space<vmem>>, vector<1x256x256xf32>
    %469 = vector.shape_cast %468 : vector<1x256x256xf32> to vector<256x256xf32>
    %cst_354 = arith.constant dense<0.000000e+00> : vector<8x256xf32>
    %470 = tpu.matmul %467, %469, %cst_354 {dimension_numbers = #tpu.dot_dimension_numbers<[1], [0], [0], [1], [0, 0, 1, 1], [], []>} : vector<8x256xf32>, vector<256x256xf32>, vector<8x256xf32> -> vector<8x256xf32>
    %471 = arith.addf %462, %470 : vector<8x256xf32>
    %c24_355 = arith.constant 24 : index
    %c0_356 = arith.constant 0 : index
    %c0_357 = arith.constant 0 : index
    %472 = vector.load %arg3[%c24_355, %c0_356, %c0_357] : memref<27x8x1xf32, #tpu.memory_space<vmem>>, vector<1x8x1xf32>
    %473 = vector.shape_cast %472 : vector<1x8x1xf32> to vector<8x1xf32>
    %474 = vector.broadcast %473 : vector<8x1xf32> to vector<8x256xf32>
    %475 = vector.broadcast %417 : vector<1x256xf32> to vector<8x256xf32>
    %476 = arith.mulf %474, %475 : vector<8x256xf32>
    %c6_358 = arith.constant 6 : index
    %c0_359 = arith.constant 0 : index
    %c0_360 = arith.constant 0 : index
    %477 = vector.load %arg2[%c6_358, %c0_359, %c0_360] : memref<9x256x256xf32, #tpu.memory_space<vmem>>, vector<1x256x256xf32>
    %478 = vector.shape_cast %477 : vector<1x256x256xf32> to vector<256x256xf32>
    %cst_361 = arith.constant dense<0.000000e+00> : vector<8x256xf32>
    %479 = tpu.matmul %476, %478, %cst_361 {dimension_numbers = #tpu.dot_dimension_numbers<[1], [0], [0], [1], [0, 0, 1, 1], [], []>} : vector<8x256xf32>, vector<256x256xf32>, vector<8x256xf32> -> vector<8x256xf32>
    %480 = arith.addf %471, %479 : vector<8x256xf32>
    %c25_362 = arith.constant 25 : index
    %c0_363 = arith.constant 0 : index
    %c0_364 = arith.constant 0 : index
    %481 = vector.load %arg3[%c25_362, %c0_363, %c0_364] : memref<27x8x1xf32, #tpu.memory_space<vmem>>, vector<1x8x1xf32>
    %482 = vector.shape_cast %481 : vector<1x8x1xf32> to vector<8x1xf32>
    %483 = vector.broadcast %482 : vector<8x1xf32> to vector<8x256xf32>
    %484 = vector.broadcast %417 : vector<1x256xf32> to vector<8x256xf32>
    %485 = arith.mulf %483, %484 : vector<8x256xf32>
    %c7_365 = arith.constant 7 : index
    %c0_366 = arith.constant 0 : index
    %c0_367 = arith.constant 0 : index
    %486 = vector.load %arg2[%c7_365, %c0_366, %c0_367] : memref<9x256x256xf32, #tpu.memory_space<vmem>>, vector<1x256x256xf32>
    %487 = vector.shape_cast %486 : vector<1x256x256xf32> to vector<256x256xf32>
    %cst_368 = arith.constant dense<0.000000e+00> : vector<8x256xf32>
    %488 = tpu.matmul %485, %487, %cst_368 {dimension_numbers = #tpu.dot_dimension_numbers<[1], [0], [0], [1], [0, 0, 1, 1], [], []>} : vector<8x256xf32>, vector<256x256xf32>, vector<8x256xf32> -> vector<8x256xf32>
    %489 = arith.addf %480, %488 : vector<8x256xf32>
    %c26_369 = arith.constant 26 : index
    %c0_370 = arith.constant 0 : index
    %c0_371 = arith.constant 0 : index
    %490 = vector.load %arg3[%c26_369, %c0_370, %c0_371] : memref<27x8x1xf32, #tpu.memory_space<vmem>>, vector<1x8x1xf32>
    %491 = vector.shape_cast %490 : vector<1x8x1xf32> to vector<8x1xf32>
    %492 = vector.broadcast %491 : vector<8x1xf32> to vector<8x256xf32>
    %493 = vector.broadcast %417 : vector<1x256xf32> to vector<8x256xf32>
    %494 = arith.mulf %492, %493 : vector<8x256xf32>
    %c8_372 = arith.constant 8 : index
    %c0_373 = arith.constant 0 : index
    %c0_374 = arith.constant 0 : index
    %495 = vector.load %arg2[%c8_372, %c0_373, %c0_374] : memref<9x256x256xf32, #tpu.memory_space<vmem>>, vector<1x256x256xf32>
    %496 = vector.shape_cast %495 : vector<1x256x256xf32> to vector<256x256xf32>
    %cst_375 = arith.constant dense<0.000000e+00> : vector<8x256xf32>
    %497 = tpu.matmul %494, %496, %cst_375 {dimension_numbers = #tpu.dot_dimension_numbers<[1], [0], [0], [1], [0, 0, 1, 1], [], []>} : vector<8x256xf32>, vector<256x256xf32>, vector<8x256xf32> -> vector<8x256xf32>
    %498 = arith.addf %489, %497 : vector<8x256xf32>
    %499 = vector.broadcast %0 : vector<8x1xf32> to vector<8x256xf32>
    %500 = arith.addf %498, %499 : vector<8x256xf32>
    %c0_376 = arith.constant 0 : index
    %c2_377 = arith.constant 2 : index
    %c0_378 = arith.constant 0 : index
    %c0_379 = arith.constant 0 : index
    %501 = vector.load %arg1[%c0_376, %c2_377, %c0_378, %c0_379] : memref<1x5x1x256xf32, #tpu.memory_space<vmem>>, vector<1x1x1x256xf32>
    %502 = vector.shape_cast %501 : vector<1x1x1x256xf32> to vector<1x256xf32>
    %c0_380 = arith.constant 0 : index
    %c0_381 = arith.constant 0 : index
    %c0_382 = arith.constant 0 : index
    %503 = vector.load %arg3[%c0_380, %c0_381, %c0_382] : memref<27x8x1xf32, #tpu.memory_space<vmem>>, vector<1x8x1xf32>
    %504 = vector.shape_cast %503 : vector<1x8x1xf32> to vector<8x1xf32>
    %505 = vector.broadcast %504 : vector<8x1xf32> to vector<8x256xf32>
    %506 = vector.broadcast %502 : vector<1x256xf32> to vector<8x256xf32>
    %507 = arith.mulf %505, %506 : vector<8x256xf32>
    %c0_383 = arith.constant 0 : index
    %c0_384 = arith.constant 0 : index
    %c0_385 = arith.constant 0 : index
    %508 = vector.load %arg2[%c0_383, %c0_384, %c0_385] : memref<9x256x256xf32, #tpu.memory_space<vmem>>, vector<1x256x256xf32>
    %509 = vector.shape_cast %508 : vector<1x256x256xf32> to vector<256x256xf32>
    %cst_386 = arith.constant dense<0.000000e+00> : vector<8x256xf32>
    %510 = tpu.matmul %507, %509, %cst_386 {dimension_numbers = #tpu.dot_dimension_numbers<[1], [0], [0], [1], [0, 0, 1, 1], [], []>} : vector<8x256xf32>, vector<256x256xf32>, vector<8x256xf32> -> vector<8x256xf32>
    %c1_387 = arith.constant 1 : index
    %c0_388 = arith.constant 0 : index
    %c0_389 = arith.constant 0 : index
    %511 = vector.load %arg3[%c1_387, %c0_388, %c0_389] : memref<27x8x1xf32, #tpu.memory_space<vmem>>, vector<1x8x1xf32>
    %512 = vector.shape_cast %511 : vector<1x8x1xf32> to vector<8x1xf32>
    %513 = vector.broadcast %512 : vector<8x1xf32> to vector<8x256xf32>
    %514 = vector.broadcast %502 : vector<1x256xf32> to vector<8x256xf32>
    %515 = arith.mulf %513, %514 : vector<8x256xf32>
    %c1_390 = arith.constant 1 : index
    %c0_391 = arith.constant 0 : index
    %c0_392 = arith.constant 0 : index
    %516 = vector.load %arg2[%c1_390, %c0_391, %c0_392] : memref<9x256x256xf32, #tpu.memory_space<vmem>>, vector<1x256x256xf32>
    %517 = vector.shape_cast %516 : vector<1x256x256xf32> to vector<256x256xf32>
    %cst_393 = arith.constant dense<0.000000e+00> : vector<8x256xf32>
    %518 = tpu.matmul %515, %517, %cst_393 {dimension_numbers = #tpu.dot_dimension_numbers<[1], [0], [0], [1], [0, 0, 1, 1], [], []>} : vector<8x256xf32>, vector<256x256xf32>, vector<8x256xf32> -> vector<8x256xf32>
    %519 = arith.addf %510, %518 : vector<8x256xf32>
    %c2_394 = arith.constant 2 : index
    %c0_395 = arith.constant 0 : index
    %c0_396 = arith.constant 0 : index
    %520 = vector.load %arg3[%c2_394, %c0_395, %c0_396] : memref<27x8x1xf32, #tpu.memory_space<vmem>>, vector<1x8x1xf32>
    %521 = vector.shape_cast %520 : vector<1x8x1xf32> to vector<8x1xf32>
    %522 = vector.broadcast %521 : vector<8x1xf32> to vector<8x256xf32>
    %523 = vector.broadcast %502 : vector<1x256xf32> to vector<8x256xf32>
    %524 = arith.mulf %522, %523 : vector<8x256xf32>
    %c2_397 = arith.constant 2 : index
    %c0_398 = arith.constant 0 : index
    %c0_399 = arith.constant 0 : index
    %525 = vector.load %arg2[%c2_397, %c0_398, %c0_399] : memref<9x256x256xf32, #tpu.memory_space<vmem>>, vector<1x256x256xf32>
    %526 = vector.shape_cast %525 : vector<1x256x256xf32> to vector<256x256xf32>
    %cst_400 = arith.constant dense<0.000000e+00> : vector<8x256xf32>
    %527 = tpu.matmul %524, %526, %cst_400 {dimension_numbers = #tpu.dot_dimension_numbers<[1], [0], [0], [1], [0, 0, 1, 1], [], []>} : vector<8x256xf32>, vector<256x256xf32>, vector<8x256xf32> -> vector<8x256xf32>
    %528 = arith.addf %519, %527 : vector<8x256xf32>
    %c3_401 = arith.constant 3 : index
    %c0_402 = arith.constant 0 : index
    %c0_403 = arith.constant 0 : index
    %529 = vector.load %arg3[%c3_401, %c0_402, %c0_403] : memref<27x8x1xf32, #tpu.memory_space<vmem>>, vector<1x8x1xf32>
    %530 = vector.shape_cast %529 : vector<1x8x1xf32> to vector<8x1xf32>
    %531 = vector.broadcast %530 : vector<8x1xf32> to vector<8x256xf32>
    %532 = vector.broadcast %502 : vector<1x256xf32> to vector<8x256xf32>
    %533 = arith.mulf %531, %532 : vector<8x256xf32>
    %c3_404 = arith.constant 3 : index
    %c0_405 = arith.constant 0 : index
    %c0_406 = arith.constant 0 : index
    %534 = vector.load %arg2[%c3_404, %c0_405, %c0_406] : memref<9x256x256xf32, #tpu.memory_space<vmem>>, vector<1x256x256xf32>
    %535 = vector.shape_cast %534 : vector<1x256x256xf32> to vector<256x256xf32>
    %cst_407 = arith.constant dense<0.000000e+00> : vector<8x256xf32>
    %536 = tpu.matmul %533, %535, %cst_407 {dimension_numbers = #tpu.dot_dimension_numbers<[1], [0], [0], [1], [0, 0, 1, 1], [], []>} : vector<8x256xf32>, vector<256x256xf32>, vector<8x256xf32> -> vector<8x256xf32>
    %537 = arith.addf %528, %536 : vector<8x256xf32>
    %c4_408 = arith.constant 4 : index
    %c0_409 = arith.constant 0 : index
    %c0_410 = arith.constant 0 : index
    %538 = vector.load %arg3[%c4_408, %c0_409, %c0_410] : memref<27x8x1xf32, #tpu.memory_space<vmem>>, vector<1x8x1xf32>
    %539 = vector.shape_cast %538 : vector<1x8x1xf32> to vector<8x1xf32>
    %540 = vector.broadcast %539 : vector<8x1xf32> to vector<8x256xf32>
    %541 = vector.broadcast %502 : vector<1x256xf32> to vector<8x256xf32>
    %542 = arith.mulf %540, %541 : vector<8x256xf32>
    %c4_411 = arith.constant 4 : index
    %c0_412 = arith.constant 0 : index
    %c0_413 = arith.constant 0 : index
    %543 = vector.load %arg2[%c4_411, %c0_412, %c0_413] : memref<9x256x256xf32, #tpu.memory_space<vmem>>, vector<1x256x256xf32>
    %544 = vector.shape_cast %543 : vector<1x256x256xf32> to vector<256x256xf32>
    %cst_414 = arith.constant dense<0.000000e+00> : vector<8x256xf32>
    %545 = tpu.matmul %542, %544, %cst_414 {dimension_numbers = #tpu.dot_dimension_numbers<[1], [0], [0], [1], [0, 0, 1, 1], [], []>} : vector<8x256xf32>, vector<256x256xf32>, vector<8x256xf32> -> vector<8x256xf32>
    %546 = arith.addf %537, %545 : vector<8x256xf32>
    %c5_415 = arith.constant 5 : index
    %c0_416 = arith.constant 0 : index
    %c0_417 = arith.constant 0 : index
    %547 = vector.load %arg3[%c5_415, %c0_416, %c0_417] : memref<27x8x1xf32, #tpu.memory_space<vmem>>, vector<1x8x1xf32>
    %548 = vector.shape_cast %547 : vector<1x8x1xf32> to vector<8x1xf32>
    %549 = vector.broadcast %548 : vector<8x1xf32> to vector<8x256xf32>
    %550 = vector.broadcast %502 : vector<1x256xf32> to vector<8x256xf32>
    %551 = arith.mulf %549, %550 : vector<8x256xf32>
    %c5_418 = arith.constant 5 : index
    %c0_419 = arith.constant 0 : index
    %c0_420 = arith.constant 0 : index
    %552 = vector.load %arg2[%c5_418, %c0_419, %c0_420] : memref<9x256x256xf32, #tpu.memory_space<vmem>>, vector<1x256x256xf32>
    %553 = vector.shape_cast %552 : vector<1x256x256xf32> to vector<256x256xf32>
    %cst_421 = arith.constant dense<0.000000e+00> : vector<8x256xf32>
    %554 = tpu.matmul %551, %553, %cst_421 {dimension_numbers = #tpu.dot_dimension_numbers<[1], [0], [0], [1], [0, 0, 1, 1], [], []>} : vector<8x256xf32>, vector<256x256xf32>, vector<8x256xf32> -> vector<8x256xf32>
    %555 = arith.addf %546, %554 : vector<8x256xf32>
    %c6_422 = arith.constant 6 : index
    %c0_423 = arith.constant 0 : index
    %c0_424 = arith.constant 0 : index
    %556 = vector.load %arg3[%c6_422, %c0_423, %c0_424] : memref<27x8x1xf32, #tpu.memory_space<vmem>>, vector<1x8x1xf32>
    %557 = vector.shape_cast %556 : vector<1x8x1xf32> to vector<8x1xf32>
    %558 = vector.broadcast %557 : vector<8x1xf32> to vector<8x256xf32>
    %559 = vector.broadcast %502 : vector<1x256xf32> to vector<8x256xf32>
    %560 = arith.mulf %558, %559 : vector<8x256xf32>
    %c6_425 = arith.constant 6 : index
    %c0_426 = arith.constant 0 : index
    %c0_427 = arith.constant 0 : index
    %561 = vector.load %arg2[%c6_425, %c0_426, %c0_427] : memref<9x256x256xf32, #tpu.memory_space<vmem>>, vector<1x256x256xf32>
    %562 = vector.shape_cast %561 : vector<1x256x256xf32> to vector<256x256xf32>
    %cst_428 = arith.constant dense<0.000000e+00> : vector<8x256xf32>
    %563 = tpu.matmul %560, %562, %cst_428 {dimension_numbers = #tpu.dot_dimension_numbers<[1], [0], [0], [1], [0, 0, 1, 1], [], []>} : vector<8x256xf32>, vector<256x256xf32>, vector<8x256xf32> -> vector<8x256xf32>
    %564 = arith.addf %555, %563 : vector<8x256xf32>
    %c7_429 = arith.constant 7 : index
    %c0_430 = arith.constant 0 : index
    %c0_431 = arith.constant 0 : index
    %565 = vector.load %arg3[%c7_429, %c0_430, %c0_431] : memref<27x8x1xf32, #tpu.memory_space<vmem>>, vector<1x8x1xf32>
    %566 = vector.shape_cast %565 : vector<1x8x1xf32> to vector<8x1xf32>
    %567 = vector.broadcast %566 : vector<8x1xf32> to vector<8x256xf32>
    %568 = vector.broadcast %502 : vector<1x256xf32> to vector<8x256xf32>
    %569 = arith.mulf %567, %568 : vector<8x256xf32>
    %c7_432 = arith.constant 7 : index
    %c0_433 = arith.constant 0 : index
    %c0_434 = arith.constant 0 : index
    %570 = vector.load %arg2[%c7_432, %c0_433, %c0_434] : memref<9x256x256xf32, #tpu.memory_space<vmem>>, vector<1x256x256xf32>
    %571 = vector.shape_cast %570 : vector<1x256x256xf32> to vector<256x256xf32>
    %cst_435 = arith.constant dense<0.000000e+00> : vector<8x256xf32>
    %572 = tpu.matmul %569, %571, %cst_435 {dimension_numbers = #tpu.dot_dimension_numbers<[1], [0], [0], [1], [0, 0, 1, 1], [], []>} : vector<8x256xf32>, vector<256x256xf32>, vector<8x256xf32> -> vector<8x256xf32>
    %573 = arith.addf %564, %572 : vector<8x256xf32>
    %c8_436 = arith.constant 8 : index
    %c0_437 = arith.constant 0 : index
    %c0_438 = arith.constant 0 : index
    %574 = vector.load %arg3[%c8_436, %c0_437, %c0_438] : memref<27x8x1xf32, #tpu.memory_space<vmem>>, vector<1x8x1xf32>
    %575 = vector.shape_cast %574 : vector<1x8x1xf32> to vector<8x1xf32>
    %576 = vector.broadcast %575 : vector<8x1xf32> to vector<8x256xf32>
    %577 = vector.broadcast %502 : vector<1x256xf32> to vector<8x256xf32>
    %578 = arith.mulf %576, %577 : vector<8x256xf32>
    %c8_439 = arith.constant 8 : index
    %c0_440 = arith.constant 0 : index
    %c0_441 = arith.constant 0 : index
    %579 = vector.load %arg2[%c8_439, %c0_440, %c0_441] : memref<9x256x256xf32, #tpu.memory_space<vmem>>, vector<1x256x256xf32>
    %580 = vector.shape_cast %579 : vector<1x256x256xf32> to vector<256x256xf32>
    %cst_442 = arith.constant dense<0.000000e+00> : vector<8x256xf32>
    %581 = tpu.matmul %578, %580, %cst_442 {dimension_numbers = #tpu.dot_dimension_numbers<[1], [0], [0], [1], [0, 0, 1, 1], [], []>} : vector<8x256xf32>, vector<256x256xf32>, vector<8x256xf32> -> vector<8x256xf32>
    %582 = arith.addf %573, %581 : vector<8x256xf32>
    %c0_443 = arith.constant 0 : index
    %c3_444 = arith.constant 3 : index
    %c0_445 = arith.constant 0 : index
    %c0_446 = arith.constant 0 : index
    %583 = vector.load %arg1[%c0_443, %c3_444, %c0_445, %c0_446] : memref<1x5x1x256xf32, #tpu.memory_space<vmem>>, vector<1x1x1x256xf32>
    %584 = vector.shape_cast %583 : vector<1x1x1x256xf32> to vector<1x256xf32>
    %c9_447 = arith.constant 9 : index
    %c0_448 = arith.constant 0 : index
    %c0_449 = arith.constant 0 : index
    %585 = vector.load %arg3[%c9_447, %c0_448, %c0_449] : memref<27x8x1xf32, #tpu.memory_space<vmem>>, vector<1x8x1xf32>
    %586 = vector.shape_cast %585 : vector<1x8x1xf32> to vector<8x1xf32>
    %587 = vector.broadcast %586 : vector<8x1xf32> to vector<8x256xf32>
    %588 = vector.broadcast %584 : vector<1x256xf32> to vector<8x256xf32>
    %589 = arith.mulf %587, %588 : vector<8x256xf32>
    %c0_450 = arith.constant 0 : index
    %c0_451 = arith.constant 0 : index
    %c0_452 = arith.constant 0 : index
    %590 = vector.load %arg2[%c0_450, %c0_451, %c0_452] : memref<9x256x256xf32, #tpu.memory_space<vmem>>, vector<1x256x256xf32>
    %591 = vector.shape_cast %590 : vector<1x256x256xf32> to vector<256x256xf32>
    %cst_453 = arith.constant dense<0.000000e+00> : vector<8x256xf32>
    %592 = tpu.matmul %589, %591, %cst_453 {dimension_numbers = #tpu.dot_dimension_numbers<[1], [0], [0], [1], [0, 0, 1, 1], [], []>} : vector<8x256xf32>, vector<256x256xf32>, vector<8x256xf32> -> vector<8x256xf32>
    %593 = arith.addf %582, %592 : vector<8x256xf32>
    %c10_454 = arith.constant 10 : index
    %c0_455 = arith.constant 0 : index
    %c0_456 = arith.constant 0 : index
    %594 = vector.load %arg3[%c10_454, %c0_455, %c0_456] : memref<27x8x1xf32, #tpu.memory_space<vmem>>, vector<1x8x1xf32>
    %595 = vector.shape_cast %594 : vector<1x8x1xf32> to vector<8x1xf32>
    %596 = vector.broadcast %595 : vector<8x1xf32> to vector<8x256xf32>
    %597 = vector.broadcast %584 : vector<1x256xf32> to vector<8x256xf32>
    %598 = arith.mulf %596, %597 : vector<8x256xf32>
    %c1_457 = arith.constant 1 : index
    %c0_458 = arith.constant 0 : index
    %c0_459 = arith.constant 0 : index
    %599 = vector.load %arg2[%c1_457, %c0_458, %c0_459] : memref<9x256x256xf32, #tpu.memory_space<vmem>>, vector<1x256x256xf32>
    %600 = vector.shape_cast %599 : vector<1x256x256xf32> to vector<256x256xf32>
    %cst_460 = arith.constant dense<0.000000e+00> : vector<8x256xf32>
    %601 = tpu.matmul %598, %600, %cst_460 {dimension_numbers = #tpu.dot_dimension_numbers<[1], [0], [0], [1], [0, 0, 1, 1], [], []>} : vector<8x256xf32>, vector<256x256xf32>, vector<8x256xf32> -> vector<8x256xf32>
    %602 = arith.addf %593, %601 : vector<8x256xf32>
    %c11_461 = arith.constant 11 : index
    %c0_462 = arith.constant 0 : index
    %c0_463 = arith.constant 0 : index
    %603 = vector.load %arg3[%c11_461, %c0_462, %c0_463] : memref<27x8x1xf32, #tpu.memory_space<vmem>>, vector<1x8x1xf32>
    %604 = vector.shape_cast %603 : vector<1x8x1xf32> to vector<8x1xf32>
    %605 = vector.broadcast %604 : vector<8x1xf32> to vector<8x256xf32>
    %606 = vector.broadcast %584 : vector<1x256xf32> to vector<8x256xf32>
    %607 = arith.mulf %605, %606 : vector<8x256xf32>
    %c2_464 = arith.constant 2 : index
    %c0_465 = arith.constant 0 : index
    %c0_466 = arith.constant 0 : index
    %608 = vector.load %arg2[%c2_464, %c0_465, %c0_466] : memref<9x256x256xf32, #tpu.memory_space<vmem>>, vector<1x256x256xf32>
    %609 = vector.shape_cast %608 : vector<1x256x256xf32> to vector<256x256xf32>
    %cst_467 = arith.constant dense<0.000000e+00> : vector<8x256xf32>
    %610 = tpu.matmul %607, %609, %cst_467 {dimension_numbers = #tpu.dot_dimension_numbers<[1], [0], [0], [1], [0, 0, 1, 1], [], []>} : vector<8x256xf32>, vector<256x256xf32>, vector<8x256xf32> -> vector<8x256xf32>
    %611 = arith.addf %602, %610 : vector<8x256xf32>
    %c12_468 = arith.constant 12 : index
    %c0_469 = arith.constant 0 : index
    %c0_470 = arith.constant 0 : index
    %612 = vector.load %arg3[%c12_468, %c0_469, %c0_470] : memref<27x8x1xf32, #tpu.memory_space<vmem>>, vector<1x8x1xf32>
    %613 = vector.shape_cast %612 : vector<1x8x1xf32> to vector<8x1xf32>
    %614 = vector.broadcast %613 : vector<8x1xf32> to vector<8x256xf32>
    %615 = vector.broadcast %584 : vector<1x256xf32> to vector<8x256xf32>
    %616 = arith.mulf %614, %615 : vector<8x256xf32>
    %c3_471 = arith.constant 3 : index
    %c0_472 = arith.constant 0 : index
    %c0_473 = arith.constant 0 : index
    %617 = vector.load %arg2[%c3_471, %c0_472, %c0_473] : memref<9x256x256xf32, #tpu.memory_space<vmem>>, vector<1x256x256xf32>
    %618 = vector.shape_cast %617 : vector<1x256x256xf32> to vector<256x256xf32>
    %cst_474 = arith.constant dense<0.000000e+00> : vector<8x256xf32>
    %619 = tpu.matmul %616, %618, %cst_474 {dimension_numbers = #tpu.dot_dimension_numbers<[1], [0], [0], [1], [0, 0, 1, 1], [], []>} : vector<8x256xf32>, vector<256x256xf32>, vector<8x256xf32> -> vector<8x256xf32>
    %620 = arith.addf %611, %619 : vector<8x256xf32>
    %c13_475 = arith.constant 13 : index
    %c0_476 = arith.constant 0 : index
    %c0_477 = arith.constant 0 : index
    %621 = vector.load %arg3[%c13_475, %c0_476, %c0_477] : memref<27x8x1xf32, #tpu.memory_space<vmem>>, vector<1x8x1xf32>
    %622 = vector.shape_cast %621 : vector<1x8x1xf32> to vector<8x1xf32>
    %623 = vector.broadcast %622 : vector<8x1xf32> to vector<8x256xf32>
    %624 = vector.broadcast %584 : vector<1x256xf32> to vector<8x256xf32>
    %625 = arith.mulf %623, %624 : vector<8x256xf32>
    %c4_478 = arith.constant 4 : index
    %c0_479 = arith.constant 0 : index
    %c0_480 = arith.constant 0 : index
    %626 = vector.load %arg2[%c4_478, %c0_479, %c0_480] : memref<9x256x256xf32, #tpu.memory_space<vmem>>, vector<1x256x256xf32>
    %627 = vector.shape_cast %626 : vector<1x256x256xf32> to vector<256x256xf32>
    %cst_481 = arith.constant dense<0.000000e+00> : vector<8x256xf32>
    %628 = tpu.matmul %625, %627, %cst_481 {dimension_numbers = #tpu.dot_dimension_numbers<[1], [0], [0], [1], [0, 0, 1, 1], [], []>} : vector<8x256xf32>, vector<256x256xf32>, vector<8x256xf32> -> vector<8x256xf32>
    %629 = arith.addf %620, %628 : vector<8x256xf32>
    %c14_482 = arith.constant 14 : index
    %c0_483 = arith.constant 0 : index
    %c0_484 = arith.constant 0 : index
    %630 = vector.load %arg3[%c14_482, %c0_483, %c0_484] : memref<27x8x1xf32, #tpu.memory_space<vmem>>, vector<1x8x1xf32>
    %631 = vector.shape_cast %630 : vector<1x8x1xf32> to vector<8x1xf32>
    %632 = vector.broadcast %631 : vector<8x1xf32> to vector<8x256xf32>
    %633 = vector.broadcast %584 : vector<1x256xf32> to vector<8x256xf32>
    %634 = arith.mulf %632, %633 : vector<8x256xf32>
    %c5_485 = arith.constant 5 : index
    %c0_486 = arith.constant 0 : index
    %c0_487 = arith.constant 0 : index
    %635 = vector.load %arg2[%c5_485, %c0_486, %c0_487] : memref<9x256x256xf32, #tpu.memory_space<vmem>>, vector<1x256x256xf32>
    %636 = vector.shape_cast %635 : vector<1x256x256xf32> to vector<256x256xf32>
    %cst_488 = arith.constant dense<0.000000e+00> : vector<8x256xf32>
    %637 = tpu.matmul %634, %636, %cst_488 {dimension_numbers = #tpu.dot_dimension_numbers<[1], [0], [0], [1], [0, 0, 1, 1], [], []>} : vector<8x256xf32>, vector<256x256xf32>, vector<8x256xf32> -> vector<8x256xf32>
    %638 = arith.addf %629, %637 : vector<8x256xf32>
    %c15_489 = arith.constant 15 : index
    %c0_490 = arith.constant 0 : index
    %c0_491 = arith.constant 0 : index
    %639 = vector.load %arg3[%c15_489, %c0_490, %c0_491] : memref<27x8x1xf32, #tpu.memory_space<vmem>>, vector<1x8x1xf32>
    %640 = vector.shape_cast %639 : vector<1x8x1xf32> to vector<8x1xf32>
    %641 = vector.broadcast %640 : vector<8x1xf32> to vector<8x256xf32>
    %642 = vector.broadcast %584 : vector<1x256xf32> to vector<8x256xf32>
    %643 = arith.mulf %641, %642 : vector<8x256xf32>
    %c6_492 = arith.constant 6 : index
    %c0_493 = arith.constant 0 : index
    %c0_494 = arith.constant 0 : index
    %644 = vector.load %arg2[%c6_492, %c0_493, %c0_494] : memref<9x256x256xf32, #tpu.memory_space<vmem>>, vector<1x256x256xf32>
    %645 = vector.shape_cast %644 : vector<1x256x256xf32> to vector<256x256xf32>
    %cst_495 = arith.constant dense<0.000000e+00> : vector<8x256xf32>
    %646 = tpu.matmul %643, %645, %cst_495 {dimension_numbers = #tpu.dot_dimension_numbers<[1], [0], [0], [1], [0, 0, 1, 1], [], []>} : vector<8x256xf32>, vector<256x256xf32>, vector<8x256xf32> -> vector<8x256xf32>
    %647 = arith.addf %638, %646 : vector<8x256xf32>
    %c16_496 = arith.constant 16 : index
    %c0_497 = arith.constant 0 : index
    %c0_498 = arith.constant 0 : index
    %648 = vector.load %arg3[%c16_496, %c0_497, %c0_498] : memref<27x8x1xf32, #tpu.memory_space<vmem>>, vector<1x8x1xf32>
    %649 = vector.shape_cast %648 : vector<1x8x1xf32> to vector<8x1xf32>
    %650 = vector.broadcast %649 : vector<8x1xf32> to vector<8x256xf32>
    %651 = vector.broadcast %584 : vector<1x256xf32> to vector<8x256xf32>
    %652 = arith.mulf %650, %651 : vector<8x256xf32>
    %c7_499 = arith.constant 7 : index
    %c0_500 = arith.constant 0 : index
    %c0_501 = arith.constant 0 : index
    %653 = vector.load %arg2[%c7_499, %c0_500, %c0_501] : memref<9x256x256xf32, #tpu.memory_space<vmem>>, vector<1x256x256xf32>
    %654 = vector.shape_cast %653 : vector<1x256x256xf32> to vector<256x256xf32>
    %cst_502 = arith.constant dense<0.000000e+00> : vector<8x256xf32>
    %655 = tpu.matmul %652, %654, %cst_502 {dimension_numbers = #tpu.dot_dimension_numbers<[1], [0], [0], [1], [0, 0, 1, 1], [], []>} : vector<8x256xf32>, vector<256x256xf32>, vector<8x256xf32> -> vector<8x256xf32>
    %656 = arith.addf %647, %655 : vector<8x256xf32>
    %c17_503 = arith.constant 17 : index
    %c0_504 = arith.constant 0 : index
    %c0_505 = arith.constant 0 : index
    %657 = vector.load %arg3[%c17_503, %c0_504, %c0_505] : memref<27x8x1xf32, #tpu.memory_space<vmem>>, vector<1x8x1xf32>
    %658 = vector.shape_cast %657 : vector<1x8x1xf32> to vector<8x1xf32>
    %659 = vector.broadcast %658 : vector<8x1xf32> to vector<8x256xf32>
    %660 = vector.broadcast %584 : vector<1x256xf32> to vector<8x256xf32>
    %661 = arith.mulf %659, %660 : vector<8x256xf32>
    %c8_506 = arith.constant 8 : index
    %c0_507 = arith.constant 0 : index
    %c0_508 = arith.constant 0 : index
    %662 = vector.load %arg2[%c8_506, %c0_507, %c0_508] : memref<9x256x256xf32, #tpu.memory_space<vmem>>, vector<1x256x256xf32>
    %663 = vector.shape_cast %662 : vector<1x256x256xf32> to vector<256x256xf32>
    %cst_509 = arith.constant dense<0.000000e+00> : vector<8x256xf32>
    %664 = tpu.matmul %661, %663, %cst_509 {dimension_numbers = #tpu.dot_dimension_numbers<[1], [0], [0], [1], [0, 0, 1, 1], [], []>} : vector<8x256xf32>, vector<256x256xf32>, vector<8x256xf32> -> vector<8x256xf32>
    %665 = arith.addf %656, %664 : vector<8x256xf32>
    %c0_510 = arith.constant 0 : index
    %c4_511 = arith.constant 4 : index
    %c0_512 = arith.constant 0 : index
    %c0_513 = arith.constant 0 : index
    %666 = vector.load %arg1[%c0_510, %c4_511, %c0_512, %c0_513] : memref<1x5x1x256xf32, #tpu.memory_space<vmem>>, vector<1x1x1x256xf32>
    %667 = vector.shape_cast %666 : vector<1x1x1x256xf32> to vector<1x256xf32>
    %c18_514 = arith.constant 18 : index
    %c0_515 = arith.constant 0 : index
    %c0_516 = arith.constant 0 : index
    %668 = vector.load %arg3[%c18_514, %c0_515, %c0_516] : memref<27x8x1xf32, #tpu.memory_space<vmem>>, vector<1x8x1xf32>
    %669 = vector.shape_cast %668 : vector<1x8x1xf32> to vector<8x1xf32>
    %670 = vector.broadcast %669 : vector<8x1xf32> to vector<8x256xf32>
    %671 = vector.broadcast %667 : vector<1x256xf32> to vector<8x256xf32>
    %672 = arith.mulf %670, %671 : vector<8x256xf32>
    %c0_517 = arith.constant 0 : index
    %c0_518 = arith.constant 0 : index
    %c0_519 = arith.constant 0 : index
    %673 = vector.load %arg2[%c0_517, %c0_518, %c0_519] : memref<9x256x256xf32, #tpu.memory_space<vmem>>, vector<1x256x256xf32>
    %674 = vector.shape_cast %673 : vector<1x256x256xf32> to vector<256x256xf32>
    %cst_520 = arith.constant dense<0.000000e+00> : vector<8x256xf32>
    %675 = tpu.matmul %672, %674, %cst_520 {dimension_numbers = #tpu.dot_dimension_numbers<[1], [0], [0], [1], [0, 0, 1, 1], [], []>} : vector<8x256xf32>, vector<256x256xf32>, vector<8x256xf32> -> vector<8x256xf32>
    %676 = arith.addf %665, %675 : vector<8x256xf32>
    %c19_521 = arith.constant 19 : index
    %c0_522 = arith.constant 0 : index
    %c0_523 = arith.constant 0 : index
    %677 = vector.load %arg3[%c19_521, %c0_522, %c0_523] : memref<27x8x1xf32, #tpu.memory_space<vmem>>, vector<1x8x1xf32>
    %678 = vector.shape_cast %677 : vector<1x8x1xf32> to vector<8x1xf32>
    %679 = vector.broadcast %678 : vector<8x1xf32> to vector<8x256xf32>
    %680 = vector.broadcast %667 : vector<1x256xf32> to vector<8x256xf32>
    %681 = arith.mulf %679, %680 : vector<8x256xf32>
    %c1_524 = arith.constant 1 : index
    %c0_525 = arith.constant 0 : index
    %c0_526 = arith.constant 0 : index
    %682 = vector.load %arg2[%c1_524, %c0_525, %c0_526] : memref<9x256x256xf32, #tpu.memory_space<vmem>>, vector<1x256x256xf32>
    %683 = vector.shape_cast %682 : vector<1x256x256xf32> to vector<256x256xf32>
    %cst_527 = arith.constant dense<0.000000e+00> : vector<8x256xf32>
    %684 = tpu.matmul %681, %683, %cst_527 {dimension_numbers = #tpu.dot_dimension_numbers<[1], [0], [0], [1], [0, 0, 1, 1], [], []>} : vector<8x256xf32>, vector<256x256xf32>, vector<8x256xf32> -> vector<8x256xf32>
    %685 = arith.addf %676, %684 : vector<8x256xf32>
    %c20_528 = arith.constant 20 : index
    %c0_529 = arith.constant 0 : index
    %c0_530 = arith.constant 0 : index
    %686 = vector.load %arg3[%c20_528, %c0_529, %c0_530] : memref<27x8x1xf32, #tpu.memory_space<vmem>>, vector<1x8x1xf32>
    %687 = vector.shape_cast %686 : vector<1x8x1xf32> to vector<8x1xf32>
    %688 = vector.broadcast %687 : vector<8x1xf32> to vector<8x256xf32>
    %689 = vector.broadcast %667 : vector<1x256xf32> to vector<8x256xf32>
    %690 = arith.mulf %688, %689 : vector<8x256xf32>
    %c2_531 = arith.constant 2 : index
    %c0_532 = arith.constant 0 : index
    %c0_533 = arith.constant 0 : index
    %691 = vector.load %arg2[%c2_531, %c0_532, %c0_533] : memref<9x256x256xf32, #tpu.memory_space<vmem>>, vector<1x256x256xf32>
    %692 = vector.shape_cast %691 : vector<1x256x256xf32> to vector<256x256xf32>
    %cst_534 = arith.constant dense<0.000000e+00> : vector<8x256xf32>
    %693 = tpu.matmul %690, %692, %cst_534 {dimension_numbers = #tpu.dot_dimension_numbers<[1], [0], [0], [1], [0, 0, 1, 1], [], []>} : vector<8x256xf32>, vector<256x256xf32>, vector<8x256xf32> -> vector<8x256xf32>
    %694 = arith.addf %685, %693 : vector<8x256xf32>
    %c21_535 = arith.constant 21 : index
    %c0_536 = arith.constant 0 : index
    %c0_537 = arith.constant 0 : index
    %695 = vector.load %arg3[%c21_535, %c0_536, %c0_537] : memref<27x8x1xf32, #tpu.memory_space<vmem>>, vector<1x8x1xf32>
    %696 = vector.shape_cast %695 : vector<1x8x1xf32> to vector<8x1xf32>
    %697 = vector.broadcast %696 : vector<8x1xf32> to vector<8x256xf32>
    %698 = vector.broadcast %667 : vector<1x256xf32> to vector<8x256xf32>
    %699 = arith.mulf %697, %698 : vector<8x256xf32>
    %c3_538 = arith.constant 3 : index
    %c0_539 = arith.constant 0 : index
    %c0_540 = arith.constant 0 : index
    %700 = vector.load %arg2[%c3_538, %c0_539, %c0_540] : memref<9x256x256xf32, #tpu.memory_space<vmem>>, vector<1x256x256xf32>
    %701 = vector.shape_cast %700 : vector<1x256x256xf32> to vector<256x256xf32>
    %cst_541 = arith.constant dense<0.000000e+00> : vector<8x256xf32>
    %702 = tpu.matmul %699, %701, %cst_541 {dimension_numbers = #tpu.dot_dimension_numbers<[1], [0], [0], [1], [0, 0, 1, 1], [], []>} : vector<8x256xf32>, vector<256x256xf32>, vector<8x256xf32> -> vector<8x256xf32>
    %703 = arith.addf %694, %702 : vector<8x256xf32>
    %c22_542 = arith.constant 22 : index
    %c0_543 = arith.constant 0 : index
    %c0_544 = arith.constant 0 : index
    %704 = vector.load %arg3[%c22_542, %c0_543, %c0_544] : memref<27x8x1xf32, #tpu.memory_space<vmem>>, vector<1x8x1xf32>
    %705 = vector.shape_cast %704 : vector<1x8x1xf32> to vector<8x1xf32>
    %706 = vector.broadcast %705 : vector<8x1xf32> to vector<8x256xf32>
    %707 = vector.broadcast %667 : vector<1x256xf32> to vector<8x256xf32>
    %708 = arith.mulf %706, %707 : vector<8x256xf32>
    %c4_545 = arith.constant 4 : index
    %c0_546 = arith.constant 0 : index
    %c0_547 = arith.constant 0 : index
    %709 = vector.load %arg2[%c4_545, %c0_546, %c0_547] : memref<9x256x256xf32, #tpu.memory_space<vmem>>, vector<1x256x256xf32>
    %710 = vector.shape_cast %709 : vector<1x256x256xf32> to vector<256x256xf32>
    %cst_548 = arith.constant dense<0.000000e+00> : vector<8x256xf32>
    %711 = tpu.matmul %708, %710, %cst_548 {dimension_numbers = #tpu.dot_dimension_numbers<[1], [0], [0], [1], [0, 0, 1, 1], [], []>} : vector<8x256xf32>, vector<256x256xf32>, vector<8x256xf32> -> vector<8x256xf32>
    %712 = arith.addf %703, %711 : vector<8x256xf32>
    %c23_549 = arith.constant 23 : index
    %c0_550 = arith.constant 0 : index
    %c0_551 = arith.constant 0 : index
    %713 = vector.load %arg3[%c23_549, %c0_550, %c0_551] : memref<27x8x1xf32, #tpu.memory_space<vmem>>, vector<1x8x1xf32>
    %714 = vector.shape_cast %713 : vector<1x8x1xf32> to vector<8x1xf32>
    %715 = vector.broadcast %714 : vector<8x1xf32> to vector<8x256xf32>
    %716 = vector.broadcast %667 : vector<1x256xf32> to vector<8x256xf32>
    %717 = arith.mulf %715, %716 : vector<8x256xf32>
    %c5_552 = arith.constant 5 : index
    %c0_553 = arith.constant 0 : index
    %c0_554 = arith.constant 0 : index
    %718 = vector.load %arg2[%c5_552, %c0_553, %c0_554] : memref<9x256x256xf32, #tpu.memory_space<vmem>>, vector<1x256x256xf32>
    %719 = vector.shape_cast %718 : vector<1x256x256xf32> to vector<256x256xf32>
    %cst_555 = arith.constant dense<0.000000e+00> : vector<8x256xf32>
    %720 = tpu.matmul %717, %719, %cst_555 {dimension_numbers = #tpu.dot_dimension_numbers<[1], [0], [0], [1], [0, 0, 1, 1], [], []>} : vector<8x256xf32>, vector<256x256xf32>, vector<8x256xf32> -> vector<8x256xf32>
    %721 = arith.addf %712, %720 : vector<8x256xf32>
    %c24_556 = arith.constant 24 : index
    %c0_557 = arith.constant 0 : index
    %c0_558 = arith.constant 0 : index
    %722 = vector.load %arg3[%c24_556, %c0_557, %c0_558] : memref<27x8x1xf32, #tpu.memory_space<vmem>>, vector<1x8x1xf32>
    %723 = vector.shape_cast %722 : vector<1x8x1xf32> to vector<8x1xf32>
    %724 = vector.broadcast %723 : vector<8x1xf32> to vector<8x256xf32>
    %725 = vector.broadcast %667 : vector<1x256xf32> to vector<8x256xf32>
    %726 = arith.mulf %724, %725 : vector<8x256xf32>
    %c6_559 = arith.constant 6 : index
    %c0_560 = arith.constant 0 : index
    %c0_561 = arith.constant 0 : index
    %727 = vector.load %arg2[%c6_559, %c0_560, %c0_561] : memref<9x256x256xf32, #tpu.memory_space<vmem>>, vector<1x256x256xf32>
    %728 = vector.shape_cast %727 : vector<1x256x256xf32> to vector<256x256xf32>
    %cst_562 = arith.constant dense<0.000000e+00> : vector<8x256xf32>
    %729 = tpu.matmul %726, %728, %cst_562 {dimension_numbers = #tpu.dot_dimension_numbers<[1], [0], [0], [1], [0, 0, 1, 1], [], []>} : vector<8x256xf32>, vector<256x256xf32>, vector<8x256xf32> -> vector<8x256xf32>
    %730 = arith.addf %721, %729 : vector<8x256xf32>
    %c25_563 = arith.constant 25 : index
    %c0_564 = arith.constant 0 : index
    %c0_565 = arith.constant 0 : index
    %731 = vector.load %arg3[%c25_563, %c0_564, %c0_565] : memref<27x8x1xf32, #tpu.memory_space<vmem>>, vector<1x8x1xf32>
    %732 = vector.shape_cast %731 : vector<1x8x1xf32> to vector<8x1xf32>
    %733 = vector.broadcast %732 : vector<8x1xf32> to vector<8x256xf32>
    %734 = vector.broadcast %667 : vector<1x256xf32> to vector<8x256xf32>
    %735 = arith.mulf %733, %734 : vector<8x256xf32>
    %c7_566 = arith.constant 7 : index
    %c0_567 = arith.constant 0 : index
    %c0_568 = arith.constant 0 : index
    %736 = vector.load %arg2[%c7_566, %c0_567, %c0_568] : memref<9x256x256xf32, #tpu.memory_space<vmem>>, vector<1x256x256xf32>
    %737 = vector.shape_cast %736 : vector<1x256x256xf32> to vector<256x256xf32>
    %cst_569 = arith.constant dense<0.000000e+00> : vector<8x256xf32>
    %738 = tpu.matmul %735, %737, %cst_569 {dimension_numbers = #tpu.dot_dimension_numbers<[1], [0], [0], [1], [0, 0, 1, 1], [], []>} : vector<8x256xf32>, vector<256x256xf32>, vector<8x256xf32> -> vector<8x256xf32>
    %739 = arith.addf %730, %738 : vector<8x256xf32>
    %c26_570 = arith.constant 26 : index
    %c0_571 = arith.constant 0 : index
    %c0_572 = arith.constant 0 : index
    %740 = vector.load %arg3[%c26_570, %c0_571, %c0_572] : memref<27x8x1xf32, #tpu.memory_space<vmem>>, vector<1x8x1xf32>
    %741 = vector.shape_cast %740 : vector<1x8x1xf32> to vector<8x1xf32>
    %742 = vector.broadcast %741 : vector<8x1xf32> to vector<8x256xf32>
    %743 = vector.broadcast %667 : vector<1x256xf32> to vector<8x256xf32>
    %744 = arith.mulf %742, %743 : vector<8x256xf32>
    %c8_573 = arith.constant 8 : index
    %c0_574 = arith.constant 0 : index
    %c0_575 = arith.constant 0 : index
    %745 = vector.load %arg2[%c8_573, %c0_574, %c0_575] : memref<9x256x256xf32, #tpu.memory_space<vmem>>, vector<1x256x256xf32>
    %746 = vector.shape_cast %745 : vector<1x256x256xf32> to vector<256x256xf32>
    %cst_576 = arith.constant dense<0.000000e+00> : vector<8x256xf32>
    %747 = tpu.matmul %744, %746, %cst_576 {dimension_numbers = #tpu.dot_dimension_numbers<[1], [0], [0], [1], [0, 0, 1, 1], [], []>} : vector<8x256xf32>, vector<256x256xf32>, vector<8x256xf32> -> vector<8x256xf32>
    %748 = arith.addf %739, %747 : vector<8x256xf32>
    %749 = vector.broadcast %0 : vector<8x1xf32> to vector<8x256xf32>
    %750 = arith.addf %748, %749 : vector<8x256xf32>
    %cst_577 = arith.constant dense<0.000000e+00> : vector<8xf32>
    %751 = vector.multi_reduction <add>, %250, %cst_577 [1] : vector<8x256xf32> to vector<8xf32>
    %752 = vector.shape_cast %751 : vector<8xf32> to vector<8x1xf32>
    %cst_578 = arith.constant 0.000000e+00 : f32
    %753 = vector.broadcast %cst_578 : f32 to vector<8x1xf32>
    %754 = arith.addf %753, %752 : vector<8x1xf32>
    %cst_579 = arith.constant dense<0.000000e+00> : vector<8xf32>
    %755 = vector.multi_reduction <add>, %500, %cst_579 [1] : vector<8x256xf32> to vector<8xf32>
    %756 = vector.shape_cast %755 : vector<8xf32> to vector<8x1xf32>
    %757 = arith.addf %754, %756 : vector<8x1xf32>
    %cst_580 = arith.constant dense<0.000000e+00> : vector<8xf32>
    %758 = vector.multi_reduction <add>, %750, %cst_580 [1] : vector<8x256xf32> to vector<8xf32>
    %759 = vector.shape_cast %758 : vector<8xf32> to vector<8x1xf32>
    %760 = arith.addf %757, %759 : vector<8x1xf32>
    %cst_581 = arith.constant 0.00130208337 : f32
    %761 = vector.broadcast %cst_581 : f32 to vector<8x1xf32>
    %762 = arith.mulf %760, %761 : vector<8x1xf32>
    %763 = vector.broadcast %762 : vector<8x1xf32> to vector<8x256xf32>
    %764 = arith.subf %250, %763 : vector<8x256xf32>
    %765 = arith.mulf %764, %764 : vector<8x256xf32>
    %cst_582 = arith.constant dense<0.000000e+00> : vector<8xf32>
    %766 = vector.multi_reduction <add>, %765, %cst_582 [1] : vector<8x256xf32> to vector<8xf32>
    %767 = vector.shape_cast %766 : vector<8xf32> to vector<8x1xf32>
    %cst_583 = arith.constant 0.000000e+00 : f32
    %768 = vector.broadcast %cst_583 : f32 to vector<8x1xf32>
    %769 = arith.addf %768, %767 : vector<8x1xf32>
    %770 = vector.broadcast %762 : vector<8x1xf32> to vector<8x256xf32>
    %771 = arith.subf %500, %770 : vector<8x256xf32>
    %772 = arith.mulf %771, %771 : vector<8x256xf32>
    %cst_584 = arith.constant dense<0.000000e+00> : vector<8xf32>
    %773 = vector.multi_reduction <add>, %772, %cst_584 [1] : vector<8x256xf32> to vector<8xf32>
    %774 = vector.shape_cast %773 : vector<8xf32> to vector<8x1xf32>
    %775 = arith.addf %769, %774 : vector<8x1xf32>
    %776 = vector.broadcast %762 : vector<8x1xf32> to vector<8x256xf32>
    %777 = arith.subf %750, %776 : vector<8x256xf32>
    %778 = arith.mulf %777, %777 : vector<8x256xf32>
    %cst_585 = arith.constant dense<0.000000e+00> : vector<8xf32>
    %779 = vector.multi_reduction <add>, %778, %cst_585 [1] : vector<8x256xf32> to vector<8xf32>
    %780 = vector.shape_cast %779 : vector<8xf32> to vector<8x1xf32>
    %781 = arith.addf %775, %780 : vector<8x1xf32>
    %cst_586 = arith.constant 0.00130208337 : f32
    %782 = vector.broadcast %cst_586 : f32 to vector<8x1xf32>
    %783 = arith.mulf %781, %782 : vector<8x1xf32>
    %cst_587 = arith.constant 9.99999974E-6 : f32
    %784 = vector.broadcast %cst_587 : f32 to vector<8x1xf32>
    %785 = arith.addf %783, %784 : vector<8x1xf32>
    %786 = math.rsqrt %785 : vector<8x1xf32>
    %787 = vector.broadcast %762 : vector<8x1xf32> to vector<8x256xf32>
    %788 = arith.subf %250, %787 : vector<8x256xf32>
    %789 = vector.broadcast %786 : vector<8x1xf32> to vector<8x256xf32>
    %790 = arith.mulf %788, %789 : vector<8x256xf32>
    %cst_588 = arith.constant 0.000000e+00 : f32
    %791 = vector.broadcast %cst_588 : f32 to vector<8x256xf32>
    %792 = arith.maximumf %790, %791 : vector<8x256xf32>
    %c0_589 = arith.constant 0 : index
    %c0_590 = arith.constant 0 : index
    %c0_591 = arith.constant 0 : index
    %c0_592 = arith.constant 0 : index
    %793 = vector.load %arg5[%c0_589, %c0_590, %c0_591, %c0_592] : memref<1x3x8x256xf32, #tpu.memory_space<vmem>>, vector<1x1x8x256xf32>
    %794 = vector.shape_cast %793 : vector<1x1x8x256xf32> to vector<8x256xf32>
    %795 = vector.shape_cast %792 : vector<8x256xf32> to vector<1x1x8x256xf32>
    tpu.vector_store %arg5[%c0_589, %c0_590, %c0_591, %c0_592], %795 {strides = array<i32>} : memref<1x3x8x256xf32, #tpu.memory_space<vmem>>, vector<1x1x8x256xf32>,
    %796 = vector.broadcast %762 : vector<8x1xf32> to vector<8x256xf32>
    %797 = arith.subf %500, %796 : vector<8x256xf32>
    %798 = vector.broadcast %786 : vector<8x1xf32> to vector<8x256xf32>
    %799 = arith.mulf %797, %798 : vector<8x256xf32>
    %cst_593 = arith.constant 0.000000e+00 : f32
    %800 = vector.broadcast %cst_593 : f32 to vector<8x256xf32>
    %801 = arith.maximumf %799, %800 : vector<8x256xf32>
    %c0_594 = arith.constant 0 : index
    %c1_595 = arith.constant 1 : index
    %c0_596 = arith.constant 0 : index
    %c0_597 = arith.constant 0 : index
    %802 = vector.load %arg5[%c0_594, %c1_595, %c0_596, %c0_597] : memref<1x3x8x256xf32, #tpu.memory_space<vmem>>, vector<1x1x8x256xf32>
    %803 = vector.shape_cast %802 : vector<1x1x8x256xf32> to vector<8x256xf32>
    %804 = vector.shape_cast %801 : vector<8x256xf32> to vector<1x1x8x256xf32>
    tpu.vector_store %arg5[%c0_594, %c1_595, %c0_596, %c0_597], %804 {strides = array<i32>} : memref<1x3x8x256xf32, #tpu.memory_space<vmem>>, vector<1x1x8x256xf32>,
    %805 = vector.broadcast %762 : vector<8x1xf32> to vector<8x256xf32>
    %806 = arith.subf %750, %805 : vector<8x256xf32>
    %807 = vector.broadcast %786 : vector<8x1xf32> to vector<8x256xf32>
    %808 = arith.mulf %806, %807 : vector<8x256xf32>
    %cst_598 = arith.constant 0.000000e+00 : f32
    %809 = vector.broadcast %cst_598 : f32 to vector<8x256xf32>
    %810 = arith.maximumf %808, %809 : vector<8x256xf32>
    %c0_599 = arith.constant 0 : index
    %c2_600 = arith.constant 2 : index
    %c0_601 = arith.constant 0 : index
    %c0_602 = arith.constant 0 : index
    %811 = vector.load %arg5[%c0_599, %c2_600, %c0_601, %c0_602] : memref<1x3x8x256xf32, #tpu.memory_space<vmem>>, vector<1x1x8x256xf32>
    %812 = vector.shape_cast %811 : vector<1x1x8x256xf32> to vector<8x256xf32>
    %813 = vector.shape_cast %810 : vector<8x256xf32> to vector<1x1x8x256xf32>
    tpu.vector_store %arg5[%c0_599, %c2_600, %c0_601, %c0_602], %813 {strides = array<i32>} : memref<1x3x8x256xf32, #tpu.memory_space<vmem>>, vector<1x1x8x256xf32>,
    return
  }
  func.func @transform_0(%arg0: i32) -> (i32, i32, i32, i32) {
    %c0_i32 = arith.constant 0 : i32
    %c0_i32_0 = arith.constant 0 : i32
    %c0_i32_1 = arith.constant 0 : i32
    %c0_i32_2 = arith.constant 0 : i32
    return %arg0, %c0_i32, %c0_i32_0, %c0_i32_1 : i32, i32, i32, i32
  }
  func.func @transform_1(%arg0: i32) -> (i32, i32, i32) {
    %c0_i32 = arith.constant 0 : i32
    %c0_i32_0 = arith.constant 0 : i32
    %c0_i32_1 = arith.constant 0 : i32
    %c0_i32_2 = arith.constant 0 : i32
    return %c0_i32, %c0_i32_0, %c0_i32_1 : i32, i32, i32
  }
  func.func @transform_2(%arg0: i32) -> (i32, i32, i32) {
    %c0_i32 = arith.constant 0 : i32
    %c0_i32_0 = arith.constant 0 : i32
    %c0_i32_1 = arith.constant 0 : i32
    %c0_i32_2 = arith.constant 0 : i32
    return %c0_i32, %c0_i32_0, %c0_i32_1 : i32, i32, i32
  }
  func.func @transform_3(%arg0: i32) -> (i32, i32) {
    %c0_i32 = arith.constant 0 : i32
    %c0_i32_0 = arith.constant 0 : i32
    %c0_i32_1 = arith.constant 0 : i32
    return %c0_i32, %c0_i32_0 : i32, i32
  }
  func.func @transform_4(%arg0: i32) -> (i32, i32, i32, i32) {
    %c0_i32 = arith.constant 0 : i32
    %c0_i32_0 = arith.constant 0 : i32
    %c0_i32_1 = arith.constant 0 : i32
    %c0_i32_2 = arith.constant 0 : i32
    return %arg0, %c0_i32, %c0_i32_0, %c0_i32_1 : i32, i32, i32, i32
  }
}

</mosaic_0001>

<llo_original>
// kernel: tpu_custom_call.1
$region0: #{tpu_custom_call.1}
  #allocation0 [shape = 'u32[]', space=smem, size = 0x4, offset = 0x4, fixed_abs, tag = 'smem constant byte address 0x4 - core index']
  #allocation1 [shape = 'u32[144,128]{1,0:T(1,128)}', space=vmem, size = 0x12000, scoped, tag = 'internal scratch']
  %s0 = inlined_call_operand.hbm [shape: f32[2,5,1,256], index: 0, kind: input, shape index: {}]
  %s1 = inlined_call_operand.hbm [shape: f32[9,256,256], index: 1, kind: input, shape index: {}]
  %s2 = inlined_call_operand.vmem [shape: f32[27,8,1], index: 2, kind: input, shape index: {}]
  %s3 = inlined_call_operand.vmem [shape: f32[8,1], index: 3, kind: input, shape index: {}]
  %s4 = inlined_call_operand.hbm [shape: f32[2,3,8,256], index: 4, kind: output, shape index: {}]
  %s5 = sld [smem:[#allocation0]]
  $region57: #{tpu_custom_call.1} parent=0
    _
  %s7 = ssub.s32 1, %s5
  %s8 = scalar_select 0, %s7, %s5
  $region1: #{tpu_custom_call.1} parent=0
    #allocation2 [shape = 'u8[10240]{0}', space=vmem, size = 0x2800, scoped, tag = 'input window, operand 0']
    #allocation3 [shape = 's32[2]{0}', space=sflag, size = 0x8, scoped, tag = 'scoped memory for tpu_custom_call.1']
    #allocation4 [shape = 's32[2]{0}', space=sflag, size = 0x8, scoped, tag = 'scoped memory for tpu_custom_call.1']
    #allocation5 [shape = 'u8[2359296]{0}', space=vmem, size = 0x240000, scoped, tag = 'input window, operand 1, single buffered']
    #allocation6 [shape = 's32[1]{0}', space=sflag, size = 0x4, scoped, tag = 'scoped memory for tpu_custom_call.1']
    #allocation7 [shape = 'u8[49152]{0}', space=vmem, size = 0xc000, scoped, tag = 'output window, operand 0']
    %9 = vsyncpa [#allocation3], 0
    %s10 = scalar_lea.sflag [#allocation3], 1
    %11 = vsyncpa %s10, 0
    %12 = vsyncpa [#allocation6], 0
    %13 = vsyncpa [#allocation4], 0
    %s14 = scalar_lea.sflag [#allocation4], 1
    %15 = vsyncpa %s14, 0
    loop: start=0, step=1, limit=4
    $region2: #{tpu_custom_call.1} parent=1 // loop_pre_header
      _
    $region3: #{tpu_custom_call.1} parent=1 // loop_header
      %s17 = sphi 0, %s21
      %p18 = scmp.ge.s32.totalorder %s17, 4
      %s27 = sphi 0, %s29
      %s30 = sphi 0, %s27
      %s31 = sphi 0, %s30
      %s47 = sphi 0, %s31
      %s51 = sphi 0, %s51
      %s53 = sphi 0, %s51
      %s54 = sphi 0, %s53
      %s68 = sphi 0, %s54
      %s72 = sphi 0, %s72
      %s74 = sphi 0, %s72
      %s75 = sphi 0, %s74
      %s89 = sphi 0, %s75
      %s93 = sphi 0, %s93
      %s95 = sphi 0, %s93
      %s96 = sphi 0, %s95
      %s110 = sphi 0, %s96
      %s116 = sphi 0, %s118
      %s119 = sphi 0, %s116
      %s120 = sphi 0, %s119
      %s136 = sphi 0, %s120
    $region4: #{tpu_custom_call.1} parent=1 // loop_header_branch
      %20 = sbr.rel (%p18) target = $region8
    $region5: #{tpu_custom_call.1} parent=1 // loop_body
      %s22 = ssub.s32 %s17, 1
      %s23 = ssub.s32 %s17, 2
      %s24 = sadd.s32 %s17, 1
      %s25 = ssub.s32 %s17, %s24
      %p26 = scmp.eq.s32.totalorder %s25, 0
      %s28 = sadd.s32 %s27, 1
      %s29 = scalar_select %p26, %s27, %s28
      %p32 = pneg %p26
      %p33 = scmp.eq.s32.totalorder %s17, 1
      %p34 = por %p32, %p33
      %p35 = scmp.ne.s32.totalorder %s27, %s30
      %p36 = scmp.eq.s32.totalorder %s17, 0
      %p37 = por %p35, %p36
      %p38 = scmp.ne.s32.totalorder %s27, %s30
      %p39 = scmp.eq.s32.totalorder %s22, 1
      %p40 = por %p38, %p39
      %p41 = scmp.ne.s32.totalorder %s30, %s31
      %p42 = scmp.eq.s32.totalorder %s22, 0
      %p43 = por %p41, %p42
      %p44 = scmp.ne.s32.totalorder %s30, %s31
      %p45 = scmp.eq.s32.totalorder %s23, 1
      %p46 = por %p44, %p45
      %p48 = scmp.ne.s32.totalorder %s31, %s47
      %p49 = scmp.eq.s32.totalorder %s23, 0
      %p50 = por %p48, %p49
      %s52 = sadd.s32 %s51, 1
      %p55 = scmp.eq.s32.totalorder %s17, 1
      %p56 = scmp.ne.s32.totalorder %s51, %s53
      %p57 = scmp.eq.s32.totalorder %s17, 0
      %p58 = por %p56, %p57
      %p59 = scmp.ne.s32.totalorder %s51, %s53
      %p60 = scmp.eq.s32.totalorder %s22, 1
      %p61 = por %p59, %p60
      %p62 = scmp.ne.s32.totalorder %s53, %s54
      %p63 = scmp.eq.s32.totalorder %s22, 0
      %p64 = por %p62, %p63
      %p65 = scmp.ne.s32.totalorder %s53, %s54
      %p66 = scmp.eq.s32.totalorder %s23, 1
      %p67 = por %p65, %p66
      %p69 = scmp.ne.s32.totalorder %s54, %s68
      %p70 = scmp.eq.s32.totalorder %s23, 0
      %p71 = por %p69, %p70
      %s73 = sadd.s32 %s72, 1
      %p76 = scmp.eq.s32.totalorder %s17, 1
      %p77 = scmp.ne.s32.totalorder %s72, %s74
      %p78 = scmp.eq.s32.totalorder %s17, 0
      %p79 = por %p77, %p78
      %p80 = scmp.ne.s32.totalorder %s72, %s74
      %p81 = scmp.eq.s32.totalorder %s22, 1
      %p82 = por %p80, %p81
      %p83 = scmp.ne.s32.totalorder %s74, %s75
      %p84 = scmp.eq.s32.totalorder %s22, 0
      %p85 = por %p83, %p84
      %p86 = scmp.ne.s32.totalorder %s74, %s75
      %p87 = scmp.eq.s32.totalorder %s23, 1
      %p88 = por %p86, %p87
      %p90 = scmp.ne.s32.totalorder %s75, %s89
      %p91 = scmp.eq.s32.totalorder %s23, 0
      %p92 = por %p90, %p91
      %s94 = sadd.s32 %s93, 1
      %p97 = scmp.eq.s32.totalorder %s17, 1
      %p98 = scmp.ne.s32.totalorder %s93, %s95
      %p99 = scmp.eq.s32.totalorder %s17, 0
      %p100 = por %p98, %p99
      %p101 = scmp.ne.s32.totalorder %s93, %s95
      %p102 = scmp.eq.s32.totalorder %s22, 1
      %p103 = por %p101, %p102
      %p104 = scmp.ne.s32.totalorder %s95, %s96
      %p105 = scmp.eq.s32.totalorder %s22, 0
      %p106 = por %p104, %p105
      %p107 = scmp.ne.s32.totalorder %s95, %s96
      %p108 = scmp.eq.s32.totalorder %s23, 1
      %p109 = por %p107, %p108
      %p111 = scmp.ne.s32.totalorder %s96, %s110
      %p112 = scmp.eq.s32.totalorder %s23, 0
      %p113 = por %p111, %p112
      %s114 = ssub.s32 %s17, %s24
      %p115 = scmp.eq.s32.totalorder %s114, 0
      %s117 = sadd.s32 %s116, 1
      %s118 = scalar_select %p115, %s116, %s117
      %p121 = pneg %p115
      %p122 = scmp.eq.s32.totalorder %s17, 1
      %p123 = por %p121, %p122
      %p124 = scmp.ne.s32.totalorder %s116, %s119
      %p125 = scmp.eq.s32.totalorder %s17, 0
      %p126 = por %p124, %p125
      %p127 = scmp.ne.s32.totalorder %s116, %s119
      %p128 = scmp.eq.s32.totalorder %s22, 1
      %p129 = por %p127, %p128
      %p130 = scmp.ne.s32.totalorder %s119, %s120
      %p131 = scmp.eq.s32.totalorder %s22, 0
      %p132 = por %p130, %p131
      %p133 = scmp.ne.s32.totalorder %s119, %s120
      %p134 = scmp.eq.s32.totalorder %s23, 1
      %p135 = por %p133, %p134
      %p137 = scmp.ne.s32.totalorder %s120, %s136
      %p138 = scmp.eq.s32.totalorder %s23, 0
      %p139 = por %p137, %p138
      %p140 = scmp.le.s32.totalorder 1, %s17
      %p141 = scmp.lt.s32.totalorder %s17, 3
      %p142 = pnand %p140, %p141
      %p143 = pneg %p142
      // Predicated region
      $region9: #{tpu_custom_call.1} parent=5 // pred_check
        _
      $region10: #{tpu_custom_call.1} parent=5 // pred_check_branch
        %145 = sbr.rel (%p142) target = $region12
      $region11: #{tpu_custom_call.1} parent=5 // pred_region
        %s146 = ssub.s32 %s17, 1
        // Predicated region
        $region13: #{tpu_custom_call.1} parent=11 // pred_check
          %p147 = pneg %p64
        $region14: #{tpu_custom_call.1} parent=11 // pred_check_branch
          %149 = sbr.rel (%p147) target = $region16
        $region15: #{tpu_custom_call.1} parent=11 // pred_region
          %s151 = ssub.s32 73728, 73728
          %152 = vsyncadd [#allocation6], %s151
          %s153 = sshll.u32 [#allocation5], 4
          %s154 = int_to_ptr.vmem [resolvable:$true] %s153
          %159 = dma.hbm_to_vmem [thread:$0]  %s1, 73728, %s154, [#allocation6], 256, 256, 16
        $region16: #{tpu_custom_call.1} parent=11 // pred_fallthru
          _
        // Predicated region
        $region17: #{tpu_custom_call.1} parent=11 // pred_check
          %p160 = pneg %p85
        $region18: #{tpu_custom_call.1} parent=11 // pred_check_branch
          %162 = sbr.rel (%p160) target = $region20
        $region19: #{tpu_custom_call.1} parent=11 // pred_region
          _
        $region20: #{tpu_custom_call.1} parent=11 // pred_fallthru
          _
        // Predicated region
        $region21: #{tpu_custom_call.1} parent=11 // pred_check
          %p163 = pneg %p106
        $region22: #{tpu_custom_call.1} parent=11 // pred_check_branch
          %165 = sbr.rel (%p163) target = $region24
        $region23: #{tpu_custom_call.1} parent=11 // pred_region
          _
        $region24: #{tpu_custom_call.1} parent=11 // pred_fallthru
          _
      $region12: #{tpu_custom_call.1} parent=5 // pred_fallthru
        _
      %p166 = scmp.lt.s32.totalorder %s17, 2
      // Predicated region
      $region25: #{tpu_custom_call.1} parent=5 // pred_check
        %p167 = pneg %p166
      $region26: #{tpu_custom_call.1} parent=5 // pred_check_branch
        %169 = sbr.rel (%p167) target = $region28
      $region27: #{tpu_custom_call.1} parent=5 // pred_region
        // Predicated region
        $region29: #{tpu_custom_call.1} parent=27 // pred_check
          %p170 = pneg %p37
        $region30: #{tpu_custom_call.1} parent=27 // pred_check_branch
          %172 = sbr.rel (%p170) target = $region32
        $region31: #{tpu_custom_call.1} parent=27 // pred_region
          %s173 = sand.u32 %s27, 1
          %s174 = scalar_lea.sflag [#allocation3], %s173
          %s175 = sand.u32 %s27, 1
          %s176 = smul.addr %s175, 10
          %s177 = scalar_lea.vmem [#allocation2], %s176
          %s179 = ssub.s32 160, 160
          %180 = vsyncadd %s174, %s179
          %s181 = smul.addr %s17, 10
          %s182 = smul.addr %s181, 16
          %s183 = scalar_lea.hbm %s0, %s182
          %s184 = sshll.u32 %s177, 4
          %s185 = int_to_ptr.vmem [resolvable:$true] %s184
          %190 = dma.hbm_to_vmem [thread:$0]  %s183, 160, %s185, %s174, 32, 32, 2
        $region32: #{tpu_custom_call.1} parent=27 // pred_fallthru
          _
      $region28: #{tpu_custom_call.1} parent=5 // pred_fallthru
        _
      %p191 = scmp.le.s32.totalorder 1, %s17
      %p192 = scmp.lt.s32.totalorder %s17, 3
      %p193 = pnand %p191, %p192
      %p194 = pneg %p193
      // Predicated region
      $region33: #{tpu_custom_call.1} parent=5 // pred_check
        _
      $region34: #{tpu_custom_call.1} parent=5 // pred_check_branch
        %196 = sbr.rel (%p193) target = $region36
      $region35: #{tpu_custom_call.1} parent=5 // pred_region
        %s197 = ssub.s32 %s17, 1
        %s198 = sand.u32 %s30, 1
        %s199 = scalar_lea.sflag [#allocation3], %s198
        %s200 = sand.u32 %s30, 1
        %s201 = smul.addr %s200, 10
        %s202 = scalar_lea.vmem [#allocation2], %s201
        // Predicated region
        $region37: #{tpu_custom_call.1} parent=35 // pred_check
          %p203 = pneg %p43
        $region38: #{tpu_custom_call.1} parent=35 // pred_check_branch
          %205 = sbr.rel (%p203) target = $region40
        $region39: #{tpu_custom_call.1} parent=35 // pred_region
          %206 = dma.done %s199, 160
        $region40: #{tpu_custom_call.1} parent=35 // pred_fallthru
          _
        // Predicated region
        $region41: #{tpu_custom_call.1} parent=35 // pred_check
          %p207 = pneg %p64
        $region42: #{tpu_custom_call.1} parent=35 // pred_check_branch
          %209 = sbr.rel (%p207) target = $region44
        $region43: #{tpu_custom_call.1} parent=35 // pred_region
          %210 = dma.done [#allocation6], 73728
        $region44: #{tpu_custom_call.1} parent=35 // pred_fallthru
          _
        %s211 = sand.u32 %s30, 1
        %s212 = scalar_lea.sflag [#allocation3], %s211
        %s213 = sand.u32 %s30, 1
        %s214 = smul.addr %s213, 10
        %s215 = scalar_lea.vmem [#allocation2], %s214
        %p216 = pneg %p43
        %p217 = pneg %p40
        %p218 = pneg %p64
        %p219 = pneg %p61
        %p220 = pneg %p85
        %p221 = pneg %p82
        %p222 = pneg %p106
        %p223 = pneg %p103
        %p224 = pneg %p132
        %p225 = pneg %p129
        %s226 = sand.u32 %s119, 1
        %s227 = scalar_lea.sflag [#allocation4], %s226
        %s228 = sand.u32 %s119, 1
        %s229 = smul.addr %s228, 48
        %s230 = scalar_lea.vmem [#allocation7], %s229
        %v231 = vld [vmem:[%s3] sm:$0xff]
        %v232 = vld [vmem:[%s202] sm:$0x3]
        %v233 = vld [vmem:[%s2] sm:$0xff]
        %235 = vset.pattern.permute.xlu0 0
        %236 = vperm.xlu0 %235, %v233
        %v237 = vpop.permute.xlu0 %236
        %v240 = vlaneseq
        %v241 = vshrl.u32 %v240, 7
        %v242 = vsub.s32 0, %v241
        %v243 = vrot.slane %v232, %v242
        %v244 = vlaneseq
        %v245 = vshrl.u32 %v244, 7
        %v246 = vsub.s32 1, %v245
        %v247 = vrot.slane %v232, %v246
        %v250 = vmul.f32 %v237, %v243
        %v251 = vmul.f32 %v237, %v247
        %v252 = vld [vmem:[#allocation5] sm:$0xff]
        %v253 = vld [vmem:[#allocation5 + $0x8] sm:$0xff]
        %v254 = vld [vmem:[#allocation5 + $0x10] sm:$0xff]
        %v255 = vld [vmem:[#allocation5 + $0x18] sm:$0xff]
        %v256 = vld [vmem:[#allocation5 + $0x20] sm:$0xff]
        %v257 = vld [vmem:[#allocation5 + $0x28] sm:$0xff]
        %v258 = vld [vmem:[#allocation5 + $0x30] sm:$0xff]
        %v259 = vld [vmem:[#allocation5 + $0x38] sm:$0xff]
        %v260 = vld [vmem:[#allocation5 + $0x40] sm:$0xff]
        %v261 = vld [vmem:[#allocation5 + $0x48] sm:$0xff]
        %v262 = vld [vmem:[#allocation5 + $0x50] sm:$0xff]
        %v263 = vld [vmem:[#allocation5 + $0x58] sm:$0xff]
        %v264 = vld [vmem:[#allocation5 + $0x60] sm:$0xff]
        %v265 = vld [vmem:[#allocation5 + $0x68] sm:$0xff]
        %v266 = vld [vmem:[#allocation5 + $0x70] sm:$0xff]
        %v267 = vld [vmem:[#allocation5 + $0x78] sm:$0xff]
        %v268 = vld [vmem:[#allocation5 + $0x80] sm:$0xff]
        %v269 = vld [vmem:[#allocation5 + $0x88] sm:$0xff]
        %v270 = vld [vmem:[#allocation5 + $0x90] sm:$0xff]
        %v271 = vld [vmem:[#allocation5 + $0x98] sm:$0xff]
        %v272 = vld [vmem:[#allocation5 + $0xa0] sm:$0xff]
        %v273 = vld [vmem:[#allocation5 + $0xa8] sm:$0xff]
        %v274 = vld [vmem:[#allocation5 + $0xb0] sm:$0xff]
        %v275 = vld [vmem:[#allocation5 + $0xb8] sm:$0xff]
        %v276 = vld [vmem:[#allocation5 + $0xc0] sm:$0xff]
        %v277 = vld [vmem:[#allocation5 + $0xc8] sm:$0xff]
        %v278 = vld [vmem:[#allocation5 + $0xd0] sm:$0xff]
        %v279 = vld [vmem:[#allocation5 + $0xd8] sm:$0xff]
        %v280 = vld [vmem:[#allocation5 + $0xe0] sm:$0xff]
        %v281 = vld [vmem:[#allocation5 + $0xe8] sm:$0xff]
        %v282 = vld [vmem:[#allocation5 + $0xf0] sm:$0xff]
        %v283 = vld [vmem:[#allocation5 + $0xf8] sm:$0xff]
        %v284 = vld [vmem:[#allocation5 + $0x100] sm:$0xff]
        %v285 = vld [vmem:[#allocation5 + $0x108] sm:$0xff]
        %v286 = vld [vmem:[#allocation5 + $0x110] sm:$0xff]
        %v287 = vld [vmem:[#allocation5 + $0x118] sm:$0xff]
        %v288 = vld [vmem:[#allocation5 + $0x120] sm:$0xff]
        %v289 = vld [vmem:[#allocation5 + $0x128] sm:$0xff]
        %v290 = vld [vmem:[#allocation5 + $0x130] sm:$0xff]
        %v291 = vld [vmem:[#allocation5 + $0x138] sm:$0xff]
        %v292 = vld [vmem:[#allocation5 + $0x140] sm:$0xff]
        %v293 = vld [vmem:[#allocation5 + $0x148] sm:$0xff]
        %v294 = vld [vmem:[#allocation5 + $0x150] sm:$0xff]
        %v295 = vld [vmem:[#allocation5 + $0x158] sm:$0xff]
        %v296 = vld [vmem:[#allocation5 + $0x160] sm:$0xff]
        %v297 = vld [vmem:[#allocation5 + $0x168] sm:$0xff]
        %v298 = vld [vmem:[#allocation5 + $0x170] sm:$0xff]
        %v299 = vld [vmem:[#allocation5 + $0x178] sm:$0xff]
        %v300 = vld [vmem:[#allocation5 + $0x180] sm:$0xff]
        %v301 = vld [vmem:[#allocation5 + $0x188] sm:$0xff]
        %v302 = vld [vmem:[#allocation5 + $0x190] sm:$0xff]
        %v303 = vld [vmem:[#allocation5 + $0x198] sm:$0xff]
        %v304 = vld [vmem:[#allocation5 + $0x1a0] sm:$0xff]
        %v305 = vld [vmem:[#allocation5 + $0x1a8] sm:$0xff]
        %v306 = vld [vmem:[#allocation5 + $0x1b0] sm:$0xff]
        %v307 = vld [vmem:[#allocation5 + $0x1b8] sm:$0xff]
        %v308 = vld [vmem:[#allocation5 + $0x1c0] sm:$0xff]
        %v309 = vld [vmem:[#allocation5 + $0x1c8] sm:$0xff]
        %v310 = vld [vmem:[#allocation5 + $0x1d0] sm:$0xff]
        %v311 = vld [vmem:[#allocation5 + $0x1d8] sm:$0xff]
        %v312 = vld [vmem:[#allocation5 + $0x1e0] sm:$0xff]
        %v313 = vld [vmem:[#allocation5 + $0x1e8] sm:$0xff]
        %v314 = vld [vmem:[#allocation5 + $0x1f0] sm:$0xff]
        %v315 = vld [vmem:[#allocation5 + $0x1f8] sm:$0xff]
        %s316 = scalar_lea.vmem %s2, 8
        %v317 = vld [vmem:[%s316] sm:$0xff]
        %319 = vset.pattern.permute.xlu0 0
        %320 = vperm.xlu0 %319, %v317
        %v321 = vpop.permute.xlu0 %320
        %v323 = vmul.f32 %v321, %v243
        %v324 = vmul.f32 %v321, %v247
        %s325 = scalar_lea.vmem [#allocation5], 512
        %v326 = vld [vmem:[%s325] sm:$0xff]
        %v327 = vld [vmem:[%s325 + $0x8] sm:$0xff]
        %v328 = vld [vmem:[%s325 + $0x10] sm:$0xff]
        %v329 = vld [vmem:[%s325 + $0x18] sm:$0xff]
        %v330 = vld [vmem:[%s325 + $0x20] sm:$0xff]
        %v331 = vld [vmem:[%s325 + $0x28] sm:$0xff]
        %v332 = vld [vmem:[%s325 + $0x30] sm:$0xff]
        %v333 = vld [vmem:[%s325 + $0x38] sm:$0xff]
        %v334 = vld [vmem:[%s325 + $0x40] sm:$0xff]
        %v335 = vld [vmem:[%s325 + $0x48] sm:$0xff]
        %v336 = vld [vmem:[%s325 + $0x50] sm:$0xff]
        %v337 = vld [vmem:[%s325 + $0x58] sm:$0xff]
        %v338 = vld [vmem:[%s325 + $0x60] sm:$0xff]
        %v339 = vld [vmem:[%s325 + $0x68] sm:$0xff]
        %v340 = vld [vmem:[%s325 + $0x70] sm:$0xff]
        %v341 = vld [vmem:[%s325 + $0x78] sm:$0xff]
        %v342 = vld [vmem:[%s325 + $0x80] sm:$0xff]
        %v343 = vld [vmem:[%s325 + $0x88] sm:$0xff]
        %v344 = vld [vmem:[%s325 + $0x90] sm:$0xff]
        %v345 = vld [vmem:[%s325 + $0x98] sm:$0xff]
        %v346 = vld [vmem:[%s325 + $0xa0] sm:$0xff]
        %v347 = vld [vmem:[%s325 + $0xa8] sm:$0xff]
        %v348 = vld [vmem:[%s325 + $0xb0] sm:$0xff]
        %v349 = vld [vmem:[%s325 + $0xb8] sm:$0xff]
        %v350 = vld [vmem:[%s325 + $0xc0] sm:$0xff]
        %v351 = vld [vmem:[%s325 + $0xc8] sm:$0xff]
        %v352 = vld [vmem:[%s325 + $0xd0] sm:$0xff]
        %v353 = vld [vmem:[%s325 + $0xd8] sm:$0xff]
        %v354 = vld [vmem:[%s325 + $0xe0] sm:$0xff]
        %v355 = vld [vmem:[%s325 + $0xe8] sm:$0xff]
        %v356 = vld [vmem:[%s325 + $0xf0] sm:$0xff]
        %v357 = vld [vmem:[%s325 + $0xf8] sm:$0xff]
        %v358 = vld [vmem:[%s325 + $0x100] sm:$0xff]
        %v359 = vld [vmem:[%s325 + $0x108] sm:$0xff]
        %v360 = vld [vmem:[%s325 + $0x110] sm:$0xff]
        %v361 = vld [vmem:[%s325 + $0x118] sm:$0xff]
        %v362 = vld [vmem:[%s325 + $0x120] sm:$0xff]
        %v363 = vld [vmem:[%s325 + $0x128] sm:$0xff]
        %v364 = vld [vmem:[%s325 + $0x130] sm:$0xff]
        %v365 = vld [vmem:[%s325 + $0x138] sm:$0xff]
        %v366 = vld [vmem:[%s325 + $0x140] sm:$0xff]
        %v367 = vld [vmem:[%s325 + $0x148] sm:$0xff]
        %v368 = vld [vmem:[%s325 + $0x150] sm:$0xff]
        %v369 = vld [vmem:[%s325 + $0x158] sm:$0xff]
        %v370 = vld [vmem:[%s325 + $0x160] sm:$0xff]
        %v371 = vld [vmem:[%s325 + $0x168] sm:$0xff]
        %v372 = vld [vmem:[%s325 + $0x170] sm:$0xff]
        %v373 = vld [vmem:[%s325 + $0x178] sm:$0xff]
        %v374 = vld [vmem:[%s325 + $0x180] sm:$0xff]
        %v375 = vld [vmem:[%s325 + $0x188] sm:$0xff]
        %v376 = vld [vmem:[%s325 + $0x190] sm:$0xff]
        %v377 = vld [vmem:[%s325 + $0x198] sm:$0xff]
        %v378 = vld [vmem:[%s325 + $0x1a0] sm:$0xff]
        %v379 = vld [vmem:[%s325 + $0x1a8] sm:$0xff]
        %v380 = vld [vmem:[%s325 + $0x1b0] sm:$0xff]
        %v381 = vld [vmem:[%s325 + $0x1b8] sm:$0xff]
        %v382 = vld [vmem:[%s325 + $0x1c0] sm:$0xff]
        %v383 = vld [vmem:[%s325 + $0x1c8] sm:$0xff]
        %v384 = vld [vmem:[%s325 + $0x1d0] sm:$0xff]
        %v385 = vld [vmem:[%s325 + $0x1d8] sm:$0xff]
        %v386 = vld [vmem:[%s325 + $0x1e0] sm:$0xff]
        %v387 = vld [vmem:[%s325 + $0x1e8] sm:$0xff]
        %v388 = vld [vmem:[%s325 + $0x1f0] sm:$0xff]
        %v389 = vld [vmem:[%s325 + $0x1f8] sm:$0xff]
        %390 = vmatprep.subr.mxu0 %v327
        %391 = vmatpush1.msra.mxu0 %v326
        %392 = vmatprep.subr.mxu0 %v329
        %393 = vmatpush1.msra.mxu0 %v328
        %394 = vmatprep.subr.mxu0 %v331
        %395 = vmatpush1.msra.mxu0 %v330
        %396 = vmatprep.subr.mxu0 %v333
        %397 = vmatpush1.msra.mxu0 %v332
        %398 = vmatprep.subr.mxu0 %v335
        %399 = vmatpush1.msra.mxu0 %v334
        %400 = vmatprep.subr.mxu0 %v337
        %401 = vmatpush1.msra.mxu0 %v336
        %402 = vmatprep.subr.mxu0 %v339
        %403 = vmatpush1.msra.mxu0 %v338
        %404 = vmatprep.subr.mxu0 %v341
        %405 = vmatpush1.msra.mxu0 %v340
        %406 = vmatprep.subr.mxu0 %v343
        %407 = vmatpush1.msra.mxu0 %v342
        %408 = vmatprep.subr.mxu0 %v345
        %409 = vmatpush1.msra.mxu0 %v344
        %410 = vmatprep.subr.mxu0 %v347
        %411 = vmatpush1.msra.mxu0 %v346
        %412 = vmatprep.subr.mxu0 %v349
        %413 = vmatpush1.msra.mxu0 %v348
        %414 = vmatprep.subr.mxu0 %v351
        %415 = vmatpush1.msra.mxu0 %v350
        %416 = vmatprep.subr.mxu0 %v353
        %417 = vmatpush1.msra.mxu0 %v352
        %418 = vmatprep.subr.mxu0 %v355
        %419 = vmatpush1.msra.mxu0 %v354
        %420 = vmatprep.subr.mxu0 %v357
        %421 = vmatpush1.msra.mxu0 %v356
        %422 = vmatprep.subr.mxu0 %v359
        %423 = vmatpush1.msra.mxu0 %v358
        %424 = vmatprep.subr.mxu0 %v361
        %425 = vmatpush1.msra.mxu0 %v360
        %426 = vmatprep.subr.mxu0 %v363
        %427 = vmatpush1.msra.mxu0 %v362
        %428 = vmatprep.subr.mxu0 %v365
        %429 = vmatpush1.msra.mxu0 %v364
        %430 = vmatprep.subr.mxu0 %v367
        %431 = vmatpush1.msra.mxu0 %v366
        %432 = vmatprep.subr.mxu0 %v369
        %433 = vmatpush1.msra.mxu0 %v368
        %434 = vmatprep.subr.mxu0 %v371
        %435 = vmatpush1.msra.mxu0 %v370
        %436 = vmatprep.subr.mxu0 %v373
        %437 = vmatpush1.msra.mxu0 %v372
        %438 = vmatprep.subr.mxu0 %v375
        %439 = vmatpush1.msra.mxu0 %v374
        %440 = vmatprep.subr.mxu0 %v377
        %441 = vmatpush1.msra.mxu0 %v376
        %442 = vmatprep.subr.mxu0 %v379
        %443 = vmatpush1.msra.mxu0 %v378
        %444 = vmatprep.subr.mxu0 %v381
        %445 = vmatpush1.msra.mxu0 %v380
        %446 = vmatprep.subr.mxu0 %v383
        %447 = vmatpush1.msra.mxu0 %v382
        %448 = vmatprep.subr.mxu0 %v385
        %449 = vmatpush1.msra.mxu0 %v384
        %450 = vmatprep.subr.mxu0 %v387
        %451 = vmatpush1.msra.mxu0 %v386
        %452 = vmatprep.subr.mxu0 %v389
        %453 = vmatpush1.msra.mxu0 %v388
        %454 = vmatprep.mubr.f32.mxu0 %v324
        %455 = vmatmul.mubr.f32.gmra.mrb[0].mxu0 %v323
        %v456 = vpop.f32.mrb[0].mxu0
        %v457 = vadd.f32 0.0, %v456
        %v458 = vpop.f32.mrb[0].mxu0
        %v459 = vadd.f32 0.0, %v458
        %460 = vdwg.mxu0
        %461 = vmatprep.subr.mxu0 %v253
        %462 = vmatpush1.msra.mxu0 %v252
        %463 = vmatprep.subr.mxu0 %v255
        %464 = vmatpush1.msra.mxu0 %v254
        %465 = vmatprep.subr.mxu0 %v257
        %466 = vmatpush1.msra.mxu0 %v256
        %467 = vmatprep.subr.mxu0 %v259
        %468 = vmatpush1.msra.mxu0 %v258
        %469 = vmatprep.subr.mxu0 %v261
        %470 = vmatpush1.msra.mxu0 %v260
        %471 = vmatprep.subr.mxu0 %v263
        %472 = vmatpush1.msra.mxu0 %v262
        %473 = vmatprep.subr.mxu0 %v265
        %474 = vmatpush1.msra.mxu0 %v264
        %475 = vmatprep.subr.mxu0 %v267
        %476 = vmatpush1.msra.mxu0 %v266
        %477 = vmatprep.subr.mxu0 %v269
        %478 = vmatpush1.msra.mxu0 %v268
        %479 = vmatprep.subr.mxu0 %v271
        %480 = vmatpush1.msra.mxu0 %v270
        %481 = vmatprep.subr.mxu0 %v273
        %482 = vmatpush1.msra.mxu0 %v272
        %483 = vmatprep.subr.mxu0 %v275
        %484 = vmatpush1.msra.mxu0 %v274
        %485 = vmatprep.subr.mxu0 %v277
        %486 = vmatpush1.msra.mxu0 %v276
        %487 = vmatprep.subr.mxu0 %v279
        %488 = vmatpush1.msra.mxu0 %v278
        %489 = vmatprep.subr.mxu0 %v281
        %490 = vmatpush1.msra.mxu0 %v280
        %491 = vmatprep.subr.mxu0 %v283
        %492 = vmatpush1.msra.mxu0 %v282
        %493 = vmatprep.subr.mxu0 %v285
        %494 = vmatpush1.msra.mxu0 %v284
        %495 = vmatprep.subr.mxu0 %v287
        %496 = vmatpush1.msra.mxu0 %v286
        %497 = vmatprep.subr.mxu0 %v289
        %498 = vmatpush1.msra.mxu0 %v288
        %499 = vmatprep.subr.mxu0 %v291
        %500 = vmatpush1.msra.mxu0 %v290
        %501 = vmatprep.subr.mxu0 %v293
        %502 = vmatpush1.msra.mxu0 %v292
        %503 = vmatprep.subr.mxu0 %v295
        %504 = vmatpush1.msra.mxu0 %v294
        %505 = vmatprep.subr.mxu0 %v297
        %506 = vmatpush1.msra.mxu0 %v296
        %507 = vmatprep.subr.mxu0 %v299
        %508 = vmatpush1.msra.mxu0 %v298
        %509 = vmatprep.subr.mxu0 %v301
        %510 = vmatpush1.msra.mxu0 %v300
        %511 = vmatprep.subr.mxu0 %v303
        %512 = vmatpush1.msra.mxu0 %v302
        %513 = vmatprep.subr.mxu0 %v305
        %514 = vmatpush1.msra.mxu0 %v304
        %515 = vmatprep.subr.mxu0 %v307
        %516 = vmatpush1.msra.mxu0 %v306
        %517 = vmatprep.subr.mxu0 %v309
        %518 = vmatpush1.msra.mxu0 %v308
        %519 = vmatprep.subr.mxu0 %v311
        %520 = vmatpush1.msra.mxu0 %v310
        %521 = vmatprep.subr.mxu0 %v313
        %522 = vmatpush1.msra.mxu0 %v312
        %523 = vmatprep.subr.mxu0 %v315
        %524 = vmatpush1.msra.mxu0 %v314
        %525 = vmatprep.mubr.f32.mxu0 %v251
        %526 = vmatmul.mubr.f32.gmra.mrb[0].mxu0 %v250
        %v527 = vpop.f32.mrb[0].mxu0
        %v528 = vadd.f32 %v457, %v527
        %v529 = vpop.f32.mrb[0].mxu0
        %v530 = vadd.f32 %v459, %v529
        %531 = vdwg.mxu0
        %s532 = scalar_lea.vmem %s2, 16
        %v533 = vld [vmem:[%s532] sm:$0xff]
        %535 = vset.pattern.permute.xlu0 0
        %536 = vperm.xlu0 %535, %v533
        %v537 = vpop.permute.xlu0 %536
        %v539 = vmul.f32 %v537, %v243
        %v540 = vmul.f32 %v537, %v247
        %s541 = scalar_lea.vmem [#allocation5], 1024
        %v542 = vld [vmem:[%s541] sm:$0xff]
        %v543 = vld [vmem:[%s541 + $0x8] sm:$0xff]
        %v544 = vld [vmem:[%s541 + $0x10] sm:$0xff]
        %v545 = vld [vmem:[%s541 + $0x18] sm:$0xff]
        %v546 = vld [vmem:[%s541 + $0x20] sm:$0xff]
        %v547 = vld [vmem:[%s541 + $0x28] sm:$0xff]
        %v548 = vld [vmem:[%s541 + $0x30] sm:$0xff]
        %v549 = vld [vmem:[%s541 + $0x38] sm:$0xff]
        %v550 = vld [vmem:[%s541 + $0x40] sm:$0xff]
        %v551 = vld [vmem:[%s541 + $0x48] sm:$0xff]
        %v552 = vld [vmem:[%s541 + $0x50] sm:$0xff]
        %v553 = vld [vmem:[%s541 + $0x58] sm:$0xff]
        %v554 = vld [vmem:[%s541 + $0x60] sm:$0xff]
        %v555 = vld [vmem:[%s541 + $0x68] sm:$0xff]
        %v556 = vld [vmem:[%s541 + $0x70] sm:$0xff]
        %v557 = vld [vmem:[%s541 + $0x78] sm:$0xff]
        %v558 = vld [vmem:[%s541 + $0x80] sm:$0xff]
        %v559 = vld [vmem:[%s541 + $0x88] sm:$0xff]
        %v560 = vld [vmem:[%s541 + $0x90] sm:$0xff]
        %v561 = vld [vmem:[%s541 + $0x98] sm:$0xff]
        %v562 = vld [vmem:[%s541 + $0xa0] sm:$0xff]
        %v563 = vld [vmem:[%s541 + $0xa8] sm:$0xff]
        %v564 = vld [vmem:[%s541 + $0xb0] sm:$0xff]
        %v565 = vld [vmem:[%s541 + $0xb8] sm:$0xff]
        %v566 = vld [vmem:[%s541 + $0xc0] sm:$0xff]
        %v567 = vld [vmem:[%s541 + $0xc8] sm:$0xff]
        %v568 = vld [vmem:[%s541 + $0xd0] sm:$0xff]
        %v569 = vld [vmem:[%s541 + $0xd8] sm:$0xff]
        %v570 = vld [vmem:[%s541 + $0xe0] sm:$0xff]
        %v571 = vld [vmem:[%s541 + $0xe8] sm:$0xff]
        %v572 = vld [vmem:[%s541 + $0xf0] sm:$0xff]
        %v573 = vld [vmem:[%s541 + $0xf8] sm:$0xff]
        %v574 = vld [vmem:[%s541 + $0x100] sm:$0xff]
        %v575 = vld [vmem:[%s541 + $0x108] sm:$0xff]
        %v576 = vld [vmem:[%s541 + $0x110] sm:$0xff]
        %v577 = vld [vmem:[%s541 + $0x118] sm:$0xff]
        %v578 = vld [vmem:[%s541 + $0x120] sm:$0xff]
        %v579 = vld [vmem:[%s541 + $0x128] sm:$0xff]
        %v580 = vld [vmem:[%s541 + $0x130] sm:$0xff]
        %v581 = vld [vmem:[%s541 + $0x138] sm:$0xff]
        %v582 = vld [vmem:[%s541 + $0x140] sm:$0xff]
        %v583 = vld [vmem:[%s541 + $0x148] sm:$0xff]
        %v584 = vld [vmem:[%s541 + $0x150] sm:$0xff]
        %v585 = vld [vmem:[%s541 + $0x158] sm:$0xff]
        %v586 = vld [vmem:[%s541 + $0x160] sm:$0xff]
        %v587 = vld [vmem:[%s541 + $0x168] sm:$0xff]
        %v588 = vld [vmem:[%s541 + $0x170] sm:$0xff]
        %v589 = vld [vmem:[%s541 + $0x178] sm:$0xff]
        %v590 = vld [vmem:[%s541 + $0x180] sm:$0xff]
        %v591 = vld [vmem:[%s541 + $0x188] sm:$0xff]
        %v592 = vld [vmem:[%s541 + $0x190] sm:$0xff]
        %v593 = vld [vmem:[%s541 + $0x198] sm:$0xff]
        %v594 = vld [vmem:[%s541 + $0x1a0] sm:$0xff]
        %v595 = vld [vmem:[%s541 + $0x1a8] sm:$0xff]
        %v596 = vld [vmem:[%s541 + $0x1b0] sm:$0xff]
        %v597 = vld [vmem:[%s541 + $0x1b8] sm:$0xff]
        %v598 = vld [vmem:[%s541 + $0x1c0] sm:$0xff]
        %v599 = vld [vmem:[%s541 + $0x1c8] sm:$0xff]
        %v600 = vld [vmem:[%s541 + $0x1d0] sm:$0xff]
        %v601 = vld [vmem:[%s541 + $0x1d8] sm:$0xff]
        %v602 = vld [vmem:[%s541 + $0x1e0] sm:$0xff]
        %v603 = vld [vmem:[%s541 + $0x1e8] sm:$0xff]
        %v604 = vld [vmem:[%s541 + $0x1f0] sm:$0xff]
        %v605 = vld [vmem:[%s541 + $0x1f8] sm:$0xff]
        %606 = vmatprep.subr.mxu0 %v543
        %607 = vmatpush1.msra.mxu0 %v542
        %608 = vmatprep.subr.mxu0 %v545
        %609 = vmatpush1.msra.mxu0 %v544
        %610 = vmatprep.subr.mxu0 %v547
        %611 = vmatpush1.msra.mxu0 %v546
        %612 = vmatprep.subr.mxu0 %v549
        %613 = vmatpush1.msra.mxu0 %v548
        %614 = vmatprep.subr.mxu0 %v551
        %615 = vmatpush1.msra.mxu0 %v550
        %616 = vmatprep.subr.mxu0 %v553
        %617 = vmatpush1.msra.mxu0 %v552
        %618 = vmatprep.subr.mxu0 %v555
        %619 = vmatpush1.msra.mxu0 %v554
        %620 = vmatprep.subr.mxu0 %v557
        %621 = vmatpush1.msra.mxu0 %v556
        %622 = vmatprep.subr.mxu0 %v559
        %623 = vmatpush1.msra.mxu0 %v558
        %624 = vmatprep.subr.mxu0 %v561
        %625 = vmatpush1.msra.mxu0 %v560
        %626 = vmatprep.subr.mxu0 %v563
        %627 = vmatpush1.msra.mxu0 %v562
        %628 = vmatprep.subr.mxu0 %v565
        %629 = vmatpush1.msra.mxu0 %v564
        %630 = vmatprep.subr.mxu0 %v567
        %631 = vmatpush1.msra.mxu0 %v566
        %632 = vmatprep.subr.mxu0 %v569
        %633 = vmatpush1.msra.mxu0 %v568
        %634 = vmatprep.subr.mxu0 %v571
        %635 = vmatpush1.msra.mxu0 %v570
        %636 = vmatprep.subr.mxu0 %v573
        %637 = vmatpush1.msra.mxu0 %v572
        %638 = vmatprep.subr.mxu0 %v575
        %639 = vmatpush1.msra.mxu0 %v574
        %640 = vmatprep.subr.mxu0 %v577
        %641 = vmatpush1.msra.mxu0 %v576
        %642 = vmatprep.subr.mxu0 %v579
        %643 = vmatpush1.msra.mxu0 %v578
        %644 = vmatprep.subr.mxu0 %v581
        %645 = vmatpush1.msra.mxu0 %v580
        %646 = vmatprep.subr.mxu0 %v583
        %647 = vmatpush1.msra.mxu0 %v582
        %648 = vmatprep.subr.mxu0 %v585
        %649 = vmatpush1.msra.mxu0 %v584
        %650 = vmatprep.subr.mxu0 %v587
        %651 = vmatpush1.msra.mxu0 %v586
        %652 = vmatprep.subr.mxu0 %v589
        %653 = vmatpush1.msra.mxu0 %v588
        %654 = vmatprep.subr.mxu0 %v591
        %655 = vmatpush1.msra.mxu0 %v590
        %656 = vmatprep.subr.mxu0 %v593
        %657 = vmatpush1.msra.mxu0 %v592
        %658 = vmatprep.subr.mxu0 %v595
        %659 = vmatpush1.msra.mxu0 %v594
        %660 = vmatprep.subr.mxu0 %v597
        %661 = vmatpush1.msra.mxu0 %v596
        %662 = vmatprep.subr.mxu0 %v599
        %663 = vmatpush1.msra.mxu0 %v598
        %664 = vmatprep.subr.mxu0 %v601
        %665 = vmatpush1.msra.mxu0 %v600
        %666 = vmatprep.subr.mxu0 %v603
        %667 = vmatpush1.msra.mxu0 %v602
        %668 = vmatprep.subr.mxu0 %v605
        %669 = vmatpush1.msra.mxu0 %v604
        %670 = vmatprep.mubr.f32.mxu0 %v540
        %671 = vmatmul.mubr.f32.gmra.mrb[0].mxu0 %v539
        %v672 = vpop.f32.mrb[0].mxu0
        %v673 = vadd.f32 0.0, %v672
        %v674 = vpop.f32.mrb[0].mxu0
        %v675 = vadd.f32 0.0, %v674
        %676 = vdwg.mxu0
        %v677 = vadd.f32 %v528, %v673
        %v678 = vadd.f32 %v530, %v675
        %s679 = scalar_lea.vmem %s2, 24
        %v680 = vld [vmem:[%s679] sm:$0xff]
        %682 = vset.pattern.permute.xlu0 0
        %683 = vperm.xlu0 %682, %v680
        %v684 = vpop.permute.xlu0 %683
        %v686 = vmul.f32 %v684, %v243
        %v687 = vmul.f32 %v684, %v247
        %s688 = scalar_lea.vmem [#allocation5], 1536
        %v689 = vld [vmem:[%s688] sm:$0xff]
        %v690 = vld [vmem:[%s688 + $0x8] sm:$0xff]
        %v691 = vld [vmem:[%s688 + $0x10] sm:$0xff]
        %v692 = vld [vmem:[%s688 + $0x18] sm:$0xff]
        %v693 = vld [vmem:[%s688 + $0x20] sm:$0xff]
        %v694 = vld [vmem:[%s688 + $0x28] sm:$0xff]
        %v695 = vld [vmem:[%s688 + $0x30] sm:$0xff]
        %v696 = vld [vmem:[%s688 + $0x38] sm:$0xff]
        %v697 = vld [vmem:[%s688 + $0x40] sm:$0xff]
        %v698 = vld [vmem:[%s688 + $0x48] sm:$0xff]
        %v699 = vld [vmem:[%s688 + $0x50] sm:$0xff]
        %v700 = vld [vmem:[%s688 + $0x58] sm:$0xff]
        %v701 = vld [vmem:[%s688 + $0x60] sm:$0xff]
        %v702 = vld [vmem:[%s688 + $0x68] sm:$0xff]
        %v703 = vld [vmem:[%s688 + $0x70] sm:$0xff]
        %v704 = vld [vmem:[%s688 + $0x78] sm:$0xff]
        %v705 = vld [vmem:[%s688 + $0x80] sm:$0xff]
        %v706 = vld [vmem:[%s688 + $0x88] sm:$0xff]
        %v707 = vld [vmem:[%s688 + $0x90] sm:$0xff]
        %v708 = vld [vmem:[%s688 + $0x98] sm:$0xff]
        %v709 = vld [vmem:[%s688 + $0xa0] sm:$0xff]
        %v710 = vld [vmem:[%s688 + $0xa8] sm:$0xff]
        %v711 = vld [vmem:[%s688 + $0xb0] sm:$0xff]
        %v712 = vld [vmem:[%s688 + $0xb8] sm:$0xff]
        %v713 = vld [vmem:[%s688 + $0xc0] sm:$0xff]
        %v714 = vld [vmem:[%s688 + $0xc8] sm:$0xff]
        %v715 = vld [vmem:[%s688 + $0xd0] sm:$0xff]
        %v716 = vld [vmem:[%s688 + $0xd8] sm:$0xff]
        %v717 = vld [vmem:[%s688 + $0xe0] sm:$0xff]
        %v718 = vld [vmem:[%s688 + $0xe8] sm:$0xff]
        %v719 = vld [vmem:[%s688 + $0xf0] sm:$0xff]
        %v720 = vld [vmem:[%s688 + $0xf8] sm:$0xff]
        %v721 = vld [vmem:[%s688 + $0x100] sm:$0xff]
        %v722 = vld [vmem:[%s688 + $0x108] sm:$0xff]
        %v723 = vld [vmem:[%s688 + $0x110] sm:$0xff]
        %v724 = vld [vmem:[%s688 + $0x118] sm:$0xff]
        %v725 = vld [vmem:[%s688 + $0x120] sm:$0xff]
        %v726 = vld [vmem:[%s688 + $0x128] sm:$0xff]
        %v727 = vld [vmem:[%s688 + $0x130] sm:$0xff]
        %v728 = vld [vmem:[%s688 + $0x138] sm:$0xff]
        %v729 = vld [vmem:[%s688 + $0x140] sm:$0xff]
        %v730 = vld [vmem:[%s688 + $0x148] sm:$0xff]
        %v731 = vld [vmem:[%s688 + $0x150] sm:$0xff]
        %v732 = vld [vmem:[%s688 + $0x158] sm:$0xff]
        %v733 = vld [vmem:[%s688 + $0x160] sm:$0xff]
        %v734 = vld [vmem:[%s688 + $0x168] sm:$0xff]
        %v735 = vld [vmem:[%s688 + $0x170] sm:$0xff]
        %v736 = vld [vmem:[%s688 + $0x178] sm:$0xff]
        %v737 = vld [vmem:[%s688 + $0x180] sm:$0xff]
        %v738 = vld [vmem:[%s688 + $0x188] sm:$0xff]
        %v739 = vld [vmem:[%s688 + $0x190] sm:$0xff]
        %v740 = vld [vmem:[%s688 + $0x198] sm:$0xff]
        %v741 = vld [vmem:[%s688 + $0x1a0] sm:$0xff]
        %v742 = vld [vmem:[%s688 + $0x1a8] sm:$0xff]
        %v743 = vld [vmem:[%s688 + $0x1b0] sm:$0xff]
        %v744 = vld [vmem:[%s688 + $0x1b8] sm:$0xff]
        %v745 = vld [vmem:[%s688 + $0x1c0] sm:$0xff]
        %v746 = vld [vmem:[%s688 + $0x1c8] sm:$0xff]
        %v747 = vld [vmem:[%s688 + $0x1d0] sm:$0xff]
        %v748 = vld [vmem:[%s688 + $0x1d8] sm:$0xff]
        %v749 = vld [vmem:[%s688 + $0x1e0] sm:$0xff]
        %v750 = vld [vmem:[%s688 + $0x1e8] sm:$0xff]
        %v751 = vld [vmem:[%s688 + $0x1f0] sm:$0xff]
        %v752 = vld [vmem:[%s688 + $0x1f8] sm:$0xff]
        %753 = vmatprep.subr.mxu0 %v690
        %754 = vmatpush1.msra.mxu0 %v689
        %755 = vmatprep.subr.mxu0 %v692
        %756 = vmatpush1.msra.mxu0 %v691
        %757 = vmatprep.subr.mxu0 %v694
        %758 = vmatpush1.msra.mxu0 %v693
        %759 = vmatprep.subr.mxu0 %v696
        %760 = vmatpush1.msra.mxu0 %v695
        %761 = vmatprep.subr.mxu0 %v698
        %762 = vmatpush1.msra.mxu0 %v697
        %763 = vmatprep.subr.mxu0 %v700
        %764 = vmatpush1.msra.mxu0 %v699
        %765 = vmatprep.subr.mxu0 %v702
        %766 = vmatpush1.msra.mxu0 %v701
        %767 = vmatprep.subr.mxu0 %v704
        %768 = vmatpush1.msra.mxu0 %v703
        %769 = vmatprep.subr.mxu0 %v706
        %770 = vmatpush1.msra.mxu0 %v705
        %771 = vmatprep.subr.mxu0 %v708
        %772 = vmatpush1.msra.mxu0 %v707
        %773 = vmatprep.subr.mxu0 %v710
        %774 = vmatpush1.msra.mxu0 %v709
        %775 = vmatprep.subr.mxu0 %v712
        %776 = vmatpush1.msra.mxu0 %v711
        %777 = vmatprep.subr.mxu0 %v714
        %778 = vmatpush1.msra.mxu0 %v713
        %779 = vmatprep.subr.mxu0 %v716
        %780 = vmatpush1.msra.mxu0 %v715
        %781 = vmatprep.subr.mxu0 %v718
        %782 = vmatpush1.msra.mxu0 %v717
        %783 = vmatprep.subr.mxu0 %v720
        %784 = vmatpush1.msra.mxu0 %v719
        %785 = vmatprep.subr.mxu0 %v722
        %786 = vmatpush1.msra.mxu0 %v721
        %787 = vmatprep.subr.mxu0 %v724
        %788 = vmatpush1.msra.mxu0 %v723
        %789 = vmatprep.subr.mxu0 %v726
        %790 = vmatpush1.msra.mxu0 %v725
        %791 = vmatprep.subr.mxu0 %v728
        %792 = vmatpush1.msra.mxu0 %v727
        %793 = vmatprep.subr.mxu0 %v730
        %794 = vmatpush1.msra.mxu0 %v729
        %795 = vmatprep.subr.mxu0 %v732
        %796 = vmatpush1.msra.mxu0 %v731
        %797 = vmatprep.subr.mxu0 %v734
        %798 = vmatpush1.msra.mxu0 %v733
        %799 = vmatprep.subr.mxu0 %v736
        %800 = vmatpush1.msra.mxu0 %v735
        %801 = vmatprep.subr.mxu0 %v738
        %802 = vmatpush1.msra.mxu0 %v737
        %803 = vmatprep.subr.mxu0 %v740
        %804 = vmatpush1.msra.mxu0 %v739
        %805 = vmatprep.subr.mxu0 %v742
        %806 = vmatpush1.msra.mxu0 %v741
        %807 = vmatprep.subr.mxu0 %v744
        %808 = vmatpush1.msra.mxu0 %v743
        %809 = vmatprep.subr.mxu0 %v746
        %810 = vmatpush1.msra.mxu0 %v745
        %811 = vmatprep.subr.mxu0 %v748
        %812 = vmatpush1.msra.mxu0 %v747
        %813 = vmatprep.subr.mxu0 %v750
        %814 = vmatpush1.msra.mxu0 %v749
        %815 = vmatprep.subr.mxu0 %v752
        %816 = vmatpush1.msra.mxu0 %v751
        %817 = vmatprep.mubr.f32.mxu0 %v687
        %818 = vmatmul.mubr.f32.gmra.mrb[0].mxu0 %v686
        %v819 = vpop.f32.mrb[0].mxu0
        %v820 = vadd.f32 0.0, %v819
        %v821 = vpop.f32.mrb[0].mxu0
        %v822 = vadd.f32 0.0, %v821
        %823 = vdwg.mxu0
        %v824 = vadd.f32 %v677, %v820
        %v825 = vadd.f32 %v678, %v822
        %s826 = scalar_lea.vmem %s2, 32
        %v827 = vld [vmem:[%s826] sm:$0xff]
        %829 = vset.pattern.permute.xlu0 0
        %830 = vperm.xlu0 %829, %v827
        %v831 = vpop.permute.xlu0 %830
        %v833 = vmul.f32 %v831, %v243
        %v834 = vmul.f32 %v831, %v247
        %s835 = scalar_lea.vmem [#allocation5], 2048
        %v836 = vld [vmem:[%s835] sm:$0xff]
        %v837 = vld [vmem:[%s835 + $0x8] sm:$0xff]
        %v838 = vld [vmem:[%s835 + $0x10] sm:$0xff]
        %v839 = vld [vmem:[%s835 + $0x18] sm:$0xff]
        %v840 = vld [vmem:[%s835 + $0x20] sm:$0xff]
        %v841 = vld [vmem:[%s835 + $0x28] sm:$0xff]
        %v842 = vld [vmem:[%s835 + $0x30] sm:$0xff]
        %v843 = vld [vmem:[%s835 + $0x38] sm:$0xff]
        %v844 = vld [vmem:[%s835 + $0x40] sm:$0xff]
        %v845 = vld [vmem:[%s835 + $0x48] sm:$0xff]
        %v846 = vld [vmem:[%s835 + $0x50] sm:$0xff]
        %v847 = vld [vmem:[%s835 + $0x58] sm:$0xff]
        %v848 = vld [vmem:[%s835 + $0x60] sm:$0xff]
        %v849 = vld [vmem:[%s835 + $0x68] sm:$0xff]
        %v850 = vld [vmem:[%s835 + $0x70] sm:$0xff]
        %v851 = vld [vmem:[%s835 + $0x78] sm:$0xff]
        %v852 = vld [vmem:[%s835 + $0x80] sm:$0xff]
        %v853 = vld [vmem:[%s835 + $0x88] sm:$0xff]
        %v854 = vld [vmem:[%s835 + $0x90] sm:$0xff]
        %v855 = vld [vmem:[%s835 + $0x98] sm:$0xff]
        %v856 = vld [vmem:[%s835 + $0xa0] sm:$0xff]
        %v857 = vld [vmem:[%s835 + $0xa8] sm:$0xff]
        %v858 = vld [vmem:[%s835 + $0xb0] sm:$0xff]
        %v859 = vld [vmem:[%s835 + $0xb8] sm:$0xff]
        %v860 = vld [vmem:[%s835 + $0xc0] sm:$0xff]
        %v861 = vld [vmem:[%s835 + $0xc8] sm:$0xff]
        %v862 = vld [vmem:[%s835 + $0xd0] sm:$0xff]
        %v863 = vld [vmem:[%s835 + $0xd8] sm:$0xff]
        %v864 = vld [vmem:[%s835 + $0xe0] sm:$0xff]
        %v865 = vld [vmem:[%s835 + $0xe8] sm:$0xff]
        %v866 = vld [vmem:[%s835 + $0xf0] sm:$0xff]
        %v867 = vld [vmem:[%s835 + $0xf8] sm:$0xff]
        %v868 = vld [vmem:[%s835 + $0x100] sm:$0xff]
        %v869 = vld [vmem:[%s835 + $0x108] sm:$0xff]
        %v870 = vld [vmem:[%s835 + $0x110] sm:$0xff]
        %v871 = vld [vmem:[%s835 + $0x118] sm:$0xff]
        %v872 = vld [vmem:[%s835 + $0x120] sm:$0xff]
        %v873 = vld [vmem:[%s835 + $0x128] sm:$0xff]
        %v874 = vld [vmem:[%s835 + $0x130] sm:$0xff]
        %v875 = vld [vmem:[%s835 + $0x138] sm:$0xff]
        %v876 = vld [vmem:[%s835 + $0x140] sm:$0xff]
        %v877 = vld [vmem:[%s835 + $0x148] sm:$0xff]
        %v878 = vld [vmem:[%s835 + $0x150] sm:$0xff]
        %v879 = vld [vmem:[%s835 + $0x158] sm:$0xff]
        %v880 = vld [vmem:[%s835 + $0x160] sm:$0xff]
        %v881 = vld [vmem:[%s835 + $0x168] sm:$0xff]
        %v882 = vld [vmem:[%s835 + $0x170] sm:$0xff]
        %v883 = vld [vmem:[%s835 + $0x178] sm:$0xff]
        %v884 = vld [vmem:[%s835 + $0x180] sm:$0xff]
        %v885 = vld [vmem:[%s835 + $0x188] sm:$0xff]
        %v886 = vld [vmem:[%s835 + $0x190] sm:$0xff]
        %v887 = vld [vmem:[%s835 + $0x198] sm:$0xff]
        %v888 = vld [vmem:[%s835 + $0x1a0] sm:$0xff]
        %v889 = vld [vmem:[%s835 + $0x1a8] sm:$0xff]
        %v890 = vld [vmem:[%s835 + $0x1b0] sm:$0xff]
        %v891 = vld [vmem:[%s835 + $0x1b8] sm:$0xff]
        %v892 = vld [vmem:[%s835 + $0x1c0] sm:$0xff]
        %v893 = vld [vmem:[%s835 + $0x1c8] sm:$0xff]
        %v894 = vld [vmem:[%s835 + $0x1d0] sm:$0xff]
        %v895 = vld [vmem:[%s835 + $0x1d8] sm:$0xff]
        %v896 = vld [vmem:[%s835 + $0x1e0] sm:$0xff]
        %v897 = vld [vmem:[%s835 + $0x1e8] sm:$0xff]
        %v898 = vld [vmem:[%s835 + $0x1f0] sm:$0xff]
        %v899 = vld [vmem:[%s835 + $0x1f8] sm:$0xff]
        %900 = vmatprep.subr.mxu0 %v837
        %901 = vmatpush1.msra.mxu0 %v836
        %902 = vmatprep.subr.mxu0 %v839
        %903 = vmatpush1.msra.mxu0 %v838
        %904 = vmatprep.subr.mxu0 %v841
        %905 = vmatpush1.msra.mxu0 %v840
        %906 = vmatprep.subr.mxu0 %v843
        %907 = vmatpush1.msra.mxu0 %v842
        %908 = vmatprep.subr.mxu0 %v845
        %909 = vmatpush1.msra.mxu0 %v844
        %910 = vmatprep.subr.mxu0 %v847
        %911 = vmatpush1.msra.mxu0 %v846
        %912 = vmatprep.subr.mxu0 %v849
        %913 = vmatpush1.msra.mxu0 %v848
        %914 = vmatprep.subr.mxu0 %v851
        %915 = vmatpush1.msra.mxu0 %v850
        %916 = vmatprep.subr.mxu0 %v853
        %917 = vmatpush1.msra.mxu0 %v852
        %918 = vmatprep.subr.mxu0 %v855
        %919 = vmatpush1.msra.mxu0 %v854
        %920 = vmatprep.subr.mxu0 %v857
        %921 = vmatpush1.msra.mxu0 %v856
        %922 = vmatprep.subr.mxu0 %v859
        %923 = vmatpush1.msra.mxu0 %v858
        %924 = vmatprep.subr.mxu0 %v861
        %925 = vmatpush1.msra.mxu0 %v860
        %926 = vmatprep.subr.mxu0 %v863
        %927 = vmatpush1.msra.mxu0 %v862
        %928 = vmatprep.subr.mxu0 %v865
        %929 = vmatpush1.msra.mxu0 %v864
        %930 = vmatprep.subr.mxu0 %v867
        %931 = vmatpush1.msra.mxu0 %v866
        %932 = vmatprep.subr.mxu0 %v869
        %933 = vmatpush1.msra.mxu0 %v868
        %934 = vmatprep.subr.mxu0 %v871
        %935 = vmatpush1.msra.mxu0 %v870
        %936 = vmatprep.subr.mxu0 %v873
        %937 = vmatpush1.msra.mxu0 %v872
        %938 = vmatprep.subr.mxu0 %v875
        %939 = vmatpush1.msra.mxu0 %v874
        %940 = vmatprep.subr.mxu0 %v877
        %941 = vmatpush1.msra.mxu0 %v876
        %942 = vmatprep.subr.mxu0 %v879
        %943 = vmatpush1.msra.mxu0 %v878
        %944 = vmatprep.subr.mxu0 %v881
        %945 = vmatpush1.msra.mxu0 %v880
        %946 = vmatprep.subr.mxu0 %v883
        %947 = vmatpush1.msra.mxu0 %v882
        %948 = vmatprep.subr.mxu0 %v885
        %949 = vmatpush1.msra.mxu0 %v884
        %950 = vmatprep.subr.mxu0 %v887
        %951 = vmatpush1.msra.mxu0 %v886
        %952 = vmatprep.subr.mxu0 %v889
        %953 = vmatpush1.msra.mxu0 %v888
        %954 = vmatprep.subr.mxu0 %v891
        %955 = vmatpush1.msra.mxu0 %v890
        %956 = vmatprep.subr.mxu0 %v893
        %957 = vmatpush1.msra.mxu0 %v892
        %958 = vmatprep.subr.mxu0 %v895
        %959 = vmatpush1.msra.mxu0 %v894
        %960 = vmatprep.subr.mxu0 %v897
        %961 = vmatpush1.msra.mxu0 %v896
        %962 = vmatprep.subr.mxu0 %v899
        %963 = vmatpush1.msra.mxu0 %v898
        %964 = vmatprep.mubr.f32.mxu0 %v834
        %965 = vmatmul.mubr.f32.gmra.mrb[0].mxu0 %v833
        %v966 = vpop.f32.mrb[0].mxu0
        %v967 = vadd.f32 0.0, %v966
        %v968 = vpop.f32.mrb[0].mxu0
        %v969 = vadd.f32 0.0, %v968
        %970 = vdwg.mxu0
        %v971 = vadd.f32 %v824, %v967
        %v972 = vadd.f32 %v825, %v969
        %s973 = scalar_lea.vmem %s2, 40
        %v974 = vld [vmem:[%s973] sm:$0xff]
        %976 = vset.pattern.permute.xlu0 0
        %977 = vperm.xlu0 %976, %v974
        %v978 = vpop.permute.xlu0 %977
        %v980 = vmul.f32 %v978, %v243
        %v981 = vmul.f32 %v978, %v247
        %s982 = scalar_lea.vmem [#allocation5], 2560
        %v983 = vld [vmem:[%s982] sm:$0xff]
        %v984 = vld [vmem:[%s982 + $0x8] sm:$0xff]
        %v985 = vld [vmem:[%s982 + $0x10] sm:$0xff]
        %v986 = vld [vmem:[%s982 + $0x18] sm:$0xff]
        %v987 = vld [vmem:[%s982 + $0x20] sm:$0xff]
        %v988 = vld [vmem:[%s982 + $0x28] sm:$0xff]
        %v989 = vld [vmem:[%s982 + $0x30] sm:$0xff]
        %v990 = vld [vmem:[%s982 + $0x38] sm:$0xff]
        %v991 = vld [vmem:[%s982 + $0x40] sm:$0xff]
        %v992 = vld [vmem:[%s982 + $0x48] sm:$0xff]
        %v993 = vld [vmem:[%s982 + $0x50] sm:$0xff]
        %v994 = vld [vmem:[%s982 + $0x58] sm:$0xff]
        %v995 = vld [vmem:[%s982 + $0x60] sm:$0xff]
        %v996 = vld [vmem:[%s982 + $0x68] sm:$0xff]
        %v997 = vld [vmem:[%s982 + $0x70] sm:$0xff]
        %v998 = vld [vmem:[%s982 + $0x78] sm:$0xff]
        %v999 = vld [vmem:[%s982 + $0x80] sm:$0xff]
        %v1000 = vld [vmem:[%s982 + $0x88] sm:$0xff]
        %v1001 = vld [vmem:[%s982 + $0x90] sm:$0xff]
        %v1002 = vld [vmem:[%s982 + $0x98] sm:$0xff]
        %v1003 = vld [vmem:[%s982 + $0xa0] sm:$0xff]
        %v1004 = vld [vmem:[%s982 + $0xa8] sm:$0xff]
        %v1005 = vld [vmem:[%s982 + $0xb0] sm:$0xff]
        %v1006 = vld [vmem:[%s982 + $0xb8] sm:$0xff]
        %v1007 = vld [vmem:[%s982 + $0xc0] sm:$0xff]
        %v1008 = vld [vmem:[%s982 + $0xc8] sm:$0xff]
        %v1009 = vld [vmem:[%s982 + $0xd0] sm:$0xff]
        %v1010 = vld [vmem:[%s982 + $0xd8] sm:$0xff]
        %v1011 = vld [vmem:[%s982 + $0xe0] sm:$0xff]
        %v1012 = vld [vmem:[%s982 + $0xe8] sm:$0xff]
        %v1013 = vld [vmem:[%s982 + $0xf0] sm:$0xff]
        %v1014 = vld [vmem:[%s982 + $0xf8] sm:$0xff]
        %v1015 = vld [vmem:[%s982 + $0x100] sm:$0xff]
        %v1016 = vld [vmem:[%s982 + $0x108] sm:$0xff]
        %v1017 = vld [vmem:[%s982 + $0x110] sm:$0xff]
        %v1018 = vld [vmem:[%s982 + $0x118] sm:$0xff]
        %v1019 = vld [vmem:[%s982 + $0x120] sm:$0xff]
        %v1020 = vld [vmem:[%s982 + $0x128] sm:$0xff]
        %v1021 = vld [vmem:[%s982 + $0x130] sm:$0xff]
        %v1022 = vld [vmem:[%s982 + $0x138] sm:$0xff]
        %v1023 = vld [vmem:[%s982 + $0x140] sm:$0xff]
        %v1024 = vld [vmem:[%s982 + $0x148] sm:$0xff]
        %v1025 = vld [vmem:[%s982 + $0x150] sm:$0xff]
        %v1026 = vld [vmem:[%s982 + $0x158] sm:$0xff]
        %v1027 = vld [vmem:[%s982 + $0x160] sm:$0xff]
        %v1028 = vld [vmem:[%s982 + $0x168] sm:$0xff]
        %v1029 = vld [vmem:[%s982 + $0x170] sm:$0xff]
        %v1030 = vld [vmem:[%s982 + $0x178] sm:$0xff]
        %v1031 = vld [vmem:[%s982 + $0x180] sm:$0xff]
        %v1032 = vld [vmem:[%s982 + $0x188] sm:$0xff]
        %v1033 = vld [vmem:[%s982 + $0x190] sm:$0xff]
        %v1034 = vld [vmem:[%s982 + $0x198] sm:$0xff]
        %v1035 = vld [vmem:[%s982 + $0x1a0] sm:$0xff]
        %v1036 = vld [vmem:[%s982 + $0x1a8] sm:$0xff]
        %v1037 = vld [vmem:[%s982 + $0x1b0] sm:$0xff]
        %v1038 = vld [vmem:[%s982 + $0x1b8] sm:$0xff]
        %v1039 = vld [vmem:[%s982 + $0x1c0] sm:$0xff]
        %v1040 = vld [vmem:[%s982 + $0x1c8] sm:$0xff]
        %v1041 = vld [vmem:[%s982 + $0x1d0] sm:$0xff]
        %v1042 = vld [vmem:[%s982 + $0x1d8] sm:$0xff]
        %v1043 = vld [vmem:[%s982 + $0x1e0] sm:$0xff]
        %v1044 = vld [vmem:[%s982 + $0x1e8] sm:$0xff]
        %v1045 = vld [vmem:[%s982 + $0x1f0] sm:$0xff]
        %v1046 = vld [vmem:[%s982 + $0x1f8] sm:$0xff]
        %1047 = vmatprep.subr.mxu0 %v984
        %1048 = vmatpush1.msra.mxu0 %v983
        %1049 = vmatprep.subr.mxu0 %v986
        %1050 = vmatpush1.msra.mxu0 %v985
        %1051 = vmatprep.subr.mxu0 %v988
        %1052 = vmatpush1.msra.mxu0 %v987
        %1053 = vmatprep.subr.mxu0 %v990
        %1054 = vmatpush1.msra.mxu0 %v989
        %1055 = vmatprep.subr.mxu0 %v992
        %1056 = vmatpush1.msra.mxu0 %v991
        %1057 = vmatprep.subr.mxu0 %v994
        %1058 = vmatpush1.msra.mxu0 %v993
        %1059 = vmatprep.subr.mxu0 %v996
        %1060 = vmatpush1.msra.mxu0 %v995
        %1061 = vmatprep.subr.mxu0 %v998
        %1062 = vmatpush1.msra.mxu0 %v997
        %1063 = vmatprep.subr.mxu0 %v1000
        %1064 = vmatpush1.msra.mxu0 %v999
        %1065 = vmatprep.subr.mxu0 %v1002
        %1066 = vmatpush1.msra.mxu0 %v1001
        %1067 = vmatprep.subr.mxu0 %v1004
        %1068 = vmatpush1.msra.mxu0 %v1003
        %1069 = vmatprep.subr.mxu0 %v1006
        %1070 = vmatpush1.msra.mxu0 %v1005
        %1071 = vmatprep.subr.mxu0 %v1008
        %1072 = vmatpush1.msra.mxu0 %v1007
        %1073 = vmatprep.subr.mxu0 %v1010
        %1074 = vmatpush1.msra.mxu0 %v1009
        %1075 = vmatprep.subr.mxu0 %v1012
        %1076 = vmatpush1.msra.mxu0 %v1011
        %1077 = vmatprep.subr.mxu0 %v1014
        %1078 = vmatpush1.msra.mxu0 %v1013
        %1079 = vmatprep.subr.mxu0 %v1016
        %1080 = vmatpush1.msra.mxu0 %v1015
        %1081 = vmatprep.subr.mxu0 %v1018
        %1082 = vmatpush1.msra.mxu0 %v1017
        %1083 = vmatprep.subr.mxu0 %v1020
        %1084 = vmatpush1.msra.mxu0 %v1019
        %1085 = vmatprep.subr.mxu0 %v1022
        %1086 = vmatpush1.msra.mxu0 %v1021
        %1087 = vmatprep.subr.mxu0 %v1024
        %1088 = vmatpush1.msra.mxu0 %v1023
        %1089 = vmatprep.subr.mxu0 %v1026
        %1090 = vmatpush1.msra.mxu0 %v1025
        %1091 = vmatprep.subr.mxu0 %v1028
        %1092 = vmatpush1.msra.mxu0 %v1027
        %1093 = vmatprep.subr.mxu0 %v1030
        %1094 = vmatpush1.msra.mxu0 %v1029
        %1095 = vmatprep.subr.mxu0 %v1032
        %1096 = vmatpush1.msra.mxu0 %v1031
        %1097 = vmatprep.subr.mxu0 %v1034
        %1098 = vmatpush1.msra.mxu0 %v1033
        %1099 = vmatprep.subr.mxu0 %v1036
        %1100 = vmatpush1.msra.mxu0 %v1035
        %1101 = vmatprep.subr.mxu0 %v1038
        %1102 = vmatpush1.msra.mxu0 %v1037
        %1103 = vmatprep.subr.mxu0 %v1040
        %1104 = vmatpush1.msra.mxu0 %v1039
        %1105 = vmatprep.subr.mxu0 %v1042
        %1106 = vmatpush1.msra.mxu0 %v1041
        %1107 = vmatprep.subr.mxu0 %v1044
        %1108 = vmatpush1.msra.mxu0 %v1043
        %1109 = vmatprep.subr.mxu0 %v1046
        %1110 = vmatpush1.msra.mxu0 %v1045
        %1111 = vmatprep.mubr.f32.mxu0 %v981
        %1112 = vmatmul.mubr.f32.gmra.mrb[0].mxu0 %v980
        %v1113 = vpop.f32.mrb[0].mxu0
        %v1114 = vadd.f32 0.0, %v1113
        %v1115 = vpop.f32.mrb[0].mxu0
        %v1116 = vadd.f32 0.0, %v1115
        %1117 = vdwg.mxu0
        %v1118 = vadd.f32 %v971, %v1114
        %v1119 = vadd.f32 %v972, %v1116
        %s1120 = scalar_lea.vmem %s2, 48
        %v1121 = vld [vmem:[%s1120] sm:$0xff]
        %1123 = vset.pattern.permute.xlu0 0
        %1124 = vperm.xlu0 %1123, %v1121
        %v1125 = vpop.permute.xlu0 %1124
        %v1127 = vmul.f32 %v1125, %v243
        %v1128 = vmul.f32 %v1125, %v247
        %s1129 = scalar_lea.vmem [#allocation5], 3072
        %v1130 = vld [vmem:[%s1129] sm:$0xff]
        %v1131 = vld [vmem:[%s1129 + $0x8] sm:$0xff]
        %v1132 = vld [vmem:[%s1129 + $0x10] sm:$0xff]
        %v1133 = vld [vmem:[%s1129 + $0x18] sm:$0xff]
        %v1134 = vld [vmem:[%s1129 + $0x20] sm:$0xff]
        %v1135 = vld [vmem:[%s1129 + $0x28] sm:$0xff]
        %v1136 = vld [vmem:[%s1129 + $0x30] sm:$0xff]
        %v1137 = vld [vmem:[%s1129 + $0x38] sm:$0xff]
        %v1138 = vld [vmem:[%s1129 + $0x40] sm:$0xff]
        %v1139 = vld [vmem:[%s1129 + $0x48] sm:$0xff]
        %v1140 = vld [vmem:[%s1129 + $0x50] sm:$0xff]
        %v1141 = vld [vmem:[%s1129 + $0x58] sm:$0xff]
        %v1142 = vld [vmem:[%s1129 + $0x60] sm:$0xff]
        %v1143 = vld [vmem:[%s1129 + $0x68] sm:$0xff]
        %v1144 = vld [vmem:[%s1129 + $0x70] sm:$0xff]
        %v1145 = vld [vmem:[%s1129 + $0x78] sm:$0xff]
        %v1146 = vld [vmem:[%s1129 + $0x80] sm:$0xff]
        %v1147 = vld [vmem:[%s1129 + $0x88] sm:$0xff]
        %v1148 = vld [vmem:[%s1129 + $0x90] sm:$0xff]
        %v1149 = vld [vmem:[%s1129 + $0x98] sm:$0xff]
        %v1150 = vld [vmem:[%s1129 + $0xa0] sm:$0xff]
        %v1151 = vld [vmem:[%s1129 + $0xa8] sm:$0xff]
        %v1152 = vld [vmem:[%s1129 + $0xb0] sm:$0xff]
        %v1153 = vld [vmem:[%s1129 + $0xb8] sm:$0xff]
        %v1154 = vld [vmem:[%s1129 + $0xc0] sm:$0xff]
        %v1155 = vld [vmem:[%s1129 + $0xc8] sm:$0xff]
        %v1156 = vld [vmem:[%s1129 + $0xd0] sm:$0xff]
        %v1157 = vld [vmem:[%s1129 + $0xd8] sm:$0xff]
        %v1158 = vld [vmem:[%s1129 + $0xe0] sm:$0xff]
        %v1159 = vld [vmem:[%s1129 + $0xe8] sm:$0xff]
        %v1160 = vld [vmem:[%s1129 + $0xf0] sm:$0xff]
        %v1161 = vld [vmem:[%s1129 + $0xf8] sm:$0xff]
        %v1162 = vld [vmem:[%s1129 + $0x100] sm:$0xff]
        %v1163 = vld [vmem:[%s1129 + $0x108] sm:$0xff]
        %v1164 = vld [vmem:[%s1129 + $0x110] sm:$0xff]
        %v1165 = vld [vmem:[%s1129 + $0x118] sm:$0xff]
        %v1166 = vld [vmem:[%s1129 + $0x120] sm:$0xff]
        %v1167 = vld [vmem:[%s1129 + $0x128] sm:$0xff]
        %v1168 = vld [vmem:[%s1129 + $0x130] sm:$0xff]
        %v1169 = vld [vmem:[%s1129 + $0x138] sm:$0xff]
        %v1170 = vld [vmem:[%s1129 + $0x140] sm:$0xff]
        %v1171 = vld [vmem:[%s1129 + $0x148] sm:$0xff]
        %v1172 = vld [vmem:[%s1129 + $0x150] sm:$0xff]
        %v1173 = vld [vmem:[%s1129 + $0x158] sm:$0xff]
        %v1174 = vld [vmem:[%s1129 + $0x160] sm:$0xff]
        %v1175 = vld [vmem:[%s1129 + $0x168] sm:$0xff]
        %v1176 = vld [vmem:[%s1129 + $0x170] sm:$0xff]
        %v1177 = vld [vmem:[%s1129 + $0x178] sm:$0xff]
        %v1178 = vld [vmem:[%s1129 + $0x180] sm:$0xff]
        %v1179 = vld [vmem:[%s1129 + $0x188] sm:$0xff]
        %v1180 = vld [vmem:[%s1129 + $0x190] sm:$0xff]
        %v1181 = vld [vmem:[%s1129 + $0x198] sm:$0xff]
        %v1182 = vld [vmem:[%s1129 + $0x1a0] sm:$0xff]
        %v1183 = vld [vmem:[%s1129 + $0x1a8] sm:$0xff]
        %v1184 = vld [vmem:[%s1129 + $0x1b0] sm:$0xff]
        %v1185 = vld [vmem:[%s1129 + $0x1b8] sm:$0xff]
        %v1186 = vld [vmem:[%s1129 + $0x1c0] sm:$0xff]
        %v1187 = vld [vmem:[%s1129 + $0x1c8] sm:$0xff]
        %v1188 = vld [vmem:[%s1129 + $0x1d0] sm:$0xff]
        %v1189 = vld [vmem:[%s1129 + $0x1d8] sm:$0xff]
        %v1190 = vld [vmem:[%s1129 + $0x1e0] sm:$0xff]
        %v1191 = vld [vmem:[%s1129 + $0x1e8] sm:$0xff]
        %v1192 = vld [vmem:[%s1129 + $0x1f0] sm:$0xff]
        %v1193 = vld [vmem:[%s1129 + $0x1f8] sm:$0xff]
        %1194 = vmatprep.subr.mxu0 %v1131
        %1195 = vmatpush1.msra.mxu0 %v1130
        %1196 = vmatprep.subr.mxu0 %v1133
        %1197 = vmatpush1.msra.mxu0 %v1132
        %1198 = vmatprep.subr.mxu0 %v1135
        %1199 = vmatpush1.msra.mxu0 %v1134
        %1200 = vmatprep.subr.mxu0 %v1137
        %1201 = vmatpush1.msra.mxu0 %v1136
        %1202 = vmatprep.subr.mxu0 %v1139
        %1203 = vmatpush1.msra.mxu0 %v1138
        %1204 = vmatprep.subr.mxu0 %v1141
        %1205 = vmatpush1.msra.mxu0 %v1140
        %1206 = vmatprep.subr.mxu0 %v1143
        %1207 = vmatpush1.msra.mxu0 %v1142
        %1208 = vmatprep.subr.mxu0 %v1145
        %1209 = vmatpush1.msra.mxu0 %v1144
        %1210 = vmatprep.subr.mxu0 %v1147
        %1211 = vmatpush1.msra.mxu0 %v1146
        %1212 = vmatprep.subr.mxu0 %v1149
        %1213 = vmatpush1.msra.mxu0 %v1148
        %1214 = vmatprep.subr.mxu0 %v1151
        %1215 = vmatpush1.msra.mxu0 %v1150
        %1216 = vmatprep.subr.mxu0 %v1153
        %1217 = vmatpush1.msra.mxu0 %v1152
        %1218 = vmatprep.subr.mxu0 %v1155
        %1219 = vmatpush1.msra.mxu0 %v1154
        %1220 = vmatprep.subr.mxu0 %v1157
        %1221 = vmatpush1.msra.mxu0 %v1156
        %1222 = vmatprep.subr.mxu0 %v1159
        %1223 = vmatpush1.msra.mxu0 %v1158
        %1224 = vmatprep.subr.mxu0 %v1161
        %1225 = vmatpush1.msra.mxu0 %v1160
        %1226 = vmatprep.subr.mxu0 %v1163
        %1227 = vmatpush1.msra.mxu0 %v1162
        %1228 = vmatprep.subr.mxu0 %v1165
        %1229 = vmatpush1.msra.mxu0 %v1164
        %1230 = vmatprep.subr.mxu0 %v1167
        %1231 = vmatpush1.msra.mxu0 %v1166
        %1232 = vmatprep.subr.mxu0 %v1169
        %1233 = vmatpush1.msra.mxu0 %v1168
        %1234 = vmatprep.subr.mxu0 %v1171
        %1235 = vmatpush1.msra.mxu0 %v1170
        %1236 = vmatprep.subr.mxu0 %v1173
        %1237 = vmatpush1.msra.mxu0 %v1172
        %1238 = vmatprep.subr.mxu0 %v1175
        %1239 = vmatpush1.msra.mxu0 %v1174
        %1240 = vmatprep.subr.mxu0 %v1177
        %1241 = vmatpush1.msra.mxu0 %v1176
        %1242 = vmatprep.subr.mxu0 %v1179
        %1243 = vmatpush1.msra.mxu0 %v1178
        %1244 = vmatprep.subr.mxu0 %v1181
        %1245 = vmatpush1.msra.mxu0 %v1180
        %1246 = vmatprep.subr.mxu0 %v1183
        %1247 = vmatpush1.msra.mxu0 %v1182
        %1248 = vmatprep.subr.mxu0 %v1185
        %1249 = vmatpush1.msra.mxu0 %v1184
        %1250 = vmatprep.subr.mxu0 %v1187
        %1251 = vmatpush1.msra.mxu0 %v1186
        %1252 = vmatprep.subr.mxu0 %v1189
        %1253 = vmatpush1.msra.mxu0 %v1188
        %1254 = vmatprep.subr.mxu0 %v1191
        %1255 = vmatpush1.msra.mxu0 %v1190
        %1256 = vmatprep.subr.mxu0 %v1193
        %1257 = vmatpush1.msra.mxu0 %v1192
        %1258 = vmatprep.mubr.f32.mxu0 %v1128
        %1259 = vmatmul.mubr.f32.gmra.mrb[0].mxu0 %v1127
        %v1260 = vpop.f32.mrb[0].mxu0
        %v1261 = vadd.f32 0.0, %v1260
        %v1262 = vpop.f32.mrb[0].mxu0
        %v1263 = vadd.f32 0.0, %v1262
        %1264 = vdwg.mxu0
        %v1265 = vadd.f32 %v1118, %v1261
        %v1266 = vadd.f32 %v1119, %v1263
        %s1267 = scalar_lea.vmem %s2, 56
        %v1268 = vld [vmem:[%s1267] sm:$0xff]
        %1270 = vset.pattern.permute.xlu0 0
        %1271 = vperm.xlu0 %1270, %v1268
        %v1272 = vpop.permute.xlu0 %1271
        %v1274 = vmul.f32 %v1272, %v243
        %v1275 = vmul.f32 %v1272, %v247
        %s1276 = scalar_lea.vmem [#allocation5], 3584
        %v1277 = vld [vmem:[%s1276] sm:$0xff]
        %v1278 = vld [vmem:[%s1276 + $0x8] sm:$0xff]
        %v1279 = vld [vmem:[%s1276 + $0x10] sm:$0xff]
        %v1280 = vld [vmem:[%s1276 + $0x18] sm:$0xff]
        %v1281 = vld [vmem:[%s1276 + $0x20] sm:$0xff]
        %v1282 = vld [vmem:[%s1276 + $0x28] sm:$0xff]
        %v1283 = vld [vmem:[%s1276 + $0x30] sm:$0xff]
        %v1284 = vld [vmem:[%s1276 + $0x38] sm:$0xff]
        %v1285 = vld [vmem:[%s1276 + $0x40] sm:$0xff]
        %v1286 = vld [vmem:[%s1276 + $0x48] sm:$0xff]
        %v1287 = vld [vmem:[%s1276 + $0x50] sm:$0xff]
        %v1288 = vld [vmem:[%s1276 + $0x58] sm:$0xff]
        %v1289 = vld [vmem:[%s1276 + $0x60] sm:$0xff]
        %v1290 = vld [vmem:[%s1276 + $0x68] sm:$0xff]
        %v1291 = vld [vmem:[%s1276 + $0x70] sm:$0xff]
        %v1292 = vld [vmem:[%s1276 + $0x78] sm:$0xff]
        %v1293 = vld [vmem:[%s1276 + $0x80] sm:$0xff]
        %v1294 = vld [vmem:[%s1276 + $0x88] sm:$0xff]
        %v1295 = vld [vmem:[%s1276 + $0x90] sm:$0xff]
        %v1296 = vld [vmem:[%s1276 + $0x98] sm:$0xff]
        %v1297 = vld [vmem:[%s1276 + $0xa0] sm:$0xff]
        %v1298 = vld [vmem:[%s1276 + $0xa8] sm:$0xff]
        %v1299 = vld [vmem:[%s1276 + $0xb0] sm:$0xff]
        %v1300 = vld [vmem:[%s1276 + $0xb8] sm:$0xff]
        %v1301 = vld [vmem:[%s1276 + $0xc0] sm:$0xff]
        %v1302 = vld [vmem:[%s1276 + $0xc8] sm:$0xff]
        %v1303 = vld [vmem:[%s1276 + $0xd0] sm:$0xff]
        %v1304 = vld [vmem:[%s1276 + $0xd8] sm:$0xff]
        %v1305 = vld [vmem:[%s1276 + $0xe0] sm:$0xff]
        %v1306 = vld [vmem:[%s1276 + $0xe8] sm:$0xff]
        %v1307 = vld [vmem:[%s1276 + $0xf0] sm:$0xff]
        %v1308 = vld [vmem:[%s1276 + $0xf8] sm:$0xff]
        %v1309 = vld [vmem:[%s1276 + $0x100] sm:$0xff]
        %v1310 = vld [vmem:[%s1276 + $0x108] sm:$0xff]
        %v1311 = vld [vmem:[%s1276 + $0x110] sm:$0xff]
        %v1312 = vld [vmem:[%s1276 + $0x118] sm:$0xff]
        %v1313 = vld [vmem:[%s1276 + $0x120] sm:$0xff]
        %v1314 = vld [vmem:[%s1276 + $0x128] sm:$0xff]
        %v1315 = vld [vmem:[%s1276 + $0x130] sm:$0xff]
        %v1316 = vld [vmem:[%s1276 + $0x138] sm:$0xff]
        %v1317 = vld [vmem:[%s1276 + $0x140] sm:$0xff]
        %v1318 = vld [vmem:[%s1276 + $0x148] sm:$0xff]
        %v1319 = vld [vmem:[%s1276 + $0x150] sm:$0xff]
        %v1320 = vld [vmem:[%s1276 + $0x158] sm:$0xff]
        %v1321 = vld [vmem:[%s1276 + $0x160] sm:$0xff]
        %v1322 = vld [vmem:[%s1276 + $0x168] sm:$0xff]
        %v1323 = vld [vmem:[%s1276 + $0x170] sm:$0xff]
        %v1324 = vld [vmem:[%s1276 + $0x178] sm:$0xff]
        %v1325 = vld [vmem:[%s1276 + $0x180] sm:$0xff]
        %v1326 = vld [vmem:[%s1276 + $0x188] sm:$0xff]
        %v1327 = vld [vmem:[%s1276 + $0x190] sm:$0xff]
        %v1328 = vld [vmem:[%s1276 + $0x198] sm:$0xff]
        %v1329 = vld [vmem:[%s1276 + $0x1a0] sm:$0xff]
        %v1330 = vld [vmem:[%s1276 + $0x1a8] sm:$0xff]
        %v1331 = vld [vmem:[%s1276 + $0x1b0] sm:$0xff]
        %v1332 = vld [vmem:[%s1276 + $0x1b8] sm:$0xff]
        %v1333 = vld [vmem:[%s1276 + $0x1c0] sm:$0xff]
        %v1334 = vld [vmem:[%s1276 + $0x1c8] sm:$0xff]
        %v1335 = vld [vmem:[%s1276 + $0x1d0] sm:$0xff]
        %v1336 = vld [vmem:[%s1276 + $0x1d8] sm:$0xff]
        %v1337 = vld [vmem:[%s1276 + $0x1e0] sm:$0xff]
        %v1338 = vld [vmem:[%s1276 + $0x1e8] sm:$0xff]
        %v1339 = vld [vmem:[%s1276 + $0x1f0] sm:$0xff]
        %v1340 = vld [vmem:[%s1276 + $0x1f8] sm:$0xff]
        %1341 = vmatprep.subr.mxu0 %v1278
        %1342 = vmatpush1.msra.mxu0 %v1277
        %1343 = vmatprep.subr.mxu0 %v1280
        %1344 = vmatpush1.msra.mxu0 %v1279
        %1345 = vmatprep.subr.mxu0 %v1282
        %1346 = vmatpush1.msra.mxu0 %v1281
        %1347 = vmatprep.subr.mxu0 %v1284
        %1348 = vmatpush1.msra.mxu0 %v1283
        %1349 = vmatprep.subr.mxu0 %v1286
        %1350 = vmatpush1.msra.mxu0 %v1285
        %1351 = vmatprep.subr.mxu0 %v1288
        %1352 = vmatpush1.msra.mxu0 %v1287
        %1353 = vmatprep.subr.mxu0 %v1290
        %1354 = vmatpush1.msra.mxu0 %v1289
        %1355 = vmatprep.subr.mxu0 %v1292
        %1356 = vmatpush1.msra.mxu0 %v1291
        %1357 = vmatprep.subr.mxu0 %v1294
        %1358 = vmatpush1.msra.mxu0 %v1293
        %1359 = vmatprep.subr.mxu0 %v1296
        %1360 = vmatpush1.msra.mxu0 %v1295
        %1361 = vmatprep.subr.mxu0 %v1298
        %1362 = vmatpush1.msra.mxu0 %v1297
        %1363 = vmatprep.subr.mxu0 %v1300
        %1364 = vmatpush1.msra.mxu0 %v1299
        %1365 = vmatprep.subr.mxu0 %v1302
        %1366 = vmatpush1.msra.mxu0 %v1301
        %1367 = vmatprep.subr.mxu0 %v1304
        %1368 = vmatpush1.msra.mxu0 %v1303
        %1369 = vmatprep.subr.mxu0 %v1306
        %1370 = vmatpush1.msra.mxu0 %v1305
        %1371 = vmatprep.subr.mxu0 %v1308
        %1372 = vmatpush1.msra.mxu0 %v1307
        %1373 = vmatprep.subr.mxu0 %v1310
        %1374 = vmatpush1.msra.mxu0 %v1309
        %1375 = vmatprep.subr.mxu0 %v1312
        %1376 = vmatpush1.msra.mxu0 %v1311
        %1377 = vmatprep.subr.mxu0 %v1314
        %1378 = vmatpush1.msra.mxu0 %v1313
        %1379 = vmatprep.subr.mxu0 %v1316
        %1380 = vmatpush1.msra.mxu0 %v1315
        %1381 = vmatprep.subr.mxu0 %v1318
        %1382 = vmatpush1.msra.mxu0 %v1317
        %1383 = vmatprep.subr.mxu0 %v1320
        %1384 = vmatpush1.msra.mxu0 %v1319
        %1385 = vmatprep.subr.mxu0 %v1322
        %1386 = vmatpush1.msra.mxu0 %v1321
        %1387 = vmatprep.subr.mxu0 %v1324
        %1388 = vmatpush1.msra.mxu0 %v1323
        %1389 = vmatprep.subr.mxu0 %v1326
        %1390 = vmatpush1.msra.mxu0 %v1325
        %1391 = vmatprep.subr.mxu0 %v1328
        %1392 = vmatpush1.msra.mxu0 %v1327
        %1393 = vmatprep.subr.mxu0 %v1330
        %1394 = vmatpush1.msra.mxu0 %v1329
        %1395 = vmatprep.subr.mxu0 %v1332
        %1396 = vmatpush1.msra.mxu0 %v1331
        %1397 = vmatprep.subr.mxu0 %v1334
        %1398 = vmatpush1.msra.mxu0 %v1333
        %1399 = vmatprep.subr.mxu0 %v1336
        %1400 = vmatpush1.msra.mxu0 %v1335
        %1401 = vmatprep.subr.mxu0 %v1338
        %1402 = vmatpush1.msra.mxu0 %v1337
        %1403 = vmatprep.subr.mxu0 %v1340
        %1404 = vmatpush1.msra.mxu0 %v1339
        %1405 = vmatprep.mubr.f32.mxu0 %v1275
        %1406 = vmatmul.mubr.f32.gmra.mrb[0].mxu0 %v1274
        %v1407 = vpop.f32.mrb[0].mxu0
        %v1408 = vadd.f32 0.0, %v1407
        %v1409 = vpop.f32.mrb[0].mxu0
        %v1410 = vadd.f32 0.0, %v1409
        %1411 = vdwg.mxu0
        %v1412 = vadd.f32 %v1265, %v1408
        %v1413 = vadd.f32 %v1266, %v1410
        %s1414 = scalar_lea.vmem %s2, 64
        %v1415 = vld [vmem:[%s1414] sm:$0xff]
        %1417 = vset.pattern.permute.xlu0 0
        %1418 = vperm.xlu0 %1417, %v1415
        %v1419 = vpop.permute.xlu0 %1418
        %v1421 = vmul.f32 %v1419, %v243
        %v1422 = vmul.f32 %v1419, %v247
        %s1423 = scalar_lea.vmem [#allocation5], 4096
        %v1424 = vld [vmem:[%s1423] sm:$0xff]
        %v1425 = vld [vmem:[%s1423 + $0x8] sm:$0xff]
        %v1426 = vld [vmem:[%s1423 + $0x10] sm:$0xff]
        %v1427 = vld [vmem:[%s1423 + $0x18] sm:$0xff]
        %v1428 = vld [vmem:[%s1423 + $0x20] sm:$0xff]
        %v1429 = vld [vmem:[%s1423 + $0x28] sm:$0xff]
        %v1430 = vld [vmem:[%s1423 + $0x30] sm:$0xff]
        %v1431 = vld [vmem:[%s1423 + $0x38] sm:$0xff]
        %v1432 = vld [vmem:[%s1423 + $0x40] sm:$0xff]
        %v1433 = vld [vmem:[%s1423 + $0x48] sm:$0xff]
        %v1434 = vld [vmem:[%s1423 + $0x50] sm:$0xff]
        %v1435 = vld [vmem:[%s1423 + $0x58] sm:$0xff]
        %v1436 = vld [vmem:[%s1423 + $0x60] sm:$0xff]
        %v1437 = vld [vmem:[%s1423 + $0x68] sm:$0xff]
        %v1438 = vld [vmem:[%s1423 + $0x70] sm:$0xff]
        %v1439 = vld [vmem:[%s1423 + $0x78] sm:$0xff]
        %v1440 = vld [vmem:[%s1423 + $0x80] sm:$0xff]
        %v1441 = vld [vmem:[%s1423 + $0x88] sm:$0xff]
        %v1442 = vld [vmem:[%s1423 + $0x90] sm:$0xff]
        %v1443 = vld [vmem:[%s1423 + $0x98] sm:$0xff]
        %v1444 = vld [vmem:[%s1423 + $0xa0] sm:$0xff]
        %v1445 = vld [vmem:[%s1423 + $0xa8] sm:$0xff]
        %v1446 = vld [vmem:[%s1423 + $0xb0] sm:$0xff]
        %v1447 = vld [vmem:[%s1423 + $0xb8] sm:$0xff]
        %v1448 = vld [vmem:[%s1423 + $0xc0] sm:$0xff]
        %v1449 = vld [vmem:[%s1423 + $0xc8] sm:$0xff]
        %v1450 = vld [vmem:[%s1423 + $0xd0] sm:$0xff]
        %v1451 = vld [vmem:[%s1423 + $0xd8] sm:$0xff]
        %v1452 = vld [vmem:[%s1423 + $0xe0] sm:$0xff]
        %v1453 = vld [vmem:[%s1423 + $0xe8] sm:$0xff]
        %v1454 = vld [vmem:[%s1423 + $0xf0] sm:$0xff]
        %v1455 = vld [vmem:[%s1423 + $0xf8] sm:$0xff]
        %v1456 = vld [vmem:[%s1423 + $0x100] sm:$0xff]
        %v1457 = vld [vmem:[%s1423 + $0x108] sm:$0xff]
        %v1458 = vld [vmem:[%s1423 + $0x110] sm:$0xff]
        %v1459 = vld [vmem:[%s1423 + $0x118] sm:$0xff]
        %v1460 = vld [vmem:[%s1423 + $0x120] sm:$0xff]
        %v1461 = vld [vmem:[%s1423 + $0x128] sm:$0xff]
        %v1462 = vld [vmem:[%s1423 + $0x130] sm:$0xff]
        %v1463 = vld [vmem:[%s1423 + $0x138] sm:$0xff]
        %v1464 = vld [vmem:[%s1423 + $0x140] sm:$0xff]
        %v1465 = vld [vmem:[%s1423 + $0x148] sm:$0xff]
        %v1466 = vld [vmem:[%s1423 + $0x150] sm:$0xff]
        %v1467 = vld [vmem:[%s1423 + $0x158] sm:$0xff]
        %v1468 = vld [vmem:[%s1423 + $0x160] sm:$0xff]
        %v1469 = vld [vmem:[%s1423 + $0x168] sm:$0xff]
        %v1470 = vld [vmem:[%s1423 + $0x170] sm:$0xff]
        %v1471 = vld [vmem:[%s1423 + $0x178] sm:$0xff]
        %v1472 = vld [vmem:[%s1423 + $0x180] sm:$0xff]
        %v1473 = vld [vmem:[%s1423 + $0x188] sm:$0xff]
        %v1474 = vld [vmem:[%s1423 + $0x190] sm:$0xff]
        %v1475 = vld [vmem:[%s1423 + $0x198] sm:$0xff]
        %v1476 = vld [vmem:[%s1423 + $0x1a0] sm:$0xff]
        %v1477 = vld [vmem:[%s1423 + $0x1a8] sm:$0xff]
        %v1478 = vld [vmem:[%s1423 + $0x1b0] sm:$0xff]
        %v1479 = vld [vmem:[%s1423 + $0x1b8] sm:$0xff]
        %v1480 = vld [vmem:[%s1423 + $0x1c0] sm:$0xff]
        %v1481 = vld [vmem:[%s1423 + $0x1c8] sm:$0xff]
        %v1482 = vld [vmem:[%s1423 + $0x1d0] sm:$0xff]
        %v1483 = vld [vmem:[%s1423 + $0x1d8] sm:$0xff]
        %v1484 = vld [vmem:[%s1423 + $0x1e0] sm:$0xff]
        %v1485 = vld [vmem:[%s1423 + $0x1e8] sm:$0xff]
        %v1486 = vld [vmem:[%s1423 + $0x1f0] sm:$0xff]
        %v1487 = vld [vmem:[%s1423 + $0x1f8] sm:$0xff]
        %1488 = vmatprep.subr.mxu0 %v1425
        %1489 = vmatpush1.msra.mxu0 %v1424
        %1490 = vmatprep.subr.mxu0 %v1427
        %1491 = vmatpush1.msra.mxu0 %v1426
        %1492 = vmatprep.subr.mxu0 %v1429
        %1493 = vmatpush1.msra.mxu0 %v1428
        %1494 = vmatprep.subr.mxu0 %v1431
        %1495 = vmatpush1.msra.mxu0 %v1430
        %1496 = vmatprep.subr.mxu0 %v1433
        %1497 = vmatpush1.msra.mxu0 %v1432
        %1498 = vmatprep.subr.mxu0 %v1435
        %1499 = vmatpush1.msra.mxu0 %v1434
        %1500 = vmatprep.subr.mxu0 %v1437
        %1501 = vmatpush1.msra.mxu0 %v1436
        %1502 = vmatprep.subr.mxu0 %v1439
        %1503 = vmatpush1.msra.mxu0 %v1438
        %1504 = vmatprep.subr.mxu0 %v1441
        %1505 = vmatpush1.msra.mxu0 %v1440
        %1506 = vmatprep.subr.mxu0 %v1443
        %1507 = vmatpush1.msra.mxu0 %v1442
        %1508 = vmatprep.subr.mxu0 %v1445
        %1509 = vmatpush1.msra.mxu0 %v1444
        %1510 = vmatprep.subr.mxu0 %v1447
        %1511 = vmatpush1.msra.mxu0 %v1446
        %1512 = vmatprep.subr.mxu0 %v1449
        %1513 = vmatpush1.msra.mxu0 %v1448
        %1514 = vmatprep.subr.mxu0 %v1451
        %1515 = vmatpush1.msra.mxu0 %v1450
        %1516 = vmatprep.subr.mxu0 %v1453
        %1517 = vmatpush1.msra.mxu0 %v1452
        %1518 = vmatprep.subr.mxu0 %v1455
        %1519 = vmatpush1.msra.mxu0 %v1454
        %1520 = vmatprep.subr.mxu0 %v1457
        %1521 = vmatpush1.msra.mxu0 %v1456
        %1522 = vmatprep.subr.mxu0 %v1459
        %1523 = vmatpush1.msra.mxu0 %v1458
        %1524 = vmatprep.subr.mxu0 %v1461
        %1525 = vmatpush1.msra.mxu0 %v1460
        %1526 = vmatprep.subr.mxu0 %v1463
        %1527 = vmatpush1.msra.mxu0 %v1462
        %1528 = vmatprep.subr.mxu0 %v1465
        %1529 = vmatpush1.msra.mxu0 %v1464
        %1530 = vmatprep.subr.mxu0 %v1467
        %1531 = vmatpush1.msra.mxu0 %v1466
        %1532 = vmatprep.subr.mxu0 %v1469
        %1533 = vmatpush1.msra.mxu0 %v1468
        %1534 = vmatprep.subr.mxu0 %v1471
        %1535 = vmatpush1.msra.mxu0 %v1470
        %1536 = vmatprep.subr.mxu0 %v1473
        %1537 = vmatpush1.msra.mxu0 %v1472
        %1538 = vmatprep.subr.mxu0 %v1475
        %1539 = vmatpush1.msra.mxu0 %v1474
        %1540 = vmatprep.subr.mxu0 %v1477
        %1541 = vmatpush1.msra.mxu0 %v1476
        %1542 = vmatprep.subr.mxu0 %v1479
        %1543 = vmatpush1.msra.mxu0 %v1478
        %1544 = vmatprep.subr.mxu0 %v1481
        %1545 = vmatpush1.msra.mxu0 %v1480
        %1546 = vmatprep.subr.mxu0 %v1483
        %1547 = vmatpush1.msra.mxu0 %v1482
        %1548 = vmatprep.subr.mxu0 %v1485
        %1549 = vmatpush1.msra.mxu0 %v1484
        %1550 = vmatprep.subr.mxu0 %v1487
        %1551 = vmatpush1.msra.mxu0 %v1486
        %1552 = vmatprep.mubr.f32.mxu0 %v1422
        %1553 = vmatmul.mubr.f32.gmra.mrb[0].mxu0 %v1421
        %v1554 = vpop.f32.mrb[0].mxu0
        %v1555 = vadd.f32 0.0, %v1554
        %v1556 = vpop.f32.mrb[0].mxu0
        %v1557 = vadd.f32 0.0, %v1556
        %1558 = vdwg.mxu0
        %v1559 = vadd.f32 %v1412, %v1555
        %v1560 = vadd.f32 %v1413, %v1557
        %s1561 = scalar_lea.vmem %s202, 2 [#allocation2]
        %v1562 = vld [vmem:[%s1561] sm:$0x3]
        %s1563 = scalar_lea.vmem %s2, 72
        %v1564 = vld [vmem:[%s1563] sm:$0xff]
        %1566 = vset.pattern.permute.xlu0 0
        %1567 = vperm.xlu0 %1566, %v1564
        %v1568 = vpop.permute.xlu0 %1567
        %v1571 = vlaneseq
        %v1572 = vshrl.u32 %v1571, 7
        %v1573 = vsub.s32 0, %v1572
        %v1574 = vrot.slane %v1562, %v1573
        %v1575 = vlaneseq
        %v1576 = vshrl.u32 %v1575, 7
        %v1577 = vsub.s32 1, %v1576
        %v1578 = vrot.slane %v1562, %v1577
        %v1581 = vmul.f32 %v1568, %v1574
        %v1582 = vmul.f32 %v1568, %v1578
        %1583 = vmatprep.subr.mxu0 %v253
        %1584 = vmatpush1.msra.mxu0 %v252
        %1585 = vmatprep.subr.mxu0 %v255
        %1586 = vmatpush1.msra.mxu0 %v254
        %1587 = vmatprep.subr.mxu0 %v257
        %1588 = vmatpush1.msra.mxu0 %v256
        %1589 = vmatprep.subr.mxu0 %v259
        %1590 = vmatpush1.msra.mxu0 %v258
        %1591 = vmatprep.subr.mxu0 %v261
        %1592 = vmatpush1.msra.mxu0 %v260
        %1593 = vmatprep.subr.mxu0 %v263
        %1594 = vmatpush1.msra.mxu0 %v262
        %1595 = vmatprep.subr.mxu0 %v265
        %1596 = vmatpush1.msra.mxu0 %v264
        %1597 = vmatprep.subr.mxu0 %v267
        %1598 = vmatpush1.msra.mxu0 %v266
        %1599 = vmatprep.subr.mxu0 %v269
        %1600 = vmatpush1.msra.mxu0 %v268
        %1601 = vmatprep.subr.mxu0 %v271
        %1602 = vmatpush1.msra.mxu0 %v270
        %1603 = vmatprep.subr.mxu0 %v273
        %1604 = vmatpush1.msra.mxu0 %v272
        %1605 = vmatprep.subr.mxu0 %v275
        %1606 = vmatpush1.msra.mxu0 %v274
        %1607 = vmatprep.subr.mxu0 %v277
        %1608 = vmatpush1.msra.mxu0 %v276
        %1609 = vmatprep.subr.mxu0 %v279
        %1610 = vmatpush1.msra.mxu0 %v278
        %1611 = vmatprep.subr.mxu0 %v281
        %1612 = vmatpush1.msra.mxu0 %v280
        %1613 = vmatprep.subr.mxu0 %v283
        %1614 = vmatpush1.msra.mxu0 %v282
        %1615 = vmatprep.subr.mxu0 %v285
        %1616 = vmatpush1.msra.mxu0 %v284
        %1617 = vmatprep.subr.mxu0 %v287
        %1618 = vmatpush1.msra.mxu0 %v286
        %1619 = vmatprep.subr.mxu0 %v289
        %1620 = vmatpush1.msra.mxu0 %v288
        %1621 = vmatprep.subr.mxu0 %v291
        %1622 = vmatpush1.msra.mxu0 %v290
        %1623 = vmatprep.subr.mxu0 %v293
        %1624 = vmatpush1.msra.mxu0 %v292
        %1625 = vmatprep.subr.mxu0 %v295
        %1626 = vmatpush1.msra.mxu0 %v294
        %1627 = vmatprep.subr.mxu0 %v297
        %1628 = vmatpush1.msra.mxu0 %v296
        %1629 = vmatprep.subr.mxu0 %v299
        %1630 = vmatpush1.msra.mxu0 %v298
        %1631 = vmatprep.subr.mxu0 %v301
        %1632 = vmatpush1.msra.mxu0 %v300
        %1633 = vmatprep.subr.mxu0 %v303
        %1634 = vmatpush1.msra.mxu0 %v302
        %1635 = vmatprep.subr.mxu0 %v305
        %1636 = vmatpush1.msra.mxu0 %v304
        %1637 = vmatprep.subr.mxu0 %v307
        %1638 = vmatpush1.msra.mxu0 %v306
        %1639 = vmatprep.subr.mxu0 %v309
        %1640 = vmatpush1.msra.mxu0 %v308
        %1641 = vmatprep.subr.mxu0 %v311
        %1642 = vmatpush1.msra.mxu0 %v310
        %1643 = vmatprep.subr.mxu0 %v313
        %1644 = vmatpush1.msra.mxu0 %v312
        %1645 = vmatprep.subr.mxu0 %v315
        %1646 = vmatpush1.msra.mxu0 %v314
        %1647 = vmatprep.mubr.f32.mxu0 %v1582
        %1648 = vmatmul.mubr.f32.gmra.mrb[0].mxu0 %v1581
        %v1649 = vpop.f32.mrb[0].mxu0
        %v1650 = vadd.f32 0.0, %v1649
        %v1651 = vpop.f32.mrb[0].mxu0
        %v1652 = vadd.f32 0.0, %v1651
        %1653 = vdwg.mxu0
        %v1654 = vadd.f32 %v1559, %v1650
        %v1655 = vadd.f32 %v1560, %v1652
        %s1656 = scalar_lea.vmem %s2, 80
        %v1657 = vld [vmem:[%s1656] sm:$0xff]
        %1659 = vset.pattern.permute.xlu0 0
        %1660 = vperm.xlu0 %1659, %v1657
        %v1661 = vpop.permute.xlu0 %1660
        %v1663 = vmul.f32 %v1661, %v1574
        %v1664 = vmul.f32 %v1661, %v1578
        %1665 = vmatprep.subr.mxu0 %v327
        %1666 = vmatpush1.msra.mxu0 %v326
        %1667 = vmatprep.subr.mxu0 %v329
        %1668 = vmatpush1.msra.mxu0 %v328
        %1669 = vmatprep.subr.mxu0 %v331
        %1670 = vmatpush1.msra.mxu0 %v330
        %1671 = vmatprep.subr.mxu0 %v333
        %1672 = vmatpush1.msra.mxu0 %v332
        %1673 = vmatprep.subr.mxu0 %v335
        %1674 = vmatpush1.msra.mxu0 %v334
        %1675 = vmatprep.subr.mxu0 %v337
        %1676 = vmatpush1.msra.mxu0 %v336
        %1677 = vmatprep.subr.mxu0 %v339
        %1678 = vmatpush1.msra.mxu0 %v338
        %1679 = vmatprep.subr.mxu0 %v341
        %1680 = vmatpush1.msra.mxu0 %v340
        %1681 = vmatprep.subr.mxu0 %v343
        %1682 = vmatpush1.msra.mxu0 %v342
        %1683 = vmatprep.subr.mxu0 %v345
        %1684 = vmatpush1.msra.mxu0 %v344
        %1685 = vmatprep.subr.mxu0 %v347
        %1686 = vmatpush1.msra.mxu0 %v346
        %1687 = vmatprep.subr.mxu0 %v349
        %1688 = vmatpush1.msra.mxu0 %v348
        %1689 = vmatprep.subr.mxu0 %v351
        %1690 = vmatpush1.msra.mxu0 %v350
        %1691 = vmatprep.subr.mxu0 %v353
        %1692 = vmatpush1.msra.mxu0 %v352
        %1693 = vmatprep.subr.mxu0 %v355
        %1694 = vmatpush1.msra.mxu0 %v354
        %1695 = vmatprep.subr.mxu0 %v357
        %1696 = vmatpush1.msra.mxu0 %v356
        %1697 = vmatprep.subr.mxu0 %v359
        %1698 = vmatpush1.msra.mxu0 %v358
        %1699 = vmatprep.subr.mxu0 %v361
        %1700 = vmatpush1.msra.mxu0 %v360
        %1701 = vmatprep.subr.mxu0 %v363
        %1702 = vmatpush1.msra.mxu0 %v362
        %1703 = vmatprep.subr.mxu0 %v365
        %1704 = vmatpush1.msra.mxu0 %v364
        %1705 = vmatprep.subr.mxu0 %v367
        %1706 = vmatpush1.msra.mxu0 %v366
        %1707 = vmatprep.subr.mxu0 %v369
        %1708 = vmatpush1.msra.mxu0 %v368
        %1709 = vmatprep.subr.mxu0 %v371
        %1710 = vmatpush1.msra.mxu0 %v370
        %1711 = vmatprep.subr.mxu0 %v373
        %1712 = vmatpush1.msra.mxu0 %v372
        %1713 = vmatprep.subr.mxu0 %v375
        %1714 = vmatpush1.msra.mxu0 %v374
        %1715 = vmatprep.subr.mxu0 %v377
        %1716 = vmatpush1.msra.mxu0 %v376
        %1717 = vmatprep.subr.mxu0 %v379
        %1718 = vmatpush1.msra.mxu0 %v378
        %1719 = vmatprep.subr.mxu0 %v381
        %1720 = vmatpush1.msra.mxu0 %v380
        %1721 = vmatprep.subr.mxu0 %v383
        %1722 = vmatpush1.msra.mxu0 %v382
        %1723 = vmatprep.subr.mxu0 %v385
        %1724 = vmatpush1.msra.mxu0 %v384
        %1725 = vmatprep.subr.mxu0 %v387
        %1726 = vmatpush1.msra.mxu0 %v386
        %1727 = vmatprep.subr.mxu0 %v389
        %1728 = vmatpush1.msra.mxu0 %v388
        %1729 = vmatprep.mubr.f32.mxu0 %v1664
        %1730 = vmatmul.mubr.f32.gmra.mrb[0].mxu0 %v1663
        %v1731 = vpop.f32.mrb[0].mxu0
        %v1732 = vadd.f32 0.0, %v1731
        %v1733 = vpop.f32.mrb[0].mxu0
        %v1734 = vadd.f32 0.0, %v1733
        %1735 = vdwg.mxu0
        %v1736 = vadd.f32 %v1654, %v1732
        %v1737 = vadd.f32 %v1655, %v1734
        %s1738 = scalar_lea.vmem %s2, 88
        %v1739 = vld [vmem:[%s1738] sm:$0xff]
        %1741 = vset.pattern.permute.xlu0 0
        %1742 = vperm.xlu0 %1741, %v1739
        %v1743 = vpop.permute.xlu0 %1742
        %v1745 = vmul.f32 %v1743, %v1574
        %v1746 = vmul.f32 %v1743, %v1578
        %1747 = vmatprep.subr.mxu0 %v543
        %1748 = vmatpush1.msra.mxu0 %v542
        %1749 = vmatprep.subr.mxu0 %v545
        %1750 = vmatpush1.msra.mxu0 %v544
        %1751 = vmatprep.subr.mxu0 %v547
        %1752 = vmatpush1.msra.mxu0 %v546
        %1753 = vmatprep.subr.mxu0 %v549
        %1754 = vmatpush1.msra.mxu0 %v548
        %1755 = vmatprep.subr.mxu0 %v551
        %1756 = vmatpush1.msra.mxu0 %v550
        %1757 = vmatprep.subr.mxu0 %v553
        %1758 = vmatpush1.msra.mxu0 %v552
        %1759 = vmatprep.subr.mxu0 %v555
        %1760 = vmatpush1.msra.mxu0 %v554
        %1761 = vmatprep.subr.mxu0 %v557
        %1762 = vmatpush1.msra.mxu0 %v556
        %1763 = vmatprep.subr.mxu0 %v559
        %1764 = vmatpush1.msra.mxu0 %v558
        %1765 = vmatprep.subr.mxu0 %v561
        %1766 = vmatpush1.msra.mxu0 %v560
        %1767 = vmatprep.subr.mxu0 %v563
        %1768 = vmatpush1.msra.mxu0 %v562
        %1769 = vmatprep.subr.mxu0 %v565
        %1770 = vmatpush1.msra.mxu0 %v564
        %1771 = vmatprep.subr.mxu0 %v567
        %1772 = vmatpush1.msra.mxu0 %v566
        %1773 = vmatprep.subr.mxu0 %v569
        %1774 = vmatpush1.msra.mxu0 %v568
        %1775 = vmatprep.subr.mxu0 %v571
        %1776 = vmatpush1.msra.mxu0 %v570
        %1777 = vmatprep.subr.mxu0 %v573
        %1778 = vmatpush1.msra.mxu0 %v572
        %1779 = vmatprep.subr.mxu0 %v575
        %1780 = vmatpush1.msra.mxu0 %v574
        %1781 = vmatprep.subr.mxu0 %v577
        %1782 = vmatpush1.msra.mxu0 %v576
        %1783 = vmatprep.subr.mxu0 %v579
        %1784 = vmatpush1.msra.mxu0 %v578
        %1785 = vmatprep.subr.mxu0 %v581
        %1786 = vmatpush1.msra.mxu0 %v580
        %1787 = vmatprep.subr.mxu0 %v583
        %1788 = vmatpush1.msra.mxu0 %v582
        %1789 = vmatprep.subr.mxu0 %v585
        %1790 = vmatpush1.msra.mxu0 %v584
        %1791 = vmatprep.subr.mxu0 %v587
        %1792 = vmatpush1.msra.mxu0 %v586
        %1793 = vmatprep.subr.mxu0 %v589
        %1794 = vmatpush1.msra.mxu0 %v588
        %1795 = vmatprep.subr.mxu0 %v591
        %1796 = vmatpush1.msra.mxu0 %v590
        %1797 = vmatprep.subr.mxu0 %v593
        %1798 = vmatpush1.msra.mxu0 %v592
        %1799 = vmatprep.subr.mxu0 %v595
        %1800 = vmatpush1.msra.mxu0 %v594
        %1801 = vmatprep.subr.mxu0 %v597
        %1802 = vmatpush1.msra.mxu0 %v596
        %1803 = vmatprep.subr.mxu0 %v599
        %1804 = vmatpush1.msra.mxu0 %v598
        %1805 = vmatprep.subr.mxu0 %v601
        %1806 = vmatpush1.msra.mxu0 %v600
        %1807 = vmatprep.subr.mxu0 %v603
        %1808 = vmatpush1.msra.mxu0 %v602
        %1809 = vmatprep.subr.mxu0 %v605
        %1810 = vmatpush1.msra.mxu0 %v604
        %1811 = vmatprep.mubr.f32.mxu0 %v1746
        %1812 = vmatmul.mubr.f32.gmra.mrb[0].mxu0 %v1745
        %v1813 = vpop.f32.mrb[0].mxu0
        %v1814 = vadd.f32 0.0, %v1813
        %v1815 = vpop.f32.mrb[0].mxu0
        %v1816 = vadd.f32 0.0, %v1815
        %1817 = vdwg.mxu0
        %v1818 = vadd.f32 %v1736, %v1814
        %v1819 = vadd.f32 %v1737, %v1816
        %s1820 = scalar_lea.vmem %s2, 96
        %v1821 = vld [vmem:[%s1820] sm:$0xff]
        %1823 = vset.pattern.permute.xlu0 0
        %1824 = vperm.xlu0 %1823, %v1821
        %v1825 = vpop.permute.xlu0 %1824
        %v1827 = vmul.f32 %v1825, %v1574
        %v1828 = vmul.f32 %v1825, %v1578
        %1829 = vmatprep.subr.mxu0 %v690
        %1830 = vmatpush1.msra.mxu0 %v689
        %1831 = vmatprep.subr.mxu0 %v692
        %1832 = vmatpush1.msra.mxu0 %v691
        %1833 = vmatprep.subr.mxu0 %v694
        %1834 = vmatpush1.msra.mxu0 %v693
        %1835 = vmatprep.subr.mxu0 %v696
        %1836 = vmatpush1.msra.mxu0 %v695
        %1837 = vmatprep.subr.mxu0 %v698
        %1838 = vmatpush1.msra.mxu0 %v697
        %1839 = vmatprep.subr.mxu0 %v700
        %1840 = vmatpush1.msra.mxu0 %v699
        %1841 = vmatprep.subr.mxu0 %v702
        %1842 = vmatpush1.msra.mxu0 %v701
        %1843 = vmatprep.subr.mxu0 %v704
        %1844 = vmatpush1.msra.mxu0 %v703
        %1845 = vmatprep.subr.mxu0 %v706
        %1846 = vmatpush1.msra.mxu0 %v705
        %1847 = vmatprep.subr.mxu0 %v708
        %1848 = vmatpush1.msra.mxu0 %v707
        %1849 = vmatprep.subr.mxu0 %v710
        %1850 = vmatpush1.msra.mxu0 %v709
        %1851 = vmatprep.subr.mxu0 %v712
        %1852 = vmatpush1.msra.mxu0 %v711
        %1853 = vmatprep.subr.mxu0 %v714
        %1854 = vmatpush1.msra.mxu0 %v713
        %1855 = vmatprep.subr.mxu0 %v716
        %1856 = vmatpush1.msra.mxu0 %v715
        %1857 = vmatprep.subr.mxu0 %v718
        %1858 = vmatpush1.msra.mxu0 %v717
        %1859 = vmatprep.subr.mxu0 %v720
        %1860 = vmatpush1.msra.mxu0 %v719
        %1861 = vmatprep.subr.mxu0 %v722
        %1862 = vmatpush1.msra.mxu0 %v721
        %1863 = vmatprep.subr.mxu0 %v724
        %1864 = vmatpush1.msra.mxu0 %v723
        %1865 = vmatprep.subr.mxu0 %v726
        %1866 = vmatpush1.msra.mxu0 %v725
        %1867 = vmatprep.subr.mxu0 %v728
        %1868 = vmatpush1.msra.mxu0 %v727
        %1869 = vmatprep.subr.mxu0 %v730
        %1870 = vmatpush1.msra.mxu0 %v729
        %1871 = vmatprep.subr.mxu0 %v732
        %1872 = vmatpush1.msra.mxu0 %v731
        %1873 = vmatprep.subr.mxu0 %v734
        %1874 = vmatpush1.msra.mxu0 %v733
        %1875 = vmatprep.subr.mxu0 %v736
        %1876 = vmatpush1.msra.mxu0 %v735
        %1877 = vmatprep.subr.mxu0 %v738
        %1878 = vmatpush1.msra.mxu0 %v737
        %1879 = vmatprep.subr.mxu0 %v740
        %1880 = vmatpush1.msra.mxu0 %v739
        %1881 = vmatprep.subr.mxu0 %v742
        %1882 = vmatpush1.msra.mxu0 %v741
        %1883 = vmatprep.subr.mxu0 %v744
        %1884 = vmatpush1.msra.mxu0 %v743
        %1885 = vmatprep.subr.mxu0 %v746
        %1886 = vmatpush1.msra.mxu0 %v745
        %1887 = vmatprep.subr.mxu0 %v748
        %1888 = vmatpush1.msra.mxu0 %v747
        %1889 = vmatprep.subr.mxu0 %v750
        %1890 = vmatpush1.msra.mxu0 %v749
        %1891 = vmatprep.subr.mxu0 %v752
        %1892 = vmatpush1.msra.mxu0 %v751
        %1893 = vmatprep.mubr.f32.mxu0 %v1828
        %1894 = vmatmul.mubr.f32.gmra.mrb[0].mxu0 %v1827
        %v1895 = vpop.f32.mrb[0].mxu0
        %v1896 = vadd.f32 0.0, %v1895
        %v1897 = vpop.f32.mrb[0].mxu0
        %v1898 = vadd.f32 0.0, %v1897
        %1899 = vdwg.mxu0
        %v1900 = vadd.f32 %v1818, %v1896
        %v1901 = vadd.f32 %v1819, %v1898
        %s1902 = scalar_lea.vmem %s2, 104
        %v1903 = vld [vmem:[%s1902] sm:$0xff]
        %1905 = vset.pattern.permute.xlu0 0
        %1906 = vperm.xlu0 %1905, %v1903
        %v1907 = vpop.permute.xlu0 %1906
        %v1909 = vmul.f32 %v1907, %v1574
        %v1910 = vmul.f32 %v1907, %v1578
        %1911 = vmatprep.subr.mxu0 %v837
        %1912 = vmatpush1.msra.mxu0 %v836
        %1913 = vmatprep.subr.mxu0 %v839
        %1914 = vmatpush1.msra.mxu0 %v838
        %1915 = vmatprep.subr.mxu0 %v841
        %1916 = vmatpush1.msra.mxu0 %v840
        %1917 = vmatprep.subr.mxu0 %v843
        %1918 = vmatpush1.msra.mxu0 %v842
        %1919 = vmatprep.subr.mxu0 %v845
        %1920 = vmatpush1.msra.mxu0 %v844
        %1921 = vmatprep.subr.mxu0 %v847
        %1922 = vmatpush1.msra.mxu0 %v846
        %1923 = vmatprep.subr.mxu0 %v849
        %1924 = vmatpush1.msra.mxu0 %v848
        %1925 = vmatprep.subr.mxu0 %v851
        %1926 = vmatpush1.msra.mxu0 %v850
        %1927 = vmatprep.subr.mxu0 %v853
        %1928 = vmatpush1.msra.mxu0 %v852
        %1929 = vmatprep.subr.mxu0 %v855
        %1930 = vmatpush1.msra.mxu0 %v854
        %1931 = vmatprep.subr.mxu0 %v857
        %1932 = vmatpush1.msra.mxu0 %v856
        %1933 = vmatprep.subr.mxu0 %v859
        %1934 = vmatpush1.msra.mxu0 %v858
        %1935 = vmatprep.subr.mxu0 %v861
        %1936 = vmatpush1.msra.mxu0 %v860
        %1937 = vmatprep.subr.mxu0 %v863
        %1938 = vmatpush1.msra.mxu0 %v862
        %1939 = vmatprep.subr.mxu0 %v865
        %1940 = vmatpush1.msra.mxu0 %v864
        %1941 = vmatprep.subr.mxu0 %v867
        %1942 = vmatpush1.msra.mxu0 %v866
        %1943 = vmatprep.subr.mxu0 %v869
        %1944 = vmatpush1.msra.mxu0 %v868
        %1945 = vmatprep.subr.mxu0 %v871
        %1946 = vmatpush1.msra.mxu0 %v870
        %1947 = vmatprep.subr.mxu0 %v873
        %1948 = vmatpush1.msra.mxu0 %v872
        %1949 = vmatprep.subr.mxu0 %v875
        %1950 = vmatpush1.msra.mxu0 %v874
        %1951 = vmatprep.subr.mxu0 %v877
        %1952 = vmatpush1.msra.mxu0 %v876
        %1953 = vmatprep.subr.mxu0 %v879
        %1954 = vmatpush1.msra.mxu0 %v878
        %1955 = vmatprep.subr.mxu0 %v881
        %1956 = vmatpush1.msra.mxu0 %v880
        %1957 = vmatprep.subr.mxu0 %v883
        %1958 = vmatpush1.msra.mxu0 %v882
        %1959 = vmatprep.subr.mxu0 %v885
        %1960 = vmatpush1.msra.mxu0 %v884
        %1961 = vmatprep.subr.mxu0 %v887
        %1962 = vmatpush1.msra.mxu0 %v886
        %1963 = vmatprep.subr.mxu0 %v889
        %1964 = vmatpush1.msra.mxu0 %v888
        %1965 = vmatprep.subr.mxu0 %v891
        %1966 = vmatpush1.msra.mxu0 %v890
        %1967 = vmatprep.subr.mxu0 %v893
        %1968 = vmatpush1.msra.mxu0 %v892
        %1969 = vmatprep.subr.mxu0 %v895
        %1970 = vmatpush1.msra.mxu0 %v894
        %1971 = vmatprep.subr.mxu0 %v897
        %1972 = vmatpush1.msra.mxu0 %v896
        %1973 = vmatprep.subr.mxu0 %v899
        %1974 = vmatpush1.msra.mxu0 %v898
        %1975 = vmatprep.mubr.f32.mxu0 %v1910
        %1976 = vmatmul.mubr.f32.gmra.mrb[0].mxu0 %v1909
        %v1977 = vpop.f32.mrb[0].mxu0
        %v1978 = vadd.f32 0.0, %v1977
        %v1979 = vpop.f32.mrb[0].mxu0
        %v1980 = vadd.f32 0.0, %v1979
        %1981 = vdwg.mxu0
        %v1982 = vadd.f32 %v1900, %v1978
        %v1983 = vadd.f32 %v1901, %v1980
        %s1984 = scalar_lea.vmem %s2, 112
        %v1985 = vld [vmem:[%s1984] sm:$0xff]
        %1987 = vset.pattern.permute.xlu0 0
        %1988 = vperm.xlu0 %1987, %v1985
        %v1989 = vpop.permute.xlu0 %1988
        %v1991 = vmul.f32 %v1989, %v1574
        %v1992 = vmul.f32 %v1989, %v1578
        %1993 = vmatprep.subr.mxu0 %v984
        %1994 = vmatpush1.msra.mxu0 %v983
        %1995 = vmatprep.subr.mxu0 %v986
        %1996 = vmatpush1.msra.mxu0 %v985
        %1997 = vmatprep.subr.mxu0 %v988
        %1998 = vmatpush1.msra.mxu0 %v987
        %1999 = vmatprep.subr.mxu0 %v990
        %2000 = vmatpush1.msra.mxu0 %v989
        %2001 = vmatprep.subr.mxu0 %v992
        %2002 = vmatpush1.msra.mxu0 %v991
        %2003 = vmatprep.subr.mxu0 %v994
        %2004 = vmatpush1.msra.mxu0 %v993
        %2005 = vmatprep.subr.mxu0 %v996
        %2006 = vmatpush1.msra.mxu0 %v995
        %2007 = vmatprep.subr.mxu0 %v998
        %2008 = vmatpush1.msra.mxu0 %v997
        %2009 = vmatprep.subr.mxu0 %v1000
        %2010 = vmatpush1.msra.mxu0 %v999
        %2011 = vmatprep.subr.mxu0 %v1002
        %2012 = vmatpush1.msra.mxu0 %v1001
        %2013 = vmatprep.subr.mxu0 %v1004
        %2014 = vmatpush1.msra.mxu0 %v1003
        %2015 = vmatprep.subr.mxu0 %v1006
        %2016 = vmatpush1.msra.mxu0 %v1005
        %2017 = vmatprep.subr.mxu0 %v1008
        %2018 = vmatpush1.msra.mxu0 %v1007
        %2019 = vmatprep.subr.mxu0 %v1010
        %2020 = vmatpush1.msra.mxu0 %v1009
        %2021 = vmatprep.subr.mxu0 %v1012
        %2022 = vmatpush1.msra.mxu0 %v1011
        %2023 = vmatprep.subr.mxu0 %v1014
        %2024 = vmatpush1.msra.mxu0 %v1013
        %2025 = vmatprep.subr.mxu0 %v1016
        %2026 = vmatpush1.msra.mxu0 %v1015
        %2027 = vmatprep.subr.mxu0 %v1018
        %2028 = vmatpush1.msra.mxu0 %v1017
        %2029 = vmatprep.subr.mxu0 %v1020
        %2030 = vmatpush1.msra.mxu0 %v1019
        %2031 = vmatprep.subr.mxu0 %v1022
        %2032 = vmatpush1.msra.mxu0 %v1021
        %2033 = vmatprep.subr.mxu0 %v1024
        %2034 = vmatpush1.msra.mxu0 %v1023
        %2035 = vmatprep.subr.mxu0 %v1026
        %2036 = vmatpush1.msra.mxu0 %v1025
        %2037 = vmatprep.subr.mxu0 %v1028
        %2038 = vmatpush1.msra.mxu0 %v1027
        %2039 = vmatprep.subr.mxu0 %v1030
        %2040 = vmatpush1.msra.mxu0 %v1029
        %2041 = vmatprep.subr.mxu0 %v1032
        %2042 = vmatpush1.msra.mxu0 %v1031
        %2043 = vmatprep.subr.mxu0 %v1034
        %2044 = vmatpush1.msra.mxu0 %v1033
        %2045 = vmatprep.subr.mxu0 %v1036
        %2046 = vmatpush1.msra.mxu0 %v1035
        %2047 = vmatprep.subr.mxu0 %v1038
        %2048 = vmatpush1.msra.mxu0 %v1037
        %2049 = vmatprep.subr.mxu0 %v1040
        %2050 = vmatpush1.msra.mxu0 %v1039
        %2051 = vmatprep.subr.mxu0 %v1042
        %2052 = vmatpush1.msra.mxu0 %v1041
        %2053 = vmatprep.subr.mxu0 %v1044
        %2054 = vmatpush1.msra.mxu0 %v1043
        %2055 = vmatprep.subr.mxu0 %v1046
        %2056 = vmatpush1.msra.mxu0 %v1045
        %2057 = vmatprep.mubr.f32.mxu0 %v1992
        %2058 = vmatmul.mubr.f32.gmra.mrb[0].mxu0 %v1991
        %v2059 = vpop.f32.mrb[0].mxu0
        %v2060 = vadd.f32 0.0, %v2059
        %v2061 = vpop.f32.mrb[0].mxu0
        %v2062 = vadd.f32 0.0, %v2061
        %2063 = vdwg.mxu0
        %v2064 = vadd.f32 %v1982, %v2060
        %v2065 = vadd.f32 %v1983, %v2062
        %s2066 = scalar_lea.vmem %s2, 120
        %v2067 = vld [vmem:[%s2066] sm:$0xff]
        %2069 = vset.pattern.permute.xlu0 0
        %2070 = vperm.xlu0 %2069, %v2067
        %v2071 = vpop.permute.xlu0 %2070
        %v2073 = vmul.f32 %v2071, %v1574
        %v2074 = vmul.f32 %v2071, %v1578
        %2075 = vmatprep.subr.mxu0 %v1131
        %2076 = vmatpush1.msra.mxu0 %v1130
        %2077 = vmatprep.subr.mxu0 %v1133
        %2078 = vmatpush1.msra.mxu0 %v1132
        %2079 = vmatprep.subr.mxu0 %v1135
        %2080 = vmatpush1.msra.mxu0 %v1134
        %2081 = vmatprep.subr.mxu0 %v1137
        %2082 = vmatpush1.msra.mxu0 %v1136
        %2083 = vmatprep.subr.mxu0 %v1139
        %2084 = vmatpush1.msra.mxu0 %v1138
        %2085 = vmatprep.subr.mxu0 %v1141
        %2086 = vmatpush1.msra.mxu0 %v1140
        %2087 = vmatprep.subr.mxu0 %v1143
        %2088 = vmatpush1.msra.mxu0 %v1142
        %2089 = vmatprep.subr.mxu0 %v1145
        %2090 = vmatpush1.msra.mxu0 %v1144
        %2091 = vmatprep.subr.mxu0 %v1147
        %2092 = vmatpush1.msra.mxu0 %v1146
        %2093 = vmatprep.subr.mxu0 %v1149
        %2094 = vmatpush1.msra.mxu0 %v1148
        %2095 = vmatprep.subr.mxu0 %v1151
        %2096 = vmatpush1.msra.mxu0 %v1150
        %2097 = vmatprep.subr.mxu0 %v1153
        %2098 = vmatpush1.msra.mxu0 %v1152
        %2099 = vmatprep.subr.mxu0 %v1155
        %2100 = vmatpush1.msra.mxu0 %v1154
        %2101 = vmatprep.subr.mxu0 %v1157
        %2102 = vmatpush1.msra.mxu0 %v1156
        %2103 = vmatprep.subr.mxu0 %v1159
        %2104 = vmatpush1.msra.mxu0 %v1158
        %2105 = vmatprep.subr.mxu0 %v1161
        %2106 = vmatpush1.msra.mxu0 %v1160
        %2107 = vmatprep.subr.mxu0 %v1163
        %2108 = vmatpush1.msra.mxu0 %v1162
        %2109 = vmatprep.subr.mxu0 %v1165
        %2110 = vmatpush1.msra.mxu0 %v1164
        %2111 = vmatprep.subr.mxu0 %v1167
        %2112 = vmatpush1.msra.mxu0 %v1166
        %2113 = vmatprep.subr.mxu0 %v1169
        %2114 = vmatpush1.msra.mxu0 %v1168
        %2115 = vmatprep.subr.mxu0 %v1171
        %2116 = vmatpush1.msra.mxu0 %v1170
        %2117 = vmatprep.subr.mxu0 %v1173
        %2118 = vmatpush1.msra.mxu0 %v1172
        %2119 = vmatprep.subr.mxu0 %v1175
        %2120 = vmatpush1.msra.mxu0 %v1174
        %2121 = vmatprep.subr.mxu0 %v1177
        %2122 = vmatpush1.msra.mxu0 %v1176
        %2123 = vmatprep.subr.mxu0 %v1179
        %2124 = vmatpush1.msra.mxu0 %v1178
        %2125 = vmatprep.subr.mxu0 %v1181
        %2126 = vmatpush1.msra.mxu0 %v1180
        %2127 = vmatprep.subr.mxu0 %v1183
        %2128 = vmatpush1.msra.mxu0 %v1182
        %2129 = vmatprep.subr.mxu0 %v1185
        %2130 = vmatpush1.msra.mxu0 %v1184
        %2131 = vmatprep.subr.mxu0 %v1187
        %2132 = vmatpush1.msra.mxu0 %v1186
        %2133 = vmatprep.subr.mxu0 %v1189
        %2134 = vmatpush1.msra.mxu0 %v1188
        %2135 = vmatprep.subr.mxu0 %v1191
        %2136 = vmatpush1.msra.mxu0 %v1190
        %2137 = vmatprep.subr.mxu0 %v1193
        %2138 = vmatpush1.msra.mxu0 %v1192
        %2139 = vmatprep.mubr.f32.mxu0 %v2074
        %2140 = vmatmul.mubr.f32.gmra.mrb[0].mxu0 %v2073
        %v2141 = vpop.f32.mrb[0].mxu0
        %v2142 = vadd.f32 0.0, %v2141
        %v2143 = vpop.f32.mrb[0].mxu0
        %v2144 = vadd.f32 0.0, %v2143
        %2145 = vdwg.mxu0
        %v2146 = vadd.f32 %v2064, %v2142
        %v2147 = vadd.f32 %v2065, %v2144
        %s2148 = scalar_lea.vmem %s2, 128
        %v2149 = vld [vmem:[%s2148] sm:$0xff]
        %2151 = vset.pattern.permute.xlu0 0
        %2152 = vperm.xlu0 %2151, %v2149
        %v2153 = vpop.permute.xlu0 %2152
        %v2155 = vmul.f32 %v2153, %v1574
        %v2156 = vmul.f32 %v2153, %v1578
        %2157 = vmatprep.subr.mxu0 %v1278
        %2158 = vmatpush1.msra.mxu0 %v1277
        %2159 = vmatprep.subr.mxu0 %v1280
        %2160 = vmatpush1.msra.mxu0 %v1279
        %2161 = vmatprep.subr.mxu0 %v1282
        %2162 = vmatpush1.msra.mxu0 %v1281
        %2163 = vmatprep.subr.mxu0 %v1284
        %2164 = vmatpush1.msra.mxu0 %v1283
        %2165 = vmatprep.subr.mxu0 %v1286
        %2166 = vmatpush1.msra.mxu0 %v1285
        %2167 = vmatprep.subr.mxu0 %v1288
        %2168 = vmatpush1.msra.mxu0 %v1287
        %2169 = vmatprep.subr.mxu0 %v1290
        %2170 = vmatpush1.msra.mxu0 %v1289
        %2171 = vmatprep.subr.mxu0 %v1292
        %2172 = vmatpush1.msra.mxu0 %v1291
        %2173 = vmatprep.subr.mxu0 %v1294
        %2174 = vmatpush1.msra.mxu0 %v1293
        %2175 = vmatprep.subr.mxu0 %v1296
        %2176 = vmatpush1.msra.mxu0 %v1295
        %2177 = vmatprep.subr.mxu0 %v1298
        %2178 = vmatpush1.msra.mxu0 %v1297
        %2179 = vmatprep.subr.mxu0 %v1300
        %2180 = vmatpush1.msra.mxu0 %v1299
        %2181 = vmatprep.subr.mxu0 %v1302
        %2182 = vmatpush1.msra.mxu0 %v1301
        %2183 = vmatprep.subr.mxu0 %v1304
        %2184 = vmatpush1.msra.mxu0 %v1303
        %2185 = vmatprep.subr.mxu0 %v1306
        %2186 = vmatpush1.msra.mxu0 %v1305
        %2187 = vmatprep.subr.mxu0 %v1308
        %2188 = vmatpush1.msra.mxu0 %v1307
        %2189 = vmatprep.subr.mxu0 %v1310
        %2190 = vmatpush1.msra.mxu0 %v1309
        %2191 = vmatprep.subr.mxu0 %v1312
        %2192 = vmatpush1.msra.mxu0 %v1311
        %2193 = vmatprep.subr.mxu0 %v1314
        %2194 = vmatpush1.msra.mxu0 %v1313
        %2195 = vmatprep.subr.mxu0 %v1316
        %2196 = vmatpush1.msra.mxu0 %v1315
        %2197 = vmatprep.subr.mxu0 %v1318
        %2198 = vmatpush1.msra.mxu0 %v1317
        %2199 = vmatprep.subr.mxu0 %v1320
        %2200 = vmatpush1.msra.mxu0 %v1319
        %2201 = vmatprep.subr.mxu0 %v1322
        %2202 = vmatpush1.msra.mxu0 %v1321
        %2203 = vmatprep.subr.mxu0 %v1324
        %2204 = vmatpush1.msra.mxu0 %v1323
        %2205 = vmatprep.subr.mxu0 %v1326
        %2206 = vmatpush1.msra.mxu0 %v1325
        %2207 = vmatprep.subr.mxu0 %v1328
        %2208 = vmatpush1.msra.mxu0 %v1327
        %2209 = vmatprep.subr.mxu0 %v1330
        %2210 = vmatpush1.msra.mxu0 %v1329
        %2211 = vmatprep.subr.mxu0 %v1332
        %2212 = vmatpush1.msra.mxu0 %v1331
        %2213 = vmatprep.subr.mxu0 %v1334
        %2214 = vmatpush1.msra.mxu0 %v1333
        %2215 = vmatprep.subr.mxu0 %v1336
        %2216 = vmatpush1.msra.mxu0 %v1335
        %2217 = vmatprep.subr.mxu0 %v1338
        %2218 = vmatpush1.msra.mxu0 %v1337
        %2219 = vmatprep.subr.mxu0 %v1340
        %2220 = vmatpush1.msra.mxu0 %v1339
        %2221 = vmatprep.mubr.f32.mxu0 %v2156
        %2222 = vmatmul.mubr.f32.gmra.mrb[0].mxu0 %v2155
        %v2223 = vpop.f32.mrb[0].mxu0
        %v2224 = vadd.f32 0.0, %v2223
        %v2225 = vpop.f32.mrb[0].mxu0
        %v2226 = vadd.f32 0.0, %v2225
        %2227 = vdwg.mxu0
        %v2228 = vadd.f32 %v2146, %v2224
        %v2229 = vadd.f32 %v2147, %v2226
        %s2230 = scalar_lea.vmem %s2, 136
        %v2231 = vld [vmem:[%s2230] sm:$0xff]
        %2233 = vset.pattern.permute.xlu0 0
        %2234 = vperm.xlu0 %2233, %v2231
        %v2235 = vpop.permute.xlu0 %2234
        %v2237 = vmul.f32 %v2235, %v1574
        %v2238 = vmul.f32 %v2235, %v1578
        %2239 = vmatprep.subr.mxu0 %v1425
        %2240 = vmatpush1.msra.mxu0 %v1424
        %2241 = vmatprep.subr.mxu0 %v1427
        %2242 = vmatpush1.msra.mxu0 %v1426
        %2243 = vmatprep.subr.mxu0 %v1429
        %2244 = vmatpush1.msra.mxu0 %v1428
        %2245 = vmatprep.subr.mxu0 %v1431
        %2246 = vmatpush1.msra.mxu0 %v1430
        %2247 = vmatprep.subr.mxu0 %v1433
        %2248 = vmatpush1.msra.mxu0 %v1432
        %2249 = vmatprep.subr.mxu0 %v1435
        %2250 = vmatpush1.msra.mxu0 %v1434
        %2251 = vmatprep.subr.mxu0 %v1437
        %2252 = vmatpush1.msra.mxu0 %v1436
        %2253 = vmatprep.subr.mxu0 %v1439
        %2254 = vmatpush1.msra.mxu0 %v1438
        %2255 = vmatprep.subr.mxu0 %v1441
        %2256 = vmatpush1.msra.mxu0 %v1440
        %2257 = vmatprep.subr.mxu0 %v1443
        %2258 = vmatpush1.msra.mxu0 %v1442
        %2259 = vmatprep.subr.mxu0 %v1445
        %2260 = vmatpush1.msra.mxu0 %v1444
        %2261 = vmatprep.subr.mxu0 %v1447
        %2262 = vmatpush1.msra.mxu0 %v1446
        %2263 = vmatprep.subr.mxu0 %v1449
        %2264 = vmatpush1.msra.mxu0 %v1448
        %2265 = vmatprep.subr.mxu0 %v1451
        %2266 = vmatpush1.msra.mxu0 %v1450
        %2267 = vmatprep.subr.mxu0 %v1453
        %2268 = vmatpush1.msra.mxu0 %v1452
        %2269 = vmatprep.subr.mxu0 %v1455
        %2270 = vmatpush1.msra.mxu0 %v1454
        %2271 = vmatprep.subr.mxu0 %v1457
        %2272 = vmatpush1.msra.mxu0 %v1456
        %2273 = vmatprep.subr.mxu0 %v1459
        %2274 = vmatpush1.msra.mxu0 %v1458
        %2275 = vmatprep.subr.mxu0 %v1461
        %2276 = vmatpush1.msra.mxu0 %v1460
        %2277 = vmatprep.subr.mxu0 %v1463
        %2278 = vmatpush1.msra.mxu0 %v1462
        %2279 = vmatprep.subr.mxu0 %v1465
        %2280 = vmatpush1.msra.mxu0 %v1464
        %2281 = vmatprep.subr.mxu0 %v1467
        %2282 = vmatpush1.msra.mxu0 %v1466
        %2283 = vmatprep.subr.mxu0 %v1469
        %2284 = vmatpush1.msra.mxu0 %v1468
        %2285 = vmatprep.subr.mxu0 %v1471
        %2286 = vmatpush1.msra.mxu0 %v1470
        %2287 = vmatprep.subr.mxu0 %v1473
        %2288 = vmatpush1.msra.mxu0 %v1472
        %2289 = vmatprep.subr.mxu0 %v1475
        %2290 = vmatpush1.msra.mxu0 %v1474
        %2291 = vmatprep.subr.mxu0 %v1477
        %2292 = vmatpush1.msra.mxu0 %v1476
        %2293 = vmatprep.subr.mxu0 %v1479
        %2294 = vmatpush1.msra.mxu0 %v1478
        %2295 = vmatprep.subr.mxu0 %v1481
        %2296 = vmatpush1.msra.mxu0 %v1480
        %2297 = vmatprep.subr.mxu0 %v1483
        %2298 = vmatpush1.msra.mxu0 %v1482
        %2299 = vmatprep.subr.mxu0 %v1485
        %2300 = vmatpush1.msra.mxu0 %v1484
        %2301 = vmatprep.subr.mxu0 %v1487
        %2302 = vmatpush1.msra.mxu0 %v1486
        %2303 = vmatprep.mubr.f32.mxu0 %v2238
        %2304 = vmatmul.mubr.f32.gmra.mrb[0].mxu0 %v2237
        %v2305 = vpop.f32.mrb[0].mxu0
        %v2306 = vadd.f32 0.0, %v2305
        %v2307 = vpop.f32.mrb[0].mxu0
        %v2308 = vadd.f32 0.0, %v2307
        %2309 = vdwg.mxu0
        %v2310 = vadd.f32 %v2228, %v2306
        %v2311 = vadd.f32 %v2229, %v2308
        %s2312 = scalar_lea.vmem %s202, 4 [#allocation2]
        %v2313 = vld [vmem:[%s2312] sm:$0x3]
        %s2314 = scalar_lea.vmem %s2, 144
        %v2315 = vld [vmem:[%s2314] sm:$0xff]
        %2317 = vset.pattern.permute.xlu0 0
        %2318 = vperm.xlu0 %2317, %v2315
        %v2319 = vpop.permute.xlu0 %2318
        %v2322 = vlaneseq
        %v2323 = vshrl.u32 %v2322, 7
        %v2324 = vsub.s32 0, %v2323
        %v2325 = vrot.slane %v2313, %v2324
        %v2326 = vlaneseq
        %v2327 = vshrl.u32 %v2326, 7
        %v2328 = vsub.s32 1, %v2327
        %v2329 = vrot.slane %v2313, %v2328
        %v2332 = vmul.f32 %v2319, %v2325
        %v2333 = vmul.f32 %v2319, %v2329
        %2334 = vmatprep.subr.mxu0 %v253
        %2335 = vmatpush1.msra.mxu0 %v252
        %2336 = vmatprep.subr.mxu0 %v255
        %2337 = vmatpush1.msra.mxu0 %v254
        %2338 = vmatprep.subr.mxu0 %v257
        %2339 = vmatpush1.msra.mxu0 %v256
        %2340 = vmatprep.subr.mxu0 %v259
        %2341 = vmatpush1.msra.mxu0 %v258
        %2342 = vmatprep.subr.mxu0 %v261
        %2343 = vmatpush1.msra.mxu0 %v260
        %2344 = vmatprep.subr.mxu0 %v263
        %2345 = vmatpush1.msra.mxu0 %v262
        %2346 = vmatprep.subr.mxu0 %v265
        %2347 = vmatpush1.msra.mxu0 %v264
        %2348 = vmatprep.subr.mxu0 %v267
        %2349 = vmatpush1.msra.mxu0 %v266
        %2350 = vmatprep.subr.mxu0 %v269
        %2351 = vmatpush1.msra.mxu0 %v268
        %2352 = vmatprep.subr.mxu0 %v271
        %2353 = vmatpush1.msra.mxu0 %v270
        %2354 = vmatprep.subr.mxu0 %v273
        %2355 = vmatpush1.msra.mxu0 %v272
        %2356 = vmatprep.subr.mxu0 %v275
        %2357 = vmatpush1.msra.mxu0 %v274
        %2358 = vmatprep.subr.mxu0 %v277
        %2359 = vmatpush1.msra.mxu0 %v276
        %2360 = vmatprep.subr.mxu0 %v279
        %2361 = vmatpush1.msra.mxu0 %v278
        %2362 = vmatprep.subr.mxu0 %v281
        %2363 = vmatpush1.msra.mxu0 %v280
        %2364 = vmatprep.subr.mxu0 %v283
        %2365 = vmatpush1.msra.mxu0 %v282
        %2366 = vmatprep.subr.mxu0 %v285
        %2367 = vmatpush1.msra.mxu0 %v284
        %2368 = vmatprep.subr.mxu0 %v287
        %2369 = vmatpush1.msra.mxu0 %v286
        %2370 = vmatprep.subr.mxu0 %v289
        %2371 = vmatpush1.msra.mxu0 %v288
        %2372 = vmatprep.subr.mxu0 %v291
        %2373 = vmatpush1.msra.mxu0 %v290
        %2374 = vmatprep.subr.mxu0 %v293
        %2375 = vmatpush1.msra.mxu0 %v292
        %2376 = vmatprep.subr.mxu0 %v295
        %2377 = vmatpush1.msra.mxu0 %v294
        %2378 = vmatprep.subr.mxu0 %v297
        %2379 = vmatpush1.msra.mxu0 %v296
        %2380 = vmatprep.subr.mxu0 %v299
        %2381 = vmatpush1.msra.mxu0 %v298
        %2382 = vmatprep.subr.mxu0 %v301
        %2383 = vmatpush1.msra.mxu0 %v300
        %2384 = vmatprep.subr.mxu0 %v303
        %2385 = vmatpush1.msra.mxu0 %v302
        %2386 = vmatprep.subr.mxu0 %v305
        %2387 = vmatpush1.msra.mxu0 %v304
        %2388 = vmatprep.subr.mxu0 %v307
        %2389 = vmatpush1.msra.mxu0 %v306
        %2390 = vmatprep.subr.mxu0 %v309
        %2391 = vmatpush1.msra.mxu0 %v308
        %2392 = vmatprep.subr.mxu0 %v311
        %2393 = vmatpush1.msra.mxu0 %v310
        %2394 = vmatprep.subr.mxu0 %v313
        %2395 = vmatpush1.msra.mxu0 %v312
        %2396 = vmatprep.subr.mxu0 %v315
        %2397 = vmatpush1.msra.mxu0 %v314
        %2398 = vmatprep.mubr.f32.mxu0 %v2333
        %2399 = vmatmul.mubr.f32.gmra.mrb[0].mxu0 %v2332
        %v2400 = vpop.f32.mrb[0].mxu0
        %v2401 = vadd.f32 0.0, %v2400
        %v2402 = vpop.f32.mrb[0].mxu0
        %v2403 = vadd.f32 0.0, %v2402
        %2404 = vdwg.mxu0
        %v2405 = vadd.f32 %v2310, %v2401
        %v2406 = vadd.f32 %v2311, %v2403
        %s2407 = scalar_lea.vmem %s2, 152
        %v2408 = vld [vmem:[%s2407] sm:$0xff]
        %2410 = vset.pattern.permute.xlu0 0
        %2411 = vperm.xlu0 %2410, %v2408
        %v2412 = vpop.permute.xlu0 %2411
        %v2414 = vmul.f32 %v2412, %v2325
        %v2415 = vmul.f32 %v2412, %v2329
        %2416 = vmatprep.subr.mxu0 %v327
        %2417 = vmatpush1.msra.mxu0 %v326
        %2418 = vmatprep.subr.mxu0 %v329
        %2419 = vmatpush1.msra.mxu0 %v328
        %2420 = vmatprep.subr.mxu0 %v331
        %2421 = vmatpush1.msra.mxu0 %v330
        %2422 = vmatprep.subr.mxu0 %v333
        %2423 = vmatpush1.msra.mxu0 %v332
        %2424 = vmatprep.subr.mxu0 %v335
        %2425 = vmatpush1.msra.mxu0 %v334
        %2426 = vmatprep.subr.mxu0 %v337
        %2427 = vmatpush1.msra.mxu0 %v336
        %2428 = vmatprep.subr.mxu0 %v339
        %2429 = vmatpush1.msra.mxu0 %v338
        %2430 = vmatprep.subr.mxu0 %v341
        %2431 = vmatpush1.msra.mxu0 %v340
        %2432 = vmatprep.subr.mxu0 %v343
        %2433 = vmatpush1.msra.mxu0 %v342
        %2434 = vmatprep.subr.mxu0 %v345
        %2435 = vmatpush1.msra.mxu0 %v344
        %2436 = vmatprep.subr.mxu0 %v347
        %2437 = vmatpush1.msra.mxu0 %v346
        %2438 = vmatprep.subr.mxu0 %v349
        %2439 = vmatpush1.msra.mxu0 %v348
        %2440 = vmatprep.subr.mxu0 %v351
        %2441 = vmatpush1.msra.mxu0 %v350
        %2442 = vmatprep.subr.mxu0 %v353
        %2443 = vmatpush1.msra.mxu0 %v352
        %2444 = vmatprep.subr.mxu0 %v355
        %2445 = vmatpush1.msra.mxu0 %v354
        %2446 = vmatprep.subr.mxu0 %v357
        %2447 = vmatpush1.msra.mxu0 %v356
        %2448 = vmatprep.subr.mxu0 %v359
        %2449 = vmatpush1.msra.mxu0 %v358
        %2450 = vmatprep.subr.mxu0 %v361
        %2451 = vmatpush1.msra.mxu0 %v360
        %2452 = vmatprep.subr.mxu0 %v363
        %2453 = vmatpush1.msra.mxu0 %v362
        %2454 = vmatprep.subr.mxu0 %v365
        %2455 = vmatpush1.msra.mxu0 %v364
        %2456 = vmatprep.subr.mxu0 %v367
        %2457 = vmatpush1.msra.mxu0 %v366
        %2458 = vmatprep.subr.mxu0 %v369
        %2459 = vmatpush1.msra.mxu0 %v368
        %2460 = vmatprep.subr.mxu0 %v371
        %2461 = vmatpush1.msra.mxu0 %v370
        %2462 = vmatprep.subr.mxu0 %v373
        %2463 = vmatpush1.msra.mxu0 %v372
        %2464 = vmatprep.subr.mxu0 %v375
        %2465 = vmatpush1.msra.mxu0 %v374
        %2466 = vmatprep.subr.mxu0 %v377
        %2467 = vmatpush1.msra.mxu0 %v376
        %2468 = vmatprep.subr.mxu0 %v379
        %2469 = vmatpush1.msra.mxu0 %v378
        %2470 = vmatprep.subr.mxu0 %v381
        %2471 = vmatpush1.msra.mxu0 %v380
        %2472 = vmatprep.subr.mxu0 %v383
        %2473 = vmatpush1.msra.mxu0 %v382
        %2474 = vmatprep.subr.mxu0 %v385
        %2475 = vmatpush1.msra.mxu0 %v384
        %2476 = vmatprep.subr.mxu0 %v387
        %2477 = vmatpush1.msra.mxu0 %v386
        %2478 = vmatprep.subr.mxu0 %v389
        %2479 = vmatpush1.msra.mxu0 %v388
        %2480 = vmatprep.mubr.f32.mxu0 %v2415
        %2481 = vmatmul.mubr.f32.gmra.mrb[0].mxu0 %v2414
        %v2482 = vpop.f32.mrb[0].mxu0
        %v2483 = vadd.f32 0.0, %v2482
        %v2484 = vpop.f32.mrb[0].mxu0
        %v2485 = vadd.f32 0.0, %v2484
        %2486 = vdwg.mxu0
        %v2487 = vadd.f32 %v2405, %v2483
        %v2488 = vadd.f32 %v2406, %v2485
        %s2489 = scalar_lea.vmem %s2, 160
        %v2490 = vld [vmem:[%s2489] sm:$0xff]
        %2492 = vset.pattern.permute.xlu0 0
        %2493 = vperm.xlu0 %2492, %v2490
        %v2494 = vpop.permute.xlu0 %2493
        %v2496 = vmul.f32 %v2494, %v2325
        %v2497 = vmul.f32 %v2494, %v2329
        %2498 = vmatprep.subr.mxu0 %v543
        %2499 = vmatpush1.msra.mxu0 %v542
        %2500 = vmatprep.subr.mxu0 %v545
        %2501 = vmatpush1.msra.mxu0 %v544
        %2502 = vmatprep.subr.mxu0 %v547
        %2503 = vmatpush1.msra.mxu0 %v546
        %2504 = vmatprep.subr.mxu0 %v549
        %2505 = vmatpush1.msra.mxu0 %v548
        %2506 = vmatprep.subr.mxu0 %v551
        %2507 = vmatpush1.msra.mxu0 %v550
        %2508 = vmatprep.subr.mxu0 %v553
        %2509 = vmatpush1.msra.mxu0 %v552
        %2510 = vmatprep.subr.mxu0 %v555
        %2511 = vmatpush1.msra.mxu0 %v554
        %2512 = vmatprep.subr.mxu0 %v557
        %2513 = vmatpush1.msra.mxu0 %v556
        %2514 = vmatprep.subr.mxu0 %v559
        %2515 = vmatpush1.msra.mxu0 %v558
        %2516 = vmatprep.subr.mxu0 %v561
        %2517 = vmatpush1.msra.mxu0 %v560
        %2518 = vmatprep.subr.mxu0 %v563
        %2519 = vmatpush1.msra.mxu0 %v562
        %2520 = vmatprep.subr.mxu0 %v565
        %2521 = vmatpush1.msra.mxu0 %v564
        %2522 = vmatprep.subr.mxu0 %v567
        %2523 = vmatpush1.msra.mxu0 %v566
        %2524 = vmatprep.subr.mxu0 %v569
        %2525 = vmatpush1.msra.mxu0 %v568
        %2526 = vmatprep.subr.mxu0 %v571
        %2527 = vmatpush1.msra.mxu0 %v570
        %2528 = vmatprep.subr.mxu0 %v573
        %2529 = vmatpush1.msra.mxu0 %v572
        %2530 = vmatprep.subr.mxu0 %v575
        %2531 = vmatpush1.msra.mxu0 %v574
        %2532 = vmatprep.subr.mxu0 %v577
        %2533 = vmatpush1.msra.mxu0 %v576
        %2534 = vmatprep.subr.mxu0 %v579
        %2535 = vmatpush1.msra.mxu0 %v578
        %2536 = vmatprep.subr.mxu0 %v581
        %2537 = vmatpush1.msra.mxu0 %v580
        %2538 = vmatprep.subr.mxu0 %v583
        %2539 = vmatpush1.msra.mxu0 %v582
        %2540 = vmatprep.subr.mxu0 %v585
        %2541 = vmatpush1.msra.mxu0 %v584
        %2542 = vmatprep.subr.mxu0 %v587
        %2543 = vmatpush1.msra.mxu0 %v586
        %2544 = vmatprep.subr.mxu0 %v589
        %2545 = vmatpush1.msra.mxu0 %v588
        %2546 = vmatprep.subr.mxu0 %v591
        %2547 = vmatpush1.msra.mxu0 %v590
        %2548 = vmatprep.subr.mxu0 %v593
        %2549 = vmatpush1.msra.mxu0 %v592
        %2550 = vmatprep.subr.mxu0 %v595
        %2551 = vmatpush1.msra.mxu0 %v594
        %2552 = vmatprep.subr.mxu0 %v597
        %2553 = vmatpush1.msra.mxu0 %v596
        %2554 = vmatprep.subr.mxu0 %v599
        %2555 = vmatpush1.msra.mxu0 %v598
        %2556 = vmatprep.subr.mxu0 %v601
        %2557 = vmatpush1.msra.mxu0 %v600
        %2558 = vmatprep.subr.mxu0 %v603
        %2559 = vmatpush1.msra.mxu0 %v602
        %2560 = vmatprep.subr.mxu0 %v605
        %2561 = vmatpush1.msra.mxu0 %v604
        %2562 = vmatprep.mubr.f32.mxu0 %v2497
        %2563 = vmatmul.mubr.f32.gmra.mrb[0].mxu0 %v2496
        %v2564 = vpop.f32.mrb[0].mxu0
        %v2565 = vadd.f32 0.0, %v2564
        %v2566 = vpop.f32.mrb[0].mxu0
        %v2567 = vadd.f32 0.0, %v2566
        %2568 = vdwg.mxu0
        %v2569 = vadd.f32 %v2487, %v2565
        %v2570 = vadd.f32 %v2488, %v2567
        %s2571 = scalar_lea.vmem %s2, 168
        %v2572 = vld [vmem:[%s2571] sm:$0xff]
        %2574 = vset.pattern.permute.xlu0 0
        %2575 = vperm.xlu0 %2574, %v2572
        %v2576 = vpop.permute.xlu0 %2575
        %v2578 = vmul.f32 %v2576, %v2325
        %v2579 = vmul.f32 %v2576, %v2329
        %2580 = vmatprep.subr.mxu0 %v690
        %2581 = vmatpush1.msra.mxu0 %v689
        %2582 = vmatprep.subr.mxu0 %v692
        %2583 = vmatpush1.msra.mxu0 %v691
        %2584 = vmatprep.subr.mxu0 %v694
        %2585 = vmatpush1.msra.mxu0 %v693
        %2586 = vmatprep.subr.mxu0 %v696
        %2587 = vmatpush1.msra.mxu0 %v695
        %2588 = vmatprep.subr.mxu0 %v698
        %2589 = vmatpush1.msra.mxu0 %v697
        %2590 = vmatprep.subr.mxu0 %v700
        %2591 = vmatpush1.msra.mxu0 %v699
        %2592 = vmatprep.subr.mxu0 %v702
        %2593 = vmatpush1.msra.mxu0 %v701
        %2594 = vmatprep.subr.mxu0 %v704
        %2595 = vmatpush1.msra.mxu0 %v703
        %2596 = vmatprep.subr.mxu0 %v706
        %2597 = vmatpush1.msra.mxu0 %v705
        %2598 = vmatprep.subr.mxu0 %v708
        %2599 = vmatpush1.msra.mxu0 %v707
        %2600 = vmatprep.subr.mxu0 %v710
        %2601 = vmatpush1.msra.mxu0 %v709
        %2602 = vmatprep.subr.mxu0 %v712
        %2603 = vmatpush1.msra.mxu0 %v711
        %2604 = vmatprep.subr.mxu0 %v714
        %2605 = vmatpush1.msra.mxu0 %v713
        %2606 = vmatprep.subr.mxu0 %v716
        %2607 = vmatpush1.msra.mxu0 %v715
        %2608 = vmatprep.subr.mxu0 %v718
        %2609 = vmatpush1.msra.mxu0 %v717
        %2610 = vmatprep.subr.mxu0 %v720
        %2611 = vmatpush1.msra.mxu0 %v719
        %2612 = vmatprep.subr.mxu0 %v722
        %2613 = vmatpush1.msra.mxu0 %v721
        %2614 = vmatprep.subr.mxu0 %v724
        %2615 = vmatpush1.msra.mxu0 %v723
        %2616 = vmatprep.subr.mxu0 %v726
        %2617 = vmatpush1.msra.mxu0 %v725
        %2618 = vmatprep.subr.mxu0 %v728
        %2619 = vmatpush1.msra.mxu0 %v727
        %2620 = vmatprep.subr.mxu0 %v730
        %2621 = vmatpush1.msra.mxu0 %v729
        %2622 = vmatprep.subr.mxu0 %v732
        %2623 = vmatpush1.msra.mxu0 %v731
        %2624 = vmatprep.subr.mxu0 %v734
        %2625 = vmatpush1.msra.mxu0 %v733
        %2626 = vmatprep.subr.mxu0 %v736
        %2627 = vmatpush1.msra.mxu0 %v735
        %2628 = vmatprep.subr.mxu0 %v738
        %2629 = vmatpush1.msra.mxu0 %v737
        %2630 = vmatprep.subr.mxu0 %v740
        %2631 = vmatpush1.msra.mxu0 %v739
        %2632 = vmatprep.subr.mxu0 %v742
        %2633 = vmatpush1.msra.mxu0 %v741
        %2634 = vmatprep.subr.mxu0 %v744
        %2635 = vmatpush1.msra.mxu0 %v743
        %2636 = vmatprep.subr.mxu0 %v746
        %2637 = vmatpush1.msra.mxu0 %v745
        %2638 = vmatprep.subr.mxu0 %v748
        %2639 = vmatpush1.msra.mxu0 %v747
        %2640 = vmatprep.subr.mxu0 %v750
        %2641 = vmatpush1.msra.mxu0 %v749
        %2642 = vmatprep.subr.mxu0 %v752
        %2643 = vmatpush1.msra.mxu0 %v751
        %2644 = vmatprep.mubr.f32.mxu0 %v2579
        %2645 = vmatmul.mubr.f32.gmra.mrb[0].mxu0 %v2578
        %v2646 = vpop.f32.mrb[0].mxu0
        %v2647 = vadd.f32 0.0, %v2646
        %v2648 = vpop.f32.mrb[0].mxu0
        %v2649 = vadd.f32 0.0, %v2648
        %2650 = vdwg.mxu0
        %v2651 = vadd.f32 %v2569, %v2647
        %v2652 = vadd.f32 %v2570, %v2649
        %s2653 = scalar_lea.vmem %s2, 176
        %v2654 = vld [vmem:[%s2653] sm:$0xff]
        %2656 = vset.pattern.permute.xlu0 0
        %2657 = vperm.xlu0 %2656, %v2654
        %v2658 = vpop.permute.xlu0 %2657
        %v2660 = vmul.f32 %v2658, %v2325
        %v2661 = vmul.f32 %v2658, %v2329
        %2662 = vmatprep.subr.mxu0 %v837
        %2663 = vmatpush1.msra.mxu0 %v836
        %2664 = vmatprep.subr.mxu0 %v839
        %2665 = vmatpush1.msra.mxu0 %v838
        %2666 = vmatprep.subr.mxu0 %v841
        %2667 = vmatpush1.msra.mxu0 %v840
        %2668 = vmatprep.subr.mxu0 %v843
        %2669 = vmatpush1.msra.mxu0 %v842
        %2670 = vmatprep.subr.mxu0 %v845
        %2671 = vmatpush1.msra.mxu0 %v844
        %2672 = vmatprep.subr.mxu0 %v847
        %2673 = vmatpush1.msra.mxu0 %v846
        %2674 = vmatprep.subr.mxu0 %v849
        %2675 = vmatpush1.msra.mxu0 %v848
        %2676 = vmatprep.subr.mxu0 %v851
        %2677 = vmatpush1.msra.mxu0 %v850
        %2678 = vmatprep.subr.mxu0 %v853
        %2679 = vmatpush1.msra.mxu0 %v852
        %2680 = vmatprep.subr.mxu0 %v855
        %2681 = vmatpush1.msra.mxu0 %v854
        %2682 = vmatprep.subr.mxu0 %v857
        %2683 = vmatpush1.msra.mxu0 %v856
        %2684 = vmatprep.subr.mxu0 %v859
        %2685 = vmatpush1.msra.mxu0 %v858
        %2686 = vmatprep.subr.mxu0 %v861
        %2687 = vmatpush1.msra.mxu0 %v860
        %2688 = vmatprep.subr.mxu0 %v863
        %2689 = vmatpush1.msra.mxu0 %v862
        %2690 = vmatprep.subr.mxu0 %v865
        %2691 = vmatpush1.msra.mxu0 %v864
        %2692 = vmatprep.subr.mxu0 %v867
        %2693 = vmatpush1.msra.mxu0 %v866
        %2694 = vmatprep.subr.mxu0 %v869
        %2695 = vmatpush1.msra.mxu0 %v868
        %2696 = vmatprep.subr.mxu0 %v871
        %2697 = vmatpush1.msra.mxu0 %v870
        %2698 = vmatprep.subr.mxu0 %v873
        %2699 = vmatpush1.msra.mxu0 %v872
        %2700 = vmatprep.subr.mxu0 %v875
        %2701 = vmatpush1.msra.mxu0 %v874
        %2702 = vmatprep.subr.mxu0 %v877
        %2703 = vmatpush1.msra.mxu0 %v876
        %2704 = vmatprep.subr.mxu0 %v879
        %2705 = vmatpush1.msra.mxu0 %v878
        %2706 = vmatprep.subr.mxu0 %v881
        %2707 = vmatpush1.msra.mxu0 %v880
        %2708 = vmatprep.subr.mxu0 %v883
        %2709 = vmatpush1.msra.mxu0 %v882
        %2710 = vmatprep.subr.mxu0 %v885
        %2711 = vmatpush1.msra.mxu0 %v884
        %2712 = vmatprep.subr.mxu0 %v887
        %2713 = vmatpush1.msra.mxu0 %v886
        %2714 = vmatprep.subr.mxu0 %v889
        %2715 = vmatpush1.msra.mxu0 %v888
        %2716 = vmatprep.subr.mxu0 %v891
        %2717 = vmatpush1.msra.mxu0 %v890
        %2718 = vmatprep.subr.mxu0 %v893
        %2719 = vmatpush1.msra.mxu0 %v892
        %2720 = vmatprep.subr.mxu0 %v895
        %2721 = vmatpush1.msra.mxu0 %v894
        %2722 = vmatprep.subr.mxu0 %v897
        %2723 = vmatpush1.msra.mxu0 %v896
        %2724 = vmatprep.subr.mxu0 %v899
        %2725 = vmatpush1.msra.mxu0 %v898
        %2726 = vmatprep.mubr.f32.mxu0 %v2661
        %2727 = vmatmul.mubr.f32.gmra.mrb[0].mxu0 %v2660
        %v2728 = vpop.f32.mrb[0].mxu0
        %v2729 = vadd.f32 0.0, %v2728
        %v2730 = vpop.f32.mrb[0].mxu0
        %v2731 = vadd.f32 0.0, %v2730
        %2732 = vdwg.mxu0
        %v2733 = vadd.f32 %v2651, %v2729
        %v2734 = vadd.f32 %v2652, %v2731
        %s2735 = scalar_lea.vmem %s2, 184
        %v2736 = vld [vmem:[%s2735] sm:$0xff]
        %2738 = vset.pattern.permute.xlu0 0
        %2739 = vperm.xlu0 %2738, %v2736
        %v2740 = vpop.permute.xlu0 %2739
        %v2742 = vmul.f32 %v2740, %v2325
        %v2743 = vmul.f32 %v2740, %v2329
        %2744 = vmatprep.subr.mxu0 %v984
        %2745 = vmatpush1.msra.mxu0 %v983
        %2746 = vmatprep.subr.mxu0 %v986
        %2747 = vmatpush1.msra.mxu0 %v985
        %2748 = vmatprep.subr.mxu0 %v988
        %2749 = vmatpush1.msra.mxu0 %v987
        %2750 = vmatprep.subr.mxu0 %v990
        %2751 = vmatpush1.msra.mxu0 %v989
        %2752 = vmatprep.subr.mxu0 %v992
        %2753 = vmatpush1.msra.mxu0 %v991
        %2754 = vmatprep.subr.mxu0 %v994
        %2755 = vmatpush1.msra.mxu0 %v993
        %2756 = vmatprep.subr.mxu0 %v996
        %2757 = vmatpush1.msra.mxu0 %v995
        %2758 = vmatprep.subr.mxu0 %v998
        %2759 = vmatpush1.msra.mxu0 %v997
        %2760 = vmatprep.subr.mxu0 %v1000
        %2761 = vmatpush1.msra.mxu0 %v999
        %2762 = vmatprep.subr.mxu0 %v1002
        %2763 = vmatpush1.msra.mxu0 %v1001
        %2764 = vmatprep.subr.mxu0 %v1004
        %2765 = vmatpush1.msra.mxu0 %v1003
        %2766 = vmatprep.subr.mxu0 %v1006
        %2767 = vmatpush1.msra.mxu0 %v1005
        %2768 = vmatprep.subr.mxu0 %v1008
        %2769 = vmatpush1.msra.mxu0 %v1007
        %2770 = vmatprep.subr.mxu0 %v1010
        %2771 = vmatpush1.msra.mxu0 %v1009
        %2772 = vmatprep.subr.mxu0 %v1012
        %2773 = vmatpush1.msra.mxu0 %v1011
        %2774 = vmatprep.subr.mxu0 %v1014
        %2775 = vmatpush1.msra.mxu0 %v1013
        %2776 = vmatprep.subr.mxu0 %v1016
        %2777 = vmatpush1.msra.mxu0 %v1015
        %2778 = vmatprep.subr.mxu0 %v1018
        %2779 = vmatpush1.msra.mxu0 %v1017
        %2780 = vmatprep.subr.mxu0 %v1020
        %2781 = vmatpush1.msra.mxu0 %v1019
        %2782 = vmatprep.subr.mxu0 %v1022
        %2783 = vmatpush1.msra.mxu0 %v1021
        %2784 = vmatprep.subr.mxu0 %v1024
        %2785 = vmatpush1.msra.mxu0 %v1023
        %2786 = vmatprep.subr.mxu0 %v1026
        %2787 = vmatpush1.msra.mxu0 %v1025
        %2788 = vmatprep.subr.mxu0 %v1028
        %2789 = vmatpush1.msra.mxu0 %v1027
        %2790 = vmatprep.subr.mxu0 %v1030
        %2791 = vmatpush1.msra.mxu0 %v1029
        %2792 = vmatprep.subr.mxu0 %v1032
        %2793 = vmatpush1.msra.mxu0 %v1031
        %2794 = vmatprep.subr.mxu0 %v1034
        %2795 = vmatpush1.msra.mxu0 %v1033
        %2796 = vmatprep.subr.mxu0 %v1036
        %2797 = vmatpush1.msra.mxu0 %v1035
        %2798 = vmatprep.subr.mxu0 %v1038
        %2799 = vmatpush1.msra.mxu0 %v1037
        %2800 = vmatprep.subr.mxu0 %v1040
        %2801 = vmatpush1.msra.mxu0 %v1039
        %2802 = vmatprep.subr.mxu0 %v1042
        %2803 = vmatpush1.msra.mxu0 %v1041
        %2804 = vmatprep.subr.mxu0 %v1044
        %2805 = vmatpush1.msra.mxu0 %v1043
        %2806 = vmatprep.subr.mxu0 %v1046
        %2807 = vmatpush1.msra.mxu0 %v1045
        %2808 = vmatprep.mubr.f32.mxu0 %v2743
        %2809 = vmatmul.mubr.f32.gmra.mrb[0].mxu0 %v2742
        %v2810 = vpop.f32.mrb[0].mxu0
        %v2811 = vadd.f32 0.0, %v2810
        %v2812 = vpop.f32.mrb[0].mxu0
        %v2813 = vadd.f32 0.0, %v2812
        %2814 = vdwg.mxu0
        %v2815 = vadd.f32 %v2733, %v2811
        %v2816 = vadd.f32 %v2734, %v2813
        %s2817 = scalar_lea.vmem %s2, 192
        %v2818 = vld [vmem:[%s2817] sm:$0xff]
        %2820 = vset.pattern.permute.xlu0 0
        %2821 = vperm.xlu0 %2820, %v2818
        %v2822 = vpop.permute.xlu0 %2821
        %v2824 = vmul.f32 %v2822, %v2325
        %v2825 = vmul.f32 %v2822, %v2329
        %2826 = vmatprep.subr.mxu0 %v1131
        %2827 = vmatpush1.msra.mxu0 %v1130
        %2828 = vmatprep.subr.mxu0 %v1133
        %2829 = vmatpush1.msra.mxu0 %v1132
        %2830 = vmatprep.subr.mxu0 %v1135
        %2831 = vmatpush1.msra.mxu0 %v1134
        %2832 = vmatprep.subr.mxu0 %v1137
        %2833 = vmatpush1.msra.mxu0 %v1136
        %2834 = vmatprep.subr.mxu0 %v1139
        %2835 = vmatpush1.msra.mxu0 %v1138
        %2836 = vmatprep.subr.mxu0 %v1141
        %2837 = vmatpush1.msra.mxu0 %v1140
        %2838 = vmatprep.subr.mxu0 %v1143
        %2839 = vmatpush1.msra.mxu0 %v1142
        %2840 = vmatprep.subr.mxu0 %v1145
        %2841 = vmatpush1.msra.mxu0 %v1144
        %2842 = vmatprep.subr.mxu0 %v1147
        %2843 = vmatpush1.msra.mxu0 %v1146
        %2844 = vmatprep.subr.mxu0 %v1149
        %2845 = vmatpush1.msra.mxu0 %v1148
        %2846 = vmatprep.subr.mxu0 %v1151
        %2847 = vmatpush1.msra.mxu0 %v1150
        %2848 = vmatprep.subr.mxu0 %v1153
        %2849 = vmatpush1.msra.mxu0 %v1152
        %2850 = vmatprep.subr.mxu0 %v1155
        %2851 = vmatpush1.msra.mxu0 %v1154
        %2852 = vmatprep.subr.mxu0 %v1157
        %2853 = vmatpush1.msra.mxu0 %v1156
        %2854 = vmatprep.subr.mxu0 %v1159
        %2855 = vmatpush1.msra.mxu0 %v1158
        %2856 = vmatprep.subr.mxu0 %v1161
        %2857 = vmatpush1.msra.mxu0 %v1160
        %2858 = vmatprep.subr.mxu0 %v1163
        %2859 = vmatpush1.msra.mxu0 %v1162
        %2860 = vmatprep.subr.mxu0 %v1165
        %2861 = vmatpush1.msra.mxu0 %v1164
        %2862 = vmatprep.subr.mxu0 %v1167
        %2863 = vmatpush1.msra.mxu0 %v1166
        %2864 = vmatprep.subr.mxu0 %v1169
        %2865 = vmatpush1.msra.mxu0 %v1168
        %2866 = vmatprep.subr.mxu0 %v1171
        %2867 = vmatpush1.msra.mxu0 %v1170
        %2868 = vmatprep.subr.mxu0 %v1173
        %2869 = vmatpush1.msra.mxu0 %v1172
        %2870 = vmatprep.subr.mxu0 %v1175
        %2871 = vmatpush1.msra.mxu0 %v1174
        %2872 = vmatprep.subr.mxu0 %v1177
        %2873 = vmatpush1.msra.mxu0 %v1176
        %2874 = vmatprep.subr.mxu0 %v1179
        %2875 = vmatpush1.msra.mxu0 %v1178
        %2876 = vmatprep.subr.mxu0 %v1181
        %2877 = vmatpush1.msra.mxu0 %v1180
        %2878 = vmatprep.subr.mxu0 %v1183
        %2879 = vmatpush1.msra.mxu0 %v1182
        %2880 = vmatprep.subr.mxu0 %v1185
        %2881 = vmatpush1.msra.mxu0 %v1184
        %2882 = vmatprep.subr.mxu0 %v1187
        %2883 = vmatpush1.msra.mxu0 %v1186
        %2884 = vmatprep.subr.mxu0 %v1189
        %2885 = vmatpush1.msra.mxu0 %v1188
        %2886 = vmatprep.subr.mxu0 %v1191
        %2887 = vmatpush1.msra.mxu0 %v1190
        %2888 = vmatprep.subr.mxu0 %v1193
        %2889 = vmatpush1.msra.mxu0 %v1192
        %2890 = vmatprep.mubr.f32.mxu0 %v2825
        %2891 = vmatmul.mubr.f32.gmra.mrb[0].mxu0 %v2824
        %v2892 = vpop.f32.mrb[0].mxu0
        %v2893 = vadd.f32 0.0, %v2892
        %v2894 = vpop.f32.mrb[0].mxu0
        %v2895 = vadd.f32 0.0, %v2894
        %2896 = vdwg.mxu0
        %v2897 = vadd.f32 %v2815, %v2893
        %v2898 = vadd.f32 %v2816, %v2895
        %s2899 = scalar_lea.vmem %s2, 200
        %v2900 = vld [vmem:[%s2899] sm:$0xff]
        %2902 = vset.pattern.permute.xlu0 0
        %2903 = vperm.xlu0 %2902, %v2900
        %v2904 = vpop.permute.xlu0 %2903
        %v2906 = vmul.f32 %v2904, %v2325
        %v2907 = vmul.f32 %v2904, %v2329
        %2908 = vmatprep.subr.mxu0 %v1278
        %2909 = vmatpush1.msra.mxu0 %v1277
        %2910 = vmatprep.subr.mxu0 %v1280
        %2911 = vmatpush1.msra.mxu0 %v1279
        %2912 = vmatprep.subr.mxu0 %v1282
        %2913 = vmatpush1.msra.mxu0 %v1281
        %2914 = vmatprep.subr.mxu0 %v1284
        %2915 = vmatpush1.msra.mxu0 %v1283
        %2916 = vmatprep.subr.mxu0 %v1286
        %2917 = vmatpush1.msra.mxu0 %v1285
        %2918 = vmatprep.subr.mxu0 %v1288
        %2919 = vmatpush1.msra.mxu0 %v1287
        %2920 = vmatprep.subr.mxu0 %v1290
        %2921 = vmatpush1.msra.mxu0 %v1289
        %2922 = vmatprep.subr.mxu0 %v1292
        %2923 = vmatpush1.msra.mxu0 %v1291
        %2924 = vmatprep.subr.mxu0 %v1294
        %2925 = vmatpush1.msra.mxu0 %v1293
        %2926 = vmatprep.subr.mxu0 %v1296
        %2927 = vmatpush1.msra.mxu0 %v1295
        %2928 = vmatprep.subr.mxu0 %v1298
        %2929 = vmatpush1.msra.mxu0 %v1297
        %2930 = vmatprep.subr.mxu0 %v1300
        %2931 = vmatpush1.msra.mxu0 %v1299
        %2932 = vmatprep.subr.mxu0 %v1302
        %2933 = vmatpush1.msra.mxu0 %v1301
        %2934 = vmatprep.subr.mxu0 %v1304
        %2935 = vmatpush1.msra.mxu0 %v1303
        %2936 = vmatprep.subr.mxu0 %v1306
        %2937 = vmatpush1.msra.mxu0 %v1305
        %2938 = vmatprep.subr.mxu0 %v1308
        %2939 = vmatpush1.msra.mxu0 %v1307
        %2940 = vmatprep.subr.mxu0 %v1310
        %2941 = vmatpush1.msra.mxu0 %v1309
        %2942 = vmatprep.subr.mxu0 %v1312
        %2943 = vmatpush1.msra.mxu0 %v1311
        %2944 = vmatprep.subr.mxu0 %v1314
        %2945 = vmatpush1.msra.mxu0 %v1313
        %2946 = vmatprep.subr.mxu0 %v1316
        %2947 = vmatpush1.msra.mxu0 %v1315
        %2948 = vmatprep.subr.mxu0 %v1318
        %2949 = vmatpush1.msra.mxu0 %v1317
        %2950 = vmatprep.subr.mxu0 %v1320
        %2951 = vmatpush1.msra.mxu0 %v1319
        %2952 = vmatprep.subr.mxu0 %v1322
        %2953 = vmatpush1.msra.mxu0 %v1321
        %2954 = vmatprep.subr.mxu0 %v1324
        %2955 = vmatpush1.msra.mxu0 %v1323
        %2956 = vmatprep.subr.mxu0 %v1326
        %2957 = vmatpush1.msra.mxu0 %v1325
        %2958 = vmatprep.subr.mxu0 %v1328
        %2959 = vmatpush1.msra.mxu0 %v1327
        %2960 = vmatprep.subr.mxu0 %v1330
        %2961 = vmatpush1.msra.mxu0 %v1329
        %2962 = vmatprep.subr.mxu0 %v1332
        %2963 = vmatpush1.msra.mxu0 %v1331
        %2964 = vmatprep.subr.mxu0 %v1334
        %2965 = vmatpush1.msra.mxu0 %v1333
        %2966 = vmatprep.subr.mxu0 %v1336
        %2967 = vmatpush1.msra.mxu0 %v1335
        %2968 = vmatprep.subr.mxu0 %v1338
        %2969 = vmatpush1.msra.mxu0 %v1337
        %2970 = vmatprep.subr.mxu0 %v1340
        %2971 = vmatpush1.msra.mxu0 %v1339
        %2972 = vmatprep.mubr.f32.mxu0 %v2907
        %2973 = vmatmul.mubr.f32.gmra.mrb[0].mxu0 %v2906
        %v2974 = vpop.f32.mrb[0].mxu0
        %v2975 = vadd.f32 0.0, %v2974
        %v2976 = vpop.f32.mrb[0].mxu0
        %v2977 = vadd.f32 0.0, %v2976
        %2978 = vdwg.mxu0
        %v2979 = vadd.f32 %v2897, %v2975
        %v2980 = vadd.f32 %v2898, %v2977
        %s2981 = scalar_lea.vmem %s2, 208
        %v2982 = vld [vmem:[%s2981] sm:$0xff]
        %2984 = vset.pattern.permute.xlu0 0
        %2985 = vperm.xlu0 %2984, %v2982
        %v2986 = vpop.permute.xlu0 %2985
        %v2988 = vmul.f32 %v2986, %v2325
        %v2989 = vmul.f32 %v2986, %v2329
        %2990 = vmatprep.subr.mxu0 %v1425
        %2991 = vmatpush1.msra.mxu0 %v1424
        %2992 = vmatprep.subr.mxu0 %v1427
        %2993 = vmatpush1.msra.mxu0 %v1426
        %2994 = vmatprep.subr.mxu0 %v1429
        %2995 = vmatpush1.msra.mxu0 %v1428
        %2996 = vmatprep.subr.mxu0 %v1431
        %2997 = vmatpush1.msra.mxu0 %v1430
        %2998 = vmatprep.subr.mxu0 %v1433
        %2999 = vmatpush1.msra.mxu0 %v1432
        %3000 = vmatprep.subr.mxu0 %v1435
        %3001 = vmatpush1.msra.mxu0 %v1434
        %3002 = vmatprep.subr.mxu0 %v1437
        %3003 = vmatpush1.msra.mxu0 %v1436
        %3004 = vmatprep.subr.mxu0 %v1439
        %3005 = vmatpush1.msra.mxu0 %v1438
        %3006 = vmatprep.subr.mxu0 %v1441
        %3007 = vmatpush1.msra.mxu0 %v1440
        %3008 = vmatprep.subr.mxu0 %v1443
        %3009 = vmatpush1.msra.mxu0 %v1442
        %3010 = vmatprep.subr.mxu0 %v1445
        %3011 = vmatpush1.msra.mxu0 %v1444
        %3012 = vmatprep.subr.mxu0 %v1447
        %3013 = vmatpush1.msra.mxu0 %v1446
        %3014 = vmatprep.subr.mxu0 %v1449
        %3015 = vmatpush1.msra.mxu0 %v1448
        %3016 = vmatprep.subr.mxu0 %v1451
        %3017 = vmatpush1.msra.mxu0 %v1450
        %3018 = vmatprep.subr.mxu0 %v1453
        %3019 = vmatpush1.msra.mxu0 %v1452
        %3020 = vmatprep.subr.mxu0 %v1455
        %3021 = vmatpush1.msra.mxu0 %v1454
        %3022 = vmatprep.subr.mxu0 %v1457
        %3023 = vmatpush1.msra.mxu0 %v1456
        %3024 = vmatprep.subr.mxu0 %v1459
        %3025 = vmatpush1.msra.mxu0 %v1458
        %3026 = vmatprep.subr.mxu0 %v1461
        %3027 = vmatpush1.msra.mxu0 %v1460
        %3028 = vmatprep.subr.mxu0 %v1463
        %3029 = vmatpush1.msra.mxu0 %v1462
        %3030 = vmatprep.subr.mxu0 %v1465
        %3031 = vmatpush1.msra.mxu0 %v1464
        %3032 = vmatprep.subr.mxu0 %v1467
        %3033 = vmatpush1.msra.mxu0 %v1466
        %3034 = vmatprep.subr.mxu0 %v1469
        %3035 = vmatpush1.msra.mxu0 %v1468
        %3036 = vmatprep.subr.mxu0 %v1471
        %3037 = vmatpush1.msra.mxu0 %v1470
        %3038 = vmatprep.subr.mxu0 %v1473
        %3039 = vmatpush1.msra.mxu0 %v1472
        %3040 = vmatprep.subr.mxu0 %v1475
        %3041 = vmatpush1.msra.mxu0 %v1474
        %3042 = vmatprep.subr.mxu0 %v1477
        %3043 = vmatpush1.msra.mxu0 %v1476
        %3044 = vmatprep.subr.mxu0 %v1479
        %3045 = vmatpush1.msra.mxu0 %v1478
        %3046 = vmatprep.subr.mxu0 %v1481
        %3047 = vmatpush1.msra.mxu0 %v1480
        %3048 = vmatprep.subr.mxu0 %v1483
        %3049 = vmatpush1.msra.mxu0 %v1482
        %3050 = vmatprep.subr.mxu0 %v1485
        %3051 = vmatpush1.msra.mxu0 %v1484
        %3052 = vmatprep.subr.mxu0 %v1487
        %3053 = vmatpush1.msra.mxu0 %v1486
        %3054 = vmatprep.mubr.f32.mxu0 %v2989
        %3055 = vmatmul.mubr.f32.gmra.mrb[0].mxu0 %v2988
        %v3056 = vpop.f32.mrb[0].mxu0
        %v3057 = vadd.f32 0.0, %v3056
        %v3058 = vpop.f32.mrb[0].mxu0
        %v3059 = vadd.f32 0.0, %v3058
        %3060 = vdwg.mxu0
        %v3061 = vadd.f32 %v2979, %v3057
        %v3062 = vadd.f32 %v2980, %v3059
        %3064 = vset.pattern.permute.xlu0 0
        %3065 = vperm.xlu0 %3064, %v231
        %v3066 = vpop.permute.xlu0 %3065
        %v3068 = vadd.f32 %v3061, %v3066
        %v3069 = vadd.f32 %v3062, %v3066
        %v3070 = vmul.f32 %v237, %v1574
        %v3071 = vmul.f32 %v237, %v1578
        %v3072 = vmul.f32 %v321, %v1574
        %v3073 = vmul.f32 %v321, %v1578
        %3074 = vmatprep.subr.mxu0 %v327
        %3075 = vmatpush1.msra.mxu0 %v326
        %3076 = vmatprep.subr.mxu0 %v329
        %3077 = vmatpush1.msra.mxu0 %v328
        %3078 = vmatprep.subr.mxu0 %v331
        %3079 = vmatpush1.msra.mxu0 %v330
        %3080 = vmatprep.subr.mxu0 %v333
        %3081 = vmatpush1.msra.mxu0 %v332
        %3082 = vmatprep.subr.mxu0 %v335
        %3083 = vmatpush1.msra.mxu0 %v334
        %3084 = vmatprep.subr.mxu0 %v337
        %3085 = vmatpush1.msra.mxu0 %v336
        %3086 = vmatprep.subr.mxu0 %v339
        %3087 = vmatpush1.msra.mxu0 %v338
        %3088 = vmatprep.subr.mxu0 %v341
        %3089 = vmatpush1.msra.mxu0 %v340
        %3090 = vmatprep.subr.mxu0 %v343
        %3091 = vmatpush1.msra.mxu0 %v342
        %3092 = vmatprep.subr.mxu0 %v345
        %3093 = vmatpush1.msra.mxu0 %v344
        %3094 = vmatprep.subr.mxu0 %v347
        %3095 = vmatpush1.msra.mxu0 %v346
        %3096 = vmatprep.subr.mxu0 %v349
        %3097 = vmatpush1.msra.mxu0 %v348
        %3098 = vmatprep.subr.mxu0 %v351
        %3099 = vmatpush1.msra.mxu0 %v350
        %3100 = vmatprep.subr.mxu0 %v353
        %3101 = vmatpush1.msra.mxu0 %v352
        %3102 = vmatprep.subr.mxu0 %v355
        %3103 = vmatpush1.msra.mxu0 %v354
        %3104 = vmatprep.subr.mxu0 %v357
        %3105 = vmatpush1.msra.mxu0 %v356
        %3106 = vmatprep.subr.mxu0 %v359
        %3107 = vmatpush1.msra.mxu0 %v358
        %3108 = vmatprep.subr.mxu0 %v361
        %3109 = vmatpush1.msra.mxu0 %v360
        %3110 = vmatprep.subr.mxu0 %v363
        %3111 = vmatpush1.msra.mxu0 %v362
        %3112 = vmatprep.subr.mxu0 %v365
        %3113 = vmatpush1.msra.mxu0 %v364
        %3114 = vmatprep.subr.mxu0 %v367
        %3115 = vmatpush1.msra.mxu0 %v366
        %3116 = vmatprep.subr.mxu0 %v369
        %3117 = vmatpush1.msra.mxu0 %v368
        %3118 = vmatprep.subr.mxu0 %v371
        %3119 = vmatpush1.msra.mxu0 %v370
        %3120 = vmatprep.subr.mxu0 %v373
        %3121 = vmatpush1.msra.mxu0 %v372
        %3122 = vmatprep.subr.mxu0 %v375
        %3123 = vmatpush1.msra.mxu0 %v374
        %3124 = vmatprep.subr.mxu0 %v377
        %3125 = vmatpush1.msra.mxu0 %v376
        %3126 = vmatprep.subr.mxu0 %v379
        %3127 = vmatpush1.msra.mxu0 %v378
        %3128 = vmatprep.subr.mxu0 %v381
        %3129 = vmatpush1.msra.mxu0 %v380
        %3130 = vmatprep.subr.mxu0 %v383
        %3131 = vmatpush1.msra.mxu0 %v382
        %3132 = vmatprep.subr.mxu0 %v385
        %3133 = vmatpush1.msra.mxu0 %v384
        %3134 = vmatprep.subr.mxu0 %v387
        %3135 = vmatpush1.msra.mxu0 %v386
        %3136 = vmatprep.subr.mxu0 %v389
        %3137 = vmatpush1.msra.mxu0 %v388
        %3138 = vmatprep.mubr.f32.mxu0 %v3073
        %3139 = vmatmul.mubr.f32.gmra.mrb[0].mxu0 %v3072
        %v3140 = vpop.f32.mrb[0].mxu0
        %v3141 = vadd.f32 0.0, %v3140
        %v3142 = vpop.f32.mrb[0].mxu0
        %v3143 = vadd.f32 0.0, %v3142
        %3144 = vdwg.mxu0
        %3145 = vmatprep.subr.mxu0 %v253
        %3146 = vmatpush1.msra.mxu0 %v252
        %3147 = vmatprep.subr.mxu0 %v255
        %3148 = vmatpush1.msra.mxu0 %v254
        %3149 = vmatprep.subr.mxu0 %v257
        %3150 = vmatpush1.msra.mxu0 %v256
        %3151 = vmatprep.subr.mxu0 %v259
        %3152 = vmatpush1.msra.mxu0 %v258
        %3153 = vmatprep.subr.mxu0 %v261
        %3154 = vmatpush1.msra.mxu0 %v260
        %3155 = vmatprep.subr.mxu0 %v263
        %3156 = vmatpush1.msra.mxu0 %v262
        %3157 = vmatprep.subr.mxu0 %v265
        %3158 = vmatpush1.msra.mxu0 %v264
        %3159 = vmatprep.subr.mxu0 %v267
        %3160 = vmatpush1.msra.mxu0 %v266
        %3161 = vmatprep.subr.mxu0 %v269
        %3162 = vmatpush1.msra.mxu0 %v268
        %3163 = vmatprep.subr.mxu0 %v271
        %3164 = vmatpush1.msra.mxu0 %v270
        %3165 = vmatprep.subr.mxu0 %v273
        %3166 = vmatpush1.msra.mxu0 %v272
        %3167 = vmatprep.subr.mxu0 %v275
        %3168 = vmatpush1.msra.mxu0 %v274
        %3169 = vmatprep.subr.mxu0 %v277
        %3170 = vmatpush1.msra.mxu0 %v276
        %3171 = vmatprep.subr.mxu0 %v279
        %3172 = vmatpush1.msra.mxu0 %v278
        %3173 = vmatprep.subr.mxu0 %v281
        %3174 = vmatpush1.msra.mxu0 %v280
        %3175 = vmatprep.subr.mxu0 %v283
        %3176 = vmatpush1.msra.mxu0 %v282
        %3177 = vmatprep.subr.mxu0 %v285
        %3178 = vmatpush1.msra.mxu0 %v284
        %3179 = vmatprep.subr.mxu0 %v287
        %3180 = vmatpush1.msra.mxu0 %v286
        %3181 = vmatprep.subr.mxu0 %v289
        %3182 = vmatpush1.msra.mxu0 %v288
        %3183 = vmatprep.subr.mxu0 %v291
        %3184 = vmatpush1.msra.mxu0 %v290
        %3185 = vmatprep.subr.mxu0 %v293
        %3186 = vmatpush1.msra.mxu0 %v292
        %3187 = vmatprep.subr.mxu0 %v295
        %3188 = vmatpush1.msra.mxu0 %v294
        %3189 = vmatprep.subr.mxu0 %v297
        %3190 = vmatpush1.msra.mxu0 %v296
        %3191 = vmatprep.subr.mxu0 %v299
        %3192 = vmatpush1.msra.mxu0 %v298
        %3193 = vmatprep.subr.mxu0 %v301
        %3194 = vmatpush1.msra.mxu0 %v300
        %3195 = vmatprep.subr.mxu0 %v303
        %3196 = vmatpush1.msra.mxu0 %v302
        %3197 = vmatprep.subr.mxu0 %v305
        %3198 = vmatpush1.msra.mxu0 %v304
        %3199 = vmatprep.subr.mxu0 %v307
        %3200 = vmatpush1.msra.mxu0 %v306
        %3201 = vmatprep.subr.mxu0 %v309
        %3202 = vmatpush1.msra.mxu0 %v308
        %3203 = vmatprep.subr.mxu0 %v311
        %3204 = vmatpush1.msra.mxu0 %v310
        %3205 = vmatprep.subr.mxu0 %v313
        %3206 = vmatpush1.msra.mxu0 %v312
        %3207 = vmatprep.subr.mxu0 %v315
        %3208 = vmatpush1.msra.mxu0 %v314
        %3209 = vmatprep.mubr.f32.mxu0 %v3071
        %3210 = vmatmul.mubr.f32.gmra.mrb[0].mxu0 %v3070
        %v3211 = vpop.f32.mrb[0].mxu0
        %v3212 = vadd.f32 %v3141, %v3211
        %v3213 = vpop.f32.mrb[0].mxu0
        %v3214 = vadd.f32 %v3143, %v3213
        %3215 = vdwg.mxu0
        %v3216 = vmul.f32 %v537, %v1574
        %v3217 = vmul.f32 %v537, %v1578
        %3218 = vmatprep.subr.mxu0 %v543
        %3219 = vmatpush1.msra.mxu0 %v542
        %3220 = vmatprep.subr.mxu0 %v545
        %3221 = vmatpush1.msra.mxu0 %v544
        %3222 = vmatprep.subr.mxu0 %v547
        %3223 = vmatpush1.msra.mxu0 %v546
        %3224 = vmatprep.subr.mxu0 %v549
        %3225 = vmatpush1.msra.mxu0 %v548
        %3226 = vmatprep.subr.mxu0 %v551
        %3227 = vmatpush1.msra.mxu0 %v550
        %3228 = vmatprep.subr.mxu0 %v553
        %3229 = vmatpush1.msra.mxu0 %v552
        %3230 = vmatprep.subr.mxu0 %v555
        %3231 = vmatpush1.msra.mxu0 %v554
        %3232 = vmatprep.subr.mxu0 %v557
        %3233 = vmatpush1.msra.mxu0 %v556
        %3234 = vmatprep.subr.mxu0 %v559
        %3235 = vmatpush1.msra.mxu0 %v558
        %3236 = vmatprep.subr.mxu0 %v561
        %3237 = vmatpush1.msra.mxu0 %v560
        %3238 = vmatprep.subr.mxu0 %v563
        %3239 = vmatpush1.msra.mxu0 %v562
        %3240 = vmatprep.subr.mxu0 %v565
        %3241 = vmatpush1.msra.mxu0 %v564
        %3242 = vmatprep.subr.mxu0 %v567
        %3243 = vmatpush1.msra.mxu0 %v566
        %3244 = vmatprep.subr.mxu0 %v569
        %3245 = vmatpush1.msra.mxu0 %v568
        %3246 = vmatprep.subr.mxu0 %v571
        %3247 = vmatpush1.msra.mxu0 %v570
        %3248 = vmatprep.subr.mxu0 %v573
        %3249 = vmatpush1.msra.mxu0 %v572
        %3250 = vmatprep.subr.mxu0 %v575
        %3251 = vmatpush1.msra.mxu0 %v574
        %3252 = vmatprep.subr.mxu0 %v577
        %3253 = vmatpush1.msra.mxu0 %v576
        %3254 = vmatprep.subr.mxu0 %v579
        %3255 = vmatpush1.msra.mxu0 %v578
        %3256 = vmatprep.subr.mxu0 %v581
        %3257 = vmatpush1.msra.mxu0 %v580
        %3258 = vmatprep.subr.mxu0 %v583
        %3259 = vmatpush1.msra.mxu0 %v582
        %3260 = vmatprep.subr.mxu0 %v585
        %3261 = vmatpush1.msra.mxu0 %v584
        %3262 = vmatprep.subr.mxu0 %v587
        %3263 = vmatpush1.msra.mxu0 %v586
        %3264 = vmatprep.subr.mxu0 %v589
        %3265 = vmatpush1.msra.mxu0 %v588
        %3266 = vmatprep.subr.mxu0 %v591
        %3267 = vmatpush1.msra.mxu0 %v590
        %3268 = vmatprep.subr.mxu0 %v593
        %3269 = vmatpush1.msra.mxu0 %v592
        %3270 = vmatprep.subr.mxu0 %v595
        %3271 = vmatpush1.msra.mxu0 %v594
        %3272 = vmatprep.subr.mxu0 %v597
        %3273 = vmatpush1.msra.mxu0 %v596
        %3274 = vmatprep.subr.mxu0 %v599
        %3275 = vmatpush1.msra.mxu0 %v598
        %3276 = vmatprep.subr.mxu0 %v601
        %3277 = vmatpush1.msra.mxu0 %v600
        %3278 = vmatprep.subr.mxu0 %v603
        %3279 = vmatpush1.msra.mxu0 %v602
        %3280 = vmatprep.subr.mxu0 %v605
        %3281 = vmatpush1.msra.mxu0 %v604
        %3282 = vmatprep.mubr.f32.mxu0 %v3217
        %3283 = vmatmul.mubr.f32.gmra.mrb[0].mxu0 %v3216
        %v3284 = vpop.f32.mrb[0].mxu0
        %v3285 = vadd.f32 0.0, %v3284
        %v3286 = vpop.f32.mrb[0].mxu0
        %v3287 = vadd.f32 0.0, %v3286
        %3288 = vdwg.mxu0
        %v3289 = vadd.f32 %v3212, %v3285
        %v3290 = vadd.f32 %v3214, %v3287
        %v3291 = vmul.f32 %v684, %v1574
        %v3292 = vmul.f32 %v684, %v1578
        %3293 = vmatprep.subr.mxu0 %v690
        %3294 = vmatpush1.msra.mxu0 %v689
        %3295 = vmatprep.subr.mxu0 %v692
        %3296 = vmatpush1.msra.mxu0 %v691
        %3297 = vmatprep.subr.mxu0 %v694
        %3298 = vmatpush1.msra.mxu0 %v693
        %3299 = vmatprep.subr.mxu0 %v696
        %3300 = vmatpush1.msra.mxu0 %v695
        %3301 = vmatprep.subr.mxu0 %v698
        %3302 = vmatpush1.msra.mxu0 %v697
        %3303 = vmatprep.subr.mxu0 %v700
        %3304 = vmatpush1.msra.mxu0 %v699
        %3305 = vmatprep.subr.mxu0 %v702
        %3306 = vmatpush1.msra.mxu0 %v701
        %3307 = vmatprep.subr.mxu0 %v704
        %3308 = vmatpush1.msra.mxu0 %v703
        %3309 = vmatprep.subr.mxu0 %v706
        %3310 = vmatpush1.msra.mxu0 %v705
        %3311 = vmatprep.subr.mxu0 %v708
        %3312 = vmatpush1.msra.mxu0 %v707
        %3313 = vmatprep.subr.mxu0 %v710
        %3314 = vmatpush1.msra.mxu0 %v709
        %3315 = vmatprep.subr.mxu0 %v712
        %3316 = vmatpush1.msra.mxu0 %v711
        %3317 = vmatprep.subr.mxu0 %v714
        %3318 = vmatpush1.msra.mxu0 %v713
        %3319 = vmatprep.subr.mxu0 %v716
        %3320 = vmatpush1.msra.mxu0 %v715
        %3321 = vmatprep.subr.mxu0 %v718
        %3322 = vmatpush1.msra.mxu0 %v717
        %3323 = vmatprep.subr.mxu0 %v720
        %3324 = vmatpush1.msra.mxu0 %v719
        %3325 = vmatprep.subr.mxu0 %v722
        %3326 = vmatpush1.msra.mxu0 %v721
        %3327 = vmatprep.subr.mxu0 %v724
        %3328 = vmatpush1.msra.mxu0 %v723
        %3329 = vmatprep.subr.mxu0 %v726
        %3330 = vmatpush1.msra.mxu0 %v725
        %3331 = vmatprep.subr.mxu0 %v728
        %3332 = vmatpush1.msra.mxu0 %v727
        %3333 = vmatprep.subr.mxu0 %v730
        %3334 = vmatpush1.msra.mxu0 %v729
        %3335 = vmatprep.subr.mxu0 %v732
        %3336 = vmatpush1.msra.mxu0 %v731
        %3337 = vmatprep.subr.mxu0 %v734
        %3338 = vmatpush1.msra.mxu0 %v733
        %3339 = vmatprep.subr.mxu0 %v736
        %3340 = vmatpush1.msra.mxu0 %v735
        %3341 = vmatprep.subr.mxu0 %v738
        %3342 = vmatpush1.msra.mxu0 %v737
        %3343 = vmatprep.subr.mxu0 %v740
        %3344 = vmatpush1.msra.mxu0 %v739
        %3345 = vmatprep.subr.mxu0 %v742
        %3346 = vmatpush1.msra.mxu0 %v741
        %3347 = vmatprep.subr.mxu0 %v744
        %3348 = vmatpush1.msra.mxu0 %v743
        %3349 = vmatprep.subr.mxu0 %v746
        %3350 = vmatpush1.msra.mxu0 %v745
        %3351 = vmatprep.subr.mxu0 %v748
        %3352 = vmatpush1.msra.mxu0 %v747
        %3353 = vmatprep.subr.mxu0 %v750
        %3354 = vmatpush1.msra.mxu0 %v749
        %3355 = vmatprep.subr.mxu0 %v752
        %3356 = vmatpush1.msra.mxu0 %v751
        %3357 = vmatprep.mubr.f32.mxu0 %v3292
        %3358 = vmatmul.mubr.f32.gmra.mrb[0].mxu0 %v3291
        %v3359 = vpop.f32.mrb[0].mxu0
        %v3360 = vadd.f32 0.0, %v3359
        %v3361 = vpop.f32.mrb[0].mxu0
        %v3362 = vadd.f32 0.0, %v3361
        %3363 = vdwg.mxu0
        %v3364 = vadd.f32 %v3289, %v3360
        %v3365 = vadd.f32 %v3290, %v3362
        %v3366 = vmul.f32 %v831, %v1574
        %v3367 = vmul.f32 %v831, %v1578
        %3368 = vmatprep.subr.mxu0 %v837
        %3369 = vmatpush1.msra.mxu0 %v836
        %3370 = vmatprep.subr.mxu0 %v839
        %3371 = vmatpush1.msra.mxu0 %v838
        %3372 = vmatprep.subr.mxu0 %v841
        %3373 = vmatpush1.msra.mxu0 %v840
        %3374 = vmatprep.subr.mxu0 %v843
        %3375 = vmatpush1.msra.mxu0 %v842
        %3376 = vmatprep.subr.mxu0 %v845
        %3377 = vmatpush1.msra.mxu0 %v844
        %3378 = vmatprep.subr.mxu0 %v847
        %3379 = vmatpush1.msra.mxu0 %v846
        %3380 = vmatprep.subr.mxu0 %v849
        %3381 = vmatpush1.msra.mxu0 %v848
        %3382 = vmatprep.subr.mxu0 %v851
        %3383 = vmatpush1.msra.mxu0 %v850
        %3384 = vmatprep.subr.mxu0 %v853
        %3385 = vmatpush1.msra.mxu0 %v852
        %3386 = vmatprep.subr.mxu0 %v855
        %3387 = vmatpush1.msra.mxu0 %v854
        %3388 = vmatprep.subr.mxu0 %v857
        %3389 = vmatpush1.msra.mxu0 %v856
        %3390 = vmatprep.subr.mxu0 %v859
        %3391 = vmatpush1.msra.mxu0 %v858
        %3392 = vmatprep.subr.mxu0 %v861
        %3393 = vmatpush1.msra.mxu0 %v860
        %3394 = vmatprep.subr.mxu0 %v863
        %3395 = vmatpush1.msra.mxu0 %v862
        %3396 = vmatprep.subr.mxu0 %v865
        %3397 = vmatpush1.msra.mxu0 %v864
        %3398 = vmatprep.subr.mxu0 %v867
        %3399 = vmatpush1.msra.mxu0 %v866
        %3400 = vmatprep.subr.mxu0 %v869
        %3401 = vmatpush1.msra.mxu0 %v868
        %3402 = vmatprep.subr.mxu0 %v871
        %3403 = vmatpush1.msra.mxu0 %v870
        %3404 = vmatprep.subr.mxu0 %v873
        %3405 = vmatpush1.msra.mxu0 %v872
        %3406 = vmatprep.subr.mxu0 %v875
        %3407 = vmatpush1.msra.mxu0 %v874
        %3408 = vmatprep.subr.mxu0 %v877
        %3409 = vmatpush1.msra.mxu0 %v876
        %3410 = vmatprep.subr.mxu0 %v879
        %3411 = vmatpush1.msra.mxu0 %v878
        %3412 = vmatprep.subr.mxu0 %v881
        %3413 = vmatpush1.msra.mxu0 %v880
        %3414 = vmatprep.subr.mxu0 %v883
        %3415 = vmatpush1.msra.mxu0 %v882
        %3416 = vmatprep.subr.mxu0 %v885
        %3417 = vmatpush1.msra.mxu0 %v884
        %3418 = vmatprep.subr.mxu0 %v887
        %3419 = vmatpush1.msra.mxu0 %v886
        %3420 = vmatprep.subr.mxu0 %v889
        %3421 = vmatpush1.msra.mxu0 %v888
        %3422 = vmatprep.subr.mxu0 %v891
        %3423 = vmatpush1.msra.mxu0 %v890
        %3424 = vmatprep.subr.mxu0 %v893
        %3425 = vmatpush1.msra.mxu0 %v892
        %3426 = vmatprep.subr.mxu0 %v895
        %3427 = vmatpush1.msra.mxu0 %v894
        %3428 = vmatprep.subr.mxu0 %v897
        %3429 = vmatpush1.msra.mxu0 %v896
        %3430 = vmatprep.subr.mxu0 %v899
        %3431 = vmatpush1.msra.mxu0 %v898
        %3432 = vmatprep.mubr.f32.mxu0 %v3367
        %3433 = vmatmul.mubr.f32.gmra.mrb[0].mxu0 %v3366
        %v3434 = vpop.f32.mrb[0].mxu0
        %v3435 = vadd.f32 0.0, %v3434
        %v3436 = vpop.f32.mrb[0].mxu0
        %v3437 = vadd.f32 0.0, %v3436
        %3438 = vdwg.mxu0
        %v3439 = vadd.f32 %v3364, %v3435
        %v3440 = vadd.f32 %v3365, %v3437
        %v3441 = vmul.f32 %v978, %v1574
        %v3442 = vmul.f32 %v978, %v1578
        %3443 = vmatprep.subr.mxu0 %v984
        %3444 = vmatpush1.msra.mxu0 %v983
        %3445 = vmatprep.subr.mxu0 %v986
        %3446 = vmatpush1.msra.mxu0 %v985
        %3447 = vmatprep.subr.mxu0 %v988
        %3448 = vmatpush1.msra.mxu0 %v987
        %3449 = vmatprep.subr.mxu0 %v990
        %3450 = vmatpush1.msra.mxu0 %v989
        %3451 = vmatprep.subr.mxu0 %v992
        %3452 = vmatpush1.msra.mxu0 %v991
        %3453 = vmatprep.subr.mxu0 %v994
        %3454 = vmatpush1.msra.mxu0 %v993
        %3455 = vmatprep.subr.mxu0 %v996
        %3456 = vmatpush1.msra.mxu0 %v995
        %3457 = vmatprep.subr.mxu0 %v998
        %3458 = vmatpush1.msra.mxu0 %v997
        %3459 = vmatprep.subr.mxu0 %v1000
        %3460 = vmatpush1.msra.mxu0 %v999
        %3461 = vmatprep.subr.mxu0 %v1002
        %3462 = vmatpush1.msra.mxu0 %v1001
        %3463 = vmatprep.subr.mxu0 %v1004
        %3464 = vmatpush1.msra.mxu0 %v1003
        %3465 = vmatprep.subr.mxu0 %v1006
        %3466 = vmatpush1.msra.mxu0 %v1005
        %3467 = vmatprep.subr.mxu0 %v1008
        %3468 = vmatpush1.msra.mxu0 %v1007
        %3469 = vmatprep.subr.mxu0 %v1010
        %3470 = vmatpush1.msra.mxu0 %v1009
        %3471 = vmatprep.subr.mxu0 %v1012
        %3472 = vmatpush1.msra.mxu0 %v1011
        %3473 = vmatprep.subr.mxu0 %v1014
        %3474 = vmatpush1.msra.mxu0 %v1013
        %3475 = vmatprep.subr.mxu0 %v1016
        %3476 = vmatpush1.msra.mxu0 %v1015
        %3477 = vmatprep.subr.mxu0 %v1018
        %3478 = vmatpush1.msra.mxu0 %v1017
        %3479 = vmatprep.subr.mxu0 %v1020
        %3480 = vmatpush1.msra.mxu0 %v1019
        %3481 = vmatprep.subr.mxu0 %v1022
        %3482 = vmatpush1.msra.mxu0 %v1021
        %3483 = vmatprep.subr.mxu0 %v1024
        %3484 = vmatpush1.msra.mxu0 %v1023
        %3485 = vmatprep.subr.mxu0 %v1026
        %3486 = vmatpush1.msra.mxu0 %v1025
        %3487 = vmatprep.subr.mxu0 %v1028
        %3488 = vmatpush1.msra.mxu0 %v1027
        %3489 = vmatprep.subr.mxu0 %v1030
        %3490 = vmatpush1.msra.mxu0 %v1029
        %3491 = vmatprep.subr.mxu0 %v1032
        %3492 = vmatpush1.msra.mxu0 %v1031
        %3493 = vmatprep.subr.mxu0 %v1034
        %3494 = vmatpush1.msra.mxu0 %v1033
        %3495 = vmatprep.subr.mxu0 %v1036
        %3496 = vmatpush1.msra.mxu0 %v1035
        %3497 = vmatprep.subr.mxu0 %v1038
        %3498 = vmatpush1.msra.mxu0 %v1037
        %3499 = vmatprep.subr.mxu0 %v1040
        %3500 = vmatpush1.msra.mxu0 %v1039
        %3501 = vmatprep.subr.mxu0 %v1042
        %3502 = vmatpush1.msra.mxu0 %v1041
        %3503 = vmatprep.subr.mxu0 %v1044
        %3504 = vmatpush1.msra.mxu0 %v1043
        %3505 = vmatprep.subr.mxu0 %v1046
        %3506 = vmatpush1.msra.mxu0 %v1045
        %3507 = vmatprep.mubr.f32.mxu0 %v3442
        %3508 = vmatmul.mubr.f32.gmra.mrb[0].mxu0 %v3441
        %v3509 = vpop.f32.mrb[0].mxu0
        %v3510 = vadd.f32 0.0, %v3509
        %v3511 = vpop.f32.mrb[0].mxu0
        %v3512 = vadd.f32 0.0, %v3511
        %3513 = vdwg.mxu0
        %v3514 = vadd.f32 %v3439, %v3510
        %v3515 = vadd.f32 %v3440, %v3512
        %v3516 = vmul.f32 %v1125, %v1574
        %v3517 = vmul.f32 %v1125, %v1578
        %3518 = vmatprep.subr.mxu0 %v1131
        %3519 = vmatpush1.msra.mxu0 %v1130
        %3520 = vmatprep.subr.mxu0 %v1133
        %3521 = vmatpush1.msra.mxu0 %v1132
        %3522 = vmatprep.subr.mxu0 %v1135
        %3523 = vmatpush1.msra.mxu0 %v1134
        %3524 = vmatprep.subr.mxu0 %v1137
        %3525 = vmatpush1.msra.mxu0 %v1136
        %3526 = vmatprep.subr.mxu0 %v1139
        %3527 = vmatpush1.msra.mxu0 %v1138
        %3528 = vmatprep.subr.mxu0 %v1141
        %3529 = vmatpush1.msra.mxu0 %v1140
        %3530 = vmatprep.subr.mxu0 %v1143
        %3531 = vmatpush1.msra.mxu0 %v1142
        %3532 = vmatprep.subr.mxu0 %v1145
        %3533 = vmatpush1.msra.mxu0 %v1144
        %3534 = vmatprep.subr.mxu0 %v1147
        %3535 = vmatpush1.msra.mxu0 %v1146
        %3536 = vmatprep.subr.mxu0 %v1149
        %3537 = vmatpush1.msra.mxu0 %v1148
        %3538 = vmatprep.subr.mxu0 %v1151
        %3539 = vmatpush1.msra.mxu0 %v1150
        %3540 = vmatprep.subr.mxu0 %v1153
        %3541 = vmatpush1.msra.mxu0 %v1152
        %3542 = vmatprep.subr.mxu0 %v1155
        %3543 = vmatpush1.msra.mxu0 %v1154
        %3544 = vmatprep.subr.mxu0 %v1157
        %3545 = vmatpush1.msra.mxu0 %v1156
        %3546 = vmatprep.subr.mxu0 %v1159
        %3547 = vmatpush1.msra.mxu0 %v1158
        %3548 = vmatprep.subr.mxu0 %v1161
        %3549 = vmatpush1.msra.mxu0 %v1160
        %3550 = vmatprep.subr.mxu0 %v1163
        %3551 = vmatpush1.msra.mxu0 %v1162
        %3552 = vmatprep.subr.mxu0 %v1165
        %3553 = vmatpush1.msra.mxu0 %v1164
        %3554 = vmatprep.subr.mxu0 %v1167
        %3555 = vmatpush1.msra.mxu0 %v1166
        %3556 = vmatprep.subr.mxu0 %v1169
        %3557 = vmatpush1.msra.mxu0 %v1168
        %3558 = vmatprep.subr.mxu0 %v1171
        %3559 = vmatpush1.msra.mxu0 %v1170
        %3560 = vmatprep.subr.mxu0 %v1173
        %3561 = vmatpush1.msra.mxu0 %v1172
        %3562 = vmatprep.subr.mxu0 %v1175
        %3563 = vmatpush1.msra.mxu0 %v1174
        %3564 = vmatprep.subr.mxu0 %v1177
        %3565 = vmatpush1.msra.mxu0 %v1176
        %3566 = vmatprep.subr.mxu0 %v1179
        %3567 = vmatpush1.msra.mxu0 %v1178
        %3568 = vmatprep.subr.mxu0 %v1181
        %3569 = vmatpush1.msra.mxu0 %v1180
        %3570 = vmatprep.subr.mxu0 %v1183
        %3571 = vmatpush1.msra.mxu0 %v1182
        %3572 = vmatprep.subr.mxu0 %v1185
        %3573 = vmatpush1.msra.mxu0 %v1184
        %3574 = vmatprep.subr.mxu0 %v1187
        %3575 = vmatpush1.msra.mxu0 %v1186
        %3576 = vmatprep.subr.mxu0 %v1189
        %3577 = vmatpush1.msra.mxu0 %v1188
        %3578 = vmatprep.subr.mxu0 %v1191
        %3579 = vmatpush1.msra.mxu0 %v1190
        %3580 = vmatprep.subr.mxu0 %v1193
        %3581 = vmatpush1.msra.mxu0 %v1192
        %3582 = vmatprep.mubr.f32.mxu0 %v3517
        %3583 = vmatmul.mubr.f32.gmra.mrb[0].mxu0 %v3516
        %v3584 = vpop.f32.mrb[0].mxu0
        %v3585 = vadd.f32 0.0, %v3584
        %v3586 = vpop.f32.mrb[0].mxu0
        %v3587 = vadd.f32 0.0, %v3586
        %3588 = vdwg.mxu0
        %v3589 = vadd.f32 %v3514, %v3585
        %v3590 = vadd.f32 %v3515, %v3587
        %v3591 = vmul.f32 %v1272, %v1574
        %v3592 = vmul.f32 %v1272, %v1578
        %3593 = vmatprep.subr.mxu0 %v1278
        %3594 = vmatpush1.msra.mxu0 %v1277
        %3595 = vmatprep.subr.mxu0 %v1280
        %3596 = vmatpush1.msra.mxu0 %v1279
        %3597 = vmatprep.subr.mxu0 %v1282
        %3598 = vmatpush1.msra.mxu0 %v1281
        %3599 = vmatprep.subr.mxu0 %v1284
        %3600 = vmatpush1.msra.mxu0 %v1283
        %3601 = vmatprep.subr.mxu0 %v1286
        %3602 = vmatpush1.msra.mxu0 %v1285
        %3603 = vmatprep.subr.mxu0 %v1288
        %3604 = vmatpush1.msra.mxu0 %v1287
        %3605 = vmatprep.subr.mxu0 %v1290
        %3606 = vmatpush1.msra.mxu0 %v1289
        %3607 = vmatprep.subr.mxu0 %v1292
        %3608 = vmatpush1.msra.mxu0 %v1291
        %3609 = vmatprep.subr.mxu0 %v1294
        %3610 = vmatpush1.msra.mxu0 %v1293
        %3611 = vmatprep.subr.mxu0 %v1296
        %3612 = vmatpush1.msra.mxu0 %v1295
        %3613 = vmatprep.subr.mxu0 %v1298
        %3614 = vmatpush1.msra.mxu0 %v1297
        %3615 = vmatprep.subr.mxu0 %v1300
        %3616 = vmatpush1.msra.mxu0 %v1299
        %3617 = vmatprep.subr.mxu0 %v1302
        %3618 = vmatpush1.msra.mxu0 %v1301
        %3619 = vmatprep.subr.mxu0 %v1304
        %3620 = vmatpush1.msra.mxu0 %v1303
        %3621 = vmatprep.subr.mxu0 %v1306
        %3622 = vmatpush1.msra.mxu0 %v1305
        %3623 = vmatprep.subr.mxu0 %v1308
        %3624 = vmatpush1.msra.mxu0 %v1307
        %3625 = vmatprep.subr.mxu0 %v1310
        %3626 = vmatpush1.msra.mxu0 %v1309
        %3627 = vmatprep.subr.mxu0 %v1312
        %3628 = vmatpush1.msra.mxu0 %v1311
        %3629 = vmatprep.subr.mxu0 %v1314
        %3630 = vmatpush1.msra.mxu0 %v1313
        %3631 = vmatprep.subr.mxu0 %v1316
        %3632 = vmatpush1.msra.mxu0 %v1315
        %3633 = vmatprep.subr.mxu0 %v1318
        %3634 = vmatpush1.msra.mxu0 %v1317
        %3635 = vmatprep.subr.mxu0 %v1320
        %3636 = vmatpush1.msra.mxu0 %v1319
        %3637 = vmatprep.subr.mxu0 %v1322
        %3638 = vmatpush1.msra.mxu0 %v1321
        %3639 = vmatprep.subr.mxu0 %v1324
        %3640 = vmatpush1.msra.mxu0 %v1323
        %3641 = vmatprep.subr.mxu0 %v1326
        %3642 = vmatpush1.msra.mxu0 %v1325
        %3643 = vmatprep.subr.mxu0 %v1328
        %3644 = vmatpush1.msra.mxu0 %v1327
        %3645 = vmatprep.subr.mxu0 %v1330
        %3646 = vmatpush1.msra.mxu0 %v1329
        %3647 = vmatprep.subr.mxu0 %v1332
        %3648 = vmatpush1.msra.mxu0 %v1331
        %3649 = vmatprep.subr.mxu0 %v1334
        %3650 = vmatpush1.msra.mxu0 %v1333
        %3651 = vmatprep.subr.mxu0 %v1336
        %3652 = vmatpush1.msra.mxu0 %v1335
        %3653 = vmatprep.subr.mxu0 %v1338
        %3654 = vmatpush1.msra.mxu0 %v1337
        %3655 = vmatprep.subr.mxu0 %v1340
        %3656 = vmatpush1.msra.mxu0 %v1339
        %3657 = vmatprep.mubr.f32.mxu0 %v3592
        %3658 = vmatmul.mubr.f32.gmra.mrb[0].mxu0 %v3591
        %v3659 = vpop.f32.mrb[0].mxu0
        %v3660 = vadd.f32 0.0, %v3659
        %v3661 = vpop.f32.mrb[0].mxu0
        %v3662 = vadd.f32 0.0, %v3661
        %3663 = vdwg.mxu0
        %v3664 = vadd.f32 %v3589, %v3660
        %v3665 = vadd.f32 %v3590, %v3662
        %v3666 = vmul.f32 %v1419, %v1574
        %v3667 = vmul.f32 %v1419, %v1578
        %3668 = vmatprep.subr.mxu0 %v1425
        %3669 = vmatpush1.msra.mxu0 %v1424
        %3670 = vmatprep.subr.mxu0 %v1427
        %3671 = vmatpush1.msra.mxu0 %v1426
        %3672 = vmatprep.subr.mxu0 %v1429
        %3673 = vmatpush1.msra.mxu0 %v1428
        %3674 = vmatprep.subr.mxu0 %v1431
        %3675 = vmatpush1.msra.mxu0 %v1430
        %3676 = vmatprep.subr.mxu0 %v1433
        %3677 = vmatpush1.msra.mxu0 %v1432
        %3678 = vmatprep.subr.mxu0 %v1435
        %3679 = vmatpush1.msra.mxu0 %v1434
        %3680 = vmatprep.subr.mxu0 %v1437
        %3681 = vmatpush1.msra.mxu0 %v1436
        %3682 = vmatprep.subr.mxu0 %v1439
        %3683 = vmatpush1.msra.mxu0 %v1438
        %3684 = vmatprep.subr.mxu0 %v1441
        %3685 = vmatpush1.msra.mxu0 %v1440
        %3686 = vmatprep.subr.mxu0 %v1443
        %3687 = vmatpush1.msra.mxu0 %v1442
        %3688 = vmatprep.subr.mxu0 %v1445
        %3689 = vmatpush1.msra.mxu0 %v1444
        %3690 = vmatprep.subr.mxu0 %v1447
        %3691 = vmatpush1.msra.mxu0 %v1446
        %3692 = vmatprep.subr.mxu0 %v1449
        %3693 = vmatpush1.msra.mxu0 %v1448
        %3694 = vmatprep.subr.mxu0 %v1451
        %3695 = vmatpush1.msra.mxu0 %v1450
        %3696 = vmatprep.subr.mxu0 %v1453
        %3697 = vmatpush1.msra.mxu0 %v1452
        %3698 = vmatprep.subr.mxu0 %v1455
        %3699 = vmatpush1.msra.mxu0 %v1454
        %3700 = vmatprep.subr.mxu0 %v1457
        %3701 = vmatpush1.msra.mxu0 %v1456
        %3702 = vmatprep.subr.mxu0 %v1459
        %3703 = vmatpush1.msra.mxu0 %v1458
        %3704 = vmatprep.subr.mxu0 %v1461
        %3705 = vmatpush1.msra.mxu0 %v1460
        %3706 = vmatprep.subr.mxu0 %v1463
        %3707 = vmatpush1.msra.mxu0 %v1462
        %3708 = vmatprep.subr.mxu0 %v1465
        %3709 = vmatpush1.msra.mxu0 %v1464
        %3710 = vmatprep.subr.mxu0 %v1467
        %3711 = vmatpush1.msra.mxu0 %v1466
        %3712 = vmatprep.subr.mxu0 %v1469
        %3713 = vmatpush1.msra.mxu0 %v1468
        %3714 = vmatprep.subr.mxu0 %v1471
        %3715 = vmatpush1.msra.mxu0 %v1470
        %3716 = vmatprep.subr.mxu0 %v1473
        %3717 = vmatpush1.msra.mxu0 %v1472
        %3718 = vmatprep.subr.mxu0 %v1475
        %3719 = vmatpush1.msra.mxu0 %v1474
        %3720 = vmatprep.subr.mxu0 %v1477
        %3721 = vmatpush1.msra.mxu0 %v1476
        %3722 = vmatprep.subr.mxu0 %v1479
        %3723 = vmatpush1.msra.mxu0 %v1478
        %3724 = vmatprep.subr.mxu0 %v1481
        %3725 = vmatpush1.msra.mxu0 %v1480
        %3726 = vmatprep.subr.mxu0 %v1483
        %3727 = vmatpush1.msra.mxu0 %v1482
        %3728 = vmatprep.subr.mxu0 %v1485
        %3729 = vmatpush1.msra.mxu0 %v1484
        %3730 = vmatprep.subr.mxu0 %v1487
        %3731 = vmatpush1.msra.mxu0 %v1486
        %3732 = vmatprep.mubr.f32.mxu0 %v3667
        %3733 = vmatmul.mubr.f32.gmra.mrb[0].mxu0 %v3666
        %v3734 = vpop.f32.mrb[0].mxu0
        %v3735 = vadd.f32 0.0, %v3734
        %v3736 = vpop.f32.mrb[0].mxu0
        %v3737 = vadd.f32 0.0, %v3736
        %3738 = vdwg.mxu0
        %v3739 = vadd.f32 %v3664, %v3735
        %v3740 = vadd.f32 %v3665, %v3737
        %v3741 = vmul.f32 %v1568, %v2325
        %v3742 = vmul.f32 %v1568, %v2329
        %3743 = vmatprep.subr.mxu0 %v253
        %3744 = vmatpush1.msra.mxu0 %v252
        %3745 = vmatprep.subr.mxu0 %v255
        %3746 = vmatpush1.msra.mxu0 %v254
        %3747 = vmatprep.subr.mxu0 %v257
        %3748 = vmatpush1.msra.mxu0 %v256
        %3749 = vmatprep.subr.mxu0 %v259
        %3750 = vmatpush1.msra.mxu0 %v258
        %3751 = vmatprep.subr.mxu0 %v261
        %3752 = vmatpush1.msra.mxu0 %v260
        %3753 = vmatprep.subr.mxu0 %v263
        %3754 = vmatpush1.msra.mxu0 %v262
        %3755 = vmatprep.subr.mxu0 %v265
        %3756 = vmatpush1.msra.mxu0 %v264
        %3757 = vmatprep.subr.mxu0 %v267
        %3758 = vmatpush1.msra.mxu0 %v266
        %3759 = vmatprep.subr.mxu0 %v269
        %3760 = vmatpush1.msra.mxu0 %v268
        %3761 = vmatprep.subr.mxu0 %v271
        %3762 = vmatpush1.msra.mxu0 %v270
        %3763 = vmatprep.subr.mxu0 %v273
        %3764 = vmatpush1.msra.mxu0 %v272
        %3765 = vmatprep.subr.mxu0 %v275
        %3766 = vmatpush1.msra.mxu0 %v274
        %3767 = vmatprep.subr.mxu0 %v277
        %3768 = vmatpush1.msra.mxu0 %v276
        %3769 = vmatprep.subr.mxu0 %v279
        %3770 = vmatpush1.msra.mxu0 %v278
        %3771 = vmatprep.subr.mxu0 %v281
        %3772 = vmatpush1.msra.mxu0 %v280
        %3773 = vmatprep.subr.mxu0 %v283
        %3774 = vmatpush1.msra.mxu0 %v282
        %3775 = vmatprep.subr.mxu0 %v285
        %3776 = vmatpush1.msra.mxu0 %v284
        %3777 = vmatprep.subr.mxu0 %v287
        %3778 = vmatpush1.msra.mxu0 %v286
        %3779 = vmatprep.subr.mxu0 %v289
        %3780 = vmatpush1.msra.mxu0 %v288
        %3781 = vmatprep.subr.mxu0 %v291
        %3782 = vmatpush1.msra.mxu0 %v290
        %3783 = vmatprep.subr.mxu0 %v293
        %3784 = vmatpush1.msra.mxu0 %v292
        %3785 = vmatprep.subr.mxu0 %v295
        %3786 = vmatpush1.msra.mxu0 %v294
        %3787 = vmatprep.subr.mxu0 %v297
        %3788 = vmatpush1.msra.mxu0 %v296
        %3789 = vmatprep.subr.mxu0 %v299
        %3790 = vmatpush1.msra.mxu0 %v298
        %3791 = vmatprep.subr.mxu0 %v301
        %3792 = vmatpush1.msra.mxu0 %v300
        %3793 = vmatprep.subr.mxu0 %v303
        %3794 = vmatpush1.msra.mxu0 %v302
        %3795 = vmatprep.subr.mxu0 %v305
        %3796 = vmatpush1.msra.mxu0 %v304
        %3797 = vmatprep.subr.mxu0 %v307
        %3798 = vmatpush1.msra.mxu0 %v306
        %3799 = vmatprep.subr.mxu0 %v309
        %3800 = vmatpush1.msra.mxu0 %v308
        %3801 = vmatprep.subr.mxu0 %v311
        %3802 = vmatpush1.msra.mxu0 %v310
        %3803 = vmatprep.subr.mxu0 %v313
        %3804 = vmatpush1.msra.mxu0 %v312
        %3805 = vmatprep.subr.mxu0 %v315
        %3806 = vmatpush1.msra.mxu0 %v314
        %3807 = vmatprep.mubr.f32.mxu0 %v3742
        %3808 = vmatmul.mubr.f32.gmra.mrb[0].mxu0 %v3741
        %v3809 = vpop.f32.mrb[0].mxu0
        %v3810 = vadd.f32 0.0, %v3809
        %v3811 = vpop.f32.mrb[0].mxu0
        %v3812 = vadd.f32 0.0, %v3811
        %3813 = vdwg.mxu0
        %v3814 = vadd.f32 %v3739, %v3810
        %v3815 = vadd.f32 %v3740, %v3812
        %v3816 = vmul.f32 %v1661, %v2325
        %v3817 = vmul.f32 %v1661, %v2329
        %3818 = vmatprep.subr.mxu0 %v327
        %3819 = vmatpush1.msra.mxu0 %v326
        %3820 = vmatprep.subr.mxu0 %v329
        %3821 = vmatpush1.msra.mxu0 %v328
        %3822 = vmatprep.subr.mxu0 %v331
        %3823 = vmatpush1.msra.mxu0 %v330
        %3824 = vmatprep.subr.mxu0 %v333
        %3825 = vmatpush1.msra.mxu0 %v332
        %3826 = vmatprep.subr.mxu0 %v335
        %3827 = vmatpush1.msra.mxu0 %v334
        %3828 = vmatprep.subr.mxu0 %v337
        %3829 = vmatpush1.msra.mxu0 %v336
        %3830 = vmatprep.subr.mxu0 %v339
        %3831 = vmatpush1.msra.mxu0 %v338
        %3832 = vmatprep.subr.mxu0 %v341
        %3833 = vmatpush1.msra.mxu0 %v340
        %3834 = vmatprep.subr.mxu0 %v343
        %3835 = vmatpush1.msra.mxu0 %v342
        %3836 = vmatprep.subr.mxu0 %v345
        %3837 = vmatpush1.msra.mxu0 %v344
        %3838 = vmatprep.subr.mxu0 %v347
        %3839 = vmatpush1.msra.mxu0 %v346
        %3840 = vmatprep.subr.mxu0 %v349
        %3841 = vmatpush1.msra.mxu0 %v348
        %3842 = vmatprep.subr.mxu0 %v351
        %3843 = vmatpush1.msra.mxu0 %v350
        %3844 = vmatprep.subr.mxu0 %v353
        %3845 = vmatpush1.msra.mxu0 %v352
        %3846 = vmatprep.subr.mxu0 %v355
        %3847 = vmatpush1.msra.mxu0 %v354
        %3848 = vmatprep.subr.mxu0 %v357
        %3849 = vmatpush1.msra.mxu0 %v356
        %3850 = vmatprep.subr.mxu0 %v359
        %3851 = vmatpush1.msra.mxu0 %v358
        %3852 = vmatprep.subr.mxu0 %v361
        %3853 = vmatpush1.msra.mxu0 %v360
        %3854 = vmatprep.subr.mxu0 %v363
        %3855 = vmatpush1.msra.mxu0 %v362
        %3856 = vmatprep.subr.mxu0 %v365
        %3857 = vmatpush1.msra.mxu0 %v364
        %3858 = vmatprep.subr.mxu0 %v367
        %3859 = vmatpush1.msra.mxu0 %v366
        %3860 = vmatprep.subr.mxu0 %v369
        %3861 = vmatpush1.msra.mxu0 %v368
        %3862 = vmatprep.subr.mxu0 %v371
        %3863 = vmatpush1.msra.mxu0 %v370
        %3864 = vmatprep.subr.mxu0 %v373
        %3865 = vmatpush1.msra.mxu0 %v372
        %3866 = vmatprep.subr.mxu0 %v375
        %3867 = vmatpush1.msra.mxu0 %v374
        %3868 = vmatprep.subr.mxu0 %v377
        %3869 = vmatpush1.msra.mxu0 %v376
        %3870 = vmatprep.subr.mxu0 %v379
        %3871 = vmatpush1.msra.mxu0 %v378
        %3872 = vmatprep.subr.mxu0 %v381
        %3873 = vmatpush1.msra.mxu0 %v380
        %3874 = vmatprep.subr.mxu0 %v383
        %3875 = vmatpush1.msra.mxu0 %v382
        %3876 = vmatprep.subr.mxu0 %v385
        %3877 = vmatpush1.msra.mxu0 %v384
        %3878 = vmatprep.subr.mxu0 %v387
        %3879 = vmatpush1.msra.mxu0 %v386
        %3880 = vmatprep.subr.mxu0 %v389
        %3881 = vmatpush1.msra.mxu0 %v388
        %3882 = vmatprep.mubr.f32.mxu0 %v3817
        %3883 = vmatmul.mubr.f32.gmra.mrb[0].mxu0 %v3816
        %v3884 = vpop.f32.mrb[0].mxu0
        %v3885 = vadd.f32 0.0, %v3884
        %v3886 = vpop.f32.mrb[0].mxu0
        %v3887 = vadd.f32 0.0, %v3886
        %3888 = vdwg.mxu0
        %v3889 = vadd.f32 %v3814, %v3885
        %v3890 = vadd.f32 %v3815, %v3887
        %v3891 = vmul.f32 %v1743, %v2325
        %v3892 = vmul.f32 %v1743, %v2329
        %3893 = vmatprep.subr.mxu0 %v543
        %3894 = vmatpush1.msra.mxu0 %v542
        %3895 = vmatprep.subr.mxu0 %v545
        %3896 = vmatpush1.msra.mxu0 %v544
        %3897 = vmatprep.subr.mxu0 %v547
        %3898 = vmatpush1.msra.mxu0 %v546
        %3899 = vmatprep.subr.mxu0 %v549
        %3900 = vmatpush1.msra.mxu0 %v548
        %3901 = vmatprep.subr.mxu0 %v551
        %3902 = vmatpush1.msra.mxu0 %v550
        %3903 = vmatprep.subr.mxu0 %v553
        %3904 = vmatpush1.msra.mxu0 %v552
        %3905 = vmatprep.subr.mxu0 %v555
        %3906 = vmatpush1.msra.mxu0 %v554
        %3907 = vmatprep.subr.mxu0 %v557
        %3908 = vmatpush1.msra.mxu0 %v556
        %3909 = vmatprep.subr.mxu0 %v559
        %3910 = vmatpush1.msra.mxu0 %v558
        %3911 = vmatprep.subr.mxu0 %v561
        %3912 = vmatpush1.msra.mxu0 %v560
        %3913 = vmatprep.subr.mxu0 %v563
        %3914 = vmatpush1.msra.mxu0 %v562
        %3915 = vmatprep.subr.mxu0 %v565
        %3916 = vmatpush1.msra.mxu0 %v564
        %3917 = vmatprep.subr.mxu0 %v567
        %3918 = vmatpush1.msra.mxu0 %v566
        %3919 = vmatprep.subr.mxu0 %v569
        %3920 = vmatpush1.msra.mxu0 %v568
        %3921 = vmatprep.subr.mxu0 %v571
        %3922 = vmatpush1.msra.mxu0 %v570
        %3923 = vmatprep.subr.mxu0 %v573
        %3924 = vmatpush1.msra.mxu0 %v572
        %3925 = vmatprep.subr.mxu0 %v575
        %3926 = vmatpush1.msra.mxu0 %v574
        %3927 = vmatprep.subr.mxu0 %v577
        %3928 = vmatpush1.msra.mxu0 %v576
        %3929 = vmatprep.subr.mxu0 %v579
        %3930 = vmatpush1.msra.mxu0 %v578
        %3931 = vmatprep.subr.mxu0 %v581
        %3932 = vmatpush1.msra.mxu0 %v580
        %3933 = vmatprep.subr.mxu0 %v583
        %3934 = vmatpush1.msra.mxu0 %v582
        %3935 = vmatprep.subr.mxu0 %v585
        %3936 = vmatpush1.msra.mxu0 %v584
        %3937 = vmatprep.subr.mxu0 %v587
        %3938 = vmatpush1.msra.mxu0 %v586
        %3939 = vmatprep.subr.mxu0 %v589
        %3940 = vmatpush1.msra.mxu0 %v588
        %3941 = vmatprep.subr.mxu0 %v591
        %3942 = vmatpush1.msra.mxu0 %v590
        %3943 = vmatprep.subr.mxu0 %v593
        %3944 = vmatpush1.msra.mxu0 %v592
        %3945 = vmatprep.subr.mxu0 %v595
        %3946 = vmatpush1.msra.mxu0 %v594
        %3947 = vmatprep.subr.mxu0 %v597
        %3948 = vmatpush1.msra.mxu0 %v596
        %3949 = vmatprep.subr.mxu0 %v599
        %3950 = vmatpush1.msra.mxu0 %v598
        %3951 = vmatprep.subr.mxu0 %v601
        %3952 = vmatpush1.msra.mxu0 %v600
        %3953 = vmatprep.subr.mxu0 %v603
        %3954 = vmatpush1.msra.mxu0 %v602
        %3955 = vmatprep.subr.mxu0 %v605
        %3956 = vmatpush1.msra.mxu0 %v604
        %3957 = vmatprep.mubr.f32.mxu0 %v3892
        %3958 = vmatmul.mubr.f32.gmra.mrb[0].mxu0 %v3891
        %v3959 = vpop.f32.mrb[0].mxu0
        %v3960 = vadd.f32 0.0, %v3959
        %v3961 = vpop.f32.mrb[0].mxu0
        %v3962 = vadd.f32 0.0, %v3961
        %3963 = vdwg.mxu0
        %v3964 = vadd.f32 %v3889, %v3960
        %v3965 = vadd.f32 %v3890, %v3962
        %v3966 = vmul.f32 %v1825, %v2325
        %v3967 = vmul.f32 %v1825, %v2329
        %3968 = vmatprep.subr.mxu0 %v690
        %3969 = vmatpush1.msra.mxu0 %v689
        %3970 = vmatprep.subr.mxu0 %v692
        %3971 = vmatpush1.msra.mxu0 %v691
        %3972 = vmatprep.subr.mxu0 %v694
        %3973 = vmatpush1.msra.mxu0 %v693
        %3974 = vmatprep.subr.mxu0 %v696
        %3975 = vmatpush1.msra.mxu0 %v695
        %3976 = vmatprep.subr.mxu0 %v698
        %3977 = vmatpush1.msra.mxu0 %v697
        %3978 = vmatprep.subr.mxu0 %v700
        %3979 = vmatpush1.msra.mxu0 %v699
        %3980 = vmatprep.subr.mxu0 %v702
        %3981 = vmatpush1.msra.mxu0 %v701
        %3982 = vmatprep.subr.mxu0 %v704
        %3983 = vmatpush1.msra.mxu0 %v703
        %3984 = vmatprep.subr.mxu0 %v706
        %3985 = vmatpush1.msra.mxu0 %v705
        %3986 = vmatprep.subr.mxu0 %v708
        %3987 = vmatpush1.msra.mxu0 %v707
        %3988 = vmatprep.subr.mxu0 %v710
        %3989 = vmatpush1.msra.mxu0 %v709
        %3990 = vmatprep.subr.mxu0 %v712
        %3991 = vmatpush1.msra.mxu0 %v711
        %3992 = vmatprep.subr.mxu0 %v714
        %3993 = vmatpush1.msra.mxu0 %v713
        %3994 = vmatprep.subr.mxu0 %v716
        %3995 = vmatpush1.msra.mxu0 %v715
        %3996 = vmatprep.subr.mxu0 %v718
        %3997 = vmatpush1.msra.mxu0 %v717
        %3998 = vmatprep.subr.mxu0 %v720
        %3999 = vmatpush1.msra.mxu0 %v719
        %4000 = vmatprep.subr.mxu0 %v722
        %4001 = vmatpush1.msra.mxu0 %v721
        %4002 = vmatprep.subr.mxu0 %v724
        %4003 = vmatpush1.msra.mxu0 %v723
        %4004 = vmatprep.subr.mxu0 %v726
        %4005 = vmatpush1.msra.mxu0 %v725
        %4006 = vmatprep.subr.mxu0 %v728
        %4007 = vmatpush1.msra.mxu0 %v727
        %4008 = vmatprep.subr.mxu0 %v730
        %4009 = vmatpush1.msra.mxu0 %v729
        %4010 = vmatprep.subr.mxu0 %v732
        %4011 = vmatpush1.msra.mxu0 %v731
        %4012 = vmatprep.subr.mxu0 %v734
        %4013 = vmatpush1.msra.mxu0 %v733
        %4014 = vmatprep.subr.mxu0 %v736
        %4015 = vmatpush1.msra.mxu0 %v735
        %4016 = vmatprep.subr.mxu0 %v738
        %4017 = vmatpush1.msra.mxu0 %v737
        %4018 = vmatprep.subr.mxu0 %v740
        %4019 = vmatpush1.msra.mxu0 %v739
        %4020 = vmatprep.subr.mxu0 %v742
        %4021 = vmatpush1.msra.mxu0 %v741
        %4022 = vmatprep.subr.mxu0 %v744
        %4023 = vmatpush1.msra.mxu0 %v743
        %4024 = vmatprep.subr.mxu0 %v746
        %4025 = vmatpush1.msra.mxu0 %v745
        %4026 = vmatprep.subr.mxu0 %v748
        %4027 = vmatpush1.msra.mxu0 %v747
        %4028 = vmatprep.subr.mxu0 %v750
        %4029 = vmatpush1.msra.mxu0 %v749
        %4030 = vmatprep.subr.mxu0 %v752
        %4031 = vmatpush1.msra.mxu0 %v751
        %4032 = vmatprep.mubr.f32.mxu0 %v3967
        %4033 = vmatmul.mubr.f32.gmra.mrb[0].mxu0 %v3966
        %v4034 = vpop.f32.mrb[0].mxu0
        %v4035 = vadd.f32 0.0, %v4034
        %v4036 = vpop.f32.mrb[0].mxu0
        %v4037 = vadd.f32 0.0, %v4036
        %4038 = vdwg.mxu0
        %v4039 = vadd.f32 %v3964, %v4035
        %v4040 = vadd.f32 %v3965, %v4037
        %v4041 = vmul.f32 %v1907, %v2325
        %v4042 = vmul.f32 %v1907, %v2329
        %4043 = vmatprep.subr.mxu0 %v837
        %4044 = vmatpush1.msra.mxu0 %v836
        %4045 = vmatprep.subr.mxu0 %v839
        %4046 = vmatpush1.msra.mxu0 %v838
        %4047 = vmatprep.subr.mxu0 %v841
        %4048 = vmatpush1.msra.mxu0 %v840
        %4049 = vmatprep.subr.mxu0 %v843
        %4050 = vmatpush1.msra.mxu0 %v842
        %4051 = vmatprep.subr.mxu0 %v845
        %4052 = vmatpush1.msra.mxu0 %v844
        %4053 = vmatprep.subr.mxu0 %v847
        %4054 = vmatpush1.msra.mxu0 %v846
        %4055 = vmatprep.subr.mxu0 %v849
        %4056 = vmatpush1.msra.mxu0 %v848
        %4057 = vmatprep.subr.mxu0 %v851
        %4058 = vmatpush1.msra.mxu0 %v850
        %4059 = vmatprep.subr.mxu0 %v853
        %4060 = vmatpush1.msra.mxu0 %v852
        %4061 = vmatprep.subr.mxu0 %v855
        %4062 = vmatpush1.msra.mxu0 %v854
        %4063 = vmatprep.subr.mxu0 %v857
        %4064 = vmatpush1.msra.mxu0 %v856
        %4065 = vmatprep.subr.mxu0 %v859
        %4066 = vmatpush1.msra.mxu0 %v858
        %4067 = vmatprep.subr.mxu0 %v861
        %4068 = vmatpush1.msra.mxu0 %v860
        %4069 = vmatprep.subr.mxu0 %v863
        %4070 = vmatpush1.msra.mxu0 %v862
        %4071 = vmatprep.subr.mxu0 %v865
        %4072 = vmatpush1.msra.mxu0 %v864
        %4073 = vmatprep.subr.mxu0 %v867
        %4074 = vmatpush1.msra.mxu0 %v866
        %4075 = vmatprep.subr.mxu0 %v869
        %4076 = vmatpush1.msra.mxu0 %v868
        %4077 = vmatprep.subr.mxu0 %v871
        %4078 = vmatpush1.msra.mxu0 %v870
        %4079 = vmatprep.subr.mxu0 %v873
        %4080 = vmatpush1.msra.mxu0 %v872
        %4081 = vmatprep.subr.mxu0 %v875
        %4082 = vmatpush1.msra.mxu0 %v874
        %4083 = vmatprep.subr.mxu0 %v877
        %4084 = vmatpush1.msra.mxu0 %v876
        %4085 = vmatprep.subr.mxu0 %v879
        %4086 = vmatpush1.msra.mxu0 %v878
        %4087 = vmatprep.subr.mxu0 %v881
        %4088 = vmatpush1.msra.mxu0 %v880
        %4089 = vmatprep.subr.mxu0 %v883
        %4090 = vmatpush1.msra.mxu0 %v882
        %4091 = vmatprep.subr.mxu0 %v885
        %4092 = vmatpush1.msra.mxu0 %v884
        %4093 = vmatprep.subr.mxu0 %v887
        %4094 = vmatpush1.msra.mxu0 %v886
        %4095 = vmatprep.subr.mxu0 %v889
        %4096 = vmatpush1.msra.mxu0 %v888
        %4097 = vmatprep.subr.mxu0 %v891
        %4098 = vmatpush1.msra.mxu0 %v890
        %4099 = vmatprep.subr.mxu0 %v893
        %4100 = vmatpush1.msra.mxu0 %v892
        %4101 = vmatprep.subr.mxu0 %v895
        %4102 = vmatpush1.msra.mxu0 %v894
        %4103 = vmatprep.subr.mxu0 %v897
        %4104 = vmatpush1.msra.mxu0 %v896
        %4105 = vmatprep.subr.mxu0 %v899
        %4106 = vmatpush1.msra.mxu0 %v898
        %4107 = vmatprep.mubr.f32.mxu0 %v4042
        %4108 = vmatmul.mubr.f32.gmra.mrb[0].mxu0 %v4041
        %v4109 = vpop.f32.mrb[0].mxu0
        %v4110 = vadd.f32 0.0, %v4109
        %v4111 = vpop.f32.mrb[0].mxu0
        %v4112 = vadd.f32 0.0, %v4111
        %4113 = vdwg.mxu0
        %v4114 = vadd.f32 %v4039, %v4110
        %v4115 = vadd.f32 %v4040, %v4112
        %v4116 = vmul.f32 %v1989, %v2325
        %v4117 = vmul.f32 %v1989, %v2329
        %4118 = vmatprep.subr.mxu0 %v984
        %4119 = vmatpush1.msra.mxu0 %v983
        %4120 = vmatprep.subr.mxu0 %v986
        %4121 = vmatpush1.msra.mxu0 %v985
        %4122 = vmatprep.subr.mxu0 %v988
        %4123 = vmatpush1.msra.mxu0 %v987
        %4124 = vmatprep.subr.mxu0 %v990
        %4125 = vmatpush1.msra.mxu0 %v989
        %4126 = vmatprep.subr.mxu0 %v992
        %4127 = vmatpush1.msra.mxu0 %v991
        %4128 = vmatprep.subr.mxu0 %v994
        %4129 = vmatpush1.msra.mxu0 %v993
        %4130 = vmatprep.subr.mxu0 %v996
        %4131 = vmatpush1.msra.mxu0 %v995
        %4132 = vmatprep.subr.mxu0 %v998
        %4133 = vmatpush1.msra.mxu0 %v997
        %4134 = vmatprep.subr.mxu0 %v1000
        %4135 = vmatpush1.msra.mxu0 %v999
        %4136 = vmatprep.subr.mxu0 %v1002
        %4137 = vmatpush1.msra.mxu0 %v1001
        %4138 = vmatprep.subr.mxu0 %v1004
        %4139 = vmatpush1.msra.mxu0 %v1003
        %4140 = vmatprep.subr.mxu0 %v1006
        %4141 = vmatpush1.msra.mxu0 %v1005
        %4142 = vmatprep.subr.mxu0 %v1008
        %4143 = vmatpush1.msra.mxu0 %v1007
        %4144 = vmatprep.subr.mxu0 %v1010
        %4145 = vmatpush1.msra.mxu0 %v1009
        %4146 = vmatprep.subr.mxu0 %v1012
        %4147 = vmatpush1.msra.mxu0 %v1011
        %4148 = vmatprep.subr.mxu0 %v1014
        %4149 = vmatpush1.msra.mxu0 %v1013
        %4150 = vmatprep.subr.mxu0 %v1016
        %4151 = vmatpush1.msra.mxu0 %v1015
        %4152 = vmatprep.subr.mxu0 %v1018
        %4153 = vmatpush1.msra.mxu0 %v1017
        %4154 = vmatprep.subr.mxu0 %v1020
        %4155 = vmatpush1.msra.mxu0 %v1019
        %4156 = vmatprep.subr.mxu0 %v1022
        %4157 = vmatpush1.msra.mxu0 %v1021
        %4158 = vmatprep.subr.mxu0 %v1024
        %4159 = vmatpush1.msra.mxu0 %v1023
        %4160 = vmatprep.subr.mxu0 %v1026
        %4161 = vmatpush1.msra.mxu0 %v1025
        %4162 = vmatprep.subr.mxu0 %v1028
        %4163 = vmatpush1.msra.mxu0 %v1027
        %4164 = vmatprep.subr.mxu0 %v1030
        %4165 = vmatpush1.msra.mxu0 %v1029
        %4166 = vmatprep.subr.mxu0 %v1032
        %4167 = vmatpush1.msra.mxu0 %v1031
        %4168 = vmatprep.subr.mxu0 %v1034
        %4169 = vmatpush1.msra.mxu0 %v1033
        %4170 = vmatprep.subr.mxu0 %v1036
        %4171 = vmatpush1.msra.mxu0 %v1035
        %4172 = vmatprep.subr.mxu0 %v1038
        %4173 = vmatpush1.msra.mxu0 %v1037
        %4174 = vmatprep.subr.mxu0 %v1040
        %4175 = vmatpush1.msra.mxu0 %v1039
        %4176 = vmatprep.subr.mxu0 %v1042
        %4177 = vmatpush1.msra.mxu0 %v1041
        %4178 = vmatprep.subr.mxu0 %v1044
        %4179 = vmatpush1.msra.mxu0 %v1043
        %4180 = vmatprep.subr.mxu0 %v1046
        %4181 = vmatpush1.msra.mxu0 %v1045
        %4182 = vmatprep.mubr.f32.mxu0 %v4117
        %4183 = vmatmul.mubr.f32.gmra.mrb[0].mxu0 %v4116
        %v4184 = vpop.f32.mrb[0].mxu0
        %v4185 = vadd.f32 0.0, %v4184
        %v4186 = vpop.f32.mrb[0].mxu0
        %v4187 = vadd.f32 0.0, %v4186
        %4188 = vdwg.mxu0
        %v4189 = vadd.f32 %v4114, %v4185
        %v4190 = vadd.f32 %v4115, %v4187
        %v4191 = vmul.f32 %v2071, %v2325
        %v4192 = vmul.f32 %v2071, %v2329
        %4193 = vmatprep.subr.mxu0 %v1131
        %4194 = vmatpush1.msra.mxu0 %v1130
        %4195 = vmatprep.subr.mxu0 %v1133
        %4196 = vmatpush1.msra.mxu0 %v1132
        %4197 = vmatprep.subr.mxu0 %v1135
        %4198 = vmatpush1.msra.mxu0 %v1134
        %4199 = vmatprep.subr.mxu0 %v1137
        %4200 = vmatpush1.msra.mxu0 %v1136
        %4201 = vmatprep.subr.mxu0 %v1139
        %4202 = vmatpush1.msra.mxu0 %v1138
        %4203 = vmatprep.subr.mxu0 %v1141
        %4204 = vmatpush1.msra.mxu0 %v1140
        %4205 = vmatprep.subr.mxu0 %v1143
        %4206 = vmatpush1.msra.mxu0 %v1142
        %4207 = vmatprep.subr.mxu0 %v1145
        %4208 = vmatpush1.msra.mxu0 %v1144
        %4209 = vmatprep.subr.mxu0 %v1147
        %4210 = vmatpush1.msra.mxu0 %v1146
        %4211 = vmatprep.subr.mxu0 %v1149
        %4212 = vmatpush1.msra.mxu0 %v1148
        %4213 = vmatprep.subr.mxu0 %v1151
        %4214 = vmatpush1.msra.mxu0 %v1150
        %4215 = vmatprep.subr.mxu0 %v1153
        %4216 = vmatpush1.msra.mxu0 %v1152
        %4217 = vmatprep.subr.mxu0 %v1155
        %4218 = vmatpush1.msra.mxu0 %v1154
        %4219 = vmatprep.subr.mxu0 %v1157
        %4220 = vmatpush1.msra.mxu0 %v1156
        %4221 = vmatprep.subr.mxu0 %v1159
        %4222 = vmatpush1.msra.mxu0 %v1158
        %4223 = vmatprep.subr.mxu0 %v1161
        %4224 = vmatpush1.msra.mxu0 %v1160
        %4225 = vmatprep.subr.mxu0 %v1163
        %4226 = vmatpush1.msra.mxu0 %v1162
        %4227 = vmatprep.subr.mxu0 %v1165
        %4228 = vmatpush1.msra.mxu0 %v1164
        %4229 = vmatprep.subr.mxu0 %v1167
        %4230 = vmatpush1.msra.mxu0 %v1166
        %4231 = vmatprep.subr.mxu0 %v1169
        %4232 = vmatpush1.msra.mxu0 %v1168
        %4233 = vmatprep.subr.mxu0 %v1171
        %4234 = vmatpush1.msra.mxu0 %v1170
        %4235 = vmatprep.subr.mxu0 %v1173
        %4236 = vmatpush1.msra.mxu0 %v1172
        %4237 = vmatprep.subr.mxu0 %v1175
        %4238 = vmatpush1.msra.mxu0 %v1174
        %4239 = vmatprep.subr.mxu0 %v1177
        %4240 = vmatpush1.msra.mxu0 %v1176
        %4241 = vmatprep.subr.mxu0 %v1179
        %4242 = vmatpush1.msra.mxu0 %v1178
        %4243 = vmatprep.subr.mxu0 %v1181
        %4244 = vmatpush1.msra.mxu0 %v1180
        %4245 = vmatprep.subr.mxu0 %v1183
        %4246 = vmatpush1.msra.mxu0 %v1182
        %4247 = vmatprep.subr.mxu0 %v1185
        %4248 = vmatpush1.msra.mxu0 %v1184
        %4249 = vmatprep.subr.mxu0 %v1187
        %4250 = vmatpush1.msra.mxu0 %v1186
        %4251 = vmatprep.subr.mxu0 %v1189
        %4252 = vmatpush1.msra.mxu0 %v1188
        %4253 = vmatprep.subr.mxu0 %v1191
        %4254 = vmatpush1.msra.mxu0 %v1190
        %4255 = vmatprep.subr.mxu0 %v1193
        %4256 = vmatpush1.msra.mxu0 %v1192
        %4257 = vmatprep.mubr.f32.mxu0 %v4192
        %4258 = vmatmul.mubr.f32.gmra.mrb[0].mxu0 %v4191
        %v4259 = vpop.f32.mrb[0].mxu0
        %v4260 = vadd.f32 0.0, %v4259
        %v4261 = vpop.f32.mrb[0].mxu0
        %v4262 = vadd.f32 0.0, %v4261
        %4263 = vdwg.mxu0
        %v4264 = vadd.f32 %v4189, %v4260
        %v4265 = vadd.f32 %v4190, %v4262
        %v4266 = vmul.f32 %v2153, %v2325
        %v4267 = vmul.f32 %v2153, %v2329
        %4268 = vmatprep.subr.mxu0 %v1278
        %4269 = vmatpush1.msra.mxu0 %v1277
        %4270 = vmatprep.subr.mxu0 %v1280
        %4271 = vmatpush1.msra.mxu0 %v1279
        %4272 = vmatprep.subr.mxu0 %v1282
        %4273 = vmatpush1.msra.mxu0 %v1281
        %4274 = vmatprep.subr.mxu0 %v1284
        %4275 = vmatpush1.msra.mxu0 %v1283
        %4276 = vmatprep.subr.mxu0 %v1286
        %4277 = vmatpush1.msra.mxu0 %v1285
        %4278 = vmatprep.subr.mxu0 %v1288
        %4279 = vmatpush1.msra.mxu0 %v1287
        %4280 = vmatprep.subr.mxu0 %v1290
        %4281 = vmatpush1.msra.mxu0 %v1289
        %4282 = vmatprep.subr.mxu0 %v1292
        %4283 = vmatpush1.msra.mxu0 %v1291
        %4284 = vmatprep.subr.mxu0 %v1294
        %4285 = vmatpush1.msra.mxu0 %v1293
        %4286 = vmatprep.subr.mxu0 %v1296
        %4287 = vmatpush1.msra.mxu0 %v1295
        %4288 = vmatprep.subr.mxu0 %v1298
        %4289 = vmatpush1.msra.mxu0 %v1297
        %4290 = vmatprep.subr.mxu0 %v1300
        %4291 = vmatpush1.msra.mxu0 %v1299
        %4292 = vmatprep.subr.mxu0 %v1302
        %4293 = vmatpush1.msra.mxu0 %v1301
        %4294 = vmatprep.subr.mxu0 %v1304
        %4295 = vmatpush1.msra.mxu0 %v1303
        %4296 = vmatprep.subr.mxu0 %v1306
        %4297 = vmatpush1.msra.mxu0 %v1305
        %4298 = vmatprep.subr.mxu0 %v1308
        %4299 = vmatpush1.msra.mxu0 %v1307
        %4300 = vmatprep.subr.mxu0 %v1310
        %4301 = vmatpush1.msra.mxu0 %v1309
        %4302 = vmatprep.subr.mxu0 %v1312
        %4303 = vmatpush1.msra.mxu0 %v1311
        %4304 = vmatprep.subr.mxu0 %v1314
        %4305 = vmatpush1.msra.mxu0 %v1313
        %4306 = vmatprep.subr.mxu0 %v1316
        %4307 = vmatpush1.msra.mxu0 %v1315
        %4308 = vmatprep.subr.mxu0 %v1318
        %4309 = vmatpush1.msra.mxu0 %v1317
        %4310 = vmatprep.subr.mxu0 %v1320
        %4311 = vmatpush1.msra.mxu0 %v1319
        %4312 = vmatprep.subr.mxu0 %v1322
        %4313 = vmatpush1.msra.mxu0 %v1321
        %4314 = vmatprep.subr.mxu0 %v1324
        %4315 = vmatpush1.msra.mxu0 %v1323
        %4316 = vmatprep.subr.mxu0 %v1326
        %4317 = vmatpush1.msra.mxu0 %v1325
        %4318 = vmatprep.subr.mxu0 %v1328
        %4319 = vmatpush1.msra.mxu0 %v1327
        %4320 = vmatprep.subr.mxu0 %v1330
        %4321 = vmatpush1.msra.mxu0 %v1329
        %4322 = vmatprep.subr.mxu0 %v1332
        %4323 = vmatpush1.msra.mxu0 %v1331
        %4324 = vmatprep.subr.mxu0 %v1334
        %4325 = vmatpush1.msra.mxu0 %v1333
        %4326 = vmatprep.subr.mxu0 %v1336
        %4327 = vmatpush1.msra.mxu0 %v1335
        %4328 = vmatprep.subr.mxu0 %v1338
        %4329 = vmatpush1.msra.mxu0 %v1337
        %4330 = vmatprep.subr.mxu0 %v1340
        %4331 = vmatpush1.msra.mxu0 %v1339
        %4332 = vmatprep.mubr.f32.mxu0 %v4267
        %4333 = vmatmul.mubr.f32.gmra.mrb[0].mxu0 %v4266
        %v4334 = vpop.f32.mrb[0].mxu0
        %v4335 = vadd.f32 0.0, %v4334
        %v4336 = vpop.f32.mrb[0].mxu0
        %v4337 = vadd.f32 0.0, %v4336
        %4338 = vdwg.mxu0
        %v4339 = vadd.f32 %v4264, %v4335
        %v4340 = vadd.f32 %v4265, %v4337
        %v4341 = vmul.f32 %v2235, %v2325
        %v4342 = vmul.f32 %v2235, %v2329
        %4343 = vmatprep.subr.mxu0 %v1425
        %4344 = vmatpush1.msra.mxu0 %v1424
        %4345 = vmatprep.subr.mxu0 %v1427
        %4346 = vmatpush1.msra.mxu0 %v1426
        %4347 = vmatprep.subr.mxu0 %v1429
        %4348 = vmatpush1.msra.mxu0 %v1428
        %4349 = vmatprep.subr.mxu0 %v1431
        %4350 = vmatpush1.msra.mxu0 %v1430
        %4351 = vmatprep.subr.mxu0 %v1433
        %4352 = vmatpush1.msra.mxu0 %v1432
        %4353 = vmatprep.subr.mxu0 %v1435
        %4354 = vmatpush1.msra.mxu0 %v1434
        %4355 = vmatprep.subr.mxu0 %v1437
        %4356 = vmatpush1.msra.mxu0 %v1436
        %4357 = vmatprep.subr.mxu0 %v1439
        %4358 = vmatpush1.msra.mxu0 %v1438
        %4359 = vmatprep.subr.mxu0 %v1441
        %4360 = vmatpush1.msra.mxu0 %v1440
        %4361 = vmatprep.subr.mxu0 %v1443
        %4362 = vmatpush1.msra.mxu0 %v1442
        %4363 = vmatprep.subr.mxu0 %v1445
        %4364 = vmatpush1.msra.mxu0 %v1444
        %4365 = vmatprep.subr.mxu0 %v1447
        %4366 = vmatpush1.msra.mxu0 %v1446
        %4367 = vmatprep.subr.mxu0 %v1449
        %4368 = vmatpush1.msra.mxu0 %v1448
        %4369 = vmatprep.subr.mxu0 %v1451
        %4370 = vmatpush1.msra.mxu0 %v1450
        %4371 = vmatprep.subr.mxu0 %v1453
        %4372 = vmatpush1.msra.mxu0 %v1452
        %4373 = vmatprep.subr.mxu0 %v1455
        %4374 = vmatpush1.msra.mxu0 %v1454
        %4375 = vmatprep.subr.mxu0 %v1457
        %4376 = vmatpush1.msra.mxu0 %v1456
        %4377 = vmatprep.subr.mxu0 %v1459
        %4378 = vmatpush1.msra.mxu0 %v1458
        %4379 = vmatprep.subr.mxu0 %v1461
        %4380 = vmatpush1.msra.mxu0 %v1460
        %4381 = vmatprep.subr.mxu0 %v1463
        %4382 = vmatpush1.msra.mxu0 %v1462
        %4383 = vmatprep.subr.mxu0 %v1465
        %4384 = vmatpush1.msra.mxu0 %v1464
        %4385 = vmatprep.subr.mxu0 %v1467
        %4386 = vmatpush1.msra.mxu0 %v1466
        %4387 = vmatprep.subr.mxu0 %v1469
        %4388 = vmatpush1.msra.mxu0 %v1468
        %4389 = vmatprep.subr.mxu0 %v1471
        %4390 = vmatpush1.msra.mxu0 %v1470
        %4391 = vmatprep.subr.mxu0 %v1473
        %4392 = vmatpush1.msra.mxu0 %v1472
        %4393 = vmatprep.subr.mxu0 %v1475
        %4394 = vmatpush1.msra.mxu0 %v1474
        %4395 = vmatprep.subr.mxu0 %v1477
        %4396 = vmatpush1.msra.mxu0 %v1476
        %4397 = vmatprep.subr.mxu0 %v1479
        %4398 = vmatpush1.msra.mxu0 %v1478
        %4399 = vmatprep.subr.mxu0 %v1481
        %4400 = vmatpush1.msra.mxu0 %v1480
        %4401 = vmatprep.subr.mxu0 %v1483
        %4402 = vmatpush1.msra.mxu0 %v1482
        %4403 = vmatprep.subr.mxu0 %v1485
        %4404 = vmatpush1.msra.mxu0 %v1484
        %4405 = vmatprep.subr.mxu0 %v1487
        %4406 = vmatpush1.msra.mxu0 %v1486
        %4407 = vmatprep.mubr.f32.mxu0 %v4342
        %4408 = vmatmul.mubr.f32.gmra.mrb[0].mxu0 %v4341
        %v4409 = vpop.f32.mrb[0].mxu0
        %v4410 = vadd.f32 0.0, %v4409
        %v4411 = vpop.f32.mrb[0].mxu0
        %v4412 = vadd.f32 0.0, %v4411
        %4413 = vdwg.mxu0
        %v4414 = vadd.f32 %v4339, %v4410
        %v4415 = vadd.f32 %v4340, %v4412
        %s4416 = scalar_lea.vmem %s202, 6 [#allocation2]
        %v4417 = vld [vmem:[%s4416] sm:$0x3]
        %v4419 = vlaneseq
        %v4420 = vshrl.u32 %v4419, 7
        %v4421 = vsub.s32 0, %v4420
        %v4422 = vrot.slane %v4417, %v4421
        %v4423 = vlaneseq
        %v4424 = vshrl.u32 %v4423, 7
        %v4425 = vsub.s32 1, %v4424
        %v4426 = vrot.slane %v4417, %v4425
        %v4429 = vmul.f32 %v2319, %v4422
        %v4430 = vmul.f32 %v2319, %v4426
        %4431 = vmatprep.subr.mxu0 %v253
        %4432 = vmatpush1.msra.mxu0 %v252
        %4433 = vmatprep.subr.mxu0 %v255
        %4434 = vmatpush1.msra.mxu0 %v254
        %4435 = vmatprep.subr.mxu0 %v257
        %4436 = vmatpush1.msra.mxu0 %v256
        %4437 = vmatprep.subr.mxu0 %v259
        %4438 = vmatpush1.msra.mxu0 %v258
        %4439 = vmatprep.subr.mxu0 %v261
        %4440 = vmatpush1.msra.mxu0 %v260
        %4441 = vmatprep.subr.mxu0 %v263
        %4442 = vmatpush1.msra.mxu0 %v262
        %4443 = vmatprep.subr.mxu0 %v265
        %4444 = vmatpush1.msra.mxu0 %v264
        %4445 = vmatprep.subr.mxu0 %v267
        %4446 = vmatpush1.msra.mxu0 %v266
        %4447 = vmatprep.subr.mxu0 %v269
        %4448 = vmatpush1.msra.mxu0 %v268
        %4449 = vmatprep.subr.mxu0 %v271
        %4450 = vmatpush1.msra.mxu0 %v270
        %4451 = vmatprep.subr.mxu0 %v273
        %4452 = vmatpush1.msra.mxu0 %v272
        %4453 = vmatprep.subr.mxu0 %v275
        %4454 = vmatpush1.msra.mxu0 %v274
        %4455 = vmatprep.subr.mxu0 %v277
        %4456 = vmatpush1.msra.mxu0 %v276
        %4457 = vmatprep.subr.mxu0 %v279
        %4458 = vmatpush1.msra.mxu0 %v278
        %4459 = vmatprep.subr.mxu0 %v281
        %4460 = vmatpush1.msra.mxu0 %v280
        %4461 = vmatprep.subr.mxu0 %v283
        %4462 = vmatpush1.msra.mxu0 %v282
        %4463 = vmatprep.subr.mxu0 %v285
        %4464 = vmatpush1.msra.mxu0 %v284
        %4465 = vmatprep.subr.mxu0 %v287
        %4466 = vmatpush1.msra.mxu0 %v286
        %4467 = vmatprep.subr.mxu0 %v289
        %4468 = vmatpush1.msra.mxu0 %v288
        %4469 = vmatprep.subr.mxu0 %v291
        %4470 = vmatpush1.msra.mxu0 %v290
        %4471 = vmatprep.subr.mxu0 %v293
        %4472 = vmatpush1.msra.mxu0 %v292
        %4473 = vmatprep.subr.mxu0 %v295
        %4474 = vmatpush1.msra.mxu0 %v294
        %4475 = vmatprep.subr.mxu0 %v297
        %4476 = vmatpush1.msra.mxu0 %v296
        %4477 = vmatprep.subr.mxu0 %v299
        %4478 = vmatpush1.msra.mxu0 %v298
        %4479 = vmatprep.subr.mxu0 %v301
        %4480 = vmatpush1.msra.mxu0 %v300
        %4481 = vmatprep.subr.mxu0 %v303
        %4482 = vmatpush1.msra.mxu0 %v302
        %4483 = vmatprep.subr.mxu0 %v305
        %4484 = vmatpush1.msra.mxu0 %v304
        %4485 = vmatprep.subr.mxu0 %v307
        %4486 = vmatpush1.msra.mxu0 %v306
        %4487 = vmatprep.subr.mxu0 %v309
        %4488 = vmatpush1.msra.mxu0 %v308
        %4489 = vmatprep.subr.mxu0 %v311
        %4490 = vmatpush1.msra.mxu0 %v310
        %4491 = vmatprep.subr.mxu0 %v313
        %4492 = vmatpush1.msra.mxu0 %v312
        %4493 = vmatprep.subr.mxu0 %v315
        %4494 = vmatpush1.msra.mxu0 %v314
        %4495 = vmatprep.mubr.f32.mxu0 %v4430
        %4496 = vmatmul.mubr.f32.gmra.mrb[0].mxu0 %v4429
        %v4497 = vpop.f32.mrb[0].mxu0
        %v4498 = vadd.f32 0.0, %v4497
        %v4499 = vpop.f32.mrb[0].mxu0
        %v4500 = vadd.f32 0.0, %v4499
        %4501 = vdwg.mxu0
        %v4502 = vadd.f32 %v4414, %v4498
        %v4503 = vadd.f32 %v4415, %v4500
        %v4504 = vmul.f32 %v2412, %v4422
        %v4505 = vmul.f32 %v2412, %v4426
        %4506 = vmatprep.subr.mxu0 %v327
        %4507 = vmatpush1.msra.mxu0 %v326
        %4508 = vmatprep.subr.mxu0 %v329
        %4509 = vmatpush1.msra.mxu0 %v328
        %4510 = vmatprep.subr.mxu0 %v331
        %4511 = vmatpush1.msra.mxu0 %v330
        %4512 = vmatprep.subr.mxu0 %v333
        %4513 = vmatpush1.msra.mxu0 %v332
        %4514 = vmatprep.subr.mxu0 %v335
        %4515 = vmatpush1.msra.mxu0 %v334
        %4516 = vmatprep.subr.mxu0 %v337
        %4517 = vmatpush1.msra.mxu0 %v336
        %4518 = vmatprep.subr.mxu0 %v339
        %4519 = vmatpush1.msra.mxu0 %v338
        %4520 = vmatprep.subr.mxu0 %v341
        %4521 = vmatpush1.msra.mxu0 %v340
        %4522 = vmatprep.subr.mxu0 %v343
        %4523 = vmatpush1.msra.mxu0 %v342
        %4524 = vmatprep.subr.mxu0 %v345
        %4525 = vmatpush1.msra.mxu0 %v344
        %4526 = vmatprep.subr.mxu0 %v347
        %4527 = vmatpush1.msra.mxu0 %v346
        %4528 = vmatprep.subr.mxu0 %v349
        %4529 = vmatpush1.msra.mxu0 %v348
        %4530 = vmatprep.subr.mxu0 %v351
        %4531 = vmatpush1.msra.mxu0 %v350
        %4532 = vmatprep.subr.mxu0 %v353
        %4533 = vmatpush1.msra.mxu0 %v352
        %4534 = vmatprep.subr.mxu0 %v355
        %4535 = vmatpush1.msra.mxu0 %v354
        %4536 = vmatprep.subr.mxu0 %v357
        %4537 = vmatpush1.msra.mxu0 %v356
        %4538 = vmatprep.subr.mxu0 %v359
        %4539 = vmatpush1.msra.mxu0 %v358
        %4540 = vmatprep.subr.mxu0 %v361
        %4541 = vmatpush1.msra.mxu0 %v360
        %4542 = vmatprep.subr.mxu0 %v363
        %4543 = vmatpush1.msra.mxu0 %v362
        %4544 = vmatprep.subr.mxu0 %v365
        %4545 = vmatpush1.msra.mxu0 %v364
        %4546 = vmatprep.subr.mxu0 %v367
        %4547 = vmatpush1.msra.mxu0 %v366
        %4548 = vmatprep.subr.mxu0 %v369
        %4549 = vmatpush1.msra.mxu0 %v368
        %4550 = vmatprep.subr.mxu0 %v371
        %4551 = vmatpush1.msra.mxu0 %v370
        %4552 = vmatprep.subr.mxu0 %v373
        %4553 = vmatpush1.msra.mxu0 %v372
        %4554 = vmatprep.subr.mxu0 %v375
        %4555 = vmatpush1.msra.mxu0 %v374
        %4556 = vmatprep.subr.mxu0 %v377
        %4557 = vmatpush1.msra.mxu0 %v376
        %4558 = vmatprep.subr.mxu0 %v379
        %4559 = vmatpush1.msra.mxu0 %v378
        %4560 = vmatprep.subr.mxu0 %v381
        %4561 = vmatpush1.msra.mxu0 %v380
        %4562 = vmatprep.subr.mxu0 %v383
        %4563 = vmatpush1.msra.mxu0 %v382
        %4564 = vmatprep.subr.mxu0 %v385
        %4565 = vmatpush1.msra.mxu0 %v384
        %4566 = vmatprep.subr.mxu0 %v387
        %4567 = vmatpush1.msra.mxu0 %v386
        %4568 = vmatprep.subr.mxu0 %v389
        %4569 = vmatpush1.msra.mxu0 %v388
        %4570 = vmatprep.mubr.f32.mxu0 %v4505
        %4571 = vmatmul.mubr.f32.gmra.mrb[0].mxu0 %v4504
        %v4572 = vpop.f32.mrb[0].mxu0
        %v4573 = vadd.f32 0.0, %v4572
        %v4574 = vpop.f32.mrb[0].mxu0
        %v4575 = vadd.f32 0.0, %v4574
        %4576 = vdwg.mxu0
        %v4577 = vadd.f32 %v4502, %v4573
        %v4578 = vadd.f32 %v4503, %v4575
        %v4579 = vmul.f32 %v2494, %v4422
        %v4580 = vmul.f32 %v2494, %v4426
        %4581 = vmatprep.subr.mxu0 %v543
        %4582 = vmatpush1.msra.mxu0 %v542
        %4583 = vmatprep.subr.mxu0 %v545
        %4584 = vmatpush1.msra.mxu0 %v544
        %4585 = vmatprep.subr.mxu0 %v547
        %4586 = vmatpush1.msra.mxu0 %v546
        %4587 = vmatprep.subr.mxu0 %v549
        %4588 = vmatpush1.msra.mxu0 %v548
        %4589 = vmatprep.subr.mxu0 %v551
        %4590 = vmatpush1.msra.mxu0 %v550
        %4591 = vmatprep.subr.mxu0 %v553
        %4592 = vmatpush1.msra.mxu0 %v552
        %4593 = vmatprep.subr.mxu0 %v555
        %4594 = vmatpush1.msra.mxu0 %v554
        %4595 = vmatprep.subr.mxu0 %v557
        %4596 = vmatpush1.msra.mxu0 %v556
        %4597 = vmatprep.subr.mxu0 %v559
        %4598 = vmatpush1.msra.mxu0 %v558
        %4599 = vmatprep.subr.mxu0 %v561
        %4600 = vmatpush1.msra.mxu0 %v560
        %4601 = vmatprep.subr.mxu0 %v563
        %4602 = vmatpush1.msra.mxu0 %v562
        %4603 = vmatprep.subr.mxu0 %v565
        %4604 = vmatpush1.msra.mxu0 %v564
        %4605 = vmatprep.subr.mxu0 %v567
        %4606 = vmatpush1.msra.mxu0 %v566
        %4607 = vmatprep.subr.mxu0 %v569
        %4608 = vmatpush1.msra.mxu0 %v568
        %4609 = vmatprep.subr.mxu0 %v571
        %4610 = vmatpush1.msra.mxu0 %v570
        %4611 = vmatprep.subr.mxu0 %v573
        %4612 = vmatpush1.msra.mxu0 %v572
        %4613 = vmatprep.subr.mxu0 %v575
        %4614 = vmatpush1.msra.mxu0 %v574
        %4615 = vmatprep.subr.mxu0 %v577
        %4616 = vmatpush1.msra.mxu0 %v576
        %4617 = vmatprep.subr.mxu0 %v579
        %4618 = vmatpush1.msra.mxu0 %v578
        %4619 = vmatprep.subr.mxu0 %v581
        %4620 = vmatpush1.msra.mxu0 %v580
        %4621 = vmatprep.subr.mxu0 %v583
        %4622 = vmatpush1.msra.mxu0 %v582
        %4623 = vmatprep.subr.mxu0 %v585
        %4624 = vmatpush1.msra.mxu0 %v584
        %4625 = vmatprep.subr.mxu0 %v587
        %4626 = vmatpush1.msra.mxu0 %v586
        %4627 = vmatprep.subr.mxu0 %v589
        %4628 = vmatpush1.msra.mxu0 %v588
        %4629 = vmatprep.subr.mxu0 %v591
        %4630 = vmatpush1.msra.mxu0 %v590
        %4631 = vmatprep.subr.mxu0 %v593
        %4632 = vmatpush1.msra.mxu0 %v592
        %4633 = vmatprep.subr.mxu0 %v595
        %4634 = vmatpush1.msra.mxu0 %v594
        %4635 = vmatprep.subr.mxu0 %v597
        %4636 = vmatpush1.msra.mxu0 %v596
        %4637 = vmatprep.subr.mxu0 %v599
        %4638 = vmatpush1.msra.mxu0 %v598
        %4639 = vmatprep.subr.mxu0 %v601
        %4640 = vmatpush1.msra.mxu0 %v600
        %4641 = vmatprep.subr.mxu0 %v603
        %4642 = vmatpush1.msra.mxu0 %v602
        %4643 = vmatprep.subr.mxu0 %v605
        %4644 = vmatpush1.msra.mxu0 %v604
        %4645 = vmatprep.mubr.f32.mxu0 %v4580
        %4646 = vmatmul.mubr.f32.gmra.mrb[0].mxu0 %v4579
        %v4647 = vpop.f32.mrb[0].mxu0
        %v4648 = vadd.f32 0.0, %v4647
        %v4649 = vpop.f32.mrb[0].mxu0
        %v4650 = vadd.f32 0.0, %v4649
        %4651 = vdwg.mxu0
        %v4652 = vadd.f32 %v4577, %v4648
        %v4653 = vadd.f32 %v4578, %v4650
        %v4654 = vmul.f32 %v2576, %v4422
        %v4655 = vmul.f32 %v2576, %v4426
        %4656 = vmatprep.subr.mxu0 %v690
        %4657 = vmatpush1.msra.mxu0 %v689
        %4658 = vmatprep.subr.mxu0 %v692
        %4659 = vmatpush1.msra.mxu0 %v691
        %4660 = vmatprep.subr.mxu0 %v694
        %4661 = vmatpush1.msra.mxu0 %v693
        %4662 = vmatprep.subr.mxu0 %v696
        %4663 = vmatpush1.msra.mxu0 %v695
        %4664 = vmatprep.subr.mxu0 %v698
        %4665 = vmatpush1.msra.mxu0 %v697
        %4666 = vmatprep.subr.mxu0 %v700
        %4667 = vmatpush1.msra.mxu0 %v699
        %4668 = vmatprep.subr.mxu0 %v702
        %4669 = vmatpush1.msra.mxu0 %v701
        %4670 = vmatprep.subr.mxu0 %v704
        %4671 = vmatpush1.msra.mxu0 %v703
        %4672 = vmatprep.subr.mxu0 %v706
        %4673 = vmatpush1.msra.mxu0 %v705
        %4674 = vmatprep.subr.mxu0 %v708
        %4675 = vmatpush1.msra.mxu0 %v707
        %4676 = vmatprep.subr.mxu0 %v710
        %4677 = vmatpush1.msra.mxu0 %v709
        %4678 = vmatprep.subr.mxu0 %v712
        %4679 = vmatpush1.msra.mxu0 %v711
        %4680 = vmatprep.subr.mxu0 %v714
        %4681 = vmatpush1.msra.mxu0 %v713
        %4682 = vmatprep.subr.mxu0 %v716
        %4683 = vmatpush1.msra.mxu0 %v715
        %4684 = vmatprep.subr.mxu0 %v718
        %4685 = vmatpush1.msra.mxu0 %v717
        %4686 = vmatprep.subr.mxu0 %v720
        %4687 = vmatpush1.msra.mxu0 %v719
        %4688 = vmatprep.subr.mxu0 %v722
        %4689 = vmatpush1.msra.mxu0 %v721
        %4690 = vmatprep.subr.mxu0 %v724
        %4691 = vmatpush1.msra.mxu0 %v723
        %4692 = vmatprep.subr.mxu0 %v726
        %4693 = vmatpush1.msra.mxu0 %v725
        %4694 = vmatprep.subr.mxu0 %v728
        %4695 = vmatpush1.msra.mxu0 %v727
        %4696 = vmatprep.subr.mxu0 %v730
        %4697 = vmatpush1.msra.mxu0 %v729
        %4698 = vmatprep.subr.mxu0 %v732
        %4699 = vmatpush1.msra.mxu0 %v731
        %4700 = vmatprep.subr.mxu0 %v734
        %4701 = vmatpush1.msra.mxu0 %v733
        %4702 = vmatprep.subr.mxu0 %v736
        %4703 = vmatpush1.msra.mxu0 %v735
        %4704 = vmatprep.subr.mxu0 %v738
        %4705 = vmatpush1.msra.mxu0 %v737
        %4706 = vmatprep.subr.mxu0 %v740
        %4707 = vmatpush1.msra.mxu0 %v739
        %4708 = vmatprep.subr.mxu0 %v742
        %4709 = vmatpush1.msra.mxu0 %v741
        %4710 = vmatprep.subr.mxu0 %v744
        %4711 = vmatpush1.msra.mxu0 %v743
        %4712 = vmatprep.subr.mxu0 %v746
        %4713 = vmatpush1.msra.mxu0 %v745
        %4714 = vmatprep.subr.mxu0 %v748
        %4715 = vmatpush1.msra.mxu0 %v747
        %4716 = vmatprep.subr.mxu0 %v750
        %4717 = vmatpush1.msra.mxu0 %v749
        %4718 = vmatprep.subr.mxu0 %v752
        %4719 = vmatpush1.msra.mxu0 %v751
        %4720 = vmatprep.mubr.f32.mxu0 %v4655
        %4721 = vmatmul.mubr.f32.gmra.mrb[0].mxu0 %v4654
        %v4722 = vpop.f32.mrb[0].mxu0
        %v4723 = vadd.f32 0.0, %v4722
        %v4724 = vpop.f32.mrb[0].mxu0
        %v4725 = vadd.f32 0.0, %v4724
        %4726 = vdwg.mxu0
        %v4727 = vadd.f32 %v4652, %v4723
        %v4728 = vadd.f32 %v4653, %v4725
        %v4729 = vmul.f32 %v2658, %v4422
        %v4730 = vmul.f32 %v2658, %v4426
        %4731 = vmatprep.subr.mxu0 %v837
        %4732 = vmatpush1.msra.mxu0 %v836
        %4733 = vmatprep.subr.mxu0 %v839
        %4734 = vmatpush1.msra.mxu0 %v838
        %4735 = vmatprep.subr.mxu0 %v841
        %4736 = vmatpush1.msra.mxu0 %v840
        %4737 = vmatprep.subr.mxu0 %v843
        %4738 = vmatpush1.msra.mxu0 %v842
        %4739 = vmatprep.subr.mxu0 %v845
        %4740 = vmatpush1.msra.mxu0 %v844
        %4741 = vmatprep.subr.mxu0 %v847
        %4742 = vmatpush1.msra.mxu0 %v846
        %4743 = vmatprep.subr.mxu0 %v849
        %4744 = vmatpush1.msra.mxu0 %v848
        %4745 = vmatprep.subr.mxu0 %v851
        %4746 = vmatpush1.msra.mxu0 %v850
        %4747 = vmatprep.subr.mxu0 %v853
        %4748 = vmatpush1.msra.mxu0 %v852
        %4749 = vmatprep.subr.mxu0 %v855
        %4750 = vmatpush1.msra.mxu0 %v854
        %4751 = vmatprep.subr.mxu0 %v857
        %4752 = vmatpush1.msra.mxu0 %v856
        %4753 = vmatprep.subr.mxu0 %v859
        %4754 = vmatpush1.msra.mxu0 %v858
        %4755 = vmatprep.subr.mxu0 %v861
        %4756 = vmatpush1.msra.mxu0 %v860
        %4757 = vmatprep.subr.mxu0 %v863
        %4758 = vmatpush1.msra.mxu0 %v862
        %4759 = vmatprep.subr.mxu0 %v865
        %4760 = vmatpush1.msra.mxu0 %v864
        %4761 = vmatprep.subr.mxu0 %v867
        %4762 = vmatpush1.msra.mxu0 %v866
        %4763 = vmatprep.subr.mxu0 %v869
        %4764 = vmatpush1.msra.mxu0 %v868
        %4765 = vmatprep.subr.mxu0 %v871
        %4766 = vmatpush1.msra.mxu0 %v870
        %4767 = vmatprep.subr.mxu0 %v873
        %4768 = vmatpush1.msra.mxu0 %v872
        %4769 = vmatprep.subr.mxu0 %v875
        %4770 = vmatpush1.msra.mxu0 %v874
        %4771 = vmatprep.subr.mxu0 %v877
        %4772 = vmatpush1.msra.mxu0 %v876
        %4773 = vmatprep.subr.mxu0 %v879
        %4774 = vmatpush1.msra.mxu0 %v878
        %4775 = vmatprep.subr.mxu0 %v881
        %4776 = vmatpush1.msra.mxu0 %v880
        %4777 = vmatprep.subr.mxu0 %v883
        %4778 = vmatpush1.msra.mxu0 %v882
        %4779 = vmatprep.subr.mxu0 %v885
        %4780 = vmatpush1.msra.mxu0 %v884
        %4781 = vmatprep.subr.mxu0 %v887
        %4782 = vmatpush1.msra.mxu0 %v886
        %4783 = vmatprep.subr.mxu0 %v889
        %4784 = vmatpush1.msra.mxu0 %v888
        %4785 = vmatprep.subr.mxu0 %v891
        %4786 = vmatpush1.msra.mxu0 %v890
        %4787 = vmatprep.subr.mxu0 %v893
        %4788 = vmatpush1.msra.mxu0 %v892
        %4789 = vmatprep.subr.mxu0 %v895
        %4790 = vmatpush1.msra.mxu0 %v894
        %4791 = vmatprep.subr.mxu0 %v897
        %4792 = vmatpush1.msra.mxu0 %v896
        %4793 = vmatprep.subr.mxu0 %v899
        %4794 = vmatpush1.msra.mxu0 %v898
        %4795 = vmatprep.mubr.f32.mxu0 %v4730
        %4796 = vmatmul.mubr.f32.gmra.mrb[0].mxu0 %v4729
        %v4797 = vpop.f32.mrb[0].mxu0
        %v4798 = vadd.f32 0.0, %v4797
        %v4799 = vpop.f32.mrb[0].mxu0
        %v4800 = vadd.f32 0.0, %v4799
        %4801 = vdwg.mxu0
        %v4802 = vadd.f32 %v4727, %v4798
        %v4803 = vadd.f32 %v4728, %v4800
        %v4804 = vmul.f32 %v2740, %v4422
        %v4805 = vmul.f32 %v2740, %v4426
        %4806 = vmatprep.subr.mxu0 %v984
        %4807 = vmatpush1.msra.mxu0 %v983
        %4808 = vmatprep.subr.mxu0 %v986
        %4809 = vmatpush1.msra.mxu0 %v985
        %4810 = vmatprep.subr.mxu0 %v988
        %4811 = vmatpush1.msra.mxu0 %v987
        %4812 = vmatprep.subr.mxu0 %v990
        %4813 = vmatpush1.msra.mxu0 %v989
        %4814 = vmatprep.subr.mxu0 %v992
        %4815 = vmatpush1.msra.mxu0 %v991
        %4816 = vmatprep.subr.mxu0 %v994
        %4817 = vmatpush1.msra.mxu0 %v993
        %4818 = vmatprep.subr.mxu0 %v996
        %4819 = vmatpush1.msra.mxu0 %v995
        %4820 = vmatprep.subr.mxu0 %v998
        %4821 = vmatpush1.msra.mxu0 %v997
        %4822 = vmatprep.subr.mxu0 %v1000
        %4823 = vmatpush1.msra.mxu0 %v999
        %4824 = vmatprep.subr.mxu0 %v1002
        %4825 = vmatpush1.msra.mxu0 %v1001
        %4826 = vmatprep.subr.mxu0 %v1004
        %4827 = vmatpush1.msra.mxu0 %v1003
        %4828 = vmatprep.subr.mxu0 %v1006
        %4829 = vmatpush1.msra.mxu0 %v1005
        %4830 = vmatprep.subr.mxu0 %v1008
        %4831 = vmatpush1.msra.mxu0 %v1007
        %4832 = vmatprep.subr.mxu0 %v1010
        %4833 = vmatpush1.msra.mxu0 %v1009
        %4834 = vmatprep.subr.mxu0 %v1012
        %4835 = vmatpush1.msra.mxu0 %v1011
        %4836 = vmatprep.subr.mxu0 %v1014
        %4837 = vmatpush1.msra.mxu0 %v1013
        %4838 = vmatprep.subr.mxu0 %v1016
        %4839 = vmatpush1.msra.mxu0 %v1015
        %4840 = vmatprep.subr.mxu0 %v1018
        %4841 = vmatpush1.msra.mxu0 %v1017
        %4842 = vmatprep.subr.mxu0 %v1020
        %4843 = vmatpush1.msra.mxu0 %v1019
        %4844 = vmatprep.subr.mxu0 %v1022
        %4845 = vmatpush1.msra.mxu0 %v1021
        %4846 = vmatprep.subr.mxu0 %v1024
        %4847 = vmatpush1.msra.mxu0 %v1023
        %4848 = vmatprep.subr.mxu0 %v1026
        %4849 = vmatpush1.msra.mxu0 %v1025
        %4850 = vmatprep.subr.mxu0 %v1028
        %4851 = vmatpush1.msra.mxu0 %v1027
        %4852 = vmatprep.subr.mxu0 %v1030
        %4853 = vmatpush1.msra.mxu0 %v1029
        %4854 = vmatprep.subr.mxu0 %v1032
        %4855 = vmatpush1.msra.mxu0 %v1031
        %4856 = vmatprep.subr.mxu0 %v1034
        %4857 = vmatpush1.msra.mxu0 %v1033
        %4858 = vmatprep.subr.mxu0 %v1036
        %4859 = vmatpush1.msra.mxu0 %v1035
        %4860 = vmatprep.subr.mxu0 %v1038
        %4861 = vmatpush1.msra.mxu0 %v1037
        %4862 = vmatprep.subr.mxu0 %v1040
        %4863 = vmatpush1.msra.mxu0 %v1039
        %4864 = vmatprep.subr.mxu0 %v1042
        %4865 = vmatpush1.msra.mxu0 %v1041
        %4866 = vmatprep.subr.mxu0 %v1044
        %4867 = vmatpush1.msra.mxu0 %v1043
        %4868 = vmatprep.subr.mxu0 %v1046
        %4869 = vmatpush1.msra.mxu0 %v1045
        %4870 = vmatprep.mubr.f32.mxu0 %v4805
        %4871 = vmatmul.mubr.f32.gmra.mrb[0].mxu0 %v4804
        %v4872 = vpop.f32.mrb[0].mxu0
        %v4873 = vadd.f32 0.0, %v4872
        %v4874 = vpop.f32.mrb[0].mxu0
        %v4875 = vadd.f32 0.0, %v4874
        %4876 = vdwg.mxu0
        %v4877 = vadd.f32 %v4802, %v4873
        %v4878 = vadd.f32 %v4803, %v4875
        %v4879 = vmul.f32 %v2822, %v4422
        %v4880 = vmul.f32 %v2822, %v4426
        %4881 = vmatprep.subr.mxu0 %v1131
        %4882 = vmatpush1.msra.mxu0 %v1130
        %4883 = vmatprep.subr.mxu0 %v1133
        %4884 = vmatpush1.msra.mxu0 %v1132
        %4885 = vmatprep.subr.mxu0 %v1135
        %4886 = vmatpush1.msra.mxu0 %v1134
        %4887 = vmatprep.subr.mxu0 %v1137
        %4888 = vmatpush1.msra.mxu0 %v1136
        %4889 = vmatprep.subr.mxu0 %v1139
        %4890 = vmatpush1.msra.mxu0 %v1138
        %4891 = vmatprep.subr.mxu0 %v1141
        %4892 = vmatpush1.msra.mxu0 %v1140
        %4893 = vmatprep.subr.mxu0 %v1143
        %4894 = vmatpush1.msra.mxu0 %v1142
        %4895 = vmatprep.subr.mxu0 %v1145
        %4896 = vmatpush1.msra.mxu0 %v1144
        %4897 = vmatprep.subr.mxu0 %v1147
        %4898 = vmatpush1.msra.mxu0 %v1146
        %4899 = vmatprep.subr.mxu0 %v1149
        %4900 = vmatpush1.msra.mxu0 %v1148
        %4901 = vmatprep.subr.mxu0 %v1151
        %4902 = vmatpush1.msra.mxu0 %v1150
        %4903 = vmatprep.subr.mxu0 %v1153
        %4904 = vmatpush1.msra.mxu0 %v1152
        %4905 = vmatprep.subr.mxu0 %v1155
        %4906 = vmatpush1.msra.mxu0 %v1154
        %4907 = vmatprep.subr.mxu0 %v1157
        %4908 = vmatpush1.msra.mxu0 %v1156
        %4909 = vmatprep.subr.mxu0 %v1159
        %4910 = vmatpush1.msra.mxu0 %v1158
        %4911 = vmatprep.subr.mxu0 %v1161
        %4912 = vmatpush1.msra.mxu0 %v1160
        %4913 = vmatprep.subr.mxu0 %v1163
        %4914 = vmatpush1.msra.mxu0 %v1162
        %4915 = vmatprep.subr.mxu0 %v1165
        %4916 = vmatpush1.msra.mxu0 %v1164
        %4917 = vmatprep.subr.mxu0 %v1167
        %4918 = vmatpush1.msra.mxu0 %v1166
        %4919 = vmatprep.subr.mxu0 %v1169
        %4920 = vmatpush1.msra.mxu0 %v1168
        %4921 = vmatprep.subr.mxu0 %v1171
        %4922 = vmatpush1.msra.mxu0 %v1170
        %4923 = vmatprep.subr.mxu0 %v1173
        %4924 = vmatpush1.msra.mxu0 %v1172
        %4925 = vmatprep.subr.mxu0 %v1175
        %4926 = vmatpush1.msra.mxu0 %v1174
        %4927 = vmatprep.subr.mxu0 %v1177
        %4928 = vmatpush1.msra.mxu0 %v1176
        %4929 = vmatprep.subr.mxu0 %v1179
        %4930 = vmatpush1.msra.mxu0 %v1178
        %4931 = vmatprep.subr.mxu0 %v1181
        %4932 = vmatpush1.msra.mxu0 %v1180
        %4933 = vmatprep.subr.mxu0 %v1183
        %4934 = vmatpush1.msra.mxu0 %v1182
        %4935 = vmatprep.subr.mxu0 %v1185
        %4936 = vmatpush1.msra.mxu0 %v1184
        %4937 = vmatprep.subr.mxu0 %v1187
        %4938 = vmatpush1.msra.mxu0 %v1186
        %4939 = vmatprep.subr.mxu0 %v1189
        %4940 = vmatpush1.msra.mxu0 %v1188
        %4941 = vmatprep.subr.mxu0 %v1191
        %4942 = vmatpush1.msra.mxu0 %v1190
        %4943 = vmatprep.subr.mxu0 %v1193
        %4944 = vmatpush1.msra.mxu0 %v1192
        %4945 = vmatprep.mubr.f32.mxu0 %v4880
        %4946 = vmatmul.mubr.f32.gmra.mrb[0].mxu0 %v4879
        %v4947 = vpop.f32.mrb[0].mxu0
        %v4948 = vadd.f32 0.0, %v4947
        %v4949 = vpop.f32.mrb[0].mxu0
        %v4950 = vadd.f32 0.0, %v4949
        %4951 = vdwg.mxu0
        %v4952 = vadd.f32 %v4877, %v4948
        %v4953 = vadd.f32 %v4878, %v4950
        %v4954 = vmul.f32 %v2904, %v4422
        %v4955 = vmul.f32 %v2904, %v4426
        %4956 = vmatprep.subr.mxu0 %v1278
        %4957 = vmatpush1.msra.mxu0 %v1277
        %4958 = vmatprep.subr.mxu0 %v1280
        %4959 = vmatpush1.msra.mxu0 %v1279
        %4960 = vmatprep.subr.mxu0 %v1282
        %4961 = vmatpush1.msra.mxu0 %v1281
        %4962 = vmatprep.subr.mxu0 %v1284
        %4963 = vmatpush1.msra.mxu0 %v1283
        %4964 = vmatprep.subr.mxu0 %v1286
        %4965 = vmatpush1.msra.mxu0 %v1285
        %4966 = vmatprep.subr.mxu0 %v1288
        %4967 = vmatpush1.msra.mxu0 %v1287
        %4968 = vmatprep.subr.mxu0 %v1290
        %4969 = vmatpush1.msra.mxu0 %v1289
        %4970 = vmatprep.subr.mxu0 %v1292
        %4971 = vmatpush1.msra.mxu0 %v1291
        %4972 = vmatprep.subr.mxu0 %v1294
        %4973 = vmatpush1.msra.mxu0 %v1293
        %4974 = vmatprep.subr.mxu0 %v1296
        %4975 = vmatpush1.msra.mxu0 %v1295
        %4976 = vmatprep.subr.mxu0 %v1298
        %4977 = vmatpush1.msra.mxu0 %v1297
        %4978 = vmatprep.subr.mxu0 %v1300
        %4979 = vmatpush1.msra.mxu0 %v1299
        %4980 = vmatprep.subr.mxu0 %v1302
        %4981 = vmatpush1.msra.mxu0 %v1301
        %4982 = vmatprep.subr.mxu0 %v1304
        %4983 = vmatpush1.msra.mxu0 %v1303
        %4984 = vmatprep.subr.mxu0 %v1306
        %4985 = vmatpush1.msra.mxu0 %v1305
        %4986 = vmatprep.subr.mxu0 %v1308
        %4987 = vmatpush1.msra.mxu0 %v1307
        %4988 = vmatprep.subr.mxu0 %v1310
        %4989 = vmatpush1.msra.mxu0 %v1309
        %4990 = vmatprep.subr.mxu0 %v1312
        %4991 = vmatpush1.msra.mxu0 %v1311
        %4992 = vmatprep.subr.mxu0 %v1314
        %4993 = vmatpush1.msra.mxu0 %v1313
        %4994 = vmatprep.subr.mxu0 %v1316
        %4995 = vmatpush1.msra.mxu0 %v1315
        %4996 = vmatprep.subr.mxu0 %v1318
        %4997 = vmatpush1.msra.mxu0 %v1317
        %4998 = vmatprep.subr.mxu0 %v1320
        %4999 = vmatpush1.msra.mxu0 %v1319
        %5000 = vmatprep.subr.mxu0 %v1322
        %5001 = vmatpush1.msra.mxu0 %v1321
        %5002 = vmatprep.subr.mxu0 %v1324
        %5003 = vmatpush1.msra.mxu0 %v1323
        %5004 = vmatprep.subr.mxu0 %v1326
        %5005 = vmatpush1.msra.mxu0 %v1325
        %5006 = vmatprep.subr.mxu0 %v1328
        %5007 = vmatpush1.msra.mxu0 %v1327
        %5008 = vmatprep.subr.mxu0 %v1330
        %5009 = vmatpush1.msra.mxu0 %v1329
        %5010 = vmatprep.subr.mxu0 %v1332
        %5011 = vmatpush1.msra.mxu0 %v1331
        %5012 = vmatprep.subr.mxu0 %v1334
        %5013 = vmatpush1.msra.mxu0 %v1333
        %5014 = vmatprep.subr.mxu0 %v1336
        %5015 = vmatpush1.msra.mxu0 %v1335
        %5016 = vmatprep.subr.mxu0 %v1338
        %5017 = vmatpush1.msra.mxu0 %v1337
        %5018 = vmatprep.subr.mxu0 %v1340
        %5019 = vmatpush1.msra.mxu0 %v1339
        %5020 = vmatprep.mubr.f32.mxu0 %v4955
        %5021 = vmatmul.mubr.f32.gmra.mrb[0].mxu0 %v4954
        %v5022 = vpop.f32.mrb[0].mxu0
        %v5023 = vadd.f32 0.0, %v5022
        %v5024 = vpop.f32.mrb[0].mxu0
        %v5025 = vadd.f32 0.0, %v5024
        %5026 = vdwg.mxu0
        %v5027 = vadd.f32 %v4952, %v5023
        %v5028 = vadd.f32 %v4953, %v5025
        %v5029 = vmul.f32 %v2986, %v4422
        %v5030 = vmul.f32 %v2986, %v4426
        %5031 = vmatprep.subr.mxu0 %v1425
        %5032 = vmatpush1.msra.mxu0 %v1424
        %5033 = vmatprep.subr.mxu0 %v1427
        %5034 = vmatpush1.msra.mxu0 %v1426
        %5035 = vmatprep.subr.mxu0 %v1429
        %5036 = vmatpush1.msra.mxu0 %v1428
        %5037 = vmatprep.subr.mxu0 %v1431
        %5038 = vmatpush1.msra.mxu0 %v1430
        %5039 = vmatprep.subr.mxu0 %v1433
        %5040 = vmatpush1.msra.mxu0 %v1432
        %5041 = vmatprep.subr.mxu0 %v1435
        %5042 = vmatpush1.msra.mxu0 %v1434
        %5043 = vmatprep.subr.mxu0 %v1437
        %5044 = vmatpush1.msra.mxu0 %v1436
        %5045 = vmatprep.subr.mxu0 %v1439
        %5046 = vmatpush1.msra.mxu0 %v1438
        %5047 = vmatprep.subr.mxu0 %v1441
        %5048 = vmatpush1.msra.mxu0 %v1440
        %5049 = vmatprep.subr.mxu0 %v1443
        %5050 = vmatpush1.msra.mxu0 %v1442
        %5051 = vmatprep.subr.mxu0 %v1445
        %5052 = vmatpush1.msra.mxu0 %v1444
        %5053 = vmatprep.subr.mxu0 %v1447
        %5054 = vmatpush1.msra.mxu0 %v1446
        %5055 = vmatprep.subr.mxu0 %v1449
        %5056 = vmatpush1.msra.mxu0 %v1448
        %5057 = vmatprep.subr.mxu0 %v1451
        %5058 = vmatpush1.msra.mxu0 %v1450
        %5059 = vmatprep.subr.mxu0 %v1453
        %5060 = vmatpush1.msra.mxu0 %v1452
        %5061 = vmatprep.subr.mxu0 %v1455
        %5062 = vmatpush1.msra.mxu0 %v1454
        %5063 = vmatprep.subr.mxu0 %v1457
        %5064 = vmatpush1.msra.mxu0 %v1456
        %5065 = vmatprep.subr.mxu0 %v1459
        %5066 = vmatpush1.msra.mxu0 %v1458
        %5067 = vmatprep.subr.mxu0 %v1461
        %5068 = vmatpush1.msra.mxu0 %v1460
        %5069 = vmatprep.subr.mxu0 %v1463
        %5070 = vmatpush1.msra.mxu0 %v1462
        %5071 = vmatprep.subr.mxu0 %v1465
        %5072 = vmatpush1.msra.mxu0 %v1464
        %5073 = vmatprep.subr.mxu0 %v1467
        %5074 = vmatpush1.msra.mxu0 %v1466
        %5075 = vmatprep.subr.mxu0 %v1469
        %5076 = vmatpush1.msra.mxu0 %v1468
        %5077 = vmatprep.subr.mxu0 %v1471
        %5078 = vmatpush1.msra.mxu0 %v1470
        %5079 = vmatprep.subr.mxu0 %v1473
        %5080 = vmatpush1.msra.mxu0 %v1472
        %5081 = vmatprep.subr.mxu0 %v1475
        %5082 = vmatpush1.msra.mxu0 %v1474
        %5083 = vmatprep.subr.mxu0 %v1477
        %5084 = vmatpush1.msra.mxu0 %v1476
        %5085 = vmatprep.subr.mxu0 %v1479
        %5086 = vmatpush1.msra.mxu0 %v1478
        %5087 = vmatprep.subr.mxu0 %v1481
        %5088 = vmatpush1.msra.mxu0 %v1480
        %5089 = vmatprep.subr.mxu0 %v1483
        %5090 = vmatpush1.msra.mxu0 %v1482
        %5091 = vmatprep.subr.mxu0 %v1485
        %5092 = vmatpush1.msra.mxu0 %v1484
        %5093 = vmatprep.subr.mxu0 %v1487
        %5094 = vmatpush1.msra.mxu0 %v1486
        %5095 = vmatprep.mubr.f32.mxu0 %v5030
        %5096 = vmatmul.mubr.f32.gmra.mrb[0].mxu0 %v5029
        %v5097 = vpop.f32.mrb[0].mxu0
        %v5098 = vadd.f32 0.0, %v5097
        %v5099 = vpop.f32.mrb[0].mxu0
        %v5100 = vadd.f32 0.0, %v5099
        %5101 = vdwg.mxu0
        %v5102 = vadd.f32 %v5027, %v5098
        %v5103 = vadd.f32 %v5028, %v5100
        %v5104 = vadd.f32 %v5102, %v3066
        %v5105 = vadd.f32 %v5103, %v3066
        %v5106 = vmul.f32 %v237, %v2325
        %v5107 = vmul.f32 %v237, %v2329
        %v5108 = vmul.f32 %v321, %v2325
        %v5109 = vmul.f32 %v321, %v2329
        %5110 = vmatprep.subr.mxu0 %v327
        %5111 = vmatpush1.msra.mxu0 %v326
        %5112 = vmatprep.subr.mxu0 %v329
        %5113 = vmatpush1.msra.mxu0 %v328
        %5114 = vmatprep.subr.mxu0 %v331
        %5115 = vmatpush1.msra.mxu0 %v330
        %5116 = vmatprep.subr.mxu0 %v333
        %5117 = vmatpush1.msra.mxu0 %v332
        %5118 = vmatprep.subr.mxu0 %v335
        %5119 = vmatpush1.msra.mxu0 %v334
        %5120 = vmatprep.subr.mxu0 %v337
        %5121 = vmatpush1.msra.mxu0 %v336
        %5122 = vmatprep.subr.mxu0 %v339
        %5123 = vmatpush1.msra.mxu0 %v338
        %5124 = vmatprep.subr.mxu0 %v341
        %5125 = vmatpush1.msra.mxu0 %v340
        %5126 = vmatprep.subr.mxu0 %v343
        %5127 = vmatpush1.msra.mxu0 %v342
        %5128 = vmatprep.subr.mxu0 %v345
        %5129 = vmatpush1.msra.mxu0 %v344
        %5130 = vmatprep.subr.mxu0 %v347
        %5131 = vmatpush1.msra.mxu0 %v346
        %5132 = vmatprep.subr.mxu0 %v349
        %5133 = vmatpush1.msra.mxu0 %v348
        %5134 = vmatprep.subr.mxu0 %v351
        %5135 = vmatpush1.msra.mxu0 %v350
        %5136 = vmatprep.subr.mxu0 %v353
        %5137 = vmatpush1.msra.mxu0 %v352
        %5138 = vmatprep.subr.mxu0 %v355
        %5139 = vmatpush1.msra.mxu0 %v354
        %5140 = vmatprep.subr.mxu0 %v357
        %5141 = vmatpush1.msra.mxu0 %v356
        %5142 = vmatprep.subr.mxu0 %v359
        %5143 = vmatpush1.msra.mxu0 %v358
        %5144 = vmatprep.subr.mxu0 %v361
        %5145 = vmatpush1.msra.mxu0 %v360
        %5146 = vmatprep.subr.mxu0 %v363
        %5147 = vmatpush1.msra.mxu0 %v362
        %5148 = vmatprep.subr.mxu0 %v365
        %5149 = vmatpush1.msra.mxu0 %v364
        %5150 = vmatprep.subr.mxu0 %v367
        %5151 = vmatpush1.msra.mxu0 %v366
        %5152 = vmatprep.subr.mxu0 %v369
        %5153 = vmatpush1.msra.mxu0 %v368
        %5154 = vmatprep.subr.mxu0 %v371
        %5155 = vmatpush1.msra.mxu0 %v370
        %5156 = vmatprep.subr.mxu0 %v373
        %5157 = vmatpush1.msra.mxu0 %v372
        %5158 = vmatprep.subr.mxu0 %v375
        %5159 = vmatpush1.msra.mxu0 %v374
        %5160 = vmatprep.subr.mxu0 %v377
        %5161 = vmatpush1.msra.mxu0 %v376
        %5162 = vmatprep.subr.mxu0 %v379
        %5163 = vmatpush1.msra.mxu0 %v378
        %5164 = vmatprep.subr.mxu0 %v381
        %5165 = vmatpush1.msra.mxu0 %v380
        %5166 = vmatprep.subr.mxu0 %v383
        %5167 = vmatpush1.msra.mxu0 %v382
        %5168 = vmatprep.subr.mxu0 %v385
        %5169 = vmatpush1.msra.mxu0 %v384
        %5170 = vmatprep.subr.mxu0 %v387
        %5171 = vmatpush1.msra.mxu0 %v386
        %5172 = vmatprep.subr.mxu0 %v389
        %5173 = vmatpush1.msra.mxu0 %v388
        %5174 = vmatprep.mubr.f32.mxu0 %v5109
        %5175 = vmatmul.mubr.f32.gmra.mrb[0].mxu0 %v5108
        %v5176 = vpop.f32.mrb[0].mxu0
        %v5177 = vadd.f32 0.0, %v5176
        %v5178 = vpop.f32.mrb[0].mxu0
        %v5179 = vadd.f32 0.0, %v5178
        %5180 = vdwg.mxu0
        %5181 = vmatprep.subr.mxu0 %v253
        %5182 = vmatpush1.msra.mxu0 %v252
        %5183 = vmatprep.subr.mxu0 %v255
        %5184 = vmatpush1.msra.mxu0 %v254
        %5185 = vmatprep.subr.mxu0 %v257
        %5186 = vmatpush1.msra.mxu0 %v256
        %5187 = vmatprep.subr.mxu0 %v259
        %5188 = vmatpush1.msra.mxu0 %v258
        %5189 = vmatprep.subr.mxu0 %v261
        %5190 = vmatpush1.msra.mxu0 %v260
        %5191 = vmatprep.subr.mxu0 %v263
        %5192 = vmatpush1.msra.mxu0 %v262
        %5193 = vmatprep.subr.mxu0 %v265
        %5194 = vmatpush1.msra.mxu0 %v264
        %5195 = vmatprep.subr.mxu0 %v267
        %5196 = vmatpush1.msra.mxu0 %v266
        %5197 = vmatprep.subr.mxu0 %v269
        %5198 = vmatpush1.msra.mxu0 %v268
        %5199 = vmatprep.subr.mxu0 %v271
        %5200 = vmatpush1.msra.mxu0 %v270
        %5201 = vmatprep.subr.mxu0 %v273
        %5202 = vmatpush1.msra.mxu0 %v272
        %5203 = vmatprep.subr.mxu0 %v275
        %5204 = vmatpush1.msra.mxu0 %v274
        %5205 = vmatprep.subr.mxu0 %v277
        %5206 = vmatpush1.msra.mxu0 %v276
        %5207 = vmatprep.subr.mxu0 %v279
        %5208 = vmatpush1.msra.mxu0 %v278
        %5209 = vmatprep.subr.mxu0 %v281
        %5210 = vmatpush1.msra.mxu0 %v280
        %5211 = vmatprep.subr.mxu0 %v283
        %5212 = vmatpush1.msra.mxu0 %v282
        %5213 = vmatprep.subr.mxu0 %v285
        %5214 = vmatpush1.msra.mxu0 %v284
        %5215 = vmatprep.subr.mxu0 %v287
        %5216 = vmatpush1.msra.mxu0 %v286
        %5217 = vmatprep.subr.mxu0 %v289
        %5218 = vmatpush1.msra.mxu0 %v288
        %5219 = vmatprep.subr.mxu0 %v291
        %5220 = vmatpush1.msra.mxu0 %v290
        %5221 = vmatprep.subr.mxu0 %v293
        %5222 = vmatpush1.msra.mxu0 %v292
        %5223 = vmatprep.subr.mxu0 %v295
        %5224 = vmatpush1.msra.mxu0 %v294
        %5225 = vmatprep.subr.mxu0 %v297
        %5226 = vmatpush1.msra.mxu0 %v296
        %5227 = vmatprep.subr.mxu0 %v299
        %5228 = vmatpush1.msra.mxu0 %v298
        %5229 = vmatprep.subr.mxu0 %v301
        %5230 = vmatpush1.msra.mxu0 %v300
        %5231 = vmatprep.subr.mxu0 %v303
        %5232 = vmatpush1.msra.mxu0 %v302
        %5233 = vmatprep.subr.mxu0 %v305
        %5234 = vmatpush1.msra.mxu0 %v304
        %5235 = vmatprep.subr.mxu0 %v307
        %5236 = vmatpush1.msra.mxu0 %v306
        %5237 = vmatprep.subr.mxu0 %v309
        %5238 = vmatpush1.msra.mxu0 %v308
        %5239 = vmatprep.subr.mxu0 %v311
        %5240 = vmatpush1.msra.mxu0 %v310
        %5241 = vmatprep.subr.mxu0 %v313
        %5242 = vmatpush1.msra.mxu0 %v312
        %5243 = vmatprep.subr.mxu0 %v315
        %5244 = vmatpush1.msra.mxu0 %v314
        %5245 = vmatprep.mubr.f32.mxu0 %v5107
        %5246 = vmatmul.mubr.f32.gmra.mrb[0].mxu0 %v5106
        %v5247 = vpop.f32.mrb[0].mxu0
        %v5248 = vadd.f32 %v5177, %v5247
        %v5249 = vpop.f32.mrb[0].mxu0
        %v5250 = vadd.f32 %v5179, %v5249
        %5251 = vdwg.mxu0
        %v5252 = vmul.f32 %v537, %v2325
        %v5253 = vmul.f32 %v537, %v2329
        %5254 = vmatprep.subr.mxu0 %v543
        %5255 = vmatpush1.msra.mxu0 %v542
        %5256 = vmatprep.subr.mxu0 %v545
        %5257 = vmatpush1.msra.mxu0 %v544
        %5258 = vmatprep.subr.mxu0 %v547
        %5259 = vmatpush1.msra.mxu0 %v546
        %5260 = vmatprep.subr.mxu0 %v549
        %5261 = vmatpush1.msra.mxu0 %v548
        %5262 = vmatprep.subr.mxu0 %v551
        %5263 = vmatpush1.msra.mxu0 %v550
        %5264 = vmatprep.subr.mxu0 %v553
        %5265 = vmatpush1.msra.mxu0 %v552
        %5266 = vmatprep.subr.mxu0 %v555
        %5267 = vmatpush1.msra.mxu0 %v554
        %5268 = vmatprep.subr.mxu0 %v557
        %5269 = vmatpush1.msra.mxu0 %v556
        %5270 = vmatprep.subr.mxu0 %v559
        %5271 = vmatpush1.msra.mxu0 %v558
        %5272 = vmatprep.subr.mxu0 %v561
        %5273 = vmatpush1.msra.mxu0 %v560
        %5274 = vmatprep.subr.mxu0 %v563
        %5275 = vmatpush1.msra.mxu0 %v562
        %5276 = vmatprep.subr.mxu0 %v565
        %5277 = vmatpush1.msra.mxu0 %v564
        %5278 = vmatprep.subr.mxu0 %v567
        %5279 = vmatpush1.msra.mxu0 %v566
        %5280 = vmatprep.subr.mxu0 %v569
        %5281 = vmatpush1.msra.mxu0 %v568
        %5282 = vmatprep.subr.mxu0 %v571
        %5283 = vmatpush1.msra.mxu0 %v570
        %5284 = vmatprep.subr.mxu0 %v573
        %5285 = vmatpush1.msra.mxu0 %v572
        %5286 = vmatprep.subr.mxu0 %v575
        %5287 = vmatpush1.msra.mxu0 %v574
        %5288 = vmatprep.subr.mxu0 %v577
        %5289 = vmatpush1.msra.mxu0 %v576
        %5290 = vmatprep.subr.mxu0 %v579
        %5291 = vmatpush1.msra.mxu0 %v578
        %5292 = vmatprep.subr.mxu0 %v581
        %5293 = vmatpush1.msra.mxu0 %v580
        %5294 = vmatprep.subr.mxu0 %v583
        %5295 = vmatpush1.msra.mxu0 %v582
        %5296 = vmatprep.subr.mxu0 %v585
        %5297 = vmatpush1.msra.mxu0 %v584
        %5298 = vmatprep.subr.mxu0 %v587
        %5299 = vmatpush1.msra.mxu0 %v586
        %5300 = vmatprep.subr.mxu0 %v589
        %5301 = vmatpush1.msra.mxu0 %v588
        %5302 = vmatprep.subr.mxu0 %v591
        %5303 = vmatpush1.msra.mxu0 %v590
        %5304 = vmatprep.subr.mxu0 %v593
        %5305 = vmatpush1.msra.mxu0 %v592
        %5306 = vmatprep.subr.mxu0 %v595
        %5307 = vmatpush1.msra.mxu0 %v594
        %5308 = vmatprep.subr.mxu0 %v597
        %5309 = vmatpush1.msra.mxu0 %v596
        %5310 = vmatprep.subr.mxu0 %v599
        %5311 = vmatpush1.msra.mxu0 %v598
        %5312 = vmatprep.subr.mxu0 %v601
        %5313 = vmatpush1.msra.mxu0 %v600
        %5314 = vmatprep.subr.mxu0 %v603
        %5315 = vmatpush1.msra.mxu0 %v602
        %5316 = vmatprep.subr.mxu0 %v605
        %5317 = vmatpush1.msra.mxu0 %v604
        %5318 = vmatprep.mubr.f32.mxu0 %v5253
        %5319 = vmatmul.mubr.f32.gmra.mrb[0].mxu0 %v5252
        %v5320 = vpop.f32.mrb[0].mxu0
        %v5321 = vadd.f32 0.0, %v5320
        %v5322 = vpop.f32.mrb[0].mxu0
        %v5323 = vadd.f32 0.0, %v5322
        %5324 = vdwg.mxu0
        %v5325 = vadd.f32 %v5248, %v5321
        %v5326 = vadd.f32 %v5250, %v5323
        %v5327 = vmul.f32 %v684, %v2325
        %v5328 = vmul.f32 %v684, %v2329
        %5329 = vmatprep.subr.mxu0 %v690
        %5330 = vmatpush1.msra.mxu0 %v689
        %5331 = vmatprep.subr.mxu0 %v692
        %5332 = vmatpush1.msra.mxu0 %v691
        %5333 = vmatprep.subr.mxu0 %v694
        %5334 = vmatpush1.msra.mxu0 %v693
        %5335 = vmatprep.subr.mxu0 %v696
        %5336 = vmatpush1.msra.mxu0 %v695
        %5337 = vmatprep.subr.mxu0 %v698
        %5338 = vmatpush1.msra.mxu0 %v697
        %5339 = vmatprep.subr.mxu0 %v700
        %5340 = vmatpush1.msra.mxu0 %v699
        %5341 = vmatprep.subr.mxu0 %v702
        %5342 = vmatpush1.msra.mxu0 %v701
        %5343 = vmatprep.subr.mxu0 %v704
        %5344 = vmatpush1.msra.mxu0 %v703
        %5345 = vmatprep.subr.mxu0 %v706
        %5346 = vmatpush1.msra.mxu0 %v705
        %5347 = vmatprep.subr.mxu0 %v708
        %5348 = vmatpush1.msra.mxu0 %v707
        %5349 = vmatprep.subr.mxu0 %v710
        %5350 = vmatpush1.msra.mxu0 %v709
        %5351 = vmatprep.subr.mxu0 %v712
        %5352 = vmatpush1.msra.mxu0 %v711
        %5353 = vmatprep.subr.mxu0 %v714
        %5354 = vmatpush1.msra.mxu0 %v713
        %5355 = vmatprep.subr.mxu0 %v716
        %5356 = vmatpush1.msra.mxu0 %v715
        %5357 = vmatprep.subr.mxu0 %v718
        %5358 = vmatpush1.msra.mxu0 %v717
        %5359 = vmatprep.subr.mxu0 %v720
        %5360 = vmatpush1.msra.mxu0 %v719
        %5361 = vmatprep.subr.mxu0 %v722
        %5362 = vmatpush1.msra.mxu0 %v721
        %5363 = vmatprep.subr.mxu0 %v724
        %5364 = vmatpush1.msra.mxu0 %v723
        %5365 = vmatprep.subr.mxu0 %v726
        %5366 = vmatpush1.msra.mxu0 %v725
        %5367 = vmatprep.subr.mxu0 %v728
        %5368 = vmatpush1.msra.mxu0 %v727
        %5369 = vmatprep.subr.mxu0 %v730
        %5370 = vmatpush1.msra.mxu0 %v729
        %5371 = vmatprep.subr.mxu0 %v732
        %5372 = vmatpush1.msra.mxu0 %v731
        %5373 = vmatprep.subr.mxu0 %v734
        %5374 = vmatpush1.msra.mxu0 %v733
        %5375 = vmatprep.subr.mxu0 %v736
        %5376 = vmatpush1.msra.mxu0 %v735
        %5377 = vmatprep.subr.mxu0 %v738
        %5378 = vmatpush1.msra.mxu0 %v737
        %5379 = vmatprep.subr.mxu0 %v740
        %5380 = vmatpush1.msra.mxu0 %v739
        %5381 = vmatprep.subr.mxu0 %v742
        %5382 = vmatpush1.msra.mxu0 %v741
        %5383 = vmatprep.subr.mxu0 %v744
        %5384 = vmatpush1.msra.mxu0 %v743
        %5385 = vmatprep.subr.mxu0 %v746
        %5386 = vmatpush1.msra.mxu0 %v745
        %5387 = vmatprep.subr.mxu0 %v748
        %5388 = vmatpush1.msra.mxu0 %v747
        %5389 = vmatprep.subr.mxu0 %v750
        %5390 = vmatpush1.msra.mxu0 %v749
        %5391 = vmatprep.subr.mxu0 %v752
        %5392 = vmatpush1.msra.mxu0 %v751
        %5393 = vmatprep.mubr.f32.mxu0 %v5328
        %5394 = vmatmul.mubr.f32.gmra.mrb[0].mxu0 %v5327
        %v5395 = vpop.f32.mrb[0].mxu0
        %v5396 = vadd.f32 0.0, %v5395
        %v5397 = vpop.f32.mrb[0].mxu0
        %v5398 = vadd.f32 0.0, %v5397
        %5399 = vdwg.mxu0
        %v5400 = vadd.f32 %v5325, %v5396
        %v5401 = vadd.f32 %v5326, %v5398
        %v5402 = vmul.f32 %v831, %v2325
        %v5403 = vmul.f32 %v831, %v2329
        %5404 = vmatprep.subr.mxu0 %v837
        %5405 = vmatpush1.msra.mxu0 %v836
        %5406 = vmatprep.subr.mxu0 %v839
        %5407 = vmatpush1.msra.mxu0 %v838
        %5408 = vmatprep.subr.mxu0 %v841
        %5409 = vmatpush1.msra.mxu0 %v840
        %5410 = vmatprep.subr.mxu0 %v843
        %5411 = vmatpush1.msra.mxu0 %v842
        %5412 = vmatprep.subr.mxu0 %v845
        %5413 = vmatpush1.msra.mxu0 %v844
        %5414 = vmatprep.subr.mxu0 %v847
        %5415 = vmatpush1.msra.mxu0 %v846
        %5416 = vmatprep.subr.mxu0 %v849
        %5417 = vmatpush1.msra.mxu0 %v848
        %5418 = vmatprep.subr.mxu0 %v851
        %5419 = vmatpush1.msra.mxu0 %v850
        %5420 = vmatprep.subr.mxu0 %v853
        %5421 = vmatpush1.msra.mxu0 %v852
        %5422 = vmatprep.subr.mxu0 %v855
        %5423 = vmatpush1.msra.mxu0 %v854
        %5424 = vmatprep.subr.mxu0 %v857
        %5425 = vmatpush1.msra.mxu0 %v856
        %5426 = vmatprep.subr.mxu0 %v859
        %5427 = vmatpush1.msra.mxu0 %v858
        %5428 = vmatprep.subr.mxu0 %v861
        %5429 = vmatpush1.msra.mxu0 %v860
        %5430 = vmatprep.subr.mxu0 %v863
        %5431 = vmatpush1.msra.mxu0 %v862
        %5432 = vmatprep.subr.mxu0 %v865
        %5433 = vmatpush1.msra.mxu0 %v864
        %5434 = vmatprep.subr.mxu0 %v867
        %5435 = vmatpush1.msra.mxu0 %v866
        %5436 = vmatprep.subr.mxu0 %v869
        %5437 = vmatpush1.msra.mxu0 %v868
        %5438 = vmatprep.subr.mxu0 %v871
        %5439 = vmatpush1.msra.mxu0 %v870
        %5440 = vmatprep.subr.mxu0 %v873
        %5441 = vmatpush1.msra.mxu0 %v872
        %5442 = vmatprep.subr.mxu0 %v875
        %5443 = vmatpush1.msra.mxu0 %v874
        %5444 = vmatprep.subr.mxu0 %v877
        %5445 = vmatpush1.msra.mxu0 %v876
        %5446 = vmatprep.subr.mxu0 %v879
        %5447 = vmatpush1.msra.mxu0 %v878
        %5448 = vmatprep.subr.mxu0 %v881
        %5449 = vmatpush1.msra.mxu0 %v880
        %5450 = vmatprep.subr.mxu0 %v883
        %5451 = vmatpush1.msra.mxu0 %v882
        %5452 = vmatprep.subr.mxu0 %v885
        %5453 = vmatpush1.msra.mxu0 %v884
        %5454 = vmatprep.subr.mxu0 %v887
        %5455 = vmatpush1.msra.mxu0 %v886
        %5456 = vmatprep.subr.mxu0 %v889
        %5457 = vmatpush1.msra.mxu0 %v888
        %5458 = vmatprep.subr.mxu0 %v891
        %5459 = vmatpush1.msra.mxu0 %v890
        %5460 = vmatprep.subr.mxu0 %v893
        %5461 = vmatpush1.msra.mxu0 %v892
        %5462 = vmatprep.subr.mxu0 %v895
        %5463 = vmatpush1.msra.mxu0 %v894
        %5464 = vmatprep.subr.mxu0 %v897
        %5465 = vmatpush1.msra.mxu0 %v896
        %5466 = vmatprep.subr.mxu0 %v899
        %5467 = vmatpush1.msra.mxu0 %v898
        %5468 = vmatprep.mubr.f32.mxu0 %v5403
        %5469 = vmatmul.mubr.f32.gmra.mrb[0].mxu0 %v5402
        %v5470 = vpop.f32.mrb[0].mxu0
        %v5471 = vadd.f32 0.0, %v5470
        %v5472 = vpop.f32.mrb[0].mxu0
        %v5473 = vadd.f32 0.0, %v5472
        %5474 = vdwg.mxu0
        %v5475 = vadd.f32 %v5400, %v5471
        %v5476 = vadd.f32 %v5401, %v5473
        %v5477 = vmul.f32 %v978, %v2325
        %v5478 = vmul.f32 %v978, %v2329
        %5479 = vmatprep.subr.mxu0 %v984
        %5480 = vmatpush1.msra.mxu0 %v983
        %5481 = vmatprep.subr.mxu0 %v986
        %5482 = vmatpush1.msra.mxu0 %v985
        %5483 = vmatprep.subr.mxu0 %v988
        %5484 = vmatpush1.msra.mxu0 %v987
        %5485 = vmatprep.subr.mxu0 %v990
        %5486 = vmatpush1.msra.mxu0 %v989
        %5487 = vmatprep.subr.mxu0 %v992
        %5488 = vmatpush1.msra.mxu0 %v991
        %5489 = vmatprep.subr.mxu0 %v994
        %5490 = vmatpush1.msra.mxu0 %v993
        %5491 = vmatprep.subr.mxu0 %v996
        %5492 = vmatpush1.msra.mxu0 %v995
        %5493 = vmatprep.subr.mxu0 %v998
        %5494 = vmatpush1.msra.mxu0 %v997
        %5495 = vmatprep.subr.mxu0 %v1000
        %5496 = vmatpush1.msra.mxu0 %v999
        %5497 = vmatprep.subr.mxu0 %v1002
        %5498 = vmatpush1.msra.mxu0 %v1001
        %5499 = vmatprep.subr.mxu0 %v1004
        %5500 = vmatpush1.msra.mxu0 %v1003
        %5501 = vmatprep.subr.mxu0 %v1006
        %5502 = vmatpush1.msra.mxu0 %v1005
        %5503 = vmatprep.subr.mxu0 %v1008
        %5504 = vmatpush1.msra.mxu0 %v1007
        %5505 = vmatprep.subr.mxu0 %v1010
        %5506 = vmatpush1.msra.mxu0 %v1009
        %5507 = vmatprep.subr.mxu0 %v1012
        %5508 = vmatpush1.msra.mxu0 %v1011
        %5509 = vmatprep.subr.mxu0 %v1014
        %5510 = vmatpush1.msra.mxu0 %v1013
        %5511 = vmatprep.subr.mxu0 %v1016
        %5512 = vmatpush1.msra.mxu0 %v1015
        %5513 = vmatprep.subr.mxu0 %v1018
        %5514 = vmatpush1.msra.mxu0 %v1017
        %5515 = vmatprep.subr.mxu0 %v1020
        %5516 = vmatpush1.msra.mxu0 %v1019
        %5517 = vmatprep.subr.mxu0 %v1022
        %5518 = vmatpush1.msra.mxu0 %v1021
        %5519 = vmatprep.subr.mxu0 %v1024
        %5520 = vmatpush1.msra.mxu0 %v1023
        %5521 = vmatprep.subr.mxu0 %v1026
        %5522 = vmatpush1.msra.mxu0 %v1025
        %5523 = vmatprep.subr.mxu0 %v1028
        %5524 = vmatpush1.msra.mxu0 %v1027
        %5525 = vmatprep.subr.mxu0 %v1030
        %5526 = vmatpush1.msra.mxu0 %v1029
        %5527 = vmatprep.subr.mxu0 %v1032
        %5528 = vmatpush1.msra.mxu0 %v1031
        %5529 = vmatprep.subr.mxu0 %v1034
        %5530 = vmatpush1.msra.mxu0 %v1033
        %5531 = vmatprep.subr.mxu0 %v1036
        %5532 = vmatpush1.msra.mxu0 %v1035
        %5533 = vmatprep.subr.mxu0 %v1038
        %5534 = vmatpush1.msra.mxu0 %v1037
        %5535 = vmatprep.subr.mxu0 %v1040
        %5536 = vmatpush1.msra.mxu0 %v1039
        %5537 = vmatprep.subr.mxu0 %v1042
        %5538 = vmatpush1.msra.mxu0 %v1041
        %5539 = vmatprep.subr.mxu0 %v1044
        %5540 = vmatpush1.msra.mxu0 %v1043
        %5541 = vmatprep.subr.mxu0 %v1046
        %5542 = vmatpush1.msra.mxu0 %v1045
        %5543 = vmatprep.mubr.f32.mxu0 %v5478
        %5544 = vmatmul.mubr.f32.gmra.mrb[0].mxu0 %v5477
        %v5545 = vpop.f32.mrb[0].mxu0
        %v5546 = vadd.f32 0.0, %v5545
        %v5547 = vpop.f32.mrb[0].mxu0
        %v5548 = vadd.f32 0.0, %v5547
        %5549 = vdwg.mxu0
        %v5550 = vadd.f32 %v5475, %v5546
        %v5551 = vadd.f32 %v5476, %v5548
        %v5552 = vmul.f32 %v1125, %v2325
        %v5553 = vmul.f32 %v1125, %v2329
        %5554 = vmatprep.subr.mxu0 %v1131
        %5555 = vmatpush1.msra.mxu0 %v1130
        %5556 = vmatprep.subr.mxu0 %v1133
        %5557 = vmatpush1.msra.mxu0 %v1132
        %5558 = vmatprep.subr.mxu0 %v1135
        %5559 = vmatpush1.msra.mxu0 %v1134
        %5560 = vmatprep.subr.mxu0 %v1137
        %5561 = vmatpush1.msra.mxu0 %v1136
        %5562 = vmatprep.subr.mxu0 %v1139
        %5563 = vmatpush1.msra.mxu0 %v1138
        %5564 = vmatprep.subr.mxu0 %v1141
        %5565 = vmatpush1.msra.mxu0 %v1140
        %5566 = vmatprep.subr.mxu0 %v1143
        %5567 = vmatpush1.msra.mxu0 %v1142
        %5568 = vmatprep.subr.mxu0 %v1145
        %5569 = vmatpush1.msra.mxu0 %v1144
        %5570 = vmatprep.subr.mxu0 %v1147
        %5571 = vmatpush1.msra.mxu0 %v1146
        %5572 = vmatprep.subr.mxu0 %v1149
        %5573 = vmatpush1.msra.mxu0 %v1148
        %5574 = vmatprep.subr.mxu0 %v1151
        %5575 = vmatpush1.msra.mxu0 %v1150
        %5576 = vmatprep.subr.mxu0 %v1153
        %5577 = vmatpush1.msra.mxu0 %v1152
        %5578 = vmatprep.subr.mxu0 %v1155
        %5579 = vmatpush1.msra.mxu0 %v1154
        %5580 = vmatprep.subr.mxu0 %v1157
        %5581 = vmatpush1.msra.mxu0 %v1156
        %5582 = vmatprep.subr.mxu0 %v1159
        %5583 = vmatpush1.msra.mxu0 %v1158
        %5584 = vmatprep.subr.mxu0 %v1161
        %5585 = vmatpush1.msra.mxu0 %v1160
        %5586 = vmatprep.subr.mxu0 %v1163
        %5587 = vmatpush1.msra.mxu0 %v1162
        %5588 = vmatprep.subr.mxu0 %v1165
        %5589 = vmatpush1.msra.mxu0 %v1164
        %5590 = vmatprep.subr.mxu0 %v1167
        %5591 = vmatpush1.msra.mxu0 %v1166
        %5592 = vmatprep.subr.mxu0 %v1169
        %5593 = vmatpush1.msra.mxu0 %v1168
        %5594 = vmatprep.subr.mxu0 %v1171
        %5595 = vmatpush1.msra.mxu0 %v1170
        %5596 = vmatprep.subr.mxu0 %v1173
        %5597 = vmatpush1.msra.mxu0 %v1172
        %5598 = vmatprep.subr.mxu0 %v1175
        %5599 = vmatpush1.msra.mxu0 %v1174
        %5600 = vmatprep.subr.mxu0 %v1177
        %5601 = vmatpush1.msra.mxu0 %v1176
        %5602 = vmatprep.subr.mxu0 %v1179
        %5603 = vmatpush1.msra.mxu0 %v1178
        %5604 = vmatprep.subr.mxu0 %v1181
        %5605 = vmatpush1.msra.mxu0 %v1180
        %5606 = vmatprep.subr.mxu0 %v1183
        %5607 = vmatpush1.msra.mxu0 %v1182
        %5608 = vmatprep.subr.mxu0 %v1185
        %5609 = vmatpush1.msra.mxu0 %v1184
        %5610 = vmatprep.subr.mxu0 %v1187
        %5611 = vmatpush1.msra.mxu0 %v1186
        %5612 = vmatprep.subr.mxu0 %v1189
        %5613 = vmatpush1.msra.mxu0 %v1188
        %5614 = vmatprep.subr.mxu0 %v1191
        %5615 = vmatpush1.msra.mxu0 %v1190
        %5616 = vmatprep.subr.mxu0 %v1193
        %5617 = vmatpush1.msra.mxu0 %v1192
        %5618 = vmatprep.mubr.f32.mxu0 %v5553
        %5619 = vmatmul.mubr.f32.gmra.mrb[0].mxu0 %v5552
        %v5620 = vpop.f32.mrb[0].mxu0
        %v5621 = vadd.f32 0.0, %v5620
        %v5622 = vpop.f32.mrb[0].mxu0
        %v5623 = vadd.f32 0.0, %v5622
        %5624 = vdwg.mxu0
        %v5625 = vadd.f32 %v5550, %v5621
        %v5626 = vadd.f32 %v5551, %v5623
        %v5627 = vmul.f32 %v1272, %v2325
        %v5628 = vmul.f32 %v1272, %v2329
        %5629 = vmatprep.subr.mxu0 %v1278
        %5630 = vmatpush1.msra.mxu0 %v1277
        %5631 = vmatprep.subr.mxu0 %v1280
        %5632 = vmatpush1.msra.mxu0 %v1279
        %5633 = vmatprep.subr.mxu0 %v1282
        %5634 = vmatpush1.msra.mxu0 %v1281
        %5635 = vmatprep.subr.mxu0 %v1284
        %5636 = vmatpush1.msra.mxu0 %v1283
        %5637 = vmatprep.subr.mxu0 %v1286
        %5638 = vmatpush1.msra.mxu0 %v1285
        %5639 = vmatprep.subr.mxu0 %v1288
        %5640 = vmatpush1.msra.mxu0 %v1287
        %5641 = vmatprep.subr.mxu0 %v1290
        %5642 = vmatpush1.msra.mxu0 %v1289
        %5643 = vmatprep.subr.mxu0 %v1292
        %5644 = vmatpush1.msra.mxu0 %v1291
        %5645 = vmatprep.subr.mxu0 %v1294
        %5646 = vmatpush1.msra.mxu0 %v1293
        %5647 = vmatprep.subr.mxu0 %v1296
        %5648 = vmatpush1.msra.mxu0 %v1295
        %5649 = vmatprep.subr.mxu0 %v1298
        %5650 = vmatpush1.msra.mxu0 %v1297
        %5651 = vmatprep.subr.mxu0 %v1300
        %5652 = vmatpush1.msra.mxu0 %v1299
        %5653 = vmatprep.subr.mxu0 %v1302
        %5654 = vmatpush1.msra.mxu0 %v1301
        %5655 = vmatprep.subr.mxu0 %v1304
        %5656 = vmatpush1.msra.mxu0 %v1303
        %5657 = vmatprep.subr.mxu0 %v1306
        %5658 = vmatpush1.msra.mxu0 %v1305
        %5659 = vmatprep.subr.mxu0 %v1308
        %5660 = vmatpush1.msra.mxu0 %v1307
        %5661 = vmatprep.subr.mxu0 %v1310
        %5662 = vmatpush1.msra.mxu0 %v1309
        %5663 = vmatprep.subr.mxu0 %v1312
        %5664 = vmatpush1.msra.mxu0 %v1311
        %5665 = vmatprep.subr.mxu0 %v1314
        %5666 = vmatpush1.msra.mxu0 %v1313
        %5667 = vmatprep.subr.mxu0 %v1316
        %5668 = vmatpush1.msra.mxu0 %v1315
        %5669 = vmatprep.subr.mxu0 %v1318
        %5670 = vmatpush1.msra.mxu0 %v1317
        %5671 = vmatprep.subr.mxu0 %v1320
        %5672 = vmatpush1.msra.mxu0 %v1319
        %5673 = vmatprep.subr.mxu0 %v1322
        %5674 = vmatpush1.msra.mxu0 %v1321
        %5675 = vmatprep.subr.mxu0 %v1324
        %5676 = vmatpush1.msra.mxu0 %v1323
        %5677 = vmatprep.subr.mxu0 %v1326
        %5678 = vmatpush1.msra.mxu0 %v1325
        %5679 = vmatprep.subr.mxu0 %v1328
        %5680 = vmatpush1.msra.mxu0 %v1327
        %5681 = vmatprep.subr.mxu0 %v1330
        %5682 = vmatpush1.msra.mxu0 %v1329
        %5683 = vmatprep.subr.mxu0 %v1332
        %5684 = vmatpush1.msra.mxu0 %v1331
        %5685 = vmatprep.subr.mxu0 %v1334
        %5686 = vmatpush1.msra.mxu0 %v1333
        %5687 = vmatprep.subr.mxu0 %v1336
        %5688 = vmatpush1.msra.mxu0 %v1335
        %5689 = vmatprep.subr.mxu0 %v1338
        %5690 = vmatpush1.msra.mxu0 %v1337
        %5691 = vmatprep.subr.mxu0 %v1340
        %5692 = vmatpush1.msra.mxu0 %v1339
        %5693 = vmatprep.mubr.f32.mxu0 %v5628
        %5694 = vmatmul.mubr.f32.gmra.mrb[0].mxu0 %v5627
        %v5695 = vpop.f32.mrb[0].mxu0
        %v5696 = vadd.f32 0.0, %v5695
        %v5697 = vpop.f32.mrb[0].mxu0
        %v5698 = vadd.f32 0.0, %v5697
        %5699 = vdwg.mxu0
        %v5700 = vadd.f32 %v5625, %v5696
        %v5701 = vadd.f32 %v5626, %v5698
        %v5702 = vmul.f32 %v1419, %v2325
        %v5703 = vmul.f32 %v1419, %v2329
        %5704 = vmatprep.subr.mxu0 %v1425
        %5705 = vmatpush1.msra.mxu0 %v1424
        %5706 = vmatprep.subr.mxu0 %v1427
        %5707 = vmatpush1.msra.mxu0 %v1426
        %5708 = vmatprep.subr.mxu0 %v1429
        %5709 = vmatpush1.msra.mxu0 %v1428
        %5710 = vmatprep.subr.mxu0 %v1431
        %5711 = vmatpush1.msra.mxu0 %v1430
        %5712 = vmatprep.subr.mxu0 %v1433
        %5713 = vmatpush1.msra.mxu0 %v1432
        %5714 = vmatprep.subr.mxu0 %v1435
        %5715 = vmatpush1.msra.mxu0 %v1434
        %5716 = vmatprep.subr.mxu0 %v1437
        %5717 = vmatpush1.msra.mxu0 %v1436
        %5718 = vmatprep.subr.mxu0 %v1439
        %5719 = vmatpush1.msra.mxu0 %v1438
        %5720 = vmatprep.subr.mxu0 %v1441
        %5721 = vmatpush1.msra.mxu0 %v1440
        %5722 = vmatprep.subr.mxu0 %v1443
        %5723 = vmatpush1.msra.mxu0 %v1442
        %5724 = vmatprep.subr.mxu0 %v1445
        %5725 = vmatpush1.msra.mxu0 %v1444
        %5726 = vmatprep.subr.mxu0 %v1447
        %5727 = vmatpush1.msra.mxu0 %v1446
        %5728 = vmatprep.subr.mxu0 %v1449
        %5729 = vmatpush1.msra.mxu0 %v1448
        %5730 = vmatprep.subr.mxu0 %v1451
        %5731 = vmatpush1.msra.mxu0 %v1450
        %5732 = vmatprep.subr.mxu0 %v1453
        %5733 = vmatpush1.msra.mxu0 %v1452
        %5734 = vmatprep.subr.mxu0 %v1455
        %5735 = vmatpush1.msra.mxu0 %v1454
        %5736 = vmatprep.subr.mxu0 %v1457
        %5737 = vmatpush1.msra.mxu0 %v1456
        %5738 = vmatprep.subr.mxu0 %v1459
        %5739 = vmatpush1.msra.mxu0 %v1458
        %5740 = vmatprep.subr.mxu0 %v1461
        %5741 = vmatpush1.msra.mxu0 %v1460
        %5742 = vmatprep.subr.mxu0 %v1463
        %5743 = vmatpush1.msra.mxu0 %v1462
        %5744 = vmatprep.subr.mxu0 %v1465
        %5745 = vmatpush1.msra.mxu0 %v1464
        %5746 = vmatprep.subr.mxu0 %v1467
        %5747 = vmatpush1.msra.mxu0 %v1466
        %5748 = vmatprep.subr.mxu0 %v1469
        %5749 = vmatpush1.msra.mxu0 %v1468
        %5750 = vmatprep.subr.mxu0 %v1471
        %5751 = vmatpush1.msra.mxu0 %v1470
        %5752 = vmatprep.subr.mxu0 %v1473
        %5753 = vmatpush1.msra.mxu0 %v1472
        %5754 = vmatprep.subr.mxu0 %v1475
        %5755 = vmatpush1.msra.mxu0 %v1474
        %5756 = vmatprep.subr.mxu0 %v1477
        %5757 = vmatpush1.msra.mxu0 %v1476
        %5758 = vmatprep.subr.mxu0 %v1479
        %5759 = vmatpush1.msra.mxu0 %v1478
        %5760 = vmatprep.subr.mxu0 %v1481
        %5761 = vmatpush1.msra.mxu0 %v1480
        %5762 = vmatprep.subr.mxu0 %v1483
        %5763 = vmatpush1.msra.mxu0 %v1482
        %5764 = vmatprep.subr.mxu0 %v1485
        %5765 = vmatpush1.msra.mxu0 %v1484
        %5766 = vmatprep.subr.mxu0 %v1487
        %5767 = vmatpush1.msra.mxu0 %v1486
        %5768 = vmatprep.mubr.f32.mxu0 %v5703
        %5769 = vmatmul.mubr.f32.gmra.mrb[0].mxu0 %v5702
        %v5770 = vpop.f32.mrb[0].mxu0
        %v5771 = vadd.f32 0.0, %v5770
        %v5772 = vpop.f32.mrb[0].mxu0
        %v5773 = vadd.f32 0.0, %v5772
        %5774 = vdwg.mxu0
        %v5775 = vadd.f32 %v5700, %v5771
        %v5776 = vadd.f32 %v5701, %v5773
        %v5777 = vmul.f32 %v1568, %v4422
        %v5778 = vmul.f32 %v1568, %v4426
        %5779 = vmatprep.subr.mxu0 %v253
        %5780 = vmatpush1.msra.mxu0 %v252
        %5781 = vmatprep.subr.mxu0 %v255
        %5782 = vmatpush1.msra.mxu0 %v254
        %5783 = vmatprep.subr.mxu0 %v257
        %5784 = vmatpush1.msra.mxu0 %v256
        %5785 = vmatprep.subr.mxu0 %v259
        %5786 = vmatpush1.msra.mxu0 %v258
        %5787 = vmatprep.subr.mxu0 %v261
        %5788 = vmatpush1.msra.mxu0 %v260
        %5789 = vmatprep.subr.mxu0 %v263
        %5790 = vmatpush1.msra.mxu0 %v262
        %5791 = vmatprep.subr.mxu0 %v265
        %5792 = vmatpush1.msra.mxu0 %v264
        %5793 = vmatprep.subr.mxu0 %v267
        %5794 = vmatpush1.msra.mxu0 %v266
        %5795 = vmatprep.subr.mxu0 %v269
        %5796 = vmatpush1.msra.mxu0 %v268
        %5797 = vmatprep.subr.mxu0 %v271
        %5798 = vmatpush1.msra.mxu0 %v270
        %5799 = vmatprep.subr.mxu0 %v273
        %5800 = vmatpush1.msra.mxu0 %v272
        %5801 = vmatprep.subr.mxu0 %v275
        %5802 = vmatpush1.msra.mxu0 %v274
        %5803 = vmatprep.subr.mxu0 %v277
        %5804 = vmatpush1.msra.mxu0 %v276
        %5805 = vmatprep.subr.mxu0 %v279
        %5806 = vmatpush1.msra.mxu0 %v278
        %5807 = vmatprep.subr.mxu0 %v281
        %5808 = vmatpush1.msra.mxu0 %v280
        %5809 = vmatprep.subr.mxu0 %v283
        %5810 = vmatpush1.msra.mxu0 %v282
        %5811 = vmatprep.subr.mxu0 %v285
        %5812 = vmatpush1.msra.mxu0 %v284
        %5813 = vmatprep.subr.mxu0 %v287
        %5814 = vmatpush1.msra.mxu0 %v286
        %5815 = vmatprep.subr.mxu0 %v289
        %5816 = vmatpush1.msra.mxu0 %v288
        %5817 = vmatprep.subr.mxu0 %v291
        %5818 = vmatpush1.msra.mxu0 %v290
        %5819 = vmatprep.subr.mxu0 %v293
        %5820 = vmatpush1.msra.mxu0 %v292
        %5821 = vmatprep.subr.mxu0 %v295
        %5822 = vmatpush1.msra.mxu0 %v294
        %5823 = vmatprep.subr.mxu0 %v297
        %5824 = vmatpush1.msra.mxu0 %v296
        %5825 = vmatprep.subr.mxu0 %v299
        %5826 = vmatpush1.msra.mxu0 %v298
        %5827 = vmatprep.subr.mxu0 %v301
        %5828 = vmatpush1.msra.mxu0 %v300
        %5829 = vmatprep.subr.mxu0 %v303
        %5830 = vmatpush1.msra.mxu0 %v302
        %5831 = vmatprep.subr.mxu0 %v305
        %5832 = vmatpush1.msra.mxu0 %v304
        %5833 = vmatprep.subr.mxu0 %v307
        %5834 = vmatpush1.msra.mxu0 %v306
        %5835 = vmatprep.subr.mxu0 %v309
        %5836 = vmatpush1.msra.mxu0 %v308
        %5837 = vmatprep.subr.mxu0 %v311
        %5838 = vmatpush1.msra.mxu0 %v310
        %5839 = vmatprep.subr.mxu0 %v313
        %5840 = vmatpush1.msra.mxu0 %v312
        %5841 = vmatprep.subr.mxu0 %v315
        %5842 = vmatpush1.msra.mxu0 %v314
        %5843 = vmatprep.mubr.f32.mxu0 %v5778
        %5844 = vmatmul.mubr.f32.gmra.mrb[0].mxu0 %v5777
        %v5845 = vpop.f32.mrb[0].mxu0
        %v5846 = vadd.f32 0.0, %v5845
        %v5847 = vpop.f32.mrb[0].mxu0
        %v5848 = vadd.f32 0.0, %v5847
        %5849 = vdwg.mxu0
        %v5850 = vadd.f32 %v5775, %v5846
        %v5851 = vadd.f32 %v5776, %v5848
        %v5852 = vmul.f32 %v1661, %v4422
        %v5853 = vmul.f32 %v1661, %v4426
        %5854 = vmatprep.subr.mxu0 %v327
        %5855 = vmatpush1.msra.mxu0 %v326
        %5856 = vmatprep.subr.mxu0 %v329
        %5857 = vmatpush1.msra.mxu0 %v328
        %5858 = vmatprep.subr.mxu0 %v331
        %5859 = vmatpush1.msra.mxu0 %v330
        %5860 = vmatprep.subr.mxu0 %v333
        %5861 = vmatpush1.msra.mxu0 %v332
        %5862 = vmatprep.subr.mxu0 %v335
        %5863 = vmatpush1.msra.mxu0 %v334
        %5864 = vmatprep.subr.mxu0 %v337
        %5865 = vmatpush1.msra.mxu0 %v336
        %5866 = vmatprep.subr.mxu0 %v339
        %5867 = vmatpush1.msra.mxu0 %v338
        %5868 = vmatprep.subr.mxu0 %v341
        %5869 = vmatpush1.msra.mxu0 %v340
        %5870 = vmatprep.subr.mxu0 %v343
        %5871 = vmatpush1.msra.mxu0 %v342
        %5872 = vmatprep.subr.mxu0 %v345
        %5873 = vmatpush1.msra.mxu0 %v344
        %5874 = vmatprep.subr.mxu0 %v347
        %5875 = vmatpush1.msra.mxu0 %v346
        %5876 = vmatprep.subr.mxu0 %v349
        %5877 = vmatpush1.msra.mxu0 %v348
        %5878 = vmatprep.subr.mxu0 %v351
        %5879 = vmatpush1.msra.mxu0 %v350
        %5880 = vmatprep.subr.mxu0 %v353
        %5881 = vmatpush1.msra.mxu0 %v352
        %5882 = vmatprep.subr.mxu0 %v355
        %5883 = vmatpush1.msra.mxu0 %v354
        %5884 = vmatprep.subr.mxu0 %v357
        %5885 = vmatpush1.msra.mxu0 %v356
        %5886 = vmatprep.subr.mxu0 %v359
        %5887 = vmatpush1.msra.mxu0 %v358
        %5888 = vmatprep.subr.mxu0 %v361
        %5889 = vmatpush1.msra.mxu0 %v360
        %5890 = vmatprep.subr.mxu0 %v363
        %5891 = vmatpush1.msra.mxu0 %v362
        %5892 = vmatprep.subr.mxu0 %v365
        %5893 = vmatpush1.msra.mxu0 %v364
        %5894 = vmatprep.subr.mxu0 %v367
        %5895 = vmatpush1.msra.mxu0 %v366
        %5896 = vmatprep.subr.mxu0 %v369
        %5897 = vmatpush1.msra.mxu0 %v368
        %5898 = vmatprep.subr.mxu0 %v371
        %5899 = vmatpush1.msra.mxu0 %v370
        %5900 = vmatprep.subr.mxu0 %v373
        %5901 = vmatpush1.msra.mxu0 %v372
        %5902 = vmatprep.subr.mxu0 %v375
        %5903 = vmatpush1.msra.mxu0 %v374
        %5904 = vmatprep.subr.mxu0 %v377
        %5905 = vmatpush1.msra.mxu0 %v376
        %5906 = vmatprep.subr.mxu0 %v379
        %5907 = vmatpush1.msra.mxu0 %v378
        %5908 = vmatprep.subr.mxu0 %v381
        %5909 = vmatpush1.msra.mxu0 %v380
        %5910 = vmatprep.subr.mxu0 %v383
        %5911 = vmatpush1.msra.mxu0 %v382
        %5912 = vmatprep.subr.mxu0 %v385
        %5913 = vmatpush1.msra.mxu0 %v384
        %5914 = vmatprep.subr.mxu0 %v387
        %5915 = vmatpush1.msra.mxu0 %v386
        %5916 = vmatprep.subr.mxu0 %v389
        %5917 = vmatpush1.msra.mxu0 %v388
        %5918 = vmatprep.mubr.f32.mxu0 %v5853
        %5919 = vmatmul.mubr.f32.gmra.mrb[0].mxu0 %v5852
        %v5920 = vpop.f32.mrb[0].mxu0
        %v5921 = vadd.f32 0.0, %v5920
        %v5922 = vpop.f32.mrb[0].mxu0
        %v5923 = vadd.f32 0.0, %v5922
        %5924 = vdwg.mxu0
        %v5925 = vadd.f32 %v5850, %v5921
        %v5926 = vadd.f32 %v5851, %v5923
        %v5927 = vmul.f32 %v1743, %v4422
        %v5928 = vmul.f32 %v1743, %v4426
        %5929 = vmatprep.subr.mxu0 %v543
        %5930 = vmatpush1.msra.mxu0 %v542
        %5931 = vmatprep.subr.mxu0 %v545
        %5932 = vmatpush1.msra.mxu0 %v544
        %5933 = vmatprep.subr.mxu0 %v547
        %5934 = vmatpush1.msra.mxu0 %v546
        %5935 = vmatprep.subr.mxu0 %v549
        %5936 = vmatpush1.msra.mxu0 %v548
        %5937 = vmatprep.subr.mxu0 %v551
        %5938 = vmatpush1.msra.mxu0 %v550
        %5939 = vmatprep.subr.mxu0 %v553
        %5940 = vmatpush1.msra.mxu0 %v552
        %5941 = vmatprep.subr.mxu0 %v555
        %5942 = vmatpush1.msra.mxu0 %v554
        %5943 = vmatprep.subr.mxu0 %v557
        %5944 = vmatpush1.msra.mxu0 %v556
        %5945 = vmatprep.subr.mxu0 %v559
        %5946 = vmatpush1.msra.mxu0 %v558
        %5947 = vmatprep.subr.mxu0 %v561
        %5948 = vmatpush1.msra.mxu0 %v560
        %5949 = vmatprep.subr.mxu0 %v563
        %5950 = vmatpush1.msra.mxu0 %v562
        %5951 = vmatprep.subr.mxu0 %v565
        %5952 = vmatpush1.msra.mxu0 %v564
        %5953 = vmatprep.subr.mxu0 %v567
        %5954 = vmatpush1.msra.mxu0 %v566
        %5955 = vmatprep.subr.mxu0 %v569
        %5956 = vmatpush1.msra.mxu0 %v568
        %5957 = vmatprep.subr.mxu0 %v571
        %5958 = vmatpush1.msra.mxu0 %v570
        %5959 = vmatprep.subr.mxu0 %v573
        %5960 = vmatpush1.msra.mxu0 %v572
        %5961 = vmatprep.subr.mxu0 %v575
        %5962 = vmatpush1.msra.mxu0 %v574
        %5963 = vmatprep.subr.mxu0 %v577
        %5964 = vmatpush1.msra.mxu0 %v576
        %5965 = vmatprep.subr.mxu0 %v579
        %5966 = vmatpush1.msra.mxu0 %v578
        %5967 = vmatprep.subr.mxu0 %v581
        %5968 = vmatpush1.msra.mxu0 %v580
        %5969 = vmatprep.subr.mxu0 %v583
        %5970 = vmatpush1.msra.mxu0 %v582
        %5971 = vmatprep.subr.mxu0 %v585
        %5972 = vmatpush1.msra.mxu0 %v584
        %5973 = vmatprep.subr.mxu0 %v587
        %5974 = vmatpush1.msra.mxu0 %v586
        %5975 = vmatprep.subr.mxu0 %v589
        %5976 = vmatpush1.msra.mxu0 %v588
        %5977 = vmatprep.subr.mxu0 %v591
        %5978 = vmatpush1.msra.mxu0 %v590
        %5979 = vmatprep.subr.mxu0 %v593
        %5980 = vmatpush1.msra.mxu0 %v592
        %5981 = vmatprep.subr.mxu0 %v595
        %5982 = vmatpush1.msra.mxu0 %v594
        %5983 = vmatprep.subr.mxu0 %v597
        %5984 = vmatpush1.msra.mxu0 %v596
        %5985 = vmatprep.subr.mxu0 %v599
        %5986 = vmatpush1.msra.mxu0 %v598
        %5987 = vmatprep.subr.mxu0 %v601
        %5988 = vmatpush1.msra.mxu0 %v600
        %5989 = vmatprep.subr.mxu0 %v603
        %5990 = vmatpush1.msra.mxu0 %v602
        %5991 = vmatprep.subr.mxu0 %v605
        %5992 = vmatpush1.msra.mxu0 %v604
        %5993 = vmatprep.mubr.f32.mxu0 %v5928
        %5994 = vmatmul.mubr.f32.gmra.mrb[0].mxu0 %v5927
        %v5995 = vpop.f32.mrb[0].mxu0
        %v5996 = vadd.f32 0.0, %v5995
        %v5997 = vpop.f32.mrb[0].mxu0
        %v5998 = vadd.f32 0.0, %v5997
        %5999 = vdwg.mxu0
        %v6000 = vadd.f32 %v5925, %v5996
        %v6001 = vadd.f32 %v5926, %v5998
        %v6002 = vmul.f32 %v1825, %v4422
        %v6003 = vmul.f32 %v1825, %v4426
        %6004 = vmatprep.subr.mxu0 %v690
        %6005 = vmatpush1.msra.mxu0 %v689
        %6006 = vmatprep.subr.mxu0 %v692
        %6007 = vmatpush1.msra.mxu0 %v691
        %6008 = vmatprep.subr.mxu0 %v694
        %6009 = vmatpush1.msra.mxu0 %v693
        %6010 = vmatprep.subr.mxu0 %v696
        %6011 = vmatpush1.msra.mxu0 %v695
        %6012 = vmatprep.subr.mxu0 %v698
        %6013 = vmatpush1.msra.mxu0 %v697
        %6014 = vmatprep.subr.mxu0 %v700
        %6015 = vmatpush1.msra.mxu0 %v699
        %6016 = vmatprep.subr.mxu0 %v702
        %6017 = vmatpush1.msra.mxu0 %v701
        %6018 = vmatprep.subr.mxu0 %v704
        %6019 = vmatpush1.msra.mxu0 %v703
        %6020 = vmatprep.subr.mxu0 %v706
        %6021 = vmatpush1.msra.mxu0 %v705
        %6022 = vmatprep.subr.mxu0 %v708
        %6023 = vmatpush1.msra.mxu0 %v707
        %6024 = vmatprep.subr.mxu0 %v710
        %6025 = vmatpush1.msra.mxu0 %v709
        %6026 = vmatprep.subr.mxu0 %v712
        %6027 = vmatpush1.msra.mxu0 %v711
        %6028 = vmatprep.subr.mxu0 %v714
        %6029 = vmatpush1.msra.mxu0 %v713
        %6030 = vmatprep.subr.mxu0 %v716
        %6031 = vmatpush1.msra.mxu0 %v715
        %6032 = vmatprep.subr.mxu0 %v718
        %6033 = vmatpush1.msra.mxu0 %v717
        %6034 = vmatprep.subr.mxu0 %v720
        %6035 = vmatpush1.msra.mxu0 %v719
        %6036 = vmatprep.subr.mxu0 %v722
        %6037 = vmatpush1.msra.mxu0 %v721
        %6038 = vmatprep.subr.mxu0 %v724
        %6039 = vmatpush1.msra.mxu0 %v723
        %6040 = vmatprep.subr.mxu0 %v726
        %6041 = vmatpush1.msra.mxu0 %v725
        %6042 = vmatprep.subr.mxu0 %v728
        %6043 = vmatpush1.msra.mxu0 %v727
        %6044 = vmatprep.subr.mxu0 %v730
        %6045 = vmatpush1.msra.mxu0 %v729
        %6046 = vmatprep.subr.mxu0 %v732
        %6047 = vmatpush1.msra.mxu0 %v731
        %6048 = vmatprep.subr.mxu0 %v734
        %6049 = vmatpush1.msra.mxu0 %v733
        %6050 = vmatprep.subr.mxu0 %v736
        %6051 = vmatpush1.msra.mxu0 %v735
        %6052 = vmatprep.subr.mxu0 %v738
        %6053 = vmatpush1.msra.mxu0 %v737
        %6054 = vmatprep.subr.mxu0 %v740
        %6055 = vmatpush1.msra.mxu0 %v739
        %6056 = vmatprep.subr.mxu0 %v742
        %6057 = vmatpush1.msra.mxu0 %v741
        %6058 = vmatprep.subr.mxu0 %v744
        %6059 = vmatpush1.msra.mxu0 %v743
        %6060 = vmatprep.subr.mxu0 %v746
        %6061 = vmatpush1.msra.mxu0 %v745
        %6062 = vmatprep.subr.mxu0 %v748
        %6063 = vmatpush1.msra.mxu0 %v747
        %6064 = vmatprep.subr.mxu0 %v750
        %6065 = vmatpush1.msra.mxu0 %v749
        %6066 = vmatprep.subr.mxu0 %v752
        %6067 = vmatpush1.msra.mxu0 %v751
        %6068 = vmatprep.mubr.f32.mxu0 %v6003
        %6069 = vmatmul.mubr.f32.gmra.mrb[0].mxu0 %v6002
        %v6070 = vpop.f32.mrb[0].mxu0
        %v6071 = vadd.f32 0.0, %v6070
        %v6072 = vpop.f32.mrb[0].mxu0
        %v6073 = vadd.f32 0.0, %v6072
        %6074 = vdwg.mxu0
        %v6075 = vadd.f32 %v6000, %v6071
        %v6076 = vadd.f32 %v6001, %v6073
        %v6077 = vmul.f32 %v1907, %v4422
        %v6078 = vmul.f32 %v1907, %v4426
        %6079 = vmatprep.subr.mxu0 %v837
        %6080 = vmatpush1.msra.mxu0 %v836
        %6081 = vmatprep.subr.mxu0 %v839
        %6082 = vmatpush1.msra.mxu0 %v838
        %6083 = vmatprep.subr.mxu0 %v841
        %6084 = vmatpush1.msra.mxu0 %v840
        %6085 = vmatprep.subr.mxu0 %v843
        %6086 = vmatpush1.msra.mxu0 %v842
        %6087 = vmatprep.subr.mxu0 %v845
        %6088 = vmatpush1.msra.mxu0 %v844
        %6089 = vmatprep.subr.mxu0 %v847
        %6090 = vmatpush1.msra.mxu0 %v846
        %6091 = vmatprep.subr.mxu0 %v849
        %6092 = vmatpush1.msra.mxu0 %v848
        %6093 = vmatprep.subr.mxu0 %v851
        %6094 = vmatpush1.msra.mxu0 %v850
        %6095 = vmatprep.subr.mxu0 %v853
        %6096 = vmatpush1.msra.mxu0 %v852
        %6097 = vmatprep.subr.mxu0 %v855
        %6098 = vmatpush1.msra.mxu0 %v854
        %6099 = vmatprep.subr.mxu0 %v857
        %6100 = vmatpush1.msra.mxu0 %v856
        %6101 = vmatprep.subr.mxu0 %v859
        %6102 = vmatpush1.msra.mxu0 %v858
        %6103 = vmatprep.subr.mxu0 %v861
        %6104 = vmatpush1.msra.mxu0 %v860
        %6105 = vmatprep.subr.mxu0 %v863
        %6106 = vmatpush1.msra.mxu0 %v862
        %6107 = vmatprep.subr.mxu0 %v865
        %6108 = vmatpush1.msra.mxu0 %v864
        %6109 = vmatprep.subr.mxu0 %v867
        %6110 = vmatpush1.msra.mxu0 %v866
        %6111 = vmatprep.subr.mxu0 %v869
        %6112 = vmatpush1.msra.mxu0 %v868
        %6113 = vmatprep.subr.mxu0 %v871
        %6114 = vmatpush1.msra.mxu0 %v870
        %6115 = vmatprep.subr.mxu0 %v873
        %6116 = vmatpush1.msra.mxu0 %v872
        %6117 = vmatprep.subr.mxu0 %v875
        %6118 = vmatpush1.msra.mxu0 %v874
        %6119 = vmatprep.subr.mxu0 %v877
        %6120 = vmatpush1.msra.mxu0 %v876
        %6121 = vmatprep.subr.mxu0 %v879
        %6122 = vmatpush1.msra.mxu0 %v878
        %6123 = vmatprep.subr.mxu0 %v881
        %6124 = vmatpush1.msra.mxu0 %v880
        %6125 = vmatprep.subr.mxu0 %v883
        %6126 = vmatpush1.msra.mxu0 %v882
        %6127 = vmatprep.subr.mxu0 %v885
        %6128 = vmatpush1.msra.mxu0 %v884
        %6129 = vmatprep.subr.mxu0 %v887
        %6130 = vmatpush1.msra.mxu0 %v886
        %6131 = vmatprep.subr.mxu0 %v889
        %6132 = vmatpush1.msra.mxu0 %v888
        %6133 = vmatprep.subr.mxu0 %v891
        %6134 = vmatpush1.msra.mxu0 %v890
        %6135 = vmatprep.subr.mxu0 %v893
        %6136 = vmatpush1.msra.mxu0 %v892
        %6137 = vmatprep.subr.mxu0 %v895
        %6138 = vmatpush1.msra.mxu0 %v894
        %6139 = vmatprep.subr.mxu0 %v897
        %6140 = vmatpush1.msra.mxu0 %v896
        %6141 = vmatprep.subr.mxu0 %v899
        %6142 = vmatpush1.msra.mxu0 %v898
        %6143 = vmatprep.mubr.f32.mxu0 %v6078
        %6144 = vmatmul.mubr.f32.gmra.mrb[0].mxu0 %v6077
        %v6145 = vpop.f32.mrb[0].mxu0
        %v6146 = vadd.f32 0.0, %v6145
        %v6147 = vpop.f32.mrb[0].mxu0
        %v6148 = vadd.f32 0.0, %v6147
        %6149 = vdwg.mxu0
        %v6150 = vadd.f32 %v6075, %v6146
        %v6151 = vadd.f32 %v6076, %v6148
        %v6152 = vmul.f32 %v1989, %v4422
        %v6153 = vmul.f32 %v1989, %v4426
        %6154 = vmatprep.subr.mxu0 %v984
        %6155 = vmatpush1.msra.mxu0 %v983
        %6156 = vmatprep.subr.mxu0 %v986
        %6157 = vmatpush1.msra.mxu0 %v985
        %6158 = vmatprep.subr.mxu0 %v988
        %6159 = vmatpush1.msra.mxu0 %v987
        %6160 = vmatprep.subr.mxu0 %v990
        %6161 = vmatpush1.msra.mxu0 %v989
        %6162 = vmatprep.subr.mxu0 %v992
        %6163 = vmatpush1.msra.mxu0 %v991
        %6164 = vmatprep.subr.mxu0 %v994
        %6165 = vmatpush1.msra.mxu0 %v993
        %6166 = vmatprep.subr.mxu0 %v996
        %6167 = vmatpush1.msra.mxu0 %v995
        %6168 = vmatprep.subr.mxu0 %v998
        %6169 = vmatpush1.msra.mxu0 %v997
        %6170 = vmatprep.subr.mxu0 %v1000
        %6171 = vmatpush1.msra.mxu0 %v999
        %6172 = vmatprep.subr.mxu0 %v1002
        %6173 = vmatpush1.msra.mxu0 %v1001
        %6174 = vmatprep.subr.mxu0 %v1004
        %6175 = vmatpush1.msra.mxu0 %v1003
        %6176 = vmatprep.subr.mxu0 %v1006
        %6177 = vmatpush1.msra.mxu0 %v1005
        %6178 = vmatprep.subr.mxu0 %v1008
        %6179 = vmatpush1.msra.mxu0 %v1007
        %6180 = vmatprep.subr.mxu0 %v1010
        %6181 = vmatpush1.msra.mxu0 %v1009
        %6182 = vmatprep.subr.mxu0 %v1012
        %6183 = vmatpush1.msra.mxu0 %v1011
        %6184 = vmatprep.subr.mxu0 %v1014
        %6185 = vmatpush1.msra.mxu0 %v1013
        %6186 = vmatprep.subr.mxu0 %v1016
        %6187 = vmatpush1.msra.mxu0 %v1015
        %6188 = vmatprep.subr.mxu0 %v1018
        %6189 = vmatpush1.msra.mxu0 %v1017
        %6190 = vmatprep.subr.mxu0 %v1020
        %6191 = vmatpush1.msra.mxu0 %v1019
        %6192 = vmatprep.subr.mxu0 %v1022
        %6193 = vmatpush1.msra.mxu0 %v1021
        %6194 = vmatprep.subr.mxu0 %v1024
        %6195 = vmatpush1.msra.mxu0 %v1023
        %6196 = vmatprep.subr.mxu0 %v1026
        %6197 = vmatpush1.msra.mxu0 %v1025
        %6198 = vmatprep.subr.mxu0 %v1028
        %6199 = vmatpush1.msra.mxu0 %v1027
        %6200 = vmatprep.subr.mxu0 %v1030
        %6201 = vmatpush1.msra.mxu0 %v1029
        %6202 = vmatprep.subr.mxu0 %v1032
        %6203 = vmatpush1.msra.mxu0 %v1031
        %6204 = vmatprep.subr.mxu0 %v1034
        %6205 = vmatpush1.msra.mxu0 %v1033
        %6206 = vmatprep.subr.mxu0 %v1036
        %6207 = vmatpush1.msra.mxu0 %v1035
        %6208 = vmatprep.subr.mxu0 %v1038
        %6209 = vmatpush1.msra.mxu0 %v1037
        %6210 = vmatprep.subr.mxu0 %v1040
        %6211 = vmatpush1.msra.mxu0 %v1039
        %6212 = vmatprep.subr.mxu0 %v1042
        %6213 = vmatpush1.msra.mxu0 %v1041
        %6214 = vmatprep.subr.mxu0 %v1044
        %6215 = vmatpush1.msra.mxu0 %v1043
        %6216 = vmatprep.subr.mxu0 %v1046
        %6217 = vmatpush1.msra.mxu0 %v1045
        %6218 = vmatprep.mubr.f32.mxu0 %v6153
        %6219 = vmatmul.mubr.f32.gmra.mrb[0].mxu0 %v6152
        %v6220 = vpop.f32.mrb[0].mxu0
        %v6221 = vadd.f32 0.0, %v6220
        %v6222 = vpop.f32.mrb[0].mxu0
        %v6223 = vadd.f32 0.0, %v6222
        %6224 = vdwg.mxu0
        %v6225 = vadd.f32 %v6150, %v6221
        %v6226 = vadd.f32 %v6151, %v6223
        %v6227 = vmul.f32 %v2071, %v4422
        %v6228 = vmul.f32 %v2071, %v4426
        %6229 = vmatprep.subr.mxu0 %v1131
        %6230 = vmatpush1.msra.mxu0 %v1130
        %6231 = vmatprep.subr.mxu0 %v1133
        %6232 = vmatpush1.msra.mxu0 %v1132
        %6233 = vmatprep.subr.mxu0 %v1135
        %6234 = vmatpush1.msra.mxu0 %v1134
        %6235 = vmatprep.subr.mxu0 %v1137
        %6236 = vmatpush1.msra.mxu0 %v1136
        %6237 = vmatprep.subr.mxu0 %v1139
        %6238 = vmatpush1.msra.mxu0 %v1138
        %6239 = vmatprep.subr.mxu0 %v1141
        %6240 = vmatpush1.msra.mxu0 %v1140
        %6241 = vmatprep.subr.mxu0 %v1143
        %6242 = vmatpush1.msra.mxu0 %v1142
        %6243 = vmatprep.subr.mxu0 %v1145
        %6244 = vmatpush1.msra.mxu0 %v1144
        %6245 = vmatprep.subr.mxu0 %v1147
        %6246 = vmatpush1.msra.mxu0 %v1146
        %6247 = vmatprep.subr.mxu0 %v1149
        %6248 = vmatpush1.msra.mxu0 %v1148
        %6249 = vmatprep.subr.mxu0 %v1151
        %6250 = vmatpush1.msra.mxu0 %v1150
        %6251 = vmatprep.subr.mxu0 %v1153
        %6252 = vmatpush1.msra.mxu0 %v1152
        %6253 = vmatprep.subr.mxu0 %v1155
        %6254 = vmatpush1.msra.mxu0 %v1154
        %6255 = vmatprep.subr.mxu0 %v1157
        %6256 = vmatpush1.msra.mxu0 %v1156
        %6257 = vmatprep.subr.mxu0 %v1159
        %6258 = vmatpush1.msra.mxu0 %v1158
        %6259 = vmatprep.subr.mxu0 %v1161
        %6260 = vmatpush1.msra.mxu0 %v1160
        %6261 = vmatprep.subr.mxu0 %v1163
        %6262 = vmatpush1.msra.mxu0 %v1162
        %6263 = vmatprep.subr.mxu0 %v1165
        %6264 = vmatpush1.msra.mxu0 %v1164
        %6265 = vmatprep.subr.mxu0 %v1167
        %6266 = vmatpush1.msra.mxu0 %v1166
        %6267 = vmatprep.subr.mxu0 %v1169
        %6268 = vmatpush1.msra.mxu0 %v1168
        %6269 = vmatprep.subr.mxu0 %v1171
        %6270 = vmatpush1.msra.mxu0 %v1170
        %6271 = vmatprep.subr.mxu0 %v1173
        %6272 = vmatpush1.msra.mxu0 %v1172
        %6273 = vmatprep.subr.mxu0 %v1175
        %6274 = vmatpush1.msra.mxu0 %v1174
        %6275 = vmatprep.subr.mxu0 %v1177
        %6276 = vmatpush1.msra.mxu0 %v1176
        %6277 = vmatprep.subr.mxu0 %v1179
        %6278 = vmatpush1.msra.mxu0 %v1178
        %6279 = vmatprep.subr.mxu0 %v1181
        %6280 = vmatpush1.msra.mxu0 %v1180
        %6281 = vmatprep.subr.mxu0 %v1183
        %6282 = vmatpush1.msra.mxu0 %v1182
        %6283 = vmatprep.subr.mxu0 %v1185
        %6284 = vmatpush1.msra.mxu0 %v1184
        %6285 = vmatprep.subr.mxu0 %v1187
        %6286 = vmatpush1.msra.mxu0 %v1186
        %6287 = vmatprep.subr.mxu0 %v1189
        %6288 = vmatpush1.msra.mxu0 %v1188
        %6289 = vmatprep.subr.mxu0 %v1191
        %6290 = vmatpush1.msra.mxu0 %v1190
        %6291 = vmatprep.subr.mxu0 %v1193
        %6292 = vmatpush1.msra.mxu0 %v1192
        %6293 = vmatprep.mubr.f32.mxu0 %v6228
        %6294 = vmatmul.mubr.f32.gmra.mrb[0].mxu0 %v6227
        %v6295 = vpop.f32.mrb[0].mxu0
        %v6296 = vadd.f32 0.0, %v6295
        %v6297 = vpop.f32.mrb[0].mxu0
        %v6298 = vadd.f32 0.0, %v6297
        %6299 = vdwg.mxu0
        %v6300 = vadd.f32 %v6225, %v6296
        %v6301 = vadd.f32 %v6226, %v6298
        %v6302 = vmul.f32 %v2153, %v4422
        %v6303 = vmul.f32 %v2153, %v4426
        %6304 = vmatprep.subr.mxu0 %v1278
        %6305 = vmatpush1.msra.mxu0 %v1277
        %6306 = vmatprep.subr.mxu0 %v1280
        %6307 = vmatpush1.msra.mxu0 %v1279
        %6308 = vmatprep.subr.mxu0 %v1282
        %6309 = vmatpush1.msra.mxu0 %v1281
        %6310 = vmatprep.subr.mxu0 %v1284
        %6311 = vmatpush1.msra.mxu0 %v1283
        %6312 = vmatprep.subr.mxu0 %v1286
        %6313 = vmatpush1.msra.mxu0 %v1285
        %6314 = vmatprep.subr.mxu0 %v1288
        %6315 = vmatpush1.msra.mxu0 %v1287
        %6316 = vmatprep.subr.mxu0 %v1290
        %6317 = vmatpush1.msra.mxu0 %v1289
        %6318 = vmatprep.subr.mxu0 %v1292
        %6319 = vmatpush1.msra.mxu0 %v1291
        %6320 = vmatprep.subr.mxu0 %v1294
        %6321 = vmatpush1.msra.mxu0 %v1293
        %6322 = vmatprep.subr.mxu0 %v1296
        %6323 = vmatpush1.msra.mxu0 %v1295
        %6324 = vmatprep.subr.mxu0 %v1298
        %6325 = vmatpush1.msra.mxu0 %v1297
        %6326 = vmatprep.subr.mxu0 %v1300
        %6327 = vmatpush1.msra.mxu0 %v1299
        %6328 = vmatprep.subr.mxu0 %v1302
        %6329 = vmatpush1.msra.mxu0 %v1301
        %6330 = vmatprep.subr.mxu0 %v1304
        %6331 = vmatpush1.msra.mxu0 %v1303
        %6332 = vmatprep.subr.mxu0 %v1306
        %6333 = vmatpush1.msra.mxu0 %v1305
        %6334 = vmatprep.subr.mxu0 %v1308
        %6335 = vmatpush1.msra.mxu0 %v1307
        %6336 = vmatprep.subr.mxu0 %v1310
        %6337 = vmatpush1.msra.mxu0 %v1309
        %6338 = vmatprep.subr.mxu0 %v1312
        %6339 = vmatpush1.msra.mxu0 %v1311
        %6340 = vmatprep.subr.mxu0 %v1314
        %6341 = vmatpush1.msra.mxu0 %v1313
        %6342 = vmatprep.subr.mxu0 %v1316
        %6343 = vmatpush1.msra.mxu0 %v1315
        %6344 = vmatprep.subr.mxu0 %v1318
        %6345 = vmatpush1.msra.mxu0 %v1317
        %6346 = vmatprep.subr.mxu0 %v1320
        %6347 = vmatpush1.msra.mxu0 %v1319
        %6348 = vmatprep.subr.mxu0 %v1322
        %6349 = vmatpush1.msra.mxu0 %v1321
        %6350 = vmatprep.subr.mxu0 %v1324
        %6351 = vmatpush1.msra.mxu0 %v1323
        %6352 = vmatprep.subr.mxu0 %v1326
        %6353 = vmatpush1.msra.mxu0 %v1325
        %6354 = vmatprep.subr.mxu0 %v1328
        %6355 = vmatpush1.msra.mxu0 %v1327
        %6356 = vmatprep.subr.mxu0 %v1330
        %6357 = vmatpush1.msra.mxu0 %v1329
        %6358 = vmatprep.subr.mxu0 %v1332
        %6359 = vmatpush1.msra.mxu0 %v1331
        %6360 = vmatprep.subr.mxu0 %v1334
        %6361 = vmatpush1.msra.mxu0 %v1333
        %6362 = vmatprep.subr.mxu0 %v1336
        %6363 = vmatpush1.msra.mxu0 %v1335
        %6364 = vmatprep.subr.mxu0 %v1338
        %6365 = vmatpush1.msra.mxu0 %v1337
        %6366 = vmatprep.subr.mxu0 %v1340
        %6367 = vmatpush1.msra.mxu0 %v1339
        %6368 = vmatprep.mubr.f32.mxu0 %v6303
        %6369 = vmatmul.mubr.f32.gmra.mrb[0].mxu0 %v6302
        %v6370 = vpop.f32.mrb[0].mxu0
        %v6371 = vadd.f32 0.0, %v6370
        %v6372 = vpop.f32.mrb[0].mxu0
        %v6373 = vadd.f32 0.0, %v6372
        %6374 = vdwg.mxu0
        %v6375 = vadd.f32 %v6300, %v6371
        %v6376 = vadd.f32 %v6301, %v6373
        %v6377 = vmul.f32 %v2235, %v4422
        %v6378 = vmul.f32 %v2235, %v4426
        %6379 = vmatprep.subr.mxu0 %v1425
        %6380 = vmatpush1.msra.mxu0 %v1424
        %6381 = vmatprep.subr.mxu0 %v1427
        %6382 = vmatpush1.msra.mxu0 %v1426
        %6383 = vmatprep.subr.mxu0 %v1429
        %6384 = vmatpush1.msra.mxu0 %v1428
        %6385 = vmatprep.subr.mxu0 %v1431
        %6386 = vmatpush1.msra.mxu0 %v1430
        %6387 = vmatprep.subr.mxu0 %v1433
        %6388 = vmatpush1.msra.mxu0 %v1432
        %6389 = vmatprep.subr.mxu0 %v1435
        %6390 = vmatpush1.msra.mxu0 %v1434
        %6391 = vmatprep.subr.mxu0 %v1437
        %6392 = vmatpush1.msra.mxu0 %v1436
        %6393 = vmatprep.subr.mxu0 %v1439
        %6394 = vmatpush1.msra.mxu0 %v1438
        %6395 = vmatprep.subr.mxu0 %v1441
        %6396 = vmatpush1.msra.mxu0 %v1440
        %6397 = vmatprep.subr.mxu0 %v1443
        %6398 = vmatpush1.msra.mxu0 %v1442
        %6399 = vmatprep.subr.mxu0 %v1445
        %6400 = vmatpush1.msra.mxu0 %v1444
        %6401 = vmatprep.subr.mxu0 %v1447
        %6402 = vmatpush1.msra.mxu0 %v1446
        %6403 = vmatprep.subr.mxu0 %v1449
        %6404 = vmatpush1.msra.mxu0 %v1448
        %6405 = vmatprep.subr.mxu0 %v1451
        %6406 = vmatpush1.msra.mxu0 %v1450
        %6407 = vmatprep.subr.mxu0 %v1453
        %6408 = vmatpush1.msra.mxu0 %v1452
        %6409 = vmatprep.subr.mxu0 %v1455
        %6410 = vmatpush1.msra.mxu0 %v1454
        %6411 = vmatprep.subr.mxu0 %v1457
        %6412 = vmatpush1.msra.mxu0 %v1456
        %6413 = vmatprep.subr.mxu0 %v1459
        %6414 = vmatpush1.msra.mxu0 %v1458
        %6415 = vmatprep.subr.mxu0 %v1461
        %6416 = vmatpush1.msra.mxu0 %v1460
        %6417 = vmatprep.subr.mxu0 %v1463
        %6418 = vmatpush1.msra.mxu0 %v1462
        %6419 = vmatprep.subr.mxu0 %v1465
        %6420 = vmatpush1.msra.mxu0 %v1464
        %6421 = vmatprep.subr.mxu0 %v1467
        %6422 = vmatpush1.msra.mxu0 %v1466
        %6423 = vmatprep.subr.mxu0 %v1469
        %6424 = vmatpush1.msra.mxu0 %v1468
        %6425 = vmatprep.subr.mxu0 %v1471
        %6426 = vmatpush1.msra.mxu0 %v1470
        %6427 = vmatprep.subr.mxu0 %v1473
        %6428 = vmatpush1.msra.mxu0 %v1472
        %6429 = vmatprep.subr.mxu0 %v1475
        %6430 = vmatpush1.msra.mxu0 %v1474
        %6431 = vmatprep.subr.mxu0 %v1477
        %6432 = vmatpush1.msra.mxu0 %v1476
        %6433 = vmatprep.subr.mxu0 %v1479
        %6434 = vmatpush1.msra.mxu0 %v1478
        %6435 = vmatprep.subr.mxu0 %v1481
        %6436 = vmatpush1.msra.mxu0 %v1480
        %6437 = vmatprep.subr.mxu0 %v1483
        %6438 = vmatpush1.msra.mxu0 %v1482
        %6439 = vmatprep.subr.mxu0 %v1485
        %6440 = vmatpush1.msra.mxu0 %v1484
        %6441 = vmatprep.subr.mxu0 %v1487
        %6442 = vmatpush1.msra.mxu0 %v1486
        %6443 = vmatprep.mubr.f32.mxu0 %v6378
        %6444 = vmatmul.mubr.f32.gmra.mrb[0].mxu0 %v6377
        %v6445 = vpop.f32.mrb[0].mxu0
        %v6446 = vadd.f32 0.0, %v6445
        %v6447 = vpop.f32.mrb[0].mxu0
        %v6448 = vadd.f32 0.0, %v6447
        %6449 = vdwg.mxu0
        %v6450 = vadd.f32 %v6375, %v6446
        %v6451 = vadd.f32 %v6376, %v6448
        %s6452 = scalar_lea.vmem %s202, 8 [#allocation2]
        %v6453 = vld [vmem:[%s6452] sm:$0x3]
        %v6455 = vlaneseq
        %v6456 = vshrl.u32 %v6455, 7
        %v6457 = vsub.s32 0, %v6456
        %v6458 = vrot.slane %v6453, %v6457
        %v6459 = vlaneseq
        %v6460 = vshrl.u32 %v6459, 7
        %v6461 = vsub.s32 1, %v6460
        %v6462 = vrot.slane %v6453, %v6461
        %v6465 = vmul.f32 %v2319, %v6458
        %v6466 = vmul.f32 %v2319, %v6462
        %6467 = vmatprep.subr.mxu0 %v253
        %6468 = vmatpush1.msra.mxu0 %v252
        %6469 = vmatprep.subr.mxu0 %v255
        %6470 = vmatpush1.msra.mxu0 %v254
        %6471 = vmatprep.subr.mxu0 %v257
        %6472 = vmatpush1.msra.mxu0 %v256
        %6473 = vmatprep.subr.mxu0 %v259
        %6474 = vmatpush1.msra.mxu0 %v258
        %6475 = vmatprep.subr.mxu0 %v261
        %6476 = vmatpush1.msra.mxu0 %v260
        %6477 = vmatprep.subr.mxu0 %v263
        %6478 = vmatpush1.msra.mxu0 %v262
        %6479 = vmatprep.subr.mxu0 %v265
        %6480 = vmatpush1.msra.mxu0 %v264
        %6481 = vmatprep.subr.mxu0 %v267
        %6482 = vmatpush1.msra.mxu0 %v266
        %6483 = vmatprep.subr.mxu0 %v269
        %6484 = vmatpush1.msra.mxu0 %v268
        %6485 = vmatprep.subr.mxu0 %v271
        %6486 = vmatpush1.msra.mxu0 %v270
        %6487 = vmatprep.subr.mxu0 %v273
        %6488 = vmatpush1.msra.mxu0 %v272
        %6489 = vmatprep.subr.mxu0 %v275
        %6490 = vmatpush1.msra.mxu0 %v274
        %6491 = vmatprep.subr.mxu0 %v277
        %6492 = vmatpush1.msra.mxu0 %v276
        %6493 = vmatprep.subr.mxu0 %v279
        %6494 = vmatpush1.msra.mxu0 %v278
        %6495 = vmatprep.subr.mxu0 %v281
        %6496 = vmatpush1.msra.mxu0 %v280
        %6497 = vmatprep.subr.mxu0 %v283
        %6498 = vmatpush1.msra.mxu0 %v282
        %6499 = vmatprep.subr.mxu0 %v285
        %6500 = vmatpush1.msra.mxu0 %v284
        %6501 = vmatprep.subr.mxu0 %v287
        %6502 = vmatpush1.msra.mxu0 %v286
        %6503 = vmatprep.subr.mxu0 %v289
        %6504 = vmatpush1.msra.mxu0 %v288
        %6505 = vmatprep.subr.mxu0 %v291
        %6506 = vmatpush1.msra.mxu0 %v290
        %6507 = vmatprep.subr.mxu0 %v293
        %6508 = vmatpush1.msra.mxu0 %v292
        %6509 = vmatprep.subr.mxu0 %v295
        %6510 = vmatpush1.msra.mxu0 %v294
        %6511 = vmatprep.subr.mxu0 %v297
        %6512 = vmatpush1.msra.mxu0 %v296
        %6513 = vmatprep.subr.mxu0 %v299
        %6514 = vmatpush1.msra.mxu0 %v298
        %6515 = vmatprep.subr.mxu0 %v301
        %6516 = vmatpush1.msra.mxu0 %v300
        %6517 = vmatprep.subr.mxu0 %v303
        %6518 = vmatpush1.msra.mxu0 %v302
        %6519 = vmatprep.subr.mxu0 %v305
        %6520 = vmatpush1.msra.mxu0 %v304
        %6521 = vmatprep.subr.mxu0 %v307
        %6522 = vmatpush1.msra.mxu0 %v306
        %6523 = vmatprep.subr.mxu0 %v309
        %6524 = vmatpush1.msra.mxu0 %v308
        %6525 = vmatprep.subr.mxu0 %v311
        %6526 = vmatpush1.msra.mxu0 %v310
        %6527 = vmatprep.subr.mxu0 %v313
        %6528 = vmatpush1.msra.mxu0 %v312
        %6529 = vmatprep.subr.mxu0 %v315
        %6530 = vmatpush1.msra.mxu0 %v314
        %6531 = vmatprep.mubr.f32.mxu0 %v6466
        %6532 = vmatmul.mubr.f32.gmra.mrb[0].mxu0 %v6465
        %v6533 = vpop.f32.mrb[0].mxu0
        %v6534 = vadd.f32 0.0, %v6533
        %v6535 = vpop.f32.mrb[0].mxu0
        %v6536 = vadd.f32 0.0, %v6535
        %6537 = vdwg.mxu0
        %v6538 = vadd.f32 %v6450, %v6534
        %v6539 = vadd.f32 %v6451, %v6536
        %v6540 = vmul.f32 %v2412, %v6458
        %v6541 = vmul.f32 %v2412, %v6462
        %6542 = vmatprep.subr.mxu0 %v327
        %6543 = vmatpush1.msra.mxu0 %v326
        %6544 = vmatprep.subr.mxu0 %v329
        %6545 = vmatpush1.msra.mxu0 %v328
        %6546 = vmatprep.subr.mxu0 %v331
        %6547 = vmatpush1.msra.mxu0 %v330
        %6548 = vmatprep.subr.mxu0 %v333
        %6549 = vmatpush1.msra.mxu0 %v332
        %6550 = vmatprep.subr.mxu0 %v335
        %6551 = vmatpush1.msra.mxu0 %v334
        %6552 = vmatprep.subr.mxu0 %v337
        %6553 = vmatpush1.msra.mxu0 %v336
        %6554 = vmatprep.subr.mxu0 %v339
        %6555 = vmatpush1.msra.mxu0 %v338
        %6556 = vmatprep.subr.mxu0 %v341
        %6557 = vmatpush1.msra.mxu0 %v340
        %6558 = vmatprep.subr.mxu0 %v343
        %6559 = vmatpush1.msra.mxu0 %v342
        %6560 = vmatprep.subr.mxu0 %v345
        %6561 = vmatpush1.msra.mxu0 %v344
        %6562 = vmatprep.subr.mxu0 %v347
        %6563 = vmatpush1.msra.mxu0 %v346
        %6564 = vmatprep.subr.mxu0 %v349
        %6565 = vmatpush1.msra.mxu0 %v348
        %6566 = vmatprep.subr.mxu0 %v351
        %6567 = vmatpush1.msra.mxu0 %v350
        %6568 = vmatprep.subr.mxu0 %v353
        %6569 = vmatpush1.msra.mxu0 %v352
        %6570 = vmatprep.subr.mxu0 %v355
        %6571 = vmatpush1.msra.mxu0 %v354
        %6572 = vmatprep.subr.mxu0 %v357
        %6573 = vmatpush1.msra.mxu0 %v356
        %6574 = vmatprep.subr.mxu0 %v359
        %6575 = vmatpush1.msra.mxu0 %v358
        %6576 = vmatprep.subr.mxu0 %v361
        %6577 = vmatpush1.msra.mxu0 %v360
        %6578 = vmatprep.subr.mxu0 %v363
        %6579 = vmatpush1.msra.mxu0 %v362
        %6580 = vmatprep.subr.mxu0 %v365
        %6581 = vmatpush1.msra.mxu0 %v364
        %6582 = vmatprep.subr.mxu0 %v367
        %6583 = vmatpush1.msra.mxu0 %v366
        %6584 = vmatprep.subr.mxu0 %v369
        %6585 = vmatpush1.msra.mxu0 %v368
        %6586 = vmatprep.subr.mxu0 %v371
        %6587 = vmatpush1.msra.mxu0 %v370
        %6588 = vmatprep.subr.mxu0 %v373
        %6589 = vmatpush1.msra.mxu0 %v372
        %6590 = vmatprep.subr.mxu0 %v375
        %6591 = vmatpush1.msra.mxu0 %v374
        %6592 = vmatprep.subr.mxu0 %v377
        %6593 = vmatpush1.msra.mxu0 %v376
        %6594 = vmatprep.subr.mxu0 %v379
        %6595 = vmatpush1.msra.mxu0 %v378
        %6596 = vmatprep.subr.mxu0 %v381
        %6597 = vmatpush1.msra.mxu0 %v380
        %6598 = vmatprep.subr.mxu0 %v383
        %6599 = vmatpush1.msra.mxu0 %v382
        %6600 = vmatprep.subr.mxu0 %v385
        %6601 = vmatpush1.msra.mxu0 %v384
        %6602 = vmatprep.subr.mxu0 %v387
        %6603 = vmatpush1.msra.mxu0 %v386
        %6604 = vmatprep.subr.mxu0 %v389
        %6605 = vmatpush1.msra.mxu0 %v388
        %6606 = vmatprep.mubr.f32.mxu0 %v6541
        %6607 = vmatmul.mubr.f32.gmra.mrb[0].mxu0 %v6540
        %v6608 = vpop.f32.mrb[0].mxu0
        %v6609 = vadd.f32 0.0, %v6608
        %v6610 = vpop.f32.mrb[0].mxu0
        %v6611 = vadd.f32 0.0, %v6610
        %6612 = vdwg.mxu0
        %v6613 = vadd.f32 %v6538, %v6609
        %v6614 = vadd.f32 %v6539, %v6611
        %v6615 = vmul.f32 %v2494, %v6458
        %v6616 = vmul.f32 %v2494, %v6462
        %6617 = vmatprep.subr.mxu0 %v543
        %6618 = vmatpush1.msra.mxu0 %v542
        %6619 = vmatprep.subr.mxu0 %v545
        %6620 = vmatpush1.msra.mxu0 %v544
        %6621 = vmatprep.subr.mxu0 %v547
        %6622 = vmatpush1.msra.mxu0 %v546
        %6623 = vmatprep.subr.mxu0 %v549
        %6624 = vmatpush1.msra.mxu0 %v548
        %6625 = vmatprep.subr.mxu0 %v551
        %6626 = vmatpush1.msra.mxu0 %v550
        %6627 = vmatprep.subr.mxu0 %v553
        %6628 = vmatpush1.msra.mxu0 %v552
        %6629 = vmatprep.subr.mxu0 %v555
        %6630 = vmatpush1.msra.mxu0 %v554
        %6631 = vmatprep.subr.mxu0 %v557
        %6632 = vmatpush1.msra.mxu0 %v556
        %6633 = vmatprep.subr.mxu0 %v559
        %6634 = vmatpush1.msra.mxu0 %v558
        %6635 = vmatprep.subr.mxu0 %v561
        %6636 = vmatpush1.msra.mxu0 %v560
        %6637 = vmatprep.subr.mxu0 %v563
        %6638 = vmatpush1.msra.mxu0 %v562
        %6639 = vmatprep.subr.mxu0 %v565
        %6640 = vmatpush1.msra.mxu0 %v564
        %6641 = vmatprep.subr.mxu0 %v567
        %6642 = vmatpush1.msra.mxu0 %v566
        %6643 = vmatprep.subr.mxu0 %v569
        %6644 = vmatpush1.msra.mxu0 %v568
        %6645 = vmatprep.subr.mxu0 %v571
        %6646 = vmatpush1.msra.mxu0 %v570
        %6647 = vmatprep.subr.mxu0 %v573
        %6648 = vmatpush1.msra.mxu0 %v572
        %6649 = vmatprep.subr.mxu0 %v575
        %6650 = vmatpush1.msra.mxu0 %v574
        %6651 = vmatprep.subr.mxu0 %v577
        %6652 = vmatpush1.msra.mxu0 %v576
        %6653 = vmatprep.subr.mxu0 %v579
        %6654 = vmatpush1.msra.mxu0 %v578
        %6655 = vmatprep.subr.mxu0 %v581
        %6656 = vmatpush1.msra.mxu0 %v580
        %6657 = vmatprep.subr.mxu0 %v583
        %6658 = vmatpush1.msra.mxu0 %v582
        %6659 = vmatprep.subr.mxu0 %v585
        %6660 = vmatpush1.msra.mxu0 %v584
        %6661 = vmatprep.subr.mxu0 %v587
        %6662 = vmatpush1.msra.mxu0 %v586
        %6663 = vmatprep.subr.mxu0 %v589
        %6664 = vmatpush1.msra.mxu0 %v588
        %6665 = vmatprep.subr.mxu0 %v591
        %6666 = vmatpush1.msra.mxu0 %v590
        %6667 = vmatprep.subr.mxu0 %v593
        %6668 = vmatpush1.msra.mxu0 %v592
        %6669 = vmatprep.subr.mxu0 %v595
        %6670 = vmatpush1.msra.mxu0 %v594
        %6671 = vmatprep.subr.mxu0 %v597
        %6672 = vmatpush1.msra.mxu0 %v596
        %6673 = vmatprep.subr.mxu0 %v599
        %6674 = vmatpush1.msra.mxu0 %v598
        %6675 = vmatprep.subr.mxu0 %v601
        %6676 = vmatpush1.msra.mxu0 %v600
        %6677 = vmatprep.subr.mxu0 %v603
        %6678 = vmatpush1.msra.mxu0 %v602
        %6679 = vmatprep.subr.mxu0 %v605
        %6680 = vmatpush1.msra.mxu0 %v604
        %6681 = vmatprep.mubr.f32.mxu0 %v6616
        %6682 = vmatmul.mubr.f32.gmra.mrb[0].mxu0 %v6615
        %v6683 = vpop.f32.mrb[0].mxu0
        %v6684 = vadd.f32 0.0, %v6683
        %v6685 = vpop.f32.mrb[0].mxu0
        %v6686 = vadd.f32 0.0, %v6685
        %6687 = vdwg.mxu0
        %v6688 = vadd.f32 %v6613, %v6684
        %v6689 = vadd.f32 %v6614, %v6686
        %v6690 = vmul.f32 %v2576, %v6458
        %v6691 = vmul.f32 %v2576, %v6462
        %6692 = vmatprep.subr.mxu0 %v690
        %6693 = vmatpush1.msra.mxu0 %v689
        %6694 = vmatprep.subr.mxu0 %v692
        %6695 = vmatpush1.msra.mxu0 %v691
        %6696 = vmatprep.subr.mxu0 %v694
        %6697 = vmatpush1.msra.mxu0 %v693
        %6698 = vmatprep.subr.mxu0 %v696
        %6699 = vmatpush1.msra.mxu0 %v695
        %6700 = vmatprep.subr.mxu0 %v698
        %6701 = vmatpush1.msra.mxu0 %v697
        %6702 = vmatprep.subr.mxu0 %v700
        %6703 = vmatpush1.msra.mxu0 %v699
        %6704 = vmatprep.subr.mxu0 %v702
        %6705 = vmatpush1.msra.mxu0 %v701
        %6706 = vmatprep.subr.mxu0 %v704
        %6707 = vmatpush1.msra.mxu0 %v703
        %6708 = vmatprep.subr.mxu0 %v706
        %6709 = vmatpush1.msra.mxu0 %v705
        %6710 = vmatprep.subr.mxu0 %v708
        %6711 = vmatpush1.msra.mxu0 %v707
        %6712 = vmatprep.subr.mxu0 %v710
        %6713 = vmatpush1.msra.mxu0 %v709
        %6714 = vmatprep.subr.mxu0 %v712
        %6715 = vmatpush1.msra.mxu0 %v711
        %6716 = vmatprep.subr.mxu0 %v714
        %6717 = vmatpush1.msra.mxu0 %v713
        %6718 = vmatprep.subr.mxu0 %v716
        %6719 = vmatpush1.msra.mxu0 %v715
        %6720 = vmatprep.subr.mxu0 %v718
        %6721 = vmatpush1.msra.mxu0 %v717
        %6722 = vmatprep.subr.mxu0 %v720
        %6723 = vmatpush1.msra.mxu0 %v719
        %6724 = vmatprep.subr.mxu0 %v722
        %6725 = vmatpush1.msra.mxu0 %v721
        %6726 = vmatprep.subr.mxu0 %v724
        %6727 = vmatpush1.msra.mxu0 %v723
        %6728 = vmatprep.subr.mxu0 %v726
        %6729 = vmatpush1.msra.mxu0 %v725
        %6730 = vmatprep.subr.mxu0 %v728
        %6731 = vmatpush1.msra.mxu0 %v727
        %6732 = vmatprep.subr.mxu0 %v730
        %6733 = vmatpush1.msra.mxu0 %v729
        %6734 = vmatprep.subr.mxu0 %v732
        %6735 = vmatpush1.msra.mxu0 %v731
        %6736 = vmatprep.subr.mxu0 %v734
        %6737 = vmatpush1.msra.mxu0 %v733
        %6738 = vmatprep.subr.mxu0 %v736
        %6739 = vmatpush1.msra.mxu0 %v735
        %6740 = vmatprep.subr.mxu0 %v738
        %6741 = vmatpush1.msra.mxu0 %v737
        %6742 = vmatprep.subr.mxu0 %v740
        %6743 = vmatpush1.msra.mxu0 %v739
        %6744 = vmatprep.subr.mxu0 %v742
        %6745 = vmatpush1.msra.mxu0 %v741
        %6746 = vmatprep.subr.mxu0 %v744
        %6747 = vmatpush1.msra.mxu0 %v743
        %6748 = vmatprep.subr.mxu0 %v746
        %6749 = vmatpush1.msra.mxu0 %v745
        %6750 = vmatprep.subr.mxu0 %v748
        %6751 = vmatpush1.msra.mxu0 %v747
        %6752 = vmatprep.subr.mxu0 %v750
        %6753 = vmatpush1.msra.mxu0 %v749
        %6754 = vmatprep.subr.mxu0 %v752
        %6755 = vmatpush1.msra.mxu0 %v751
        %6756 = vmatprep.mubr.f32.mxu0 %v6691
        %6757 = vmatmul.mubr.f32.gmra.mrb[0].mxu0 %v6690
        %v6758 = vpop.f32.mrb[0].mxu0
        %v6759 = vadd.f32 0.0, %v6758
        %v6760 = vpop.f32.mrb[0].mxu0
        %v6761 = vadd.f32 0.0, %v6760
        %6762 = vdwg.mxu0
        %v6763 = vadd.f32 %v6688, %v6759
        %v6764 = vadd.f32 %v6689, %v6761
        %v6765 = vmul.f32 %v2658, %v6458
        %v6766 = vmul.f32 %v2658, %v6462
        %6767 = vmatprep.subr.mxu0 %v837
        %6768 = vmatpush1.msra.mxu0 %v836
        %6769 = vmatprep.subr.mxu0 %v839
        %6770 = vmatpush1.msra.mxu0 %v838
        %6771 = vmatprep.subr.mxu0 %v841
        %6772 = vmatpush1.msra.mxu0 %v840
        %6773 = vmatprep.subr.mxu0 %v843
        %6774 = vmatpush1.msra.mxu0 %v842
        %6775 = vmatprep.subr.mxu0 %v845
        %6776 = vmatpush1.msra.mxu0 %v844
        %6777 = vmatprep.subr.mxu0 %v847
        %6778 = vmatpush1.msra.mxu0 %v846
        %6779 = vmatprep.subr.mxu0 %v849
        %6780 = vmatpush1.msra.mxu0 %v848
        %6781 = vmatprep.subr.mxu0 %v851
        %6782 = vmatpush1.msra.mxu0 %v850
        %6783 = vmatprep.subr.mxu0 %v853
        %6784 = vmatpush1.msra.mxu0 %v852
        %6785 = vmatprep.subr.mxu0 %v855
        %6786 = vmatpush1.msra.mxu0 %v854
        %6787 = vmatprep.subr.mxu0 %v857
        %6788 = vmatpush1.msra.mxu0 %v856
        %6789 = vmatprep.subr.mxu0 %v859
        %6790 = vmatpush1.msra.mxu0 %v858
        %6791 = vmatprep.subr.mxu0 %v861
        %6792 = vmatpush1.msra.mxu0 %v860
        %6793 = vmatprep.subr.mxu0 %v863
        %6794 = vmatpush1.msra.mxu0 %v862
        %6795 = vmatprep.subr.mxu0 %v865
        %6796 = vmatpush1.msra.mxu0 %v864
        %6797 = vmatprep.subr.mxu0 %v867
        %6798 = vmatpush1.msra.mxu0 %v866
        %6799 = vmatprep.subr.mxu0 %v869
        %6800 = vmatpush1.msra.mxu0 %v868
        %6801 = vmatprep.subr.mxu0 %v871
        %6802 = vmatpush1.msra.mxu0 %v870
        %6803 = vmatprep.subr.mxu0 %v873
        %6804 = vmatpush1.msra.mxu0 %v872
        %6805 = vmatprep.subr.mxu0 %v875
        %6806 = vmatpush1.msra.mxu0 %v874
        %6807 = vmatprep.subr.mxu0 %v877
        %6808 = vmatpush1.msra.mxu0 %v876
        %6809 = vmatprep.subr.mxu0 %v879
        %6810 = vmatpush1.msra.mxu0 %v878
        %6811 = vmatprep.subr.mxu0 %v881
        %6812 = vmatpush1.msra.mxu0 %v880
        %6813 = vmatprep.subr.mxu0 %v883
        %6814 = vmatpush1.msra.mxu0 %v882
        %6815 = vmatprep.subr.mxu0 %v885
        %6816 = vmatpush1.msra.mxu0 %v884
        %6817 = vmatprep.subr.mxu0 %v887
        %6818 = vmatpush1.msra.mxu0 %v886
        %6819 = vmatprep.subr.mxu0 %v889
        %6820 = vmatpush1.msra.mxu0 %v888
        %6821 = vmatprep.subr.mxu0 %v891
        %6822 = vmatpush1.msra.mxu0 %v890
        %6823 = vmatprep.subr.mxu0 %v893
        %6824 = vmatpush1.msra.mxu0 %v892
        %6825 = vmatprep.subr.mxu0 %v895
        %6826 = vmatpush1.msra.mxu0 %v894
        %6827 = vmatprep.subr.mxu0 %v897
        %6828 = vmatpush1.msra.mxu0 %v896
        %6829 = vmatprep.subr.mxu0 %v899
        %6830 = vmatpush1.msra.mxu0 %v898
        %6831 = vmatprep.mubr.f32.mxu0 %v6766
        %6832 = vmatmul.mubr.f32.gmra.mrb[0].mxu0 %v6765
        %v6833 = vpop.f32.mrb[0].mxu0
        %v6834 = vadd.f32 0.0, %v6833
        %v6835 = vpop.f32.mrb[0].mxu0
        %v6836 = vadd.f32 0.0, %v6835
        %6837 = vdwg.mxu0
        %v6838 = vadd.f32 %v6763, %v6834
        %v6839 = vadd.f32 %v6764, %v6836
        %v6840 = vmul.f32 %v2740, %v6458
        %v6841 = vmul.f32 %v2740, %v6462
        %6842 = vmatprep.subr.mxu0 %v984
        %6843 = vmatpush1.msra.mxu0 %v983
        %6844 = vmatprep.subr.mxu0 %v986
        %6845 = vmatpush1.msra.mxu0 %v985
        %6846 = vmatprep.subr.mxu0 %v988
        %6847 = vmatpush1.msra.mxu0 %v987
        %6848 = vmatprep.subr.mxu0 %v990
        %6849 = vmatpush1.msra.mxu0 %v989
        %6850 = vmatprep.subr.mxu0 %v992
        %6851 = vmatpush1.msra.mxu0 %v991
        %6852 = vmatprep.subr.mxu0 %v994
        %6853 = vmatpush1.msra.mxu0 %v993
        %6854 = vmatprep.subr.mxu0 %v996
        %6855 = vmatpush1.msra.mxu0 %v995
        %6856 = vmatprep.subr.mxu0 %v998
        %6857 = vmatpush1.msra.mxu0 %v997
        %6858 = vmatprep.subr.mxu0 %v1000
        %6859 = vmatpush1.msra.mxu0 %v999
        %6860 = vmatprep.subr.mxu0 %v1002
        %6861 = vmatpush1.msra.mxu0 %v1001
        %6862 = vmatprep.subr.mxu0 %v1004
        %6863 = vmatpush1.msra.mxu0 %v1003
        %6864 = vmatprep.subr.mxu0 %v1006
        %6865 = vmatpush1.msra.mxu0 %v1005
        %6866 = vmatprep.subr.mxu0 %v1008
        %6867 = vmatpush1.msra.mxu0 %v1007
        %6868 = vmatprep.subr.mxu0 %v1010
        %6869 = vmatpush1.msra.mxu0 %v1009
        %6870 = vmatprep.subr.mxu0 %v1012
        %6871 = vmatpush1.msra.mxu0 %v1011
        %6872 = vmatprep.subr.mxu0 %v1014
        %6873 = vmatpush1.msra.mxu0 %v1013
        %6874 = vmatprep.subr.mxu0 %v1016
        %6875 = vmatpush1.msra.mxu0 %v1015
        %6876 = vmatprep.subr.mxu0 %v1018
        %6877 = vmatpush1.msra.mxu0 %v1017
        %6878 = vmatprep.subr.mxu0 %v1020
        %6879 = vmatpush1.msra.mxu0 %v1019
        %6880 = vmatprep.subr.mxu0 %v1022
        %6881 = vmatpush1.msra.mxu0 %v1021
        %6882 = vmatprep.subr.mxu0 %v1024
        %6883 = vmatpush1.msra.mxu0 %v1023
        %6884 = vmatprep.subr.mxu0 %v1026
        %6885 = vmatpush1.msra.mxu0 %v1025
        %6886 = vmatprep.subr.mxu0 %v1028
        %6887 = vmatpush1.msra.mxu0 %v1027
        %6888 = vmatprep.subr.mxu0 %v1030
        %6889 = vmatpush1.msra.mxu0 %v1029
        %6890 = vmatprep.subr.mxu0 %v1032
        %6891 = vmatpush1.msra.mxu0 %v1031
        %6892 = vmatprep.subr.mxu0 %v1034
        %6893 = vmatpush1.msra.mxu0 %v1033
        %6894 = vmatprep.subr.mxu0 %v1036
        %6895 = vmatpush1.msra.mxu0 %v1035
        %6896 = vmatprep.subr.mxu0 %v1038
        %6897 = vmatpush1.msra.mxu0 %v1037
        %6898 = vmatprep.subr.mxu0 %v1040
        %6899 = vmatpush1.msra.mxu0 %v1039
        %6900 = vmatprep.subr.mxu0 %v1042
        %6901 = vmatpush1.msra.mxu0 %v1041
        %6902 = vmatprep.subr.mxu0 %v1044
        %6903 = vmatpush1.msra.mxu0 %v1043
        %6904 = vmatprep.subr.mxu0 %v1046
        %6905 = vmatpush1.msra.mxu0 %v1045
        %6906 = vmatprep.mubr.f32.mxu0 %v6841
        %6907 = vmatmul.mubr.f32.gmra.mrb[0].mxu0 %v6840
        %v6908 = vpop.f32.mrb[0].mxu0
        %v6909 = vadd.f32 0.0, %v6908
        %v6910 = vpop.f32.mrb[0].mxu0
        %v6911 = vadd.f32 0.0, %v6910
        %6912 = vdwg.mxu0
        %v6913 = vadd.f32 %v6838, %v6909
        %v6914 = vadd.f32 %v6839, %v6911
        %v6915 = vmul.f32 %v2822, %v6458
        %v6916 = vmul.f32 %v2822, %v6462
        %6917 = vmatprep.subr.mxu0 %v1131
        %6918 = vmatpush1.msra.mxu0 %v1130
        %6919 = vmatprep.subr.mxu0 %v1133
        %6920 = vmatpush1.msra.mxu0 %v1132
        %6921 = vmatprep.subr.mxu0 %v1135
        %6922 = vmatpush1.msra.mxu0 %v1134
        %6923 = vmatprep.subr.mxu0 %v1137
        %6924 = vmatpush1.msra.mxu0 %v1136
        %6925 = vmatprep.subr.mxu0 %v1139
        %6926 = vmatpush1.msra.mxu0 %v1138
        %6927 = vmatprep.subr.mxu0 %v1141
        %6928 = vmatpush1.msra.mxu0 %v1140
        %6929 = vmatprep.subr.mxu0 %v1143
        %6930 = vmatpush1.msra.mxu0 %v1142
        %6931 = vmatprep.subr.mxu0 %v1145
        %6932 = vmatpush1.msra.mxu0 %v1144
        %6933 = vmatprep.subr.mxu0 %v1147
        %6934 = vmatpush1.msra.mxu0 %v1146
        %6935 = vmatprep.subr.mxu0 %v1149
        %6936 = vmatpush1.msra.mxu0 %v1148
        %6937 = vmatprep.subr.mxu0 %v1151
        %6938 = vmatpush1.msra.mxu0 %v1150
        %6939 = vmatprep.subr.mxu0 %v1153
        %6940 = vmatpush1.msra.mxu0 %v1152
        %6941 = vmatprep.subr.mxu0 %v1155
        %6942 = vmatpush1.msra.mxu0 %v1154
        %6943 = vmatprep.subr.mxu0 %v1157
        %6944 = vmatpush1.msra.mxu0 %v1156
        %6945 = vmatprep.subr.mxu0 %v1159
        %6946 = vmatpush1.msra.mxu0 %v1158
        %6947 = vmatprep.subr.mxu0 %v1161
        %6948 = vmatpush1.msra.mxu0 %v1160
        %6949 = vmatprep.subr.mxu0 %v1163
        %6950 = vmatpush1.msra.mxu0 %v1162
        %6951 = vmatprep.subr.mxu0 %v1165
        %6952 = vmatpush1.msra.mxu0 %v1164
        %6953 = vmatprep.subr.mxu0 %v1167
        %6954 = vmatpush1.msra.mxu0 %v1166
        %6955 = vmatprep.subr.mxu0 %v1169
        %6956 = vmatpush1.msra.mxu0 %v1168
        %6957 = vmatprep.subr.mxu0 %v1171
        %6958 = vmatpush1.msra.mxu0 %v1170
        %6959 = vmatprep.subr.mxu0 %v1173
        %6960 = vmatpush1.msra.mxu0 %v1172
        %6961 = vmatprep.subr.mxu0 %v1175
        %6962 = vmatpush1.msra.mxu0 %v1174
        %6963 = vmatprep.subr.mxu0 %v1177
        %6964 = vmatpush1.msra.mxu0 %v1176
        %6965 = vmatprep.subr.mxu0 %v1179
        %6966 = vmatpush1.msra.mxu0 %v1178
        %6967 = vmatprep.subr.mxu0 %v1181
        %6968 = vmatpush1.msra.mxu0 %v1180
        %6969 = vmatprep.subr.mxu0 %v1183
        %6970 = vmatpush1.msra.mxu0 %v1182
        %6971 = vmatprep.subr.mxu0 %v1185
        %6972 = vmatpush1.msra.mxu0 %v1184
        %6973 = vmatprep.subr.mxu0 %v1187
        %6974 = vmatpush1.msra.mxu0 %v1186
        %6975 = vmatprep.subr.mxu0 %v1189
        %6976 = vmatpush1.msra.mxu0 %v1188
        %6977 = vmatprep.subr.mxu0 %v1191
        %6978 = vmatpush1.msra.mxu0 %v1190
        %6979 = vmatprep.subr.mxu0 %v1193
        %6980 = vmatpush1.msra.mxu0 %v1192
        %6981 = vmatprep.mubr.f32.mxu0 %v6916
        %6982 = vmatmul.mubr.f32.gmra.mrb[0].mxu0 %v6915
        %v6983 = vpop.f32.mrb[0].mxu0
        %v6984 = vadd.f32 0.0, %v6983
        %v6985 = vpop.f32.mrb[0].mxu0
        %v6986 = vadd.f32 0.0, %v6985
        %6987 = vdwg.mxu0
        %v6988 = vadd.f32 %v6913, %v6984
        %v6989 = vadd.f32 %v6914, %v6986
        %v6990 = vmul.f32 %v2904, %v6458
        %v6991 = vmul.f32 %v2904, %v6462
        %6992 = vmatprep.subr.mxu0 %v1278
        %6993 = vmatpush1.msra.mxu0 %v1277
        %6994 = vmatprep.subr.mxu0 %v1280
        %6995 = vmatpush1.msra.mxu0 %v1279
        %6996 = vmatprep.subr.mxu0 %v1282
        %6997 = vmatpush1.msra.mxu0 %v1281
        %6998 = vmatprep.subr.mxu0 %v1284
        %6999 = vmatpush1.msra.mxu0 %v1283
        %7000 = vmatprep.subr.mxu0 %v1286
        %7001 = vmatpush1.msra.mxu0 %v1285
        %7002 = vmatprep.subr.mxu0 %v1288
        %7003 = vmatpush1.msra.mxu0 %v1287
        %7004 = vmatprep.subr.mxu0 %v1290
        %7005 = vmatpush1.msra.mxu0 %v1289
        %7006 = vmatprep.subr.mxu0 %v1292
        %7007 = vmatpush1.msra.mxu0 %v1291
        %7008 = vmatprep.subr.mxu0 %v1294
        %7009 = vmatpush1.msra.mxu0 %v1293
        %7010 = vmatprep.subr.mxu0 %v1296
        %7011 = vmatpush1.msra.mxu0 %v1295
        %7012 = vmatprep.subr.mxu0 %v1298
        %7013 = vmatpush1.msra.mxu0 %v1297
        %7014 = vmatprep.subr.mxu0 %v1300
        %7015 = vmatpush1.msra.mxu0 %v1299
        %7016 = vmatprep.subr.mxu0 %v1302
        %7017 = vmatpush1.msra.mxu0 %v1301
        %7018 = vmatprep.subr.mxu0 %v1304
        %7019 = vmatpush1.msra.mxu0 %v1303
        %7020 = vmatprep.subr.mxu0 %v1306
        %7021 = vmatpush1.msra.mxu0 %v1305
        %7022 = vmatprep.subr.mxu0 %v1308
        %7023 = vmatpush1.msra.mxu0 %v1307
        %7024 = vmatprep.subr.mxu0 %v1310
        %7025 = vmatpush1.msra.mxu0 %v1309
        %7026 = vmatprep.subr.mxu0 %v1312
        %7027 = vmatpush1.msra.mxu0 %v1311
        %7028 = vmatprep.subr.mxu0 %v1314
        %7029 = vmatpush1.msra.mxu0 %v1313
        %7030 = vmatprep.subr.mxu0 %v1316
        %7031 = vmatpush1.msra.mxu0 %v1315
        %7032 = vmatprep.subr.mxu0 %v1318
        %7033 = vmatpush1.msra.mxu0 %v1317
        %7034 = vmatprep.subr.mxu0 %v1320
        %7035 = vmatpush1.msra.mxu0 %v1319
        %7036 = vmatprep.subr.mxu0 %v1322
        %7037 = vmatpush1.msra.mxu0 %v1321
        %7038 = vmatprep.subr.mxu0 %v1324
        %7039 = vmatpush1.msra.mxu0 %v1323
        %7040 = vmatprep.subr.mxu0 %v1326
        %7041 = vmatpush1.msra.mxu0 %v1325
        %7042 = vmatprep.subr.mxu0 %v1328
        %7043 = vmatpush1.msra.mxu0 %v1327
        %7044 = vmatprep.subr.mxu0 %v1330
        %7045 = vmatpush1.msra.mxu0 %v1329
        %7046 = vmatprep.subr.mxu0 %v1332
        %7047 = vmatpush1.msra.mxu0 %v1331
        %7048 = vmatprep.subr.mxu0 %v1334
        %7049 = vmatpush1.msra.mxu0 %v1333
        %7050 = vmatprep.subr.mxu0 %v1336
        %7051 = vmatpush1.msra.mxu0 %v1335
        %7052 = vmatprep.subr.mxu0 %v1338
        %7053 = vmatpush1.msra.mxu0 %v1337
        %7054 = vmatprep.subr.mxu0 %v1340
        %7055 = vmatpush1.msra.mxu0 %v1339
        %7056 = vmatprep.mubr.f32.mxu0 %v6991
        %7057 = vmatmul.mubr.f32.gmra.mrb[0].mxu0 %v6990
        %v7058 = vpop.f32.mrb[0].mxu0
        %v7059 = vadd.f32 0.0, %v7058
        %v7060 = vpop.f32.mrb[0].mxu0
        %v7061 = vadd.f32 0.0, %v7060
        %7062 = vdwg.mxu0
        %v7063 = vadd.f32 %v6988, %v7059
        %v7064 = vadd.f32 %v6989, %v7061
        %v7065 = vmul.f32 %v2986, %v6458
        %v7066 = vmul.f32 %v2986, %v6462
        %7067 = vmatprep.subr.mxu0 %v1425
        %7068 = vmatpush1.msra.mxu0 %v1424
        %7069 = vmatprep.subr.mxu0 %v1427
        %7070 = vmatpush1.msra.mxu0 %v1426
        %7071 = vmatprep.subr.mxu0 %v1429
        %7072 = vmatpush1.msra.mxu0 %v1428
        %7073 = vmatprep.subr.mxu0 %v1431
        %7074 = vmatpush1.msra.mxu0 %v1430
        %7075 = vmatprep.subr.mxu0 %v1433
        %7076 = vmatpush1.msra.mxu0 %v1432
        %7077 = vmatprep.subr.mxu0 %v1435
        %7078 = vmatpush1.msra.mxu0 %v1434
        %7079 = vmatprep.subr.mxu0 %v1437
        %7080 = vmatpush1.msra.mxu0 %v1436
        %7081 = vmatprep.subr.mxu0 %v1439
        %7082 = vmatpush1.msra.mxu0 %v1438
        %7083 = vmatprep.subr.mxu0 %v1441
        %7084 = vmatpush1.msra.mxu0 %v1440
        %7085 = vmatprep.subr.mxu0 %v1443
        %7086 = vmatpush1.msra.mxu0 %v1442
        %7087 = vmatprep.subr.mxu0 %v1445
        %7088 = vmatpush1.msra.mxu0 %v1444
        %7089 = vmatprep.subr.mxu0 %v1447
        %7090 = vmatpush1.msra.mxu0 %v1446
        %7091 = vmatprep.subr.mxu0 %v1449
        %7092 = vmatpush1.msra.mxu0 %v1448
        %7093 = vmatprep.subr.mxu0 %v1451
        %7094 = vmatpush1.msra.mxu0 %v1450
        %7095 = vmatprep.subr.mxu0 %v1453
        %7096 = vmatpush1.msra.mxu0 %v1452
        %7097 = vmatprep.subr.mxu0 %v1455
        %7098 = vmatpush1.msra.mxu0 %v1454
        %7099 = vmatprep.subr.mxu0 %v1457
        %7100 = vmatpush1.msra.mxu0 %v1456
        %7101 = vmatprep.subr.mxu0 %v1459
        %7102 = vmatpush1.msra.mxu0 %v1458
        %7103 = vmatprep.subr.mxu0 %v1461
        %7104 = vmatpush1.msra.mxu0 %v1460
        %7105 = vmatprep.subr.mxu0 %v1463
        %7106 = vmatpush1.msra.mxu0 %v1462
        %7107 = vmatprep.subr.mxu0 %v1465
        %7108 = vmatpush1.msra.mxu0 %v1464
        %7109 = vmatprep.subr.mxu0 %v1467
        %7110 = vmatpush1.msra.mxu0 %v1466
        %7111 = vmatprep.subr.mxu0 %v1469
        %7112 = vmatpush1.msra.mxu0 %v1468
        %7113 = vmatprep.subr.mxu0 %v1471
        %7114 = vmatpush1.msra.mxu0 %v1470
        %7115 = vmatprep.subr.mxu0 %v1473
        %7116 = vmatpush1.msra.mxu0 %v1472
        %7117 = vmatprep.subr.mxu0 %v1475
        %7118 = vmatpush1.msra.mxu0 %v1474
        %7119 = vmatprep.subr.mxu0 %v1477
        %7120 = vmatpush1.msra.mxu0 %v1476
        %7121 = vmatprep.subr.mxu0 %v1479
        %7122 = vmatpush1.msra.mxu0 %v1478
        %7123 = vmatprep.subr.mxu0 %v1481
        %7124 = vmatpush1.msra.mxu0 %v1480
        %7125 = vmatprep.subr.mxu0 %v1483
        %7126 = vmatpush1.msra.mxu0 %v1482
        %7127 = vmatprep.subr.mxu0 %v1485
        %7128 = vmatpush1.msra.mxu0 %v1484
        %7129 = vmatprep.subr.mxu0 %v1487
        %7130 = vmatpush1.msra.mxu0 %v1486
        %7131 = vmatprep.mubr.f32.mxu0 %v7066
        %7132 = vmatmul.mubr.f32.gmra.mrb[0].mxu0 %v7065
        %v7133 = vpop.f32.mrb[0].mxu0
        %v7134 = vadd.f32 0.0, %v7133
        %v7135 = vpop.f32.mrb[0].mxu0
        %v7136 = vadd.f32 0.0, %v7135
        %7137 = vdwg.mxu0
        %v7138 = vadd.f32 %v7063, %v7134
        %v7139 = vadd.f32 %v7064, %v7136
        %v7140 = vadd.f32 %v7138, %v3066
        %v7141 = vadd.f32 %v7139, %v3066
        %v7142 = vadd.f32 %v3068, %v3069
        %7143 = vadd.xlane.f32.xlu0 %v7142
        %v7144 = vpop.xlane.xlu0 %7143
        %v7145 = vadd.f32 %v7144, 0.0
        %v7146 = vadd.f32 %v5104, %v5105
        %7147 = vadd.xlane.f32.xlu0 %v7146
        %v7148 = vpop.xlane.xlu0 %7147
        %v7149 = vadd.f32 %v7145, %v7148
        %v7150 = vadd.f32 %v7140, %v7141
        %7151 = vadd.xlane.f32.xlu0 %v7150
        %v7152 = vpop.xlane.xlu0 %7151
        %v7153 = vadd.f32 %v7149, %v7152
        %v7154 = vmul.f32 %v7153, 0.0013020834
        %v7155 = vsub.f32 %v3068, %v7154
        %v7156 = vsub.f32 %v3069, %v7154
        %v7157 = vmul.f32 %v7155, %v7155
        %v7158 = vmul.f32 %v7156, %v7156
        %v7159 = vadd.f32 %v7157, %v7158
        %7160 = vadd.xlane.f32.xlu0 %v7159
        %v7161 = vpop.xlane.xlu0 %7160
        %v7162 = vadd.f32 %v7161, 0.0
        %v7163 = vsub.f32 %v5104, %v7154
        %v7164 = vsub.f32 %v5105, %v7154
        %v7165 = vmul.f32 %v7163, %v7163
        %v7166 = vmul.f32 %v7164, %v7164
        %v7167 = vadd.f32 %v7165, %v7166
        %7168 = vadd.xlane.f32.xlu0 %v7167
        %v7169 = vpop.xlane.xlu0 %7168
        %v7170 = vadd.f32 %v7162, %v7169
        %v7171 = vsub.f32 %v7140, %v7154
        %v7172 = vsub.f32 %v7141, %v7154
        %v7173 = vmul.f32 %v7171, %v7171
        %v7174 = vmul.f32 %v7172, %v7172
        %v7175 = vadd.f32 %v7173, %v7174
        %7176 = vadd.xlane.f32.xlu0 %v7175
        %v7177 = vpop.xlane.xlu0 %7176
        %v7178 = vadd.f32 %v7170, %v7177
        %v7179 = vmul.f32 %v7178, 0.0013020834
        %v7180 = vadd.f32 %v7179, 1e-05
        %v7181 = vrsqrt.pop %v7180
        %v7182 = vmul.f32 %v7155, %v7181
        %v7183 = vmul.f32 %v7156, %v7181
        %v7184 = vmax.f32 %v7182, 0.0
        %v7185 = vmax.f32 %v7183, 0.0
        %7186 = vst [vmem:[%s230] sm:$0xff] %v7184
        %7187 = vst [vmem:[%s230 + $0x8] sm:$0xff] %v7185
        %v7188 = vmul.f32 %v7163, %v7181
        %v7189 = vmul.f32 %v7164, %v7181
        %v7190 = vmax.f32 %v7188, 0.0
        %v7191 = vmax.f32 %v7189, 0.0
        %s7192 = scalar_lea.vmem %s230, 16 [#allocation7]
        %7193 = vst [vmem:[%s7192] sm:$0xff] %v7190
        %7194 = vst [vmem:[%s7192 + $0x8] sm:$0xff] %v7191
        %v7195 = vmul.f32 %v7171, %v7181
        %v7196 = vmul.f32 %v7172, %v7181
        %v7197 = vmax.f32 %v7195, 0.0
        %v7198 = vmax.f32 %v7196, 0.0
        %s7199 = scalar_lea.vmem %s230, 32 [#allocation7]
        %7200 = vst [vmem:[%s7199] sm:$0xff] %v7197
        %7201 = vst [vmem:[%s7199 + $0x8] sm:$0xff] %v7198
        %s7202 = sand.u32 %s119, 1
        %s7203 = scalar_lea.sflag [#allocation4], %s7202
        %s7204 = sand.u32 %s119, 1
        %s7205 = smul.addr %s7204, 48
        %s7206 = scalar_lea.vmem [#allocation7], %s7205
        // Predicated region
        $region45: #{tpu_custom_call.1} parent=35 // pred_check
          %p7207 = pneg %p129
        $region46: #{tpu_custom_call.1} parent=35 // pred_check_branch
          %7209 = sbr.rel (%p7207) target = $region48
        $region47: #{tpu_custom_call.1} parent=35 // pred_region
          %s7211 = ssub.s32 768, 768
          %7212 = vsyncadd %s7203, %s7211
          %s7213 = smul.addr %s22, 6
          %s7214 = smul.addr %s7213, 128
          %s7215 = scalar_lea.hbm %s4, %s7214
          %s7216 = sshll.u32 %s7206, 4
          %s7217 = int_to_ptr.vmem [resolvable:$true] %s7216
          %7222 = dma.vmem_to_hbm [thread:$0]  %s7217, 768, %s7215, %s7203, 256, 256, 16
        $region48: #{tpu_custom_call.1} parent=35 // pred_fallthru
          _
      $region36: #{tpu_custom_call.1} parent=5 // pred_fallthru
        _
      %p7223 = scmp.le.s32.totalorder 2, %s17
      // Predicated region
      $region49: #{tpu_custom_call.1} parent=5 // pred_check
        %p7224 = pneg %p7223
      $region50: #{tpu_custom_call.1} parent=5 // pred_check_branch
        %7226 = sbr.rel (%p7224) target = $region52
      $region51: #{tpu_custom_call.1} parent=5 // pred_region
        %s7227 = ssub.s32 %s17, 2
        // Predicated region
        $region53: #{tpu_custom_call.1} parent=51 // pred_check
          %p7228 = pneg %p135
        $region54: #{tpu_custom_call.1} parent=51 // pred_check_branch
          %7230 = sbr.rel (%p7228) target = $region56
        $region55: #{tpu_custom_call.1} parent=51 // pred_region
          %s7231 = sand.u32 %s120, 1
          %s7232 = scalar_lea.sflag [#allocation4], %s7231
          %s7233 = sand.u32 %s120, 1
          %s7234 = smul.addr %s7233, 48
          %s7235 = scalar_lea.vmem [#allocation7], %s7234
          %7236 = dma.done %s7232, 768
        $region56: #{tpu_custom_call.1} parent=51 // pred_fallthru
          _
      $region52: #{tpu_custom_call.1} parent=5 // pred_fallthru
        _
    $region6: #{tpu_custom_call.1} parent=1 // loop_footer
      %s21 = sadd.s32 1, %s17
    $region7: #{tpu_custom_call.1} parent=1 // loop_footer_branch
      %16 = sbr.rel target = $region3
    $region8: #{tpu_custom_call.1} parent=1 // loop_exit
      _
    %7237 = vsyncpa [#allocation3], 1
    %s7238 = scalar_lea.sflag [#allocation3], 1
    %7239 = vsyncpa %s7238, 1
    %7240 = vsyncpa [#allocation6], 1
    %7241 = vsyncpa [#allocation4], 1
    %s7242 = scalar_lea.sflag [#allocation4], 1
    %7243 = vsyncpa %s7242, 1

</llo_original>
